<compile_context>
chip_gen: v7x
topology: tpu7x:2x2x1
jax: 0.10.0
libtpu: 0.0.40
codegen_flags: <defaults>
</compile_context>

<pallas_src>
import math
from functools import partial

import jax
import jax.numpy as jnp
from jax import lax
from jax.experimental import pallas as pl
from jax.experimental.pallas import tpu as pltpu


# ----------------------------------------------------------------------------
# Small helpers
# ----------------------------------------------------------------------------

_VMEM_LIMIT_CACHE = [None]


def _vmem_limit_bytes():
    """Generation-aware scoped VMEM limit (~75% of physical, capped 100 MiB)."""
    if _VMEM_LIMIT_CACHE[0] is None:
        limit = 64 * 1024 * 1024
        try:
            info_fn = getattr(pltpu, "get_tpu_info", None)
            if info_fn is not None:
                info = info_fn()
                for name in ("vmem_capacity_bytes", "vmem_size_bytes",
                             "vmem_capacity", "vmem_bytes"):
                    cap = getattr(info, name, None)
                    if cap:
                        limit = min(int(cap) * 3 // 4, 100 * 1024 * 1024)
                        break
        except Exception:
            pass
        _VMEM_LIMIT_CACHE[0] = limit
    return _VMEM_LIMIT_CACHE[0]


def _cparams(*sem):
    return pltpu.CompilerParams(dimension_semantics=tuple(sem),
                                vmem_limit_bytes=_vmem_limit_bytes())


def _round_up(n, m):
    return (n + m - 1) // m * m


def _choose_row_tile(M, max_tile):
    """Row tile that is the full extent or an 8-multiple divisor of M (so no
    jnp.pad HBM copies are needed); falls back to padding for awkward M."""
    if M <= max_tile:
        return M, M, 1
    t = (max_tile // 8) * 8
    while t >= 8:
        if M % t == 0:
            return t, M, M // t
        t -= 8
    Mp = _round_up(M, max_tile)
    return max_tile, Mp, Mp // max_tile


def _pad_rows(x, Mp, axis=0):
    pad = Mp - x.shape[axis]
    if pad == 0:
        return x
    widths = [(0, 0)] * x.ndim
    widths[axis] = (0, pad)
    return jnp.pad(x, widths)


# ----------------------------------------------------------------------------
# in_proj with the grouped 1x1 conv + SiLU folded into the same matmul
# ----------------------------------------------------------------------------

def _inproj_conv_kernel(x_ref, w_ref, ba_ref, z_ref, a_ref, *, d_inner):
    out = jnp.dot(x_ref[...], w_ref[...], preferred_element_type=jnp.float32)
    z_ref[...] = out[:, :d_inner]
    a = out[:, d_inner:] + ba_ref[...]
    a_ref[...] = a * pl.reciprocal(1.0 + jnp.exp(-a), approx=True)


def pallas_inproj_conv(x, w_z, w_a, b_a, max_tile=2048):
    """z = x @ w_z ; a = SiLU(x @ w_a + b_a)   (1x1 grouped conv pre-folded)."""
    M, K = x.shape
    d_inner = w_z.shape[1]
    G = w_a.shape[1]
    tm, Mp, gm = _choose_row_tile(M, max_tile)
    xb = _pad_rows(x, Mp).astype(jnp.bfloat16)
    w_cat = jnp.concatenate([w_z, w_a], axis=1).astype(jnp.bfloat16)
    z, a = pl.pallas_call(
        partial(_inproj_conv_kernel, d_inner=d_inner),
        out_shape=(jax.ShapeDtypeStruct((Mp, d_inner), jnp.float32),
                   jax.ShapeDtypeStruct((Mp, G), jnp.float32)),
        grid=(gm,),
        in_specs=[
            pl.BlockSpec((tm, K), lambda i: (i, 0)),
            pl.BlockSpec((K, d_inner + G), lambda i: (0, 0)),
            pl.BlockSpec((1, G), lambda i: (0, 0)),
        ],
        out_specs=(pl.BlockSpec((tm, d_inner), lambda i: (i, 0)),
                   pl.BlockSpec((tm, G), lambda i: (i, 0))),
        compiler_params=_cparams("parallel"),
    )(xb, w_cat, b_a.reshape(1, G).astype(jnp.float32))
    return z[:M], a[:M]


# ----------------------------------------------------------------------------
# Depthwise 3x3/stride conv (spatial on lanes) fused with depth_fc + SiLU
# ----------------------------------------------------------------------------

def _depthconv_fc_kernel(t_ref, wd_ref, bd_ref, wf_ref, bf_ref, o_ref):
    # taps: (9, 1, C, SP) -- channels on sublanes, spatial on lanes.
    # wd:(9,C,1)  bd:(C,1)  wf:(SP,C_out)  bf:(1,C_out)  out:(1,C,C_out)
    S = t_ref.shape[0]
    acc = t_ref[0, 0] * wd_ref[0] + bd_ref[...]
    for s in range(1, S):
        acc = acc + t_ref[s, 0] * wd_ref[s]
    r = jnp.dot(acc.astype(jnp.bfloat16), wf_ref[...],
                preferred_element_type=jnp.float32) + bf_ref[...]
    o_ref[0] = r * pl.reciprocal(1.0 + jnp.exp(-r), approx=True)


def pallas_depthconv_fc(taps, w_depth, b_depth, w_fc, b_fc):
    """taps:(9,B,C,SP)  w_depth:(C,9)  b_depth:(C,)  w_fc:(SP,C_out)
    b_fc:(C_out,)  ->  (B, C, C_out)   [depthwise conv -> fc over SP -> SiLU]"""
    S, B, C, SP = taps.shape
    C_out = w_fc.shape[1]
    assert w_fc.shape[0] == SP
    return pl.pallas_call(
        _depthconv_fc_kernel,
        out_shape=jax.ShapeDtypeStruct((B, C, C_out), jnp.float32),
        grid=(B,),
        in_specs=[
            pl.BlockSpec((S, 1, C, SP), lambda b: (0, b, 0, 0)),
            pl.BlockSpec((S, C, 1), lambda b: (0, 0, 0)),
            pl.BlockSpec((C, 1), lambda b: (0, 0)),
            pl.BlockSpec((SP, C_out), lambda b: (0, 0)),
            pl.BlockSpec((1, C_out), lambda b: (0, 0)),
        ],
        out_specs=pl.BlockSpec((1, C, C_out), lambda b: (b, 0, 0)),
        compiler_params=_cparams("parallel"),
    )(taps.astype(jnp.float32),
      w_depth.T.reshape(S, C, 1).astype(jnp.float32),
      b_depth.reshape(C, 1).astype(jnp.float32),
      w_fc.astype(jnp.bfloat16),
      b_fc.reshape(1, C_out).astype(jnp.float32))


# ----------------------------------------------------------------------------
# Selective scan with x_proj / dt_proj fused in, time-chunked prologue
# ----------------------------------------------------------------------------

def _scan_kernel(u_ref, w_ref, a_ref, d_ref, dtb_ref, y_ref,
                 dA_ref, dBu_ref, cb_ref, yacc_ref, *, unroll):
    # u:(1,LLp,Dm)  w:(Dm,Dm+2N) [dt|B|C]  a:(N,Dm)  d,dtb:(1,Dm)
    N, Dm = a_ref.shape
    LLp = u_ref.shape[1]
    t_chunk = dA_ref.shape[0]
    n_chunks = LLp // t_chunk
    A = a_ref[...]

    def chunk_body(c, h):
        base = pl.multiple_of(c * t_chunk, unroll)
        u_c = u_ref[0, pl.ds(base, t_chunk), :]                       # (T, Dm)
        # fused x_proj / dt_proj: one MXU pass, off the serial path
        proj = jnp.dot(u_c.astype(jnp.bfloat16), w_ref[...],
                       preferred_element_type=jnp.float32)            # (T, Dm+2N)
        dt_raw = proj[:, :Dm] + dtb_ref[...]
        dt_sp = (jnp.maximum(dt_raw, 0.0)
                 + jnp.log(1.0 + jnp.exp(-jnp.abs(dt_raw))))          # softplus
        dtu = dt_sp * u_c
        b_c = proj[:, Dm:Dm + N]                                      # (T, N)
        c_c = proj[:, Dm + N:Dm + 2 * N]                              # (T, N)
        dA_ref[...] = jnp.exp(dt_sp[:, None, :] * A[None, :, :])      # (T,N,Dm)
        dBu_ref[...] = b_c[:, :, None] * dtu[:, None, :]              # (T,N,Dm)
        cb_ref[...] = c_c[:, :, None] * jnp.ones_like(dtu)[:, None, :]

        # sequential recurrence: 2 VPU ops / step on the critical path;
        # reduce + stores are batched per unrolled group of 8 steps.
        def step(i, h):
            tt = pl.multiple_of(i * unroll, unroll)
            rows = []
            for j in range(unroll):                    # static unroll
                t = tt + j
                h = dA_ref[t] * h + dBu_ref[t]
                rows.append(jnp.sum(cb_ref[t] * h, axis=0, keepdims=True))
            row0 = pl.multiple_of(base + tt, unroll)
            yacc_ref[pl.ds(row0, unroll), :] = jnp.concatenate(rows, axis=0)
            return h

        return lax.fori_loop(0, t_chunk // unroll, step, h)

    lax.fori_loop(0, n_chunks, chunk_body, jnp.zeros((N, Dm), jnp.float32))

    # skip connection + one lane-dense store of the whole block
    y_ref[0] = yacc_ref[...] + d_ref[...] * u_ref[0]


def pallas_selective_scan(xs, w_comb, A_T, D, dt_bias, *, d_state,
                          unroll=8, max_chunk=512):
    """Mamba selective scan (delta_softplus=True) with x_proj/dt_proj fused.

    xs: (B, LL, Dm) f32; w_comb: (Dm, Dm+2N) columns = [dt | B | C];
    A_T: (N, Dm); D, dt_bias: (Dm,).  Returns (B, LLp, Dm); trailing padded
    time steps (if any) must be sliced off by the caller.
    TODO(synk): for B==1 on v7x, split the channel axis so the grid can shard
    across the two TensorCores.
    """
    B, LL, Dm = xs.shape
    N = d_state
    assert w_comb.shape == (Dm, Dm + 2 * N)
    t_chunk = _round_up(min(max_chunk, _round_up(LL, unroll)), unroll)
    LLp = _round_up(LL, t_chunk)
    assert t_chunk % unroll == 0 and LLp % t_chunk == 0
    xs = _pad_rows(xs.astype(jnp.float32), LLp, axis=1)
    return pl.pallas_call(
        partial(_scan_kernel, unroll=unroll),
        out_shape=jax.ShapeDtypeStruct((B, LLp, Dm), jnp.float32),
        grid=(B,),
        in_specs=[
            pl.BlockSpec((1, LLp, Dm), lambda b: (b, 0, 0)),
            pl.BlockSpec((Dm, Dm + 2 * N), lambda b: (0, 0)),
            pl.BlockSpec((N, Dm), lambda b: (0, 0)),
            pl.BlockSpec((1, Dm), lambda b: (0, 0)),
            pl.BlockSpec((1, Dm), lambda b: (0, 0)),
        ],
        out_specs=pl.BlockSpec((1, LLp, Dm), lambda b: (b, 0, 0)),
        scratch_shapes=[
            pltpu.VMEM((t_chunk, N, Dm), jnp.float32),   # exp(dt * A)
            pltpu.VMEM((t_chunk, N, Dm), jnp.float32),   # dt * u * B
            pltpu.VMEM((t_chunk, N, Dm), jnp.float32),   # C broadcast over d
            pltpu.VMEM((LLp, Dm), jnp.float32),          # y accumulator
        ],
        compiler_params=_cparams("parallel"),
    )(xs, w_comb.astype(jnp.bfloat16), A_T.astype(jnp.float32),
      D.reshape(1, Dm).astype(jnp.float32),
      dt_bias.reshape(1, Dm).astype(jnp.float32))


# ----------------------------------------------------------------------------
# fold (Linear) -> LayerNorm -> * SiLU(z) -> out_proj, fused, M-tiled
# ----------------------------------------------------------------------------

def _fold_norm_gate_proj_kernel(y_ref, z_ref, wf_ref, g_ref, be_ref, wo_ref,
                                o_ref):
    t = jnp.dot(y_ref[...], wf_ref[...], preferred_element_type=jnp.float32)
    mu = jnp.mean(t, axis=-1, keepdims=True)
    var = jnp.mean(jnp.square(t - mu), axis=-1, keepdims=True)
    tn = (t - mu) * lax.rsqrt(var + 1e-5)
    tn = tn * g_ref[...] + be_ref[...]
    z = z_ref[...]
    gated = tn * (z * pl.reciprocal(1.0 + jnp.exp(-z), approx=True))
    o_ref[...] = jnp.dot(gated.astype(wo_ref.dtype), wo_ref[...],
                         preferred_element_type=jnp.float32)


def pallas_fold_norm_gate_proj(y_seq, z, w_fold, ln_g, ln_b, w_out,
                               max_tile=2048):
    M, Dseq = y_seq.shape
    Din = w_fold.shape[1]
    Dout = w_out.shape[1]
    tm, Mp, gm = _choose_row_tile(M, max_tile)
    yb = _pad_rows(y_seq, Mp).astype(jnp.bfloat16)
    zb = _pad_rows(z, Mp).astype(jnp.float32)
    out = pl.pallas_call(
        _fold_norm_gate_proj_kernel,
        out_shape=jax.ShapeDtypeStruct((Mp, Dout), jnp.float32),
        grid=(gm,),
        in_specs=[
            pl.BlockSpec((tm, Dseq), lambda i: (i, 0)),
            pl.BlockSpec((tm, Din), lambda i: (i, 0)),
            pl.BlockSpec((Dseq, Din), lambda i: (0, 0)),
            pl.BlockSpec((1, Din), lambda i: (0, 0)),
            pl.BlockSpec((1, Din), lambda i: (0, 0)),
            pl.BlockSpec((Din, Dout), lambda i: (0, 0)),
        ],
        out_specs=pl.BlockSpec((tm, Dout), lambda i: (i, 0)),
        compiler_params=_cparams("parallel"),
    )(yb, zb, w_fold.astype(jnp.bfloat16),
      ln_g.reshape(1, Din).astype(jnp.float32),
      ln_b.reshape(1, Din).astype(jnp.float32),
      w_out.astype(jnp.bfloat16))
    return out[:M]


# ----------------------------------------------------------------------------
# Glue (data layout only, JAX level)
# ----------------------------------------------------------------------------

def _im2col_nhwc(x, ksize, stride, pad):
    """(B,H,W,C) -> (B,OH,OW,C,ksize*ksize), tap index k = kh*ksize + kw."""
    B, H, W, C = x.shape
    xp = jnp.pad(x, ((0, 0), (pad, pad), (pad, pad), (0, 0)))
    OH = (H + 2 * pad - ksize) // stride + 1
    OW = (W + 2 * pad - ksize) // stride + 1
    cols = []
    for kh in range(ksize):
        for kw in range(ksize):
            cols.append(xp[:, kh:kh + stride * (OH - 1) + 1:stride,
                           kw:kw + stride * (OW - 1) + 1:stride, :])
    return jnp.stack(cols, axis=-1)


def _depth_taps_cf(x_nhwc, ksize, stride, pad):
    """(B,H,W,C) -> (k*k, B, C, OH*OW): channels-first, spatial on lanes."""
    B, H, W, C = x_nhwc.shape
    x_cf = jnp.transpose(x_nhwc, (0, 3, 1, 2))
    xp = jnp.pad(x_cf, ((0, 0), (0, 0), (pad, pad), (pad, pad)))
    OH = (H + 2 * pad - ksize) // stride + 1
    OW = (W + 2 * pad - ksize) // stride + 1
    taps = []
    for kh in range(ksize):
        for kw in range(ksize):
            taps.append(xp[:, :, kh:kh + stride * (OH - 1) + 1:stride,
                           kw:kw + stride * (OW - 1) + 1:stride])
    t = jnp.stack(taps, axis=0)
    return t.reshape(ksize * ksize, B, C, OH * OW), OH, OW


# ----------------------------------------------------------------------------
# Forward pass
# ----------------------------------------------------------------------------

def ss2depthconv_k1_forward(x, params, *, squeeze=8, d_state=16,
                            d_depth_stride=2, scan_unroll=8, scan_chunk=512):
    """SS2DepthConv_K1.forward, mode='head', inference (dropout = identity)."""
    B, H, W, d_model = x.shape
    d_inner = d_model                       # expand = 1
    G = d_inner // squeeze                  # 1x1 grouped conv output channels
    d_seq = G * 9                           # d_sequence_model
    L = H * W
    M = B * L

    # ---- in_proj with the 1x1 grouped conv + SiLU folded in (trace time) ----
    w_in = params["w_in"]
    w_z = w_in[:, d_inner:]
    w_a = jnp.einsum("kgs,gs->kg",
                     w_in[:, :d_inner].reshape(d_model, G, squeeze),
                     params["w_conv2d"])
    z, a = pallas_inproj_conv(x.reshape(M, d_model), w_z, w_a,
                              params["b_conv2d"])            # (M,d_inner),(M,G)
    a_map = a.reshape(B, H, W, G)

    # ---- 3x3 unfold (pad 1, stride 1) ----------------------------------------
    # TODO(synk): fuse the two im2col/unfold passes into the Pallas kernels via
    #             halo row BlockSpecs / pltpu.roll; at realistic H,W they are
    #             the dominant HBM traffic.
    unf = _im2col_nhwc(a_map, 3, 1, 1)                        # (B,H,W,G,9)
    x_seq = unf.reshape(B, L, d_seq)                          # scan body seq
    unf_c = unf.reshape(B, H, W, d_seq)

    # ---- depthwise 3x3 stride-2 conv + depth_fc + SiLU (one fused kernel) ----
    taps, OH, OW = _depth_taps_cf(unf_c, 3, d_depth_stride, 1)
    assert params["w_depth_fc"].shape[0] == OH * OW, \
        "d_depth_out must equal (H//stride)*(W//stride)"
    dx_seq = pallas_depthconv_fc(taps, params["w_depth"], params["b_depth"],
                                 params["w_depth_fc"], params["b_depth_fc"])
    # dx_seq: (B, CC=d_seq, d_seq) -- time on axis 1, scan channel on axis 2

    # ---- forward_core, mode == 'head' ----------------------------------------
    # TODO(synk): only mode='head' of forward_core is implemented.
    CC = d_seq
    xs_seq = jnp.concatenate([dx_seq, x_seq], axis=1)         # (B, LL, d_seq)

    dt_rank = params["w_dtproj"].shape[0]
    w_comb = jnp.concatenate(
        [params["w_xproj"][:, :dt_rank] @ params["w_dtproj"],
         params["w_xproj"][:, dt_rank:]], axis=1)             # (d_seq, d_seq+2N)
    A_T = -jnp.exp(params["A_logs"]).T                        # (N, d_seq)

    y = pallas_selective_scan(xs_seq, w_comb, A_T, params["Ds"],
                              params["dt_bias"], d_state=d_state,
                              unroll=scan_unroll, max_chunk=scan_chunk)
    y_seq = y[:, CC:CC + L, :].reshape(M, d_seq)              # drop head prefix

    # ---- fold + LayerNorm + SiLU(z) gate + out_proj ---------------------------
    out = pallas_fold_norm_gate_proj(y_seq, z, params["w_fold"],
                                     params["ln_g"], params["ln_b"],
                                     params["w_out"])         # (M, d_model)
    # dropout: inference mode (identity)
    return out.reshape(B, H, W, d_model)


# ----------------------------------------------------------------------------
# Deterministic parameter init (synthetic, shapes match the module's __init__)
# ----------------------------------------------------------------------------

def init_params(key, d_model=16, squeeze=8, d_state=16, d_depth_stride=2,
                H=8, W=8):
    d_inner = d_model
    G = d_inner // squeeze
    d_seq = G * 9
    dt_rank = math.ceil((d_model // squeeze * 9) / 16)
    d_depth_out = (H // d_depth_stride) * (W // d_depth_stride)
    ks = jax.random.split(key, 12)

    def u(k, shape, scale):
        return jax.random.uniform(k, shape, jnp.float32, -scale, scale)

    params = {
        "w_in":       u(ks[0], (d_model, 2 * d_inner), d_model ** -0.5),
        "w_conv2d":   u(ks[1], (G, squeeze), squeeze ** -0.5),
        "b_conv2d":   u(ks[2], (G,), squeeze ** -0.5),
        "w_depth":    u(ks[3], (d_seq, 9), 1.0 / 3.0),
        "b_depth":    u(ks[4], (d_seq,), 1.0 / 3.0),
        "w_depth_fc": u(ks[5], (d_depth_out, d_seq), d_depth_out ** -0.5),
        "b_depth_fc": u(ks[6], (d_seq,), d_depth_out ** -0.5),
        "w_xproj":    u(ks[7], (d_seq, dt_rank + 2 * d_state), d_seq ** -0.5),
        "w_dtproj":   u(ks[8], (dt_rank, d_seq), dt_rank ** -0.5),
        "w_fold":     u(ks[9], (d_seq, d_inner), d_seq ** -0.5),
        "w_out":      u(ks[10], (d_inner, d_model), d_inner ** -0.5),
        "ln_g":       jnp.ones((d_inner,), jnp.float32),
        "ln_b":       jnp.zeros((d_inner,), jnp.float32),
        "A_logs":     jnp.log(jnp.tile(
            jnp.arange(1, d_state + 1, dtype=jnp.float32)[None, :], (d_seq, 1))),
        "Ds":         jnp.ones((d_seq,), jnp.float32),
    }
    dt_min, dt_max, dt_init_floor = 1e-3, 0.1, 1e-4
    dt = jnp.exp(jax.random.uniform(ks[11], (d_seq,), jnp.float32)
                 * (math.log(dt_max) - math.log(dt_min)) + math.log(dt_min))
    dt = jnp.maximum(dt, dt_init_floor)
    params["dt_bias"] = dt + jnp.log(-jnp.expm1(-dt))
    return params


# ----------------------------------------------------------------------------

if __name__ == "__main__":
    B, H, W, d_model = 2, 8, 8, 16
    key = jax.random.PRNGKey(0)
    kx, kp = jax.random.split(key)
    x = jax.random.normal(kx, (B, H, W, d_model), jnp.float32)
    params = init_params(kp, d_model=d_model, H=H, W=W)

    fwd = jax.jit(ss2depthconv_k1_forward)
    out = jax.block_until_ready(fwd(x, params))

    assert out.shape == (B, H, W, d_model), out.shape
    assert out.dtype == jnp.float32
    assert not bool(jnp.isnan(out).any())
    print("KERNEL_OK")
</pallas_src>

<mosaic_0001>
module attributes {stable_mosaic.version = 11 : i64} {
  func.func @_inproj_conv_kernel(%arg0: i32, %arg1: memref<128x16xbf16, #tpu.memory_space<vmem>>, %arg2: memref<16x18xbf16, #tpu.memory_space<vmem>>, %arg3: memref<1x2xf32, #tpu.memory_space<vmem>>, %arg4: memref<128x16xf32, #tpu.memory_space<vmem>>, %arg5: memref<128x2xf32, #tpu.memory_space<vmem>>) attributes {dimension_semantics = [#tpu.dimension_semantics<parallel>], iteration_bounds = array<i64: 1>, scalar_prefetch = 0 : i64, scratch_operands = 0 : i64, tpu.core_type = #tpu.core_type<tc>, window_params = [{transform_indices = @transform_0, window_bounds = array<i64: 128, 16>}, {pipeline_mode = #tpu.pipeline_mode<synchronous>, transform_indices = @transform_1, window_bounds = array<i64: 16, 18>}, {pipeline_mode = #tpu.pipeline_mode<synchronous>, transform_indices = @transform_2, window_bounds = array<i64: 1, 2>}, {transform_indices = @transform_3, window_bounds = array<i64: 128, 16>}, {transform_indices = @transform_4, window_bounds = array<i64: 128, 2>}]} {
    %c0 = arith.constant 0 : index
    %c0_0 = arith.constant 0 : index
    %0 = vector.load %arg1[%c0, %c0_0] : memref<128x16xbf16, #tpu.memory_space<vmem>>, vector<128x16xbf16>
    %c0_1 = arith.constant 0 : index
    %c0_2 = arith.constant 0 : index
    %1 = vector.load %arg2[%c0_1, %c0_2] : memref<16x18xbf16, #tpu.memory_space<vmem>>, vector<16x18xbf16>
    %cst = arith.constant dense<0.000000e+00> : vector<128x18xf32>
    %2 = tpu.matmul %0, %1, %cst {dimension_numbers = #tpu.dot_dimension_numbers<[1], [0], [0], [1], [0, 0, 1, 1], [], []>} : vector<128x16xbf16>, vector<16x18xbf16>, vector<128x18xf32> -> vector<128x18xf32>
    %3 = vector.extract_strided_slice %2 {offsets = [0, 0], sizes = [128, 16], strides = [1, 1]} : vector<128x18xf32> to vector<128x16xf32>
    %c0_3 = arith.constant 0 : index
    %c0_4 = arith.constant 0 : index
    %4 = vector.load %arg4[%c0_3, %c0_4] : memref<128x16xf32, #tpu.memory_space<vmem>>, vector<128x16xf32>
    tpu.vector_store %arg4[%c0_3, %c0_4], %3 {strides = array<i32>} : memref<128x16xf32, #tpu.memory_space<vmem>>, vector<128x16xf32>,
    %5 = vector.extract_strided_slice %2 {offsets = [0, 16], sizes = [128, 2], strides = [1, 1]} : vector<128x18xf32> to vector<128x2xf32>
    %c0_5 = arith.constant 0 : index
    %c0_6 = arith.constant 0 : index
    %6 = vector.load %arg3[%c0_5, %c0_6] : memref<1x2xf32, #tpu.memory_space<vmem>>, vector<1x2xf32>
    %7 = vector.broadcast %6 : vector<1x2xf32> to vector<128x2xf32>
    %8 = arith.addf %5, %7 : vector<128x2xf32>
    %cst_7 = arith.constant 0.000000e+00 : f32
    %9 = vector.broadcast %cst_7 : f32 to vector<128x2xf32>
    %10 = arith.subf %9, %8 : vector<128x2xf32>
    %11 = math.exp %10 : vector<128x2xf32>
    %cst_8 = arith.constant 1.000000e+00 : f32
    %12 = vector.broadcast %cst_8 : f32 to vector<128x2xf32>
    %13 = arith.addf %12, %11 : vector<128x2xf32>
    %14 = tpu.reciprocal %13 {approx = true} : vector<128x2xf32> -> vector<128x2xf32>
    %15 = arith.mulf %8, %14 : vector<128x2xf32>
    %c0_9 = arith.constant 0 : index
    %c0_10 = arith.constant 0 : index
    %16 = vector.load %arg5[%c0_9, %c0_10] : memref<128x2xf32, #tpu.memory_space<vmem>>, vector<128x2xf32>
    tpu.vector_store %arg5[%c0_9, %c0_10], %15 {strides = array<i32>} : memref<128x2xf32, #tpu.memory_space<vmem>>, vector<128x2xf32>,
    return
  }
  func.func @transform_0(%arg0: i32) -> (i32, i32) {
    %c0_i32 = arith.constant 0 : i32
    %c0_i32_0 = arith.constant 0 : i32
    return %arg0, %c0_i32 : i32, i32
  }
  func.func @transform_1(%arg0: i32) -> (i32, i32) {
    %c0_i32 = arith.constant 0 : i32
    %c0_i32_0 = arith.constant 0 : i32
    %c0_i32_1 = arith.constant 0 : i32
    return %c0_i32, %c0_i32_0 : i32, i32
  }
  func.func @transform_2(%arg0: i32) -> (i32, i32) {
    %c0_i32 = arith.constant 0 : i32
    %c0_i32_0 = arith.constant 0 : i32
    %c0_i32_1 = arith.constant 0 : i32
    return %c0_i32, %c0_i32_0 : i32, i32
  }
  func.func @transform_3(%arg0: i32) -> (i32, i32) {
    %c0_i32 = arith.constant 0 : i32
    %c0_i32_0 = arith.constant 0 : i32
    return %arg0, %c0_i32 : i32, i32
  }
  func.func @transform_4(%arg0: i32) -> (i32, i32) {
    %c0_i32 = arith.constant 0 : i32
    %c0_i32_0 = arith.constant 0 : i32
    return %arg0, %c0_i32 : i32, i32
  }
}

module attributes {stable_mosaic.version = 11 : i64} {
  func.func @_depthconv_fc_kernel(%arg0: i32, %arg1: memref<9x1x18x16xf32, #tpu.memory_space<vmem>>, %arg2: memref<9x18x1xf32, #tpu.memory_space<vmem>>, %arg3: memref<18x1xf32, #tpu.memory_space<vmem>>, %arg4: memref<16x18xbf16, #tpu.memory_space<vmem>>, %arg5: memref<1x18xf32, #tpu.memory_space<vmem>>, %arg6: memref<1x18x18xf32, #tpu.memory_space<vmem>>) attributes {dimension_semantics = [#tpu.dimension_semantics<parallel>], iteration_bounds = array<i64: 2>, scalar_prefetch = 0 : i64, scratch_operands = 0 : i64, tpu.core_type = #tpu.core_type<tc>, window_params = [{transform_indices = @transform_0, window_bounds = array<i64: 9, 1, 18, 16>}, {pipeline_mode = #tpu.pipeline_mode<synchronous>, transform_indices = @transform_1, window_bounds = array<i64: 9, 18, 1>}, {pipeline_mode = #tpu.pipeline_mode<synchronous>, transform_indices = @transform_2, window_bounds = array<i64: 18, 1>}, {pipeline_mode = #tpu.pipeline_mode<synchronous>, transform_indices = @transform_3, window_bounds = array<i64: 16, 18>}, {pipeline_mode = #tpu.pipeline_mode<synchronous>, transform_indices = @transform_4, window_bounds = array<i64: 1, 18>}, {transform_indices = @transform_5, window_bounds = array<i64: 1, 18, 18>}]} {
    %c0 = arith.constant 0 : index
    %c0_0 = arith.constant 0 : index
    %c0_1 = arith.constant 0 : index
    %c0_2 = arith.constant 0 : index
    %0 = vector.load %arg1[%c0, %c0_0, %c0_1, %c0_2] : memref<9x1x18x16xf32, #tpu.memory_space<vmem>>, vector<1x1x18x16xf32>
    %1 = vector.shape_cast %0 : vector<1x1x18x16xf32> to vector<18x16xf32>
    %c0_3 = arith.constant 0 : index
    %c0_4 = arith.constant 0 : index
    %c0_5 = arith.constant 0 : index
    %2 = vector.load %arg2[%c0_3, %c0_4, %c0_5] : memref<9x18x1xf32, #tpu.memory_space<vmem>>, vector<1x18x1xf32>
    %3 = vector.shape_cast %2 : vector<1x18x1xf32> to vector<18x1xf32>
    %4 = vector.broadcast %3 : vector<18x1xf32> to vector<18x16xf32>
    %5 = arith.mulf %1, %4 : vector<18x16xf32>
    %c0_6 = arith.constant 0 : index
    %c0_7 = arith.constant 0 : index
    %6 = vector.load %arg3[%c0_6, %c0_7] : memref<18x1xf32, #tpu.memory_space<vmem>>, vector<18x1xf32>
    %7 = vector.broadcast %6 : vector<18x1xf32> to vector<18x16xf32>
    %8 = arith.addf %5, %7 : vector<18x16xf32>
    %c1 = arith.constant 1 : index
    %c0_8 = arith.constant 0 : index
    %c0_9 = arith.constant 0 : index
    %c0_10 = arith.constant 0 : index
    %9 = vector.load %arg1[%c1, %c0_8, %c0_9, %c0_10] : memref<9x1x18x16xf32, #tpu.memory_space<vmem>>, vector<1x1x18x16xf32>
    %10 = vector.shape_cast %9 : vector<1x1x18x16xf32> to vector<18x16xf32>
    %c1_11 = arith.constant 1 : index
    %c0_12 = arith.constant 0 : index
    %c0_13 = arith.constant 0 : index
    %11 = vector.load %arg2[%c1_11, %c0_12, %c0_13] : memref<9x18x1xf32, #tpu.memory_space<vmem>>, vector<1x18x1xf32>
    %12 = vector.shape_cast %11 : vector<1x18x1xf32> to vector<18x1xf32>
    %13 = vector.broadcast %12 : vector<18x1xf32> to vector<18x16xf32>
    %14 = arith.mulf %10, %13 : vector<18x16xf32>
    %15 = arith.addf %8, %14 : vector<18x16xf32>
    %c2 = arith.constant 2 : index
    %c0_14 = arith.constant 0 : index
    %c0_15 = arith.constant 0 : index
    %c0_16 = arith.constant 0 : index
    %16 = vector.load %arg1[%c2, %c0_14, %c0_15, %c0_16] : memref<9x1x18x16xf32, #tpu.memory_space<vmem>>, vector<1x1x18x16xf32>
    %17 = vector.shape_cast %16 : vector<1x1x18x16xf32> to vector<18x16xf32>
    %c2_17 = arith.constant 2 : index
    %c0_18 = arith.constant 0 : index
    %c0_19 = arith.constant 0 : index
    %18 = vector.load %arg2[%c2_17, %c0_18, %c0_19] : memref<9x18x1xf32, #tpu.memory_space<vmem>>, vector<1x18x1xf32>
    %19 = vector.shape_cast %18 : vector<1x18x1xf32> to vector<18x1xf32>
    %20 = vector.broadcast %19 : vector<18x1xf32> to vector<18x16xf32>
    %21 = arith.mulf %17, %20 : vector<18x16xf32>
    %22 = arith.addf %15, %21 : vector<18x16xf32>
    %c3 = arith.constant 3 : index
    %c0_20 = arith.constant 0 : index
    %c0_21 = arith.constant 0 : index
    %c0_22 = arith.constant 0 : index
    %23 = vector.load %arg1[%c3, %c0_20, %c0_21, %c0_22] : memref<9x1x18x16xf32, #tpu.memory_space<vmem>>, vector<1x1x18x16xf32>
    %24 = vector.shape_cast %23 : vector<1x1x18x16xf32> to vector<18x16xf32>
    %c3_23 = arith.constant 3 : index
    %c0_24 = arith.constant 0 : index
    %c0_25 = arith.constant 0 : index
    %25 = vector.load %arg2[%c3_23, %c0_24, %c0_25] : memref<9x18x1xf32, #tpu.memory_space<vmem>>, vector<1x18x1xf32>
    %26 = vector.shape_cast %25 : vector<1x18x1xf32> to vector<18x1xf32>
    %27 = vector.broadcast %26 : vector<18x1xf32> to vector<18x16xf32>
    %28 = arith.mulf %24, %27 : vector<18x16xf32>
    %29 = arith.addf %22, %28 : vector<18x16xf32>
    %c4 = arith.constant 4 : index
    %c0_26 = arith.constant 0 : index
    %c0_27 = arith.constant 0 : index
    %c0_28 = arith.constant 0 : index
    %30 = vector.load %arg1[%c4, %c0_26, %c0_27, %c0_28] : memref<9x1x18x16xf32, #tpu.memory_space<vmem>>, vector<1x1x18x16xf32>
    %31 = vector.shape_cast %30 : vector<1x1x18x16xf32> to vector<18x16xf32>
    %c4_29 = arith.constant 4 : index
    %c0_30 = arith.constant 0 : index
    %c0_31 = arith.constant 0 : index
    %32 = vector.load %arg2[%c4_29, %c0_30, %c0_31] : memref<9x18x1xf32, #tpu.memory_space<vmem>>, vector<1x18x1xf32>
    %33 = vector.shape_cast %32 : vector<1x18x1xf32> to vector<18x1xf32>
    %34 = vector.broadcast %33 : vector<18x1xf32> to vector<18x16xf32>
    %35 = arith.mulf %31, %34 : vector<18x16xf32>
    %36 = arith.addf %29, %35 : vector<18x16xf32>
    %c5 = arith.constant 5 : index
    %c0_32 = arith.constant 0 : index
    %c0_33 = arith.constant 0 : index
    %c0_34 = arith.constant 0 : index
    %37 = vector.load %arg1[%c5, %c0_32, %c0_33, %c0_34] : memref<9x1x18x16xf32, #tpu.memory_space<vmem>>, vector<1x1x18x16xf32>
    %38 = vector.shape_cast %37 : vector<1x1x18x16xf32> to vector<18x16xf32>
    %c5_35 = arith.constant 5 : index
    %c0_36 = arith.constant 0 : index
    %c0_37 = arith.constant 0 : index
    %39 = vector.load %arg2[%c5_35, %c0_36, %c0_37] : memref<9x18x1xf32, #tpu.memory_space<vmem>>, vector<1x18x1xf32>
    %40 = vector.shape_cast %39 : vector<1x18x1xf32> to vector<18x1xf32>
    %41 = vector.broadcast %40 : vector<18x1xf32> to vector<18x16xf32>
    %42 = arith.mulf %38, %41 : vector<18x16xf32>
    %43 = arith.addf %36, %42 : vector<18x16xf32>
    %c6 = arith.constant 6 : index
    %c0_38 = arith.constant 0 : index
    %c0_39 = arith.constant 0 : index
    %c0_40 = arith.constant 0 : index
    %44 = vector.load %arg1[%c6, %c0_38, %c0_39, %c0_40] : memref<9x1x18x16xf32, #tpu.memory_space<vmem>>, vector<1x1x18x16xf32>
    %45 = vector.shape_cast %44 : vector<1x1x18x16xf32> to vector<18x16xf32>
    %c6_41 = arith.constant 6 : index
    %c0_42 = arith.constant 0 : index
    %c0_43 = arith.constant 0 : index
    %46 = vector.load %arg2[%c6_41, %c0_42, %c0_43] : memref<9x18x1xf32, #tpu.memory_space<vmem>>, vector<1x18x1xf32>
    %47 = vector.shape_cast %46 : vector<1x18x1xf32> to vector<18x1xf32>
    %48 = vector.broadcast %47 : vector<18x1xf32> to vector<18x16xf32>
    %49 = arith.mulf %45, %48 : vector<18x16xf32>
    %50 = arith.addf %43, %49 : vector<18x16xf32>
    %c7 = arith.constant 7 : index
    %c0_44 = arith.constant 0 : index
    %c0_45 = arith.constant 0 : index
    %c0_46 = arith.constant 0 : index
    %51 = vector.load %arg1[%c7, %c0_44, %c0_45, %c0_46] : memref<9x1x18x16xf32, #tpu.memory_space<vmem>>, vector<1x1x18x16xf32>
    %52 = vector.shape_cast %51 : vector<1x1x18x16xf32> to vector<18x16xf32>
    %c7_47 = arith.constant 7 : index
    %c0_48 = arith.constant 0 : index
    %c0_49 = arith.constant 0 : index
    %53 = vector.load %arg2[%c7_47, %c0_48, %c0_49] : memref<9x18x1xf32, #tpu.memory_space<vmem>>, vector<1x18x1xf32>
    %54 = vector.shape_cast %53 : vector<1x18x1xf32> to vector<18x1xf32>
    %55 = vector.broadcast %54 : vector<18x1xf32> to vector<18x16xf32>
    %56 = arith.mulf %52, %55 : vector<18x16xf32>
    %57 = arith.addf %50, %56 : vector<18x16xf32>
    %c8 = arith.constant 8 : index
    %c0_50 = arith.constant 0 : index
    %c0_51 = arith.constant 0 : index
    %c0_52 = arith.constant 0 : index
    %58 = vector.load %arg1[%c8, %c0_50, %c0_51, %c0_52] : memref<9x1x18x16xf32, #tpu.memory_space<vmem>>, vector<1x1x18x16xf32>
    %59 = vector.shape_cast %58 : vector<1x1x18x16xf32> to vector<18x16xf32>
    %c8_53 = arith.constant 8 : index
    %c0_54 = arith.constant 0 : index
    %c0_55 = arith.constant 0 : index
    %60 = vector.load %arg2[%c8_53, %c0_54, %c0_55] : memref<9x18x1xf32, #tpu.memory_space<vmem>>, vector<1x18x1xf32>
    %61 = vector.shape_cast %60 : vector<1x18x1xf32> to vector<18x1xf32>
    %62 = vector.broadcast %61 : vector<18x1xf32> to vector<18x16xf32>
    %63 = arith.mulf %59, %62 : vector<18x16xf32>
    %64 = arith.addf %57, %63 : vector<18x16xf32>
    %65 = arith.truncf %64 : vector<18x16xf32> to vector<18x16xbf16>
    %c0_56 = arith.constant 0 : index
    %c0_57 = arith.constant 0 : index
    %66 = vector.load %arg4[%c0_56, %c0_57] : memref<16x18xbf16, #tpu.memory_space<vmem>>, vector<16x18xbf16>
    %cst = arith.constant dense<0.000000e+00> : vector<18x18xf32>
    %67 = tpu.matmul %65, %66, %cst {dimension_numbers = #tpu.dot_dimension_numbers<[1], [0], [0], [1], [0, 0, 1, 1], [], []>} : vector<18x16xbf16>, vector<16x18xbf16>, vector<18x18xf32> -> vector<18x18xf32>
    %c0_58 = arith.constant 0 : index
    %c0_59 = arith.constant 0 : index
    %68 = vector.load %arg5[%c0_58, %c0_59] : memref<1x18xf32, #tpu.memory_space<vmem>>, vector<1x18xf32>
    %69 = vector.broadcast %68 : vector<1x18xf32> to vector<18x18xf32>
    %70 = arith.addf %67, %69 : vector<18x18xf32>
    %cst_60 = arith.constant 0.000000e+00 : f32
    %71 = vector.broadcast %cst_60 : f32 to vector<18x18xf32>
    %72 = arith.subf %71, %70 : vector<18x18xf32>
    %73 = math.exp %72 : vector<18x18xf32>
    %cst_61 = arith.constant 1.000000e+00 : f32
    %74 = vector.broadcast %cst_61 : f32 to vector<18x18xf32>
    %75 = arith.addf %74, %73 : vector<18x18xf32>
    %76 = tpu.reciprocal %75 {approx = true} : vector<18x18xf32> -> vector<18x18xf32>
    %77 = arith.mulf %70, %76 : vector<18x18xf32>
    %c0_62 = arith.constant 0 : index
    %c0_63 = arith.constant 0 : index
    %c0_64 = arith.constant 0 : index
    %78 = vector.load %arg6[%c0_62, %c0_63, %c0_64] : memref<1x18x18xf32, #tpu.memory_space<vmem>>, vector<1x18x18xf32>
    %79 = vector.shape_cast %78 : vector<1x18x18xf32> to vector<18x18xf32>
    %80 = vector.shape_cast %77 : vector<18x18xf32> to vector<1x18x18xf32>
    tpu.vector_store %arg6[%c0_62, %c0_63, %c0_64], %80 {strides = array<i32>} : memref<1x18x18xf32, #tpu.memory_space<vmem>>, vector<1x18x18xf32>,
    return
  }
  func.func @transform_0(%arg0: i32) -> (i32, i32, i32, i32) {
    %c0_i32 = arith.constant 0 : i32
    %c0_i32_0 = arith.constant 0 : i32
    %c0_i32_1 = arith.constant 0 : i32
    %c0_i32_2 = arith.constant 0 : i32
    return %c0_i32, %arg0, %c0_i32_0, %c0_i32_1 : i32, i32, i32, i32
  }
  func.func @transform_1(%arg0: i32) -> (i32, i32, i32) {
    %c0_i32 = arith.constant 0 : i32
    %c0_i32_0 = arith.constant 0 : i32
    %c0_i32_1 = arith.constant 0 : i32
    %c0_i32_2 = arith.constant 0 : i32
    return %c0_i32, %c0_i32_0, %c0_i32_1 : i32, i32, i32
  }
  func.func @transform_2(%arg0: i32) -> (i32, i32) {
    %c0_i32 = arith.constant 0 : i32
    %c0_i32_0 = arith.constant 0 : i32
    %c0_i32_1 = arith.constant 0 : i32
    return %c0_i32, %c0_i32_0 : i32, i32
  }
  func.func @transform_3(%arg0: i32) -> (i32, i32) {
    %c0_i32 = arith.constant 0 : i32
    %c0_i32_0 = arith.constant 0 : i32
    %c0_i32_1 = arith.constant 0 : i32
    return %c0_i32, %c0_i32_0 : i32, i32
  }
  func.func @transform_4(%arg0: i32) -> (i32, i32) {
    %c0_i32 = arith.constant 0 : i32
    %c0_i32_0 = arith.constant 0 : i32
    %c0_i32_1 = arith.constant 0 : i32
    return %c0_i32, %c0_i32_0 : i32, i32
  }
  func.func @transform_5(%arg0: i32) -> (i32, i32, i32) {
    %c0_i32 = arith.constant 0 : i32
    %c0_i32_0 = arith.constant 0 : i32
    %c0_i32_1 = arith.constant 0 : i32
    return %arg0, %c0_i32, %c0_i32_0 : i32, i32, i32
  }
}

module attributes {stable_mosaic.version = 11 : i64} {
  func.func @_scan_kernel(%arg0: i32, %arg1: memref<1x88x18xf32, #tpu.memory_space<vmem>>, %arg2: memref<18x50xbf16, #tpu.memory_space<vmem>>, %arg3: memref<16x18xf32, #tpu.memory_space<vmem>>, %arg4: memref<1x18xf32, #tpu.memory_space<vmem>>, %arg5: memref<1x18xf32, #tpu.memory_space<vmem>>, %arg6: memref<1x88x18xf32, #tpu.memory_space<vmem>>, %arg7: memref<88x16x18xf32, #tpu.memory_space<vmem>>, %arg8: memref<88x16x18xf32, #tpu.memory_space<vmem>>, %arg9: memref<88x16x18xf32, #tpu.memory_space<vmem>>, %arg10: memref<88x18xf32, #tpu.memory_space<vmem>>) attributes {dimension_semantics = [#tpu.dimension_semantics<parallel>], iteration_bounds = array<i64: 2>, scalar_prefetch = 0 : i64, scratch_operands = 4 : i64, tpu.core_type = #tpu.core_type<tc>, window_params = [{transform_indices = @transform_0, window_bounds = array<i64: 1, 88, 18>}, {pipeline_mode = #tpu.pipeline_mode<synchronous>, transform_indices = @transform_1, window_bounds = array<i64: 18, 50>}, {pipeline_mode = #tpu.pipeline_mode<synchronous>, transform_indices = @transform_2, window_bounds = array<i64: 16, 18>}, {pipeline_mode = #tpu.pipeline_mode<synchronous>, transform_indices = @transform_3, window_bounds = array<i64: 1, 18>}, {pipeline_mode = #tpu.pipeline_mode<synchronous>, transform_indices = @transform_4, window_bounds = array<i64: 1, 18>}, {transform_indices = @transform_5, window_bounds = array<i64: 1, 88, 18>}]} {
    %c0 = arith.constant 0 : index
    %c0_0 = arith.constant 0 : index
    %0 = vector.load %arg3[%c0, %c0_0] : memref<16x18xf32, #tpu.memory_space<vmem>>, vector<16x18xf32>
    %cst = arith.constant 0.000000e+00 : f32
    %1 = vector.broadcast %cst : f32 to vector<16x18xf32>
    %c0_i32 = arith.constant 0 : i32
    %c88_i32 = arith.constant 88 : i32
    %2 = arith.muli %c0_i32, %c88_i32 : i32
    %3 = tpu.assume_multiple %2, 8 : i32
    %c0_1 = arith.constant 0 : index
    %4 = arith.index_cast %3 : i32 to index
    %c0_2 = arith.constant 0 : index
    %5 = vector.load %arg1[%c0_1, %4, %c0_2] : memref<1x88x18xf32, #tpu.memory_space<vmem>>, vector<1x88x18xf32>
    %6 = vector.shape_cast %5 : vector<1x88x18xf32> to vector<88x18xf32>
    %7 = arith.truncf %6 : vector<88x18xf32> to vector<88x18xbf16>
    %c0_3 = arith.constant 0 : index
    %c0_4 = arith.constant 0 : index
    %8 = vector.load %arg2[%c0_3, %c0_4] : memref<18x50xbf16, #tpu.memory_space<vmem>>, vector<18x50xbf16>
    %cst_5 = arith.constant dense<0.000000e+00> : vector<88x50xf32>
    %9 = tpu.matmul %7, %8, %cst_5 {dimension_numbers = #tpu.dot_dimension_numbers<[1], [0], [0], [1], [0, 0, 1, 1], [], []>} : vector<88x18xbf16>, vector<18x50xbf16>, vector<88x50xf32> -> vector<88x50xf32>
    %10 = vector.extract_strided_slice %9 {offsets = [0, 0], sizes = [88, 18], strides = [1, 1]} : vector<88x50xf32> to vector<88x18xf32>
    %c0_6 = arith.constant 0 : index
    %c0_7 = arith.constant 0 : index
    %11 = vector.load %arg5[%c0_6, %c0_7] : memref<1x18xf32, #tpu.memory_space<vmem>>, vector<1x18xf32>
    %12 = vector.broadcast %11 : vector<1x18xf32> to vector<88x18xf32>
    %13 = arith.addf %10, %12 : vector<88x18xf32>
    %cst_8 = arith.constant 0.000000e+00 : f32
    %14 = vector.broadcast %cst_8 : f32 to vector<88x18xf32>
    %15 = arith.maximumf %13, %14 : vector<88x18xf32>
    %16 = math.absf %13 : vector<88x18xf32>
    %cst_9 = arith.constant 0.000000e+00 : f32
    %17 = vector.broadcast %cst_9 : f32 to vector<88x18xf32>
    %18 = arith.subf %17, %16 : vector<88x18xf32>
    %19 = math.exp %18 : vector<88x18xf32>
    %cst_10 = arith.constant 1.000000e+00 : f32
    %20 = vector.broadcast %cst_10 : f32 to vector<88x18xf32>
    %21 = arith.addf %20, %19 : vector<88x18xf32>
    %22 = math.log %21 : vector<88x18xf32>
    %23 = arith.addf %15, %22 : vector<88x18xf32>
    %24 = arith.mulf %23, %6 : vector<88x18xf32>
    %25 = vector.extract_strided_slice %9 {offsets = [0, 18], sizes = [88, 16], strides = [1, 1]} : vector<88x50xf32> to vector<88x16xf32>
    %26 = vector.extract_strided_slice %9 {offsets = [0, 34], sizes = [88, 16], strides = [1, 1]} : vector<88x50xf32> to vector<88x16xf32>
    %27 = vector.shape_cast %23 : vector<88x18xf32> to vector<88x1x18xf32>
    %28 = vector.shape_cast %0 : vector<16x18xf32> to vector<1x16x18xf32>
    %29 = vector.broadcast %27 : vector<88x1x18xf32> to vector<88x16x18xf32>
    %30 = vector.broadcast %28 : vector<1x16x18xf32> to vector<88x16x18xf32>
    %31 = arith.mulf %29, %30 : vector<88x16x18xf32>
    %32 = math.exp %31 : vector<88x16x18xf32>
    %c0_11 = arith.constant 0 : index
    %c0_12 = arith.constant 0 : index
    %c0_13 = arith.constant 0 : index
    %33 = vector.load %arg7[%c0_11, %c0_12, %c0_13] : memref<88x16x18xf32, #tpu.memory_space<vmem>>, vector<88x16x18xf32>
    tpu.vector_store %arg7[%c0_11, %c0_12, %c0_13], %32 {strides = array<i32>} : memref<88x16x18xf32, #tpu.memory_space<vmem>>, vector<88x16x18xf32>,
    %34 = vector.shape_cast %25 : vector<88x16xf32> to vector<88x16x1xf32>
    %35 = vector.shape_cast %24 : vector<88x18xf32> to vector<88x1x18xf32>
    %36 = vector.broadcast %34 : vector<88x16x1xf32> to vector<88x16x18xf32>
    %37 = vector.broadcast %35 : vector<88x1x18xf32> to vector<88x16x18xf32>
    %38 = arith.mulf %36, %37 : vector<88x16x18xf32>
    %c0_14 = arith.constant 0 : index
    %c0_15 = arith.constant 0 : index
    %c0_16 = arith.constant 0 : index
    %39 = vector.load %arg8[%c0_14, %c0_15, %c0_16] : memref<88x16x18xf32, #tpu.memory_space<vmem>>, vector<88x16x18xf32>
    tpu.vector_store %arg8[%c0_14, %c0_15, %c0_16], %38 {strides = array<i32>} : memref<88x16x18xf32, #tpu.memory_space<vmem>>, vector<88x16x18xf32>,
    %40 = vector.shape_cast %26 : vector<88x16xf32> to vector<88x16x1xf32>
    %cst_17 = arith.constant 1.000000e+00 : f32
    %41 = vector.broadcast %cst_17 : f32 to vector<88x18xf32>
    %42 = vector.shape_cast %41 : vector<88x18xf32> to vector<88x1x18xf32>
    %43 = vector.broadcast %40 : vector<88x16x1xf32> to vector<88x16x18xf32>
    %44 = vector.broadcast %42 : vector<88x1x18xf32> to vector<88x16x18xf32>
    %45 = arith.mulf %43, %44 : vector<88x16x18xf32>
    %c0_18 = arith.constant 0 : index
    %c0_19 = arith.constant 0 : index
    %c0_20 = arith.constant 0 : index
    %46 = vector.load %arg9[%c0_18, %c0_19, %c0_20] : memref<88x16x18xf32, #tpu.memory_space<vmem>>, vector<88x16x18xf32>
    tpu.vector_store %arg9[%c0_18, %c0_19, %c0_20], %45 {strides = array<i32>} : memref<88x16x18xf32, #tpu.memory_space<vmem>>, vector<88x16x18xf32>,
    %c0_i32_21 = arith.constant 0 : i32
    %c11_i32 = arith.constant 11 : i32
    %47 = arith.addi %c0_i32_21, %c11_i32 : i32
    %c1_i32 = arith.constant 1 : i32
    %48 = scf.for %arg11 = %c0_i32_21 to %47 step %c1_i32 iter_args(%arg12 = %1) -> (vector<16x18xf32>)  : i32 {
      %c8_i32 = arith.constant 8 : i32
      %59 = arith.muli %arg11, %c8_i32 : i32
      %60 = tpu.assume_multiple %59, 8 : i32
      %c0_i32_34 = arith.constant 0 : i32
      %61 = arith.addi %60, %c0_i32_34 : i32
      %62 = arith.index_cast %61 : i32 to index
      %c0_35 = arith.constant 0 : index
      %c0_36 = arith.constant 0 : index
      %63 = vector.load %arg7[%62, %c0_35, %c0_36] : memref<88x16x18xf32, #tpu.memory_space<vmem>>, vector<1x16x18xf32>
      %64 = vector.shape_cast %63 : vector<1x16x18xf32> to vector<16x18xf32>
      %65 = arith.mulf %64, %arg12 : vector<16x18xf32>
      %66 = arith.index_cast %61 : i32 to index
      %c0_37 = arith.constant 0 : index
      %c0_38 = arith.constant 0 : index
      %67 = vector.load %arg8[%66, %c0_37, %c0_38] : memref<88x16x18xf32, #tpu.memory_space<vmem>>, vector<1x16x18xf32>
      %68 = vector.shape_cast %67 : vector<1x16x18xf32> to vector<16x18xf32>
      %69 = arith.addf %65, %68 : vector<16x18xf32>
      %70 = arith.index_cast %61 : i32 to index
      %c0_39 = arith.constant 0 : index
      %c0_40 = arith.constant 0 : index
      %71 = vector.load %arg9[%70, %c0_39, %c0_40] : memref<88x16x18xf32, #tpu.memory_space<vmem>>, vector<1x16x18xf32>
      %72 = vector.shape_cast %71 : vector<1x16x18xf32> to vector<16x18xf32>
      %73 = arith.mulf %72, %69 : vector<16x18xf32>
      %cst_41 = arith.constant dense<0.000000e+00> : vector<18xf32>
      %74 = vector.multi_reduction <add>, %73, %cst_41 [0] : vector<16x18xf32> to vector<18xf32>
      %75 = vector.shape_cast %74 : vector<18xf32> to vector<1x18xf32>
      %c1_i32_42 = arith.constant 1 : i32
      %76 = arith.addi %60, %c1_i32_42 : i32
      %77 = arith.index_cast %76 : i32 to index
      %c0_43 = arith.constant 0 : index
      %c0_44 = arith.constant 0 : index
      %78 = vector.load %arg7[%77, %c0_43, %c0_44] : memref<88x16x18xf32, #tpu.memory_space<vmem>>, vector<1x16x18xf32>
      %79 = vector.shape_cast %78 : vector<1x16x18xf32> to vector<16x18xf32>
      %80 = arith.mulf %79, %69 : vector<16x18xf32>
      %81 = arith.index_cast %76 : i32 to index
      %c0_45 = arith.constant 0 : index
      %c0_46 = arith.constant 0 : index
      %82 = vector.load %arg8[%81, %c0_45, %c0_46] : memref<88x16x18xf32, #tpu.memory_space<vmem>>, vector<1x16x18xf32>
      %83 = vector.shape_cast %82 : vector<1x16x18xf32> to vector<16x18xf32>
      %84 = arith.addf %80, %83 : vector<16x18xf32>
      %85 = arith.index_cast %76 : i32 to index
      %c0_47 = arith.constant 0 : index
      %c0_48 = arith.constant 0 : index
      %86 = vector.load %arg9[%85, %c0_47, %c0_48] : memref<88x16x18xf32, #tpu.memory_space<vmem>>, vector<1x16x18xf32>
      %87 = vector.shape_cast %86 : vector<1x16x18xf32> to vector<16x18xf32>
      %88 = arith.mulf %87, %84 : vector<16x18xf32>
      %cst_49 = arith.constant dense<0.000000e+00> : vector<18xf32>
      %89 = vector.multi_reduction <add>, %88, %cst_49 [0] : vector<16x18xf32> to vector<18xf32>
      %90 = vector.shape_cast %89 : vector<18xf32> to vector<1x18xf32>
      %c2_i32 = arith.constant 2 : i32
      %91 = arith.addi %60, %c2_i32 : i32
      %92 = arith.index_cast %91 : i32 to index
      %c0_50 = arith.constant 0 : index
      %c0_51 = arith.constant 0 : index
      %93 = vector.load %arg7[%92, %c0_50, %c0_51] : memref<88x16x18xf32, #tpu.memory_space<vmem>>, vector<1x16x18xf32>
      %94 = vector.shape_cast %93 : vector<1x16x18xf32> to vector<16x18xf32>
      %95 = arith.mulf %94, %84 : vector<16x18xf32>
      %96 = arith.index_cast %91 : i32 to index
      %c0_52 = arith.constant 0 : index
      %c0_53 = arith.constant 0 : index
      %97 = vector.load %arg8[%96, %c0_52, %c0_53] : memref<88x16x18xf32, #tpu.memory_space<vmem>>, vector<1x16x18xf32>
      %98 = vector.shape_cast %97 : vector<1x16x18xf32> to vector<16x18xf32>
      %99 = arith.addf %95, %98 : vector<16x18xf32>
      %100 = arith.index_cast %91 : i32 to index
      %c0_54 = arith.constant 0 : index
      %c0_55 = arith.constant 0 : index
      %101 = vector.load %arg9[%100, %c0_54, %c0_55] : memref<88x16x18xf32, #tpu.memory_space<vmem>>, vector<1x16x18xf32>
      %102 = vector.shape_cast %101 : vector<1x16x18xf32> to vector<16x18xf32>
      %103 = arith.mulf %102, %99 : vector<16x18xf32>
      %cst_56 = arith.constant dense<0.000000e+00> : vector<18xf32>
      %104 = vector.multi_reduction <add>, %103, %cst_56 [0] : vector<16x18xf32> to vector<18xf32>
      %105 = vector.shape_cast %104 : vector<18xf32> to vector<1x18xf32>
      %c3_i32 = arith.constant 3 : i32
      %106 = arith.addi %60, %c3_i32 : i32
      %107 = arith.index_cast %106 : i32 to index
      %c0_57 = arith.constant 0 : index
      %c0_58 = arith.constant 0 : index
      %108 = vector.load %arg7[%107, %c0_57, %c0_58] : memref<88x16x18xf32, #tpu.memory_space<vmem>>, vector<1x16x18xf32>
      %109 = vector.shape_cast %108 : vector<1x16x18xf32> to vector<16x18xf32>
      %110 = arith.mulf %109, %99 : vector<16x18xf32>
      %111 = arith.index_cast %106 : i32 to index
      %c0_59 = arith.constant 0 : index
      %c0_60 = arith.constant 0 : index
      %112 = vector.load %arg8[%111, %c0_59, %c0_60] : memref<88x16x18xf32, #tpu.memory_space<vmem>>, vector<1x16x18xf32>
      %113 = vector.shape_cast %112 : vector<1x16x18xf32> to vector<16x18xf32>
      %114 = arith.addf %110, %113 : vector<16x18xf32>
      %115 = arith.index_cast %106 : i32 to index
      %c0_61 = arith.constant 0 : index
      %c0_62 = arith.constant 0 : index
      %116 = vector.load %arg9[%115, %c0_61, %c0_62] : memref<88x16x18xf32, #tpu.memory_space<vmem>>, vector<1x16x18xf32>
      %117 = vector.shape_cast %116 : vector<1x16x18xf32> to vector<16x18xf32>
      %118 = arith.mulf %117, %114 : vector<16x18xf32>
      %cst_63 = arith.constant dense<0.000000e+00> : vector<18xf32>
      %119 = vector.multi_reduction <add>, %118, %cst_63 [0] : vector<16x18xf32> to vector<18xf32>
      %120 = vector.shape_cast %119 : vector<18xf32> to vector<1x18xf32>
      %c4_i32 = arith.constant 4 : i32
      %121 = arith.addi %60, %c4_i32 : i32
      %122 = arith.index_cast %121 : i32 to index
      %c0_64 = arith.constant 0 : index
      %c0_65 = arith.constant 0 : index
      %123 = vector.load %arg7[%122, %c0_64, %c0_65] : memref<88x16x18xf32, #tpu.memory_space<vmem>>, vector<1x16x18xf32>
      %124 = vector.shape_cast %123 : vector<1x16x18xf32> to vector<16x18xf32>
      %125 = arith.mulf %124, %114 : vector<16x18xf32>
      %126 = arith.index_cast %121 : i32 to index
      %c0_66 = arith.constant 0 : index
      %c0_67 = arith.constant 0 : index
      %127 = vector.load %arg8[%126, %c0_66, %c0_67] : memref<88x16x18xf32, #tpu.memory_space<vmem>>, vector<1x16x18xf32>
      %128 = vector.shape_cast %127 : vector<1x16x18xf32> to vector<16x18xf32>
      %129 = arith.addf %125, %128 : vector<16x18xf32>
      %130 = arith.index_cast %121 : i32 to index
      %c0_68 = arith.constant 0 : index
      %c0_69 = arith.constant 0 : index
      %131 = vector.load %arg9[%130, %c0_68, %c0_69] : memref<88x16x18xf32, #tpu.memory_space<vmem>>, vector<1x16x18xf32>
      %132 = vector.shape_cast %131 : vector<1x16x18xf32> to vector<16x18xf32>
      %133 = arith.mulf %132, %129 : vector<16x18xf32>
      %cst_70 = arith.constant dense<0.000000e+00> : vector<18xf32>
      %134 = vector.multi_reduction <add>, %133, %cst_70 [0] : vector<16x18xf32> to vector<18xf32>
      %135 = vector.shape_cast %134 : vector<18xf32> to vector<1x18xf32>
      %c5_i32 = arith.constant 5 : i32
      %136 = arith.addi %60, %c5_i32 : i32
      %137 = arith.index_cast %136 : i32 to index
      %c0_71 = arith.constant 0 : index
      %c0_72 = arith.constant 0 : index
      %138 = vector.load %arg7[%137, %c0_71, %c0_72] : memref<88x16x18xf32, #tpu.memory_space<vmem>>, vector<1x16x18xf32>
      %139 = vector.shape_cast %138 : vector<1x16x18xf32> to vector<16x18xf32>
      %140 = arith.mulf %139, %129 : vector<16x18xf32>
      %141 = arith.index_cast %136 : i32 to index
      %c0_73 = arith.constant 0 : index
      %c0_74 = arith.constant 0 : index
      %142 = vector.load %arg8[%141, %c0_73, %c0_74] : memref<88x16x18xf32, #tpu.memory_space<vmem>>, vector<1x16x18xf32>
      %143 = vector.shape_cast %142 : vector<1x16x18xf32> to vector<16x18xf32>
      %144 = arith.addf %140, %143 : vector<16x18xf32>
      %145 = arith.index_cast %136 : i32 to index
      %c0_75 = arith.constant 0 : index
      %c0_76 = arith.constant 0 : index
      %146 = vector.load %arg9[%145, %c0_75, %c0_76] : memref<88x16x18xf32, #tpu.memory_space<vmem>>, vector<1x16x18xf32>
      %147 = vector.shape_cast %146 : vector<1x16x18xf32> to vector<16x18xf32>
      %148 = arith.mulf %147, %144 : vector<16x18xf32>
      %cst_77 = arith.constant dense<0.000000e+00> : vector<18xf32>
      %149 = vector.multi_reduction <add>, %148, %cst_77 [0] : vector<16x18xf32> to vector<18xf32>
      %150 = vector.shape_cast %149 : vector<18xf32> to vector<1x18xf32>
      %c6_i32 = arith.constant 6 : i32
      %151 = arith.addi %60, %c6_i32 : i32
      %152 = arith.index_cast %151 : i32 to index
      %c0_78 = arith.constant 0 : index
      %c0_79 = arith.constant 0 : index
      %153 = vector.load %arg7[%152, %c0_78, %c0_79] : memref<88x16x18xf32, #tpu.memory_space<vmem>>, vector<1x16x18xf32>
      %154 = vector.shape_cast %153 : vector<1x16x18xf32> to vector<16x18xf32>
      %155 = arith.mulf %154, %144 : vector<16x18xf32>
      %156 = arith.index_cast %151 : i32 to index
      %c0_80 = arith.constant 0 : index
      %c0_81 = arith.constant 0 : index
      %157 = vector.load %arg8[%156, %c0_80, %c0_81] : memref<88x16x18xf32, #tpu.memory_space<vmem>>, vector<1x16x18xf32>
      %158 = vector.shape_cast %157 : vector<1x16x18xf32> to vector<16x18xf32>
      %159 = arith.addf %155, %158 : vector<16x18xf32>
      %160 = arith.index_cast %151 : i32 to index
      %c0_82 = arith.constant 0 : index
      %c0_83 = arith.constant 0 : index
      %161 = vector.load %arg9[%160, %c0_82, %c0_83] : memref<88x16x18xf32, #tpu.memory_space<vmem>>, vector<1x16x18xf32>
      %162 = vector.shape_cast %161 : vector<1x16x18xf32> to vector<16x18xf32>
      %163 = arith.mulf %162, %159 : vector<16x18xf32>
      %cst_84 = arith.constant dense<0.000000e+00> : vector<18xf32>
      %164 = vector.multi_reduction <add>, %163, %cst_84 [0] : vector<16x18xf32> to vector<18xf32>
      %165 = vector.shape_cast %164 : vector<18xf32> to vector<1x18xf32>
      %c7_i32 = arith.constant 7 : i32
      %166 = arith.addi %60, %c7_i32 : i32
      %167 = arith.index_cast %166 : i32 to index
      %c0_85 = arith.constant 0 : index
      %c0_86 = arith.constant 0 : index
      %168 = vector.load %arg7[%167, %c0_85, %c0_86] : memref<88x16x18xf32, #tpu.memory_space<vmem>>, vector<1x16x18xf32>
      %169 = vector.shape_cast %168 : vector<1x16x18xf32> to vector<16x18xf32>
      %170 = arith.mulf %169, %159 : vector<16x18xf32>
      %171 = arith.index_cast %166 : i32 to index
      %c0_87 = arith.constant 0 : index
      %c0_88 = arith.constant 0 : index
      %172 = vector.load %arg8[%171, %c0_87, %c0_88] : memref<88x16x18xf32, #tpu.memory_space<vmem>>, vector<1x16x18xf32>
      %173 = vector.shape_cast %172 : vector<1x16x18xf32> to vector<16x18xf32>
      %174 = arith.addf %170, %173 : vector<16x18xf32>
      %175 = arith.index_cast %166 : i32 to index
      %c0_89 = arith.constant 0 : index
      %c0_90 = arith.constant 0 : index
      %176 = vector.load %arg9[%175, %c0_89, %c0_90] : memref<88x16x18xf32, #tpu.memory_space<vmem>>, vector<1x16x18xf32>
      %177 = vector.shape_cast %176 : vector<1x16x18xf32> to vector<16x18xf32>
      %178 = arith.mulf %177, %174 : vector<16x18xf32>
      %cst_91 = arith.constant dense<0.000000e+00> : vector<18xf32>
      %179 = vector.multi_reduction <add>, %178, %cst_91 [0] : vector<16x18xf32> to vector<18xf32>
      %180 = vector.shape_cast %179 : vector<18xf32> to vector<1x18xf32>
      %181 = arith.addi %3, %60 : i32
      %182 = tpu.assume_multiple %181, 8 : i32
      %183 = tpu.concatenate %75, %90, %105, %120, %135, %150, %165, %180 in 0 : vector<1x18xf32>, vector<1x18xf32>, vector<1x18xf32>, vector<1x18xf32>, vector<1x18xf32>, vector<1x18xf32>, vector<1x18xf32>, vector<1x18xf32> -> vector<8x18xf32>
      %184 = arith.index_cast %182 : i32 to index
      %c0_92 = arith.constant 0 : index
      %185 = vector.load %arg10[%184, %c0_92] : memref<88x18xf32, #tpu.memory_space<vmem>>, vector<8x18xf32>
      tpu.vector_store %arg10[%184, %c0_92], %183 {strides = array<i32>} : memref<88x18xf32, #tpu.memory_space<vmem>>, vector<8x18xf32>,
      scf.yield %174 : vector<16x18xf32>
    }
    %c11_i32_22 = arith.constant 11 : i32
    %c1_i32_23 = arith.constant 1 : i32
    %c0_24 = arith.constant 0 : index
    %c0_25 = arith.constant 0 : index
    %49 = vector.load %arg10[%c0_24, %c0_25] : memref<88x18xf32, #tpu.memory_space<vmem>>, vector<88x18xf32>
    %c0_26 = arith.constant 0 : index
    %c0_27 = arith.constant 0 : index
    %50 = vector.load %arg4[%c0_26, %c0_27] : memref<1x18xf32, #tpu.memory_space<vmem>>, vector<1x18xf32>
    %c0_28 = arith.constant 0 : index
    %c0_29 = arith.constant 0 : index
    %c0_30 = arith.constant 0 : index
    %51 = vector.load %arg1[%c0_28, %c0_29, %c0_30] : memref<1x88x18xf32, #tpu.memory_space<vmem>>, vector<1x88x18xf32>
    %52 = vector.shape_cast %51 : vector<1x88x18xf32> to vector<88x18xf32>
    %53 = vector.broadcast %50 : vector<1x18xf32> to vector<88x18xf32>
    %54 = arith.mulf %53, %52 : vector<88x18xf32>
    %55 = arith.addf %49, %54 : vector<88x18xf32>
    %c0_31 = arith.constant 0 : index
    %c0_32 = arith.constant 0 : index
    %c0_33 = arith.constant 0 : index
    %56 = vector.load %arg6[%c0_31, %c0_32, %c0_33] : memref<1x88x18xf32, #tpu.memory_space<vmem>>, vector<1x88x18xf32>
    %57 = vector.shape_cast %56 : vector<1x88x18xf32> to vector<88x18xf32>
    %58 = vector.shape_cast %55 : vector<88x18xf32> to vector<1x88x18xf32>
    tpu.vector_store %arg6[%c0_31, %c0_32, %c0_33], %58 {strides = array<i32>} : memref<1x88x18xf32, #tpu.memory_space<vmem>>, vector<1x88x18xf32>,
    return
  }
  func.func @transform_0(%arg0: i32) -> (i32, i32, i32) {
    %c0_i32 = arith.constant 0 : i32
    %c0_i32_0 = arith.constant 0 : i32
    %c0_i32_1 = arith.constant 0 : i32
    return %arg0, %c0_i32, %c0_i32_0 : i32, i32, i32
  }
  func.func @transform_1(%arg0: i32) -> (i32, i32) {
    %c0_i32 = arith.constant 0 : i32
    %c0_i32_0 = arith.constant 0 : i32
    %c0_i32_1 = arith.constant 0 : i32
    return %c0_i32, %c0_i32_0 : i32, i32
  }
  func.func @transform_2(%arg0: i32) -> (i32, i32) {
    %c0_i32 = arith.constant 0 : i32
    %c0_i32_0 = arith.constant 0 : i32
    %c0_i32_1 = arith.constant 0 : i32
    return %c0_i32, %c0_i32_0 : i32, i32
  }
  func.func @transform_3(%arg0: i32) -> (i32, i32) {
    %c0_i32 = arith.constant 0 : i32
    %c0_i32_0 = arith.constant 0 : i32
    %c0_i32_1 = arith.constant 0 : i32
    return %c0_i32, %c0_i32_0 : i32, i32
  }
  func.func @transform_4(%arg0: i32) -> (i32, i32) {
    %c0_i32 = arith.constant 0 : i32
    %c0_i32_0 = arith.constant 0 : i32
    %c0_i32_1 = arith.constant 0 : i32
    return %c0_i32, %c0_i32_0 : i32, i32
  }
  func.func @transform_5(%arg0: i32) -> (i32, i32, i32) {
    %c0_i32 = arith.constant 0 : i32
    %c0_i32_0 = arith.constant 0 : i32
    %c0_i32_1 = arith.constant 0 : i32
    return %arg0, %c0_i32, %c0_i32_0 : i32, i32, i32
  }
}

module attributes {stable_mosaic.version = 11 : i64} {
  func.func @_fold_norm_gate_proj_kernel(%arg0: i32, %arg1: memref<128x18xbf16, #tpu.memory_space<vmem>>, %arg2: memref<128x16xf32, #tpu.memory_space<vmem>>, %arg3: memref<18x16xbf16, #tpu.memory_space<vmem>>, %arg4: memref<1x16xf32, #tpu.memory_space<vmem>>, %arg5: memref<1x16xf32, #tpu.memory_space<vmem>>, %arg6: memref<16x16xbf16, #tpu.memory_space<vmem>>, %arg7: memref<128x16xf32, #tpu.memory_space<vmem>>) attributes {dimension_semantics = [#tpu.dimension_semantics<parallel>], iteration_bounds = array<i64: 1>, scalar_prefetch = 0 : i64, scratch_operands = 0 : i64, tpu.core_type = #tpu.core_type<tc>, window_params = [{transform_indices = @transform_0, window_bounds = array<i64: 128, 18>}, {transform_indices = @transform_1, window_bounds = array<i64: 128, 16>}, {pipeline_mode = #tpu.pipeline_mode<synchronous>, transform_indices = @transform_2, window_bounds = array<i64: 18, 16>}, {pipeline_mode = #tpu.pipeline_mode<synchronous>, transform_indices = @transform_3, window_bounds = array<i64: 1, 16>}, {pipeline_mode = #tpu.pipeline_mode<synchronous>, transform_indices = @transform_4, window_bounds = array<i64: 1, 16>}, {pipeline_mode = #tpu.pipeline_mode<synchronous>, transform_indices = @transform_5, window_bounds = array<i64: 16, 16>}, {transform_indices = @transform_6, window_bounds = array<i64: 128, 16>}]} {
    %c0 = arith.constant 0 : index
    %c0_0 = arith.constant 0 : index
    %0 = vector.load %arg1[%c0, %c0_0] : memref<128x18xbf16, #tpu.memory_space<vmem>>, vector<128x18xbf16>
    %c0_1 = arith.constant 0 : index
    %c0_2 = arith.constant 0 : index
    %1 = vector.load %arg3[%c0_1, %c0_2] : memref<18x16xbf16, #tpu.memory_space<vmem>>, vector<18x16xbf16>
    %cst = arith.constant dense<0.000000e+00> : vector<128x16xf32>
    %2 = tpu.matmul %0, %1, %cst {dimension_numbers = #tpu.dot_dimension_numbers<[1], [0], [0], [1], [0, 0, 1, 1], [], []>} : vector<128x18xbf16>, vector<18x16xbf16>, vector<128x16xf32> -> vector<128x16xf32>
    %cst_3 = arith.constant dense<0.000000e+00> : vector<128xf32>
    %3 = vector.multi_reduction <add>, %2, %cst_3 [1] : vector<128x16xf32> to vector<128xf32>
    %4 = vector.shape_cast %3 : vector<128xf32> to vector<128x1xf32>
    %cst_4 = arith.constant 1.600000e+01 : f32
    %5 = vector.broadcast %cst_4 : f32 to vector<128x1xf32>
    %6 = arith.divf %4, %5 : vector<128x1xf32>
    %7 = vector.broadcast %6 : vector<128x1xf32> to vector<128x16xf32>
    %8 = arith.subf %2, %7 : vector<128x16xf32>
    %9 = arith.mulf %8, %8 : vector<128x16xf32>
    %cst_5 = arith.constant dense<0.000000e+00> : vector<128xf32>
    %10 = vector.multi_reduction <add>, %9, %cst_5 [1] : vector<128x16xf32> to vector<128xf32>
    %11 = vector.shape_cast %10 : vector<128xf32> to vector<128x1xf32>
    %cst_6 = arith.constant 1.600000e+01 : f32
    %12 = vector.broadcast %cst_6 : f32 to vector<128x1xf32>
    %13 = arith.divf %11, %12 : vector<128x1xf32>
    %14 = vector.broadcast %6 : vector<128x1xf32> to vector<128x16xf32>
    %15 = arith.subf %2, %14 : vector<128x16xf32>
    %cst_7 = arith.constant 9.99999974E-6 : f32
    %16 = vector.broadcast %cst_7 : f32 to vector<128x1xf32>
    %17 = arith.addf %13, %16 : vector<128x1xf32>
    %18 = math.rsqrt %17 : vector<128x1xf32>
    %19 = vector.broadcast %18 : vector<128x1xf32> to vector<128x16xf32>
    %20 = arith.mulf %15, %19 : vector<128x16xf32>
    %c0_8 = arith.constant 0 : index
    %c0_9 = arith.constant 0 : index
    %21 = vector.load %arg4[%c0_8, %c0_9] : memref<1x16xf32, #tpu.memory_space<vmem>>, vector<1x16xf32>
    %22 = vector.broadcast %21 : vector<1x16xf32> to vector<128x16xf32>
    %23 = arith.mulf %20, %22 : vector<128x16xf32>
    %c0_10 = arith.constant 0 : index
    %c0_11 = arith.constant 0 : index
    %24 = vector.load %arg5[%c0_10, %c0_11] : memref<1x16xf32, #tpu.memory_space<vmem>>, vector<1x16xf32>
    %25 = vector.broadcast %24 : vector<1x16xf32> to vector<128x16xf32>
    %26 = arith.addf %23, %25 : vector<128x16xf32>
    %c0_12 = arith.constant 0 : index
    %c0_13 = arith.constant 0 : index
    %27 = vector.load %arg2[%c0_12, %c0_13] : memref<128x16xf32, #tpu.memory_space<vmem>>, vector<128x16xf32>
    %cst_14 = arith.constant 0.000000e+00 : f32
    %28 = vector.broadcast %cst_14 : f32 to vector<128x16xf32>
    %29 = arith.subf %28, %27 : vector<128x16xf32>
    %30 = math.exp %29 : vector<128x16xf32>
    %cst_15 = arith.constant 1.000000e+00 : f32
    %31 = vector.broadcast %cst_15 : f32 to vector<128x16xf32>
    %32 = arith.addf %31, %30 : vector<128x16xf32>
    %33 = tpu.reciprocal %32 {approx = true} : vector<128x16xf32> -> vector<128x16xf32>
    %34 = arith.mulf %27, %33 : vector<128x16xf32>
    %35 = arith.mulf %26, %34 : vector<128x16xf32>
    %36 = arith.truncf %35 : vector<128x16xf32> to vector<128x16xbf16>
    %c0_16 = arith.constant 0 : index
    %c0_17 = arith.constant 0 : index
    %37 = vector.load %arg6[%c0_16, %c0_17] : memref<16x16xbf16, #tpu.memory_space<vmem>>, vector<16x16xbf16>
    %cst_18 = arith.constant dense<0.000000e+00> : vector<128x16xf32>
    %38 = tpu.matmul %36, %37, %cst_18 {dimension_numbers = #tpu.dot_dimension_numbers<[1], [0], [0], [1], [0, 0, 1, 1], [], []>} : vector<128x16xbf16>, vector<16x16xbf16>, vector<128x16xf32> -> vector<128x16xf32>
    %c0_19 = arith.constant 0 : index
    %c0_20 = arith.constant 0 : index
    %39 = vector.load %arg7[%c0_19, %c0_20] : memref<128x16xf32, #tpu.memory_space<vmem>>, vector<128x16xf32>
    tpu.vector_store %arg7[%c0_19, %c0_20], %38 {strides = array<i32>} : memref<128x16xf32, #tpu.memory_space<vmem>>, vector<128x16xf32>,
    return
  }
  func.func @transform_0(%arg0: i32) -> (i32, i32) {
    %c0_i32 = arith.constant 0 : i32
    %c0_i32_0 = arith.constant 0 : i32
    return %arg0, %c0_i32 : i32, i32
  }
  func.func @transform_1(%arg0: i32) -> (i32, i32) {
    %c0_i32 = arith.constant 0 : i32
    %c0_i32_0 = arith.constant 0 : i32
    return %arg0, %c0_i32 : i32, i32
  }
  func.func @transform_2(%arg0: i32) -> (i32, i32) {
    %c0_i32 = arith.constant 0 : i32
    %c0_i32_0 = arith.constant 0 : i32
    %c0_i32_1 = arith.constant 0 : i32
    return %c0_i32, %c0_i32_0 : i32, i32
  }
  func.func @transform_3(%arg0: i32) -> (i32, i32) {
    %c0_i32 = arith.constant 0 : i32
    %c0_i32_0 = arith.constant 0 : i32
    %c0_i32_1 = arith.constant 0 : i32
    return %c0_i32, %c0_i32_0 : i32, i32
  }
  func.func @transform_4(%arg0: i32) -> (i32, i32) {
    %c0_i32 = arith.constant 0 : i32
    %c0_i32_0 = arith.constant 0 : i32
    %c0_i32_1 = arith.constant 0 : i32
    return %c0_i32, %c0_i32_0 : i32, i32
  }
  func.func @transform_5(%arg0: i32) -> (i32, i32) {
    %c0_i32 = arith.constant 0 : i32
    %c0_i32_0 = arith.constant 0 : i32
    %c0_i32_1 = arith.constant 0 : i32
    return %c0_i32, %c0_i32_0 : i32, i32
  }
  func.func @transform_6(%arg0: i32) -> (i32, i32) {
    %c0_i32 = arith.constant 0 : i32
    %c0_i32_0 = arith.constant 0 : i32
    return %arg0, %c0_i32 : i32, i32
  }
}

</mosaic_0001>

<llo_original>
// kernel: ss2depthconv_k1_forward.4
$region0: #{ss2depthconv_k1_forward.4}
  #allocation0 [shape = 'u32[]', space=smem, size = 0x4, offset = 0x4, fixed_abs, tag = 'smem constant byte address 0x4 - core index']
  #allocation1 [shape = 'u32[144,128]{1,0:T(1,128)}', space=vmem, size = 0x12000, scoped, tag = 'internal scratch']
  %s0 = inlined_call_operand.hbm [shape: bf16[128,16], index: 0, kind: input, shape index: {}]
  %s1 = inlined_call_operand.hbm [shape: bf16[16,18], index: 1, kind: input, shape index: {}]
  %s2 = inlined_call_operand.hbm [shape: f32[1,2], index: 2, kind: input, shape index: {}]
  %s3 = inlined_call_operand.hbm [shape: f32[128,16], index: 3, kind: output, shape index: {0}]
  %s4 = inlined_call_operand.hbm [shape: f32[128,2], index: 4, kind: output, shape index: {1}]
  %5 = xla_tuple %s3, %s4
  %s6 = sld [smem:[#allocation0]]
  $region42: #{ss2depthconv_k1_forward.4} parent=0
    _
  %s8 = ssub.s32 1, %s6
  %s9 = scalar_select 0, %s8, %s6
  $region1: #{ss2depthconv_k1_forward.4} parent=0
    #allocation2 [shape = 'u8[32768]{0}', space=vmem, size = 0x8000, scoped, tag = 'input window, operand 0, single buffered']
    #allocation3 [shape = 's32[1]{0}', space=sflag, size = 0x4, scoped, tag = 'scoped memory for ss2depthconv_k1_forward.4']
    #allocation4 [shape = 's32[1]{0}', space=sflag, size = 0x4, scoped, tag = 'scoped memory for ss2depthconv_k1_forward.4']
    #allocation5 [shape = 'u8[4096]{0}', space=vmem, size = 0x1000, scoped, tag = 'input window, operand 1, single buffered']
    #allocation6 [shape = 's32[1]{0}', space=sflag, size = 0x4, scoped, tag = 'scoped memory for ss2depthconv_k1_forward.4']
    #allocation7 [shape = 'u8[512]{0}', space=vmem, size = 0x400, scoped, tag = 'input window, operand 2, single buffered']
    #allocation8 [shape = 'u8[65536]{0}', space=vmem, size = 0x10000, scoped, tag = 'output window, operand 0, single buffered']
    #allocation9 [shape = 'u8[65536]{0}', space=vmem, size = 0x10000, scoped, tag = 'output window, operand 1, single buffered']
    #allocation10 [shape = 's32[1]{0}', space=sflag, size = 0x4, scoped, tag = 'scoped memory for ss2depthconv_k1_forward.4']
    %10 = vsyncpa [#allocation3], 0
    %11 = vsyncpa [#allocation6], 0
    %12 = vsyncpa [#allocation4], 0
    %13 = vsyncpa [#allocation10], 0
    // Predicated region
    $region2: #{ss2depthconv_k1_forward.4} parent=1 // pred_check
      _
    $region3: #{ss2depthconv_k1_forward.4} parent=1 // pred_check_branch
      %15 = sbr.rel (0) target = $region5
    $region4: #{ss2depthconv_k1_forward.4} parent=1 // pred_region
      %s17 = ssub.s32 1024, 1024
      %18 = vsyncadd [#allocation3], %s17
      %s19 = sshll.u32 [#allocation2], 4
      %s20 = int_to_ptr.vmem [resolvable:$true] %s19
      %25 = dma.hbm_to_vmem [thread:$0]  %s0, 1024, %s20, [#allocation3], 64, 64, 4
    $region5: #{ss2depthconv_k1_forward.4} parent=1 // pred_fallthru
      _
    // Predicated region
    $region6: #{ss2depthconv_k1_forward.4} parent=1 // pred_check
      _
    $region7: #{ss2depthconv_k1_forward.4} parent=1 // pred_check_branch
      %27 = sbr.rel (0) target = $region9
    $region8: #{ss2depthconv_k1_forward.4} parent=1 // pred_region
      %s29 = ssub.s32 128, 128
      %30 = vsyncadd [#allocation6], %s29
      %s31 = sshll.u32 [#allocation5], 4
      %s32 = int_to_ptr.vmem [resolvable:$true] %s31
      %37 = dma.hbm_to_vmem [thread:$0]  %s1, 128, %s32, [#allocation6], 64, 64, 4
    $region9: #{ss2depthconv_k1_forward.4} parent=1 // pred_fallthru
      _
    // Predicated region
    $region10: #{ss2depthconv_k1_forward.4} parent=1 // pred_check
      _
    $region11: #{ss2depthconv_k1_forward.4} parent=1 // pred_check_branch
      %39 = sbr.rel (0) target = $region13
    $region12: #{ss2depthconv_k1_forward.4} parent=1 // pred_region
      %s41 = ssub.s32 16, 16
      %42 = vsyncadd [#allocation6], %s41
      %s44 = sshll.u32 [#allocation7], 4
      %s45 = int_to_ptr.vmem [resolvable:$true] %s44
      %47 = dma.hbm_to_vmem [thread:$0]  %s2, 16, %s45, [#allocation6]
    $region13: #{ss2depthconv_k1_forward.4} parent=1 // pred_fallthru
      _
    // Predicated region
    $region14: #{ss2depthconv_k1_forward.4} parent=1 // pred_check
      _
    $region15: #{ss2depthconv_k1_forward.4} parent=1 // pred_check_branch
      %49 = sbr.rel (0) target = $region17
    $region16: #{ss2depthconv_k1_forward.4} parent=1 // pred_region
      %50 = dma.done [#allocation3], 1024
    $region17: #{ss2depthconv_k1_forward.4} parent=1 // pred_fallthru
      _
    // Predicated region
    $region18: #{ss2depthconv_k1_forward.4} parent=1 // pred_check
      _
    $region19: #{ss2depthconv_k1_forward.4} parent=1 // pred_check_branch
      %52 = sbr.rel (0) target = $region21
    $region20: #{ss2depthconv_k1_forward.4} parent=1 // pred_region
      %53 = dma.done [#allocation6], 128
    $region21: #{ss2depthconv_k1_forward.4} parent=1 // pred_fallthru
      _
    // Predicated region
    $region22: #{ss2depthconv_k1_forward.4} parent=1 // pred_check
      _
    $region23: #{ss2depthconv_k1_forward.4} parent=1 // pred_check_branch
      %55 = sbr.rel (0) target = $region25
    $region24: #{ss2depthconv_k1_forward.4} parent=1 // pred_region
      %56 = dma.done [#allocation6], 16
    $region25: #{ss2depthconv_k1_forward.4} parent=1 // pred_fallthru
      _
    %v58 = vld [vmem:[#allocation2] sm:$0xf]
    %v59 = vld [vmem:[#allocation2 + $0x4] sm:$0xf]
    %v60 = vld [vmem:[#allocation2 + $0x8] sm:$0xf]
    %v61 = vld [vmem:[#allocation2 + $0xc] sm:$0xf]
    %v62 = vld [vmem:[#allocation2 + $0x10] sm:$0xf]
    %v63 = vld [vmem:[#allocation2 + $0x14] sm:$0xf]
    %v64 = vld [vmem:[#allocation2 + $0x18] sm:$0xf]
    %v65 = vld [vmem:[#allocation2 + $0x1c] sm:$0xf]
    %v66 = vld [vmem:[#allocation2 + $0x20] sm:$0xf]
    %v67 = vld [vmem:[#allocation2 + $0x24] sm:$0xf]
    %v68 = vld [vmem:[#allocation2 + $0x28] sm:$0xf]
    %v69 = vld [vmem:[#allocation2 + $0x2c] sm:$0xf]
    %v70 = vld [vmem:[#allocation2 + $0x30] sm:$0xf]
    %v71 = vld [vmem:[#allocation2 + $0x34] sm:$0xf]
    %v72 = vld [vmem:[#allocation2 + $0x38] sm:$0xf]
    %v73 = vld [vmem:[#allocation2 + $0x3c] sm:$0xf]
    %v74 = vld [vmem:[#allocation5] sm:$0xf]
    %v75 = vld [vmem:[#allocation5 + $0x4] sm:$0xf]
    %v92 = vunpack.c.l.b16 %v58
    %v93 = vunpack.c.l.b16 %v59
    %v94 = vunpack.c.l.b16 %v60
    %v95 = vunpack.c.l.b16 %v61
    %v96 = vunpack.c.l.b16 %v62
    %v97 = vunpack.c.l.b16 %v63
    %v98 = vunpack.c.l.b16 %v64
    %v99 = vunpack.c.l.b16 %v65
    %v100 = vunpack.c.l.b16 %v66
    %v101 = vunpack.c.l.b16 %v67
    %v102 = vunpack.c.l.b16 %v68
    %v103 = vunpack.c.l.b16 %v69
    %v104 = vunpack.c.l.b16 %v70
    %v105 = vunpack.c.l.b16 %v71
    %v106 = vunpack.c.l.b16 %v72
    %v107 = vunpack.c.l.b16 %v73
    %v108 = vpack.c.b16 %v93, %v92
    %v109 = vpack.c.b16 %v95, %v94
    %v110 = vpack.c.b16 %v97, %v96
    %v111 = vpack.c.b16 %v99, %v98
    %v112 = vpack.c.b16 %v101, %v100
    %v113 = vpack.c.b16 %v103, %v102
    %v114 = vpack.c.b16 %v105, %v104
    %v115 = vpack.c.b16 %v107, %v106
    %v118 = vunpack.c.l.b16 %v74
    %v119 = vunpack.c.l.b16 %v75
    %v120 = vpack.c.b16 %v119, %v118
    %vm122 = vcmask 130048
    %v124 = vsel %vm122, %v108, 0
    %v127 = vsel %vm122, %v109, 0
    %v130 = vsel %vm122, %v110, 0
    %v133 = vsel %vm122, %v111, 0
    %v136 = vsel %vm122, %v112, 0
    %v139 = vsel %vm122, %v113, 0
    %v142 = vsel %vm122, %v114, 0
    %v145 = vsel %vm122, %v115, 0
    %147 = vmatprep.subr.bf16.mxu0 0
    %148 = vmatpush1.bf16.msra.mxu0 %v120
    %149 = vmatprep.subr.bf16.mxu0 0
    %150 = vmatpush1.bf16.msra.mxu0 0
    %151 = vmatprep.subr.bf16.mxu0 0
    %152 = vmatpush1.bf16.msra.mxu0 0
    %153 = vmatprep.subr.bf16.mxu0 0
    %154 = vmatpush1.bf16.msra.mxu0 0
    %155 = vmatprep.subr.bf16.mxu0 0
    %156 = vmatpush1.bf16.msra.mxu0 0
    %157 = vmatprep.subr.bf16.mxu0 0
    %158 = vmatpush1.bf16.msra.mxu0 0
    %159 = vmatprep.subr.bf16.mxu0 0
    %160 = vmatpush1.bf16.msra.mxu0 0
    %161 = vmatprep.subr.bf16.mxu0 0
    %162 = vmatpush1.bf16.msra.mxu0 0
    %163 = vmatprep.subr.bf16.mxu0 0
    %164 = vmatpush1.bf16.msra.mxu0 0
    %165 = vmatprep.subr.bf16.mxu0 0
    %166 = vmatpush1.bf16.msra.mxu0 0
    %167 = vmatprep.subr.bf16.mxu0 0
    %168 = vmatpush1.bf16.msra.mxu0 0
    %169 = vmatprep.subr.bf16.mxu0 0
    %170 = vmatpush1.bf16.msra.mxu0 0
    %171 = vmatprep.subr.bf16.mxu0 0
    %172 = vmatpush1.bf16.msra.mxu0 0
    %173 = vmatprep.subr.bf16.mxu0 0
    %174 = vmatpush1.bf16.msra.mxu0 0
    %175 = vmatprep.subr.bf16.mxu0 0
    %176 = vmatpush1.bf16.msra.mxu0 0
    %177 = vmatprep.subr.bf16.mxu0 0
    %178 = vmatpush1.bf16.msra.mxu0 0
    %179 = vmatprep.mubr.bf16.mxu0 0
    %180 = vmatmul.mubr.bf16.gmra.mrb[0].mxu0 %v124
    %v181 = vpop.f32.mrb[0].mxu0
    %v182 = vadd.f32 0.0, %v181
    %v183 = vpop.f32.mrb[0].mxu0
    %v184 = vpop.f32.mrb[0].mxu0
    %v185 = vadd.f32 0.0, %v184
    %v186 = vpop.f32.mrb[0].mxu0
    %187 = vmatprep.mubr.bf16.mxu0 0
    %188 = vmatmul.mubr.bf16.gmra.mrb[0].mxu0 %v127
    %v189 = vpop.f32.mrb[0].mxu0
    %v190 = vadd.f32 0.0, %v189
    %v191 = vpop.f32.mrb[0].mxu0
    %v192 = vpop.f32.mrb[0].mxu0
    %v193 = vadd.f32 0.0, %v192
    %v194 = vpop.f32.mrb[0].mxu0
    %195 = vmatprep.mubr.bf16.mxu0 0
    %196 = vmatmul.mubr.bf16.gmra.mrb[0].mxu0 %v130
    %v197 = vpop.f32.mrb[0].mxu0
    %v198 = vadd.f32 0.0, %v197
    %v199 = vpop.f32.mrb[0].mxu0
    %v200 = vpop.f32.mrb[0].mxu0
    %v201 = vadd.f32 0.0, %v200
    %v202 = vpop.f32.mrb[0].mxu0
    %203 = vmatprep.mubr.bf16.mxu0 0
    %204 = vmatmul.mubr.bf16.gmra.mrb[0].mxu0 %v133
    %v205 = vpop.f32.mrb[0].mxu0
    %v206 = vadd.f32 0.0, %v205
    %v207 = vpop.f32.mrb[0].mxu0
    %v208 = vpop.f32.mrb[0].mxu0
    %v209 = vadd.f32 0.0, %v208
    %v210 = vpop.f32.mrb[0].mxu0
    %211 = vmatprep.mubr.bf16.mxu0 0
    %212 = vmatmul.mubr.bf16.gmra.mrb[0].mxu0 %v136
    %v213 = vpop.f32.mrb[0].mxu0
    %v214 = vadd.f32 0.0, %v213
    %v215 = vpop.f32.mrb[0].mxu0
    %v216 = vpop.f32.mrb[0].mxu0
    %v217 = vadd.f32 0.0, %v216
    %v218 = vpop.f32.mrb[0].mxu0
    %219 = vmatprep.mubr.bf16.mxu0 0
    %220 = vmatmul.mubr.bf16.gmra.mrb[0].mxu0 %v139
    %v221 = vpop.f32.mrb[0].mxu0
    %v222 = vadd.f32 0.0, %v221
    %v223 = vpop.f32.mrb[0].mxu0
    %v224 = vpop.f32.mrb[0].mxu0
    %v225 = vadd.f32 0.0, %v224
    %v226 = vpop.f32.mrb[0].mxu0
    %227 = vmatprep.mubr.bf16.mxu0 0
    %228 = vmatmul.mubr.bf16.gmra.mrb[0].mxu0 %v142
    %v229 = vpop.f32.mrb[0].mxu0
    %v230 = vadd.f32 0.0, %v229
    %v231 = vpop.f32.mrb[0].mxu0
    %v232 = vpop.f32.mrb[0].mxu0
    %v233 = vadd.f32 0.0, %v232
    %v234 = vpop.f32.mrb[0].mxu0
    %235 = vmatprep.mubr.bf16.mxu0 0
    %236 = vmatmul.mubr.bf16.gmra.mrb[0].mxu0 %v145
    %v237 = vpop.f32.mrb[0].mxu0
    %v238 = vadd.f32 0.0, %v237
    %v239 = vpop.f32.mrb[0].mxu0
    %v240 = vpop.f32.mrb[0].mxu0
    %v241 = vadd.f32 0.0, %v240
    %v242 = vpop.f32.mrb[0].mxu0
    %243 = vdwg.mxu0
    %244 = vst.msk [vmem:[#allocation8] sm:$0xff] %vm122, %v182
    %245 = vst.msk [vmem:[#allocation8 + $0x8] sm:$0xff] %vm122, %v185
    %246 = vst.msk [vmem:[#allocation8 + $0x10] sm:$0xff] %vm122, %v190
    %247 = vst.msk [vmem:[#allocation8 + $0x18] sm:$0xff] %vm122, %v193
    %248 = vst.msk [vmem:[#allocation8 + $0x20] sm:$0xff] %vm122, %v198
    %249 = vst.msk [vmem:[#allocation8 + $0x28] sm:$0xff] %vm122, %v201
    %250 = vst.msk [vmem:[#allocation8 + $0x30] sm:$0xff] %vm122, %v206
    %251 = vst.msk [vmem:[#allocation8 + $0x38] sm:$0xff] %vm122, %v209
    %252 = vst.msk [vmem:[#allocation8 + $0x40] sm:$0xff] %vm122, %v214
    %253 = vst.msk [vmem:[#allocation8 + $0x48] sm:$0xff] %vm122, %v217
    %254 = vst.msk [vmem:[#allocation8 + $0x50] sm:$0xff] %vm122, %v222
    %255 = vst.msk [vmem:[#allocation8 + $0x58] sm:$0xff] %vm122, %v225
    %256 = vst.msk [vmem:[#allocation8 + $0x60] sm:$0xff] %vm122, %v230
    %257 = vst.msk [vmem:[#allocation8 + $0x68] sm:$0xff] %vm122, %v233
    %258 = vst.msk [vmem:[#allocation8 + $0x70] sm:$0xff] %vm122, %v238
    %259 = vst.msk [vmem:[#allocation8 + $0x78] sm:$0xff] %vm122, %v241
    %v260 = vld [vmem:[#allocation7] sm:$0x1]
    %v262 = vlaneseq
    %v263 = vshrl.u32 %v262, 7
    %v264 = vsub.s32 0, %v263
    %v265 = vrot.slane %v260, %v264
    %266 = vrot.lane.b32.xlu0 %v265, 16
    %v267 = vpop.permute.xlu0 %266
    %v269 = vadd.f32 %v182, %v267
    %v270 = vadd.f32 %v185, %v267
    %v271 = vadd.f32 %v190, %v267
    %v272 = vadd.f32 %v193, %v267
    %v273 = vadd.f32 %v198, %v267
    %v274 = vadd.f32 %v201, %v267
    %v275 = vadd.f32 %v206, %v267
    %v276 = vadd.f32 %v209, %v267
    %v277 = vadd.f32 %v214, %v267
    %v278 = vadd.f32 %v217, %v267
    %v279 = vadd.f32 %v222, %v267
    %v280 = vadd.f32 %v225, %v267
    %v281 = vadd.f32 %v230, %v267
    %v282 = vadd.f32 %v233, %v267
    %v283 = vadd.f32 %v238, %v267
    %v284 = vadd.f32 %v241, %v267
    %v285 = vsub.f32 0.0, %v269
    %v286 = vsub.f32 0.0, %v270
    %v287 = vsub.f32 0.0, %v271
    %v288 = vsub.f32 0.0, %v272
    %v289 = vsub.f32 0.0, %v273
    %v290 = vsub.f32 0.0, %v274
    %v291 = vsub.f32 0.0, %v275
    %v292 = vsub.f32 0.0, %v276
    %v293 = vsub.f32 0.0, %v277
    %v294 = vsub.f32 0.0, %v278
    %v295 = vsub.f32 0.0, %v279
    %v296 = vsub.f32 0.0, %v280
    %v297 = vsub.f32 0.0, %v281
    %v298 = vsub.f32 0.0, %v282
    %v299 = vsub.f32 0.0, %v283
    %v300 = vsub.f32 0.0, %v284
    %v301 = vmul.f32 %v285, 1.442695
    %v302 = vpow.pop %v301
    %v303 = vmul.f32 %v286, 1.442695
    %v304 = vpow.pop %v303
    %v305 = vmul.f32 %v287, 1.442695
    %v306 = vpow.pop %v305
    %v307 = vmul.f32 %v288, 1.442695
    %v308 = vpow.pop %v307
    %v309 = vmul.f32 %v289, 1.442695
    %v310 = vpow.pop %v309
    %v311 = vmul.f32 %v290, 1.442695
    %v312 = vpow.pop %v311
    %v313 = vmul.f32 %v291, 1.442695
    %v314 = vpow.pop %v313
    %v315 = vmul.f32 %v292, 1.442695
    %v316 = vpow.pop %v315
    %v317 = vmul.f32 %v293, 1.442695
    %v318 = vpow.pop %v317
    %v319 = vmul.f32 %v294, 1.442695
    %v320 = vpow.pop %v319
    %v321 = vmul.f32 %v295, 1.442695
    %v322 = vpow.pop %v321
    %v323 = vmul.f32 %v296, 1.442695
    %v324 = vpow.pop %v323
    %v325 = vmul.f32 %v297, 1.442695
    %v326 = vpow.pop %v325
    %v327 = vmul.f32 %v298, 1.442695
    %v328 = vpow.pop %v327
    %v329 = vmul.f32 %v299, 1.442695
    %v330 = vpow.pop %v329
    %v331 = vmul.f32 %v300, 1.442695
    %v332 = vpow.pop %v331
    %v333 = vadd.f32 %v302, 1.0
    %v334 = vadd.f32 %v304, 1.0
    %v335 = vadd.f32 %v306, 1.0
    %v336 = vadd.f32 %v308, 1.0
    %v337 = vadd.f32 %v310, 1.0
    %v338 = vadd.f32 %v312, 1.0
    %v339 = vadd.f32 %v314, 1.0
    %v340 = vadd.f32 %v316, 1.0
    %v341 = vadd.f32 %v318, 1.0
    %v342 = vadd.f32 %v320, 1.0
    %v343 = vadd.f32 %v322, 1.0
    %v344 = vadd.f32 %v324, 1.0
    %v345 = vadd.f32 %v326, 1.0
    %v346 = vadd.f32 %v328, 1.0
    %v347 = vadd.f32 %v330, 1.0
    %v348 = vadd.f32 %v332, 1.0
    %v349 = vrcp.pop %v333
    %v350 = vrcp.pop %v334
    %v351 = vrcp.pop %v335
    %v352 = vrcp.pop %v336
    %v353 = vrcp.pop %v337
    %v354 = vrcp.pop %v338
    %v355 = vrcp.pop %v339
    %v356 = vrcp.pop %v340
    %v357 = vrcp.pop %v341
    %v358 = vrcp.pop %v342
    %v359 = vrcp.pop %v343
    %v360 = vrcp.pop %v344
    %v361 = vrcp.pop %v345
    %v362 = vrcp.pop %v346
    %v363 = vrcp.pop %v347
    %v364 = vrcp.pop %v348
    %v365 = vmul.f32 %v269, %v349
    %v366 = vmul.f32 %v270, %v350
    %v367 = vmul.f32 %v271, %v351
    %v368 = vmul.f32 %v272, %v352
    %v369 = vmul.f32 %v273, %v353
    %v370 = vmul.f32 %v274, %v354
    %v371 = vmul.f32 %v275, %v355
    %v372 = vmul.f32 %v276, %v356
    %v373 = vmul.f32 %v277, %v357
    %v374 = vmul.f32 %v278, %v358
    %v375 = vmul.f32 %v279, %v359
    %v376 = vmul.f32 %v280, %v360
    %v377 = vmul.f32 %v281, %v361
    %v378 = vmul.f32 %v282, %v362
    %v379 = vmul.f32 %v283, %v363
    %v380 = vmul.f32 %v284, %v364
    %397 = vrot.lane.b32.xlu0 %v365, 112
    %v398 = vpop.permute.xlu0 %397
    %399 = vrot.lane.b32.xlu0 %v366, 112
    %v400 = vpop.permute.xlu0 %399
    %401 = vrot.lane.b32.xlu0 %v367, 112
    %v402 = vpop.permute.xlu0 %401
    %403 = vrot.lane.b32.xlu0 %v368, 112
    %v404 = vpop.permute.xlu0 %403
    %405 = vrot.lane.b32.xlu0 %v369, 112
    %v406 = vpop.permute.xlu0 %405
    %407 = vrot.lane.b32.xlu0 %v370, 112
    %v408 = vpop.permute.xlu0 %407
    %409 = vrot.lane.b32.xlu0 %v371, 112
    %v410 = vpop.permute.xlu0 %409
    %411 = vrot.lane.b32.xlu0 %v372, 112
    %v412 = vpop.permute.xlu0 %411
    %413 = vrot.lane.b32.xlu0 %v373, 112
    %v414 = vpop.permute.xlu0 %413
    %415 = vrot.lane.b32.xlu0 %v374, 112
    %v416 = vpop.permute.xlu0 %415
    %417 = vrot.lane.b32.xlu0 %v375, 112
    %v418 = vpop.permute.xlu0 %417
    %419 = vrot.lane.b32.xlu0 %v376, 112
    %v420 = vpop.permute.xlu0 %419
    %421 = vrot.lane.b32.xlu0 %v377, 112
    %v422 = vpop.permute.xlu0 %421
    %423 = vrot.lane.b32.xlu0 %v378, 112
    %v424 = vpop.permute.xlu0 %423
    %425 = vrot.lane.b32.xlu0 %v379, 112
    %v426 = vpop.permute.xlu0 %425
    %427 = vrot.lane.b32.xlu0 %v380, 112
    %v428 = vpop.permute.xlu0 %427
    %vm445 = vcmask 15360
    %446 = vst.msk [vmem:[#allocation9] sm:$0xff] %vm445, %v398
    %447 = vst.msk [vmem:[#allocation9 + $0x8] sm:$0xff] %vm445, %v400
    %448 = vst.msk [vmem:[#allocation9 + $0x10] sm:$0xff] %vm445, %v402
    %449 = vst.msk [vmem:[#allocation9 + $0x18] sm:$0xff] %vm445, %v404
    %450 = vst.msk [vmem:[#allocation9 + $0x20] sm:$0xff] %vm445, %v406
    %451 = vst.msk [vmem:[#allocation9 + $0x28] sm:$0xff] %vm445, %v408
    %452 = vst.msk [vmem:[#allocation9 + $0x30] sm:$0xff] %vm445, %v410
    %453 = vst.msk [vmem:[#allocation9 + $0x38] sm:$0xff] %vm445, %v412
    %454 = vst.msk [vmem:[#allocation9 + $0x40] sm:$0xff] %vm445, %v414
    %455 = vst.msk [vmem:[#allocation9 + $0x48] sm:$0xff] %vm445, %v416
    %456 = vst.msk [vmem:[#allocation9 + $0x50] sm:$0xff] %vm445, %v418
    %457 = vst.msk [vmem:[#allocation9 + $0x58] sm:$0xff] %vm445, %v420
    %458 = vst.msk [vmem:[#allocation9 + $0x60] sm:$0xff] %vm445, %v422
    %459 = vst.msk [vmem:[#allocation9 + $0x68] sm:$0xff] %vm445, %v424
    %460 = vst.msk [vmem:[#allocation9 + $0x70] sm:$0xff] %vm445, %v426
    %461 = vst.msk [vmem:[#allocation9 + $0x78] sm:$0xff] %vm445, %v428
    // Predicated region
    $region26: #{ss2depthconv_k1_forward.4} parent=1 // pred_check
      _
    $region27: #{ss2depthconv_k1_forward.4} parent=1 // pred_check_branch
      %463 = sbr.rel (0) target = $region29
    $region28: #{ss2depthconv_k1_forward.4} parent=1 // pred_region
      %s465 = ssub.s32 2048, 2048
      %466 = vsyncadd [#allocation4], %s465
      %s467 = sshll.u32 [#allocation8], 4
      %s468 = int_to_ptr.vmem [resolvable:$true] %s467
      %473 = dma.vmem_to_hbm [thread:$0]  %s468, 2048, %s3, [#allocation4], 128, 128, 8
    $region29: #{ss2depthconv_k1_forward.4} parent=1 // pred_fallthru
      _
    // Predicated region
    $region30: #{ss2depthconv_k1_forward.4} parent=1 // pred_check
      _
    $region31: #{ss2depthconv_k1_forward.4} parent=1 // pred_check_branch
      %475 = sbr.rel (0) target = $region33
    $region32: #{ss2depthconv_k1_forward.4} parent=1 // pred_region
      %s477 = ssub.s32 2048, 2048
      %478 = vsyncadd [#allocation10], %s477
      %s479 = sshll.u32 [#allocation9], 4
      %s480 = int_to_ptr.vmem [resolvable:$true] %s479
      %485 = dma.vmem_to_hbm [thread:$0]  %s480, 2048, %s4, [#allocation10], 128, 128, 8
    $region33: #{ss2depthconv_k1_forward.4} parent=1 // pred_fallthru
      _
    // Predicated region
    $region34: #{ss2depthconv_k1_forward.4} parent=1 // pred_check
      _
    $region35: #{ss2depthconv_k1_forward.4} parent=1 // pred_check_branch
      %487 = sbr.rel (0) target = $region37
    $region36: #{ss2depthconv_k1_forward.4} parent=1 // pred_region
      %488 = dma.done [#allocation4], 2048
    $region37: #{ss2depthconv_k1_forward.4} parent=1 // pred_fallthru
      _
    // Predicated region
    $region38: #{ss2depthconv_k1_forward.4} parent=1 // pred_check
      _
    $region39: #{ss2depthconv_k1_forward.4} parent=1 // pred_check_branch
      %490 = sbr.rel (0) target = $region41
    $region40: #{ss2depthconv_k1_forward.4} parent=1 // pred_region
      %491 = dma.done [#allocation10], 2048
    $region41: #{ss2depthconv_k1_forward.4} parent=1 // pred_fallthru
      _
    %492 = vsyncpa [#allocation3], 1
    %493 = vsyncpa [#allocation6], 1
    %494 = vsyncpa [#allocation4], 1
    %495 = vsyncpa [#allocation10], 1

// kernel: ss2depthconv_k1_forward.5
$region0: #{ss2depthconv_k1_forward.5}
  #allocation0 [shape = 'u32[]', space=smem, size = 0x4, offset = 0x4, fixed_abs, tag = 'smem constant byte address 0x4 - core index']
  #allocation1 [shape = 'u32[144,128]{1,0:T(1,128)}', space=vmem, size = 0x12000, scoped, tag = 'internal scratch']
  #allocation12 [shape = 's32[]', space=sflag, size = 0x4, offset = 0, fixed_abs, tag = 'sflag constant byte address 0x0 - dummy sync flag']
  %s0 = inlined_call_operand.hbm [shape: f32[9,2,18,16], index: 0, kind: input, shape index: {}]
  %s1 = inlined_call_operand.hbm [shape: f32[9,18,1], index: 1, kind: input, shape index: {}]
  %s2 = inlined_call_operand.hbm [shape: f32[18,1], index: 2, kind: input, shape index: {}]
  %s3 = inlined_call_operand.hbm [shape: bf16[16,18], index: 3, kind: input, shape index: {}]
  %s4 = inlined_call_operand.hbm [shape: f32[1,18], index: 4, kind: input, shape index: {}]
  %s5 = inlined_call_operand.hbm [shape: f32[2,18,18], index: 5, kind: output, shape index: {}]
  %s6 = sld [smem:[#allocation0]]
  $region73: #{ss2depthconv_k1_forward.5} parent=0
    _
  %s8 = ssub.s32 1, %s6
  %s9 = scalar_select 0, %s8, %s6
  $region1: #{ss2depthconv_k1_forward.5} parent=0
    #allocation2 [shape = 'u8[221184]{0}', space=vmem, size = 0x36000, scoped, tag = 'input window, operand 0']
    #allocation3 [shape = 's32[2]{0}', space=sflag, size = 0x8, scoped, tag = 'scoped memory for ss2depthconv_k1_forward.5']
    #allocation4 [shape = 's32[2]{0}', space=sflag, size = 0x8, scoped, tag = 'scoped memory for ss2depthconv_k1_forward.5']
    #allocation5 [shape = 'u8[110592]{0}', space=vmem, size = 0x1b000, scoped, tag = 'input window, operand 1, single buffered']
    #allocation6 [shape = 's32[1]{0}', space=sflag, size = 0x4, scoped, tag = 'scoped memory for ss2depthconv_k1_forward.5']
    #allocation7 [shape = 'u8[12288]{0}', space=vmem, size = 0x3000, scoped, tag = 'input window, operand 2, single buffered']
    #allocation8 [shape = 'u8[4096]{0}', space=vmem, size = 0x1000, scoped, tag = 'input window, operand 3, single buffered']
    #allocation9 [shape = 's32[1]{0}', space=sflag, size = 0x4, scoped, tag = 'scoped memory for ss2depthconv_k1_forward.5']
    #allocation10 [shape = 'u8[512]{0}', space=vmem, size = 0x400, scoped, tag = 'input window, operand 4, single buffered']
    #allocation11 [shape = 'u8[24576]{0}', space=vmem, size = 0x6000, scoped, tag = 'output window, operand 0']
    %10 = vsyncpa [#allocation3], 0
    %s11 = scalar_lea.sflag [#allocation3], 1
    %12 = vsyncpa %s11, 0
    %13 = vsyncpa [#allocation6], 0
    %14 = vsyncpa [#allocation9], 0
    %15 = vsyncpa [#allocation4], 0
    %s16 = scalar_lea.sflag [#allocation4], 1
    %17 = vsyncpa %s16, 0
    loop: start=0, step=1, limit=4
    $region2: #{ss2depthconv_k1_forward.5} parent=1 // loop_pre_header
      _
    $region3: #{ss2depthconv_k1_forward.5} parent=1 // loop_header
      %s19 = sphi 0, %s23
      %p20 = scmp.ge.s32.totalorder %s19, 4
      %s29 = sphi 0, %s31
      %s32 = sphi 0, %s29
      %s33 = sphi 0, %s32
      %s49 = sphi 0, %s33
      %s53 = sphi 0, %s53
      %s55 = sphi 0, %s53
      %s56 = sphi 0, %s55
      %s70 = sphi 0, %s56
      %s74 = sphi 0, %s74
      %s76 = sphi 0, %s74
      %s77 = sphi 0, %s76
      %s91 = sphi 0, %s77
      %s95 = sphi 0, %s95
      %s97 = sphi 0, %s95
      %s98 = sphi 0, %s97
      %s112 = sphi 0, %s98
      %s116 = sphi 0, %s116
      %s118 = sphi 0, %s116
      %s119 = sphi 0, %s118
      %s133 = sphi 0, %s119
      %s139 = sphi 0, %s141
      %s142 = sphi 0, %s139
      %s143 = sphi 0, %s142
      %s159 = sphi 0, %s143
    $region4: #{ss2depthconv_k1_forward.5} parent=1 // loop_header_branch
      %22 = sbr.rel (%p20) target = $region8
    $region5: #{ss2depthconv_k1_forward.5} parent=1 // loop_body
      %s24 = ssub.s32 %s19, 1
      %s25 = ssub.s32 %s19, 2
      %s26 = sadd.s32 %s19, 1
      %s27 = ssub.s32 %s19, %s26
      %p28 = scmp.eq.s32.totalorder %s27, 0
      %s30 = sadd.s32 %s29, 1
      %s31 = scalar_select %p28, %s29, %s30
      %p34 = pneg %p28
      %p35 = scmp.eq.s32.totalorder %s19, 1
      %p36 = por %p34, %p35
      %p37 = scmp.ne.s32.totalorder %s29, %s32
      %p38 = scmp.eq.s32.totalorder %s19, 0
      %p39 = por %p37, %p38
      %p40 = scmp.ne.s32.totalorder %s29, %s32
      %p41 = scmp.eq.s32.totalorder %s24, 1
      %p42 = por %p40, %p41
      %p43 = scmp.ne.s32.totalorder %s32, %s33
      %p44 = scmp.eq.s32.totalorder %s24, 0
      %p45 = por %p43, %p44
      %p46 = scmp.ne.s32.totalorder %s32, %s33
      %p47 = scmp.eq.s32.totalorder %s25, 1
      %p48 = por %p46, %p47
      %p50 = scmp.ne.s32.totalorder %s33, %s49
      %p51 = scmp.eq.s32.totalorder %s25, 0
      %p52 = por %p50, %p51
      %s54 = sadd.s32 %s53, 1
      %p57 = scmp.eq.s32.totalorder %s19, 1
      %p58 = scmp.ne.s32.totalorder %s53, %s55
      %p59 = scmp.eq.s32.totalorder %s19, 0
      %p60 = por %p58, %p59
      %p61 = scmp.ne.s32.totalorder %s53, %s55
      %p62 = scmp.eq.s32.totalorder %s24, 1
      %p63 = por %p61, %p62
      %p64 = scmp.ne.s32.totalorder %s55, %s56
      %p65 = scmp.eq.s32.totalorder %s24, 0
      %p66 = por %p64, %p65
      %p67 = scmp.ne.s32.totalorder %s55, %s56
      %p68 = scmp.eq.s32.totalorder %s25, 1
      %p69 = por %p67, %p68
      %p71 = scmp.ne.s32.totalorder %s56, %s70
      %p72 = scmp.eq.s32.totalorder %s25, 0
      %p73 = por %p71, %p72
      %s75 = sadd.s32 %s74, 1
      %p78 = scmp.eq.s32.totalorder %s19, 1
      %p79 = scmp.ne.s32.totalorder %s74, %s76
      %p80 = scmp.eq.s32.totalorder %s19, 0
      %p81 = por %p79, %p80
      %p82 = scmp.ne.s32.totalorder %s74, %s76
      %p83 = scmp.eq.s32.totalorder %s24, 1
      %p84 = por %p82, %p83
      %p85 = scmp.ne.s32.totalorder %s76, %s77
      %p86 = scmp.eq.s32.totalorder %s24, 0
      %p87 = por %p85, %p86
      %p88 = scmp.ne.s32.totalorder %s76, %s77
      %p89 = scmp.eq.s32.totalorder %s25, 1
      %p90 = por %p88, %p89
      %p92 = scmp.ne.s32.totalorder %s77, %s91
      %p93 = scmp.eq.s32.totalorder %s25, 0
      %p94 = por %p92, %p93
      %s96 = sadd.s32 %s95, 1
      %p99 = scmp.eq.s32.totalorder %s19, 1
      %p100 = scmp.ne.s32.totalorder %s95, %s97
      %p101 = scmp.eq.s32.totalorder %s19, 0
      %p102 = por %p100, %p101
      %p103 = scmp.ne.s32.totalorder %s95, %s97
      %p104 = scmp.eq.s32.totalorder %s24, 1
      %p105 = por %p103, %p104
      %p106 = scmp.ne.s32.totalorder %s97, %s98
      %p107 = scmp.eq.s32.totalorder %s24, 0
      %p108 = por %p106, %p107
      %p109 = scmp.ne.s32.totalorder %s97, %s98
      %p110 = scmp.eq.s32.totalorder %s25, 1
      %p111 = por %p109, %p110
      %p113 = scmp.ne.s32.totalorder %s98, %s112
      %p114 = scmp.eq.s32.totalorder %s25, 0
      %p115 = por %p113, %p114
      %s117 = sadd.s32 %s116, 1
      %p120 = scmp.eq.s32.totalorder %s19, 1
      %p121 = scmp.ne.s32.totalorder %s116, %s118
      %p122 = scmp.eq.s32.totalorder %s19, 0
      %p123 = por %p121, %p122
      %p124 = scmp.ne.s32.totalorder %s116, %s118
      %p125 = scmp.eq.s32.totalorder %s24, 1
      %p126 = por %p124, %p125
      %p127 = scmp.ne.s32.totalorder %s118, %s119
      %p128 = scmp.eq.s32.totalorder %s24, 0
      %p129 = por %p127, %p128
      %p130 = scmp.ne.s32.totalorder %s118, %s119
      %p131 = scmp.eq.s32.totalorder %s25, 1
      %p132 = por %p130, %p131
      %p134 = scmp.ne.s32.totalorder %s119, %s133
      %p135 = scmp.eq.s32.totalorder %s25, 0
      %p136 = por %p134, %p135
      %s137 = ssub.s32 %s19, %s26
      %p138 = scmp.eq.s32.totalorder %s137, 0
      %s140 = sadd.s32 %s139, 1
      %s141 = scalar_select %p138, %s139, %s140
      %p144 = pneg %p138
      %p145 = scmp.eq.s32.totalorder %s19, 1
      %p146 = por %p144, %p145
      %p147 = scmp.ne.s32.totalorder %s139, %s142
      %p148 = scmp.eq.s32.totalorder %s19, 0
      %p149 = por %p147, %p148
      %p150 = scmp.ne.s32.totalorder %s139, %s142
      %p151 = scmp.eq.s32.totalorder %s24, 1
      %p152 = por %p150, %p151
      %p153 = scmp.ne.s32.totalorder %s142, %s143
      %p154 = scmp.eq.s32.totalorder %s24, 0
      %p155 = por %p153, %p154
      %p156 = scmp.ne.s32.totalorder %s142, %s143
      %p157 = scmp.eq.s32.totalorder %s25, 1
      %p158 = por %p156, %p157
      %p160 = scmp.ne.s32.totalorder %s143, %s159
      %p161 = scmp.eq.s32.totalorder %s25, 0
      %p162 = por %p160, %p161
      %p163 = scmp.le.s32.totalorder 1, %s19
      %p164 = scmp.lt.s32.totalorder %s19, 3
      %p165 = pnand %p163, %p164
      %p166 = pneg %p165
      // Predicated region
      $region9: #{ss2depthconv_k1_forward.5} parent=5 // pred_check
        _
      $region10: #{ss2depthconv_k1_forward.5} parent=5 // pred_check_branch
        %168 = sbr.rel (%p165) target = $region12
      $region11: #{ss2depthconv_k1_forward.5} parent=5 // pred_region
        %s169 = ssub.s32 %s19, 1
        // Predicated region
        $region13: #{ss2depthconv_k1_forward.5} parent=11 // pred_check
          %p170 = pneg %p66
        $region14: #{ss2depthconv_k1_forward.5} parent=11 // pred_check_branch
          %172 = sbr.rel (%p170) target = $region16
        $region15: #{ss2depthconv_k1_forward.5} parent=11 // pred_region
          %s174 = ssub.s32 3456, 3456
          %175 = vsyncadd [#allocation6], %s174
          %s176 = sshll.u32 [#allocation5], 4
          %s177 = int_to_ptr.vmem [resolvable:$true] %s176
          %182 = dma.hbm_to_vmem [thread:$0]  %s1, 3456, %s177, [#allocation6], 128, 128, 8
        $region16: #{ss2depthconv_k1_forward.5} parent=11 // pred_fallthru
          _
        // Predicated region
        $region17: #{ss2depthconv_k1_forward.5} parent=11 // pred_check
          %p183 = pneg %p87
        $region18: #{ss2depthconv_k1_forward.5} parent=11 // pred_check_branch
          %185 = sbr.rel (%p183) target = $region20
        $region19: #{ss2depthconv_k1_forward.5} parent=11 // pred_region
          %s187 = ssub.s32 384, 384
          %188 = vsyncadd [#allocation6], %s187
          %s189 = sshll.u32 [#allocation7], 4
          %s190 = int_to_ptr.vmem [resolvable:$true] %s189
          %195 = dma.hbm_to_vmem [thread:$0]  %s2, 384, %s190, [#allocation6], 128, 128, 8
        $region20: #{ss2depthconv_k1_forward.5} parent=11 // pred_fallthru
          _
        // Predicated region
        $region21: #{ss2depthconv_k1_forward.5} parent=11 // pred_check
          %p196 = pneg %p108
        $region22: #{ss2depthconv_k1_forward.5} parent=11 // pred_check_branch
          %198 = sbr.rel (%p196) target = $region24
        $region23: #{ss2depthconv_k1_forward.5} parent=11 // pred_region
          %s200 = ssub.s32 128, 128
          %201 = vsyncadd [#allocation9], %s200
          %s202 = sshll.u32 [#allocation8], 4
          %s203 = int_to_ptr.vmem [resolvable:$true] %s202
          %208 = dma.hbm_to_vmem [thread:$0]  %s3, 128, %s203, [#allocation9], 64, 64, 4
        $region24: #{ss2depthconv_k1_forward.5} parent=11 // pred_fallthru
          _
        // Predicated region
        $region25: #{ss2depthconv_k1_forward.5} parent=11 // pred_check
          %p209 = pneg %p129
        $region26: #{ss2depthconv_k1_forward.5} parent=11 // pred_check_branch
          %211 = sbr.rel (%p209) target = $region28
        $region27: #{ss2depthconv_k1_forward.5} parent=11 // pred_region
          %s213 = ssub.s32 16, 16
          %214 = vsyncadd [#allocation9], %s213
          %s216 = sshll.u32 [#allocation10], 4
          %s217 = int_to_ptr.vmem [resolvable:$true] %s216
          %219 = dma.hbm_to_vmem [thread:$0]  %s4, 16, %s217, [#allocation9]
        $region28: #{ss2depthconv_k1_forward.5} parent=11 // pred_fallthru
          _
      $region12: #{ss2depthconv_k1_forward.5} parent=5 // pred_fallthru
        _
      %p220 = scmp.lt.s32.totalorder %s19, 2
      // Predicated region
      $region29: #{ss2depthconv_k1_forward.5} parent=5 // pred_check
        %p221 = pneg %p220
      $region30: #{ss2depthconv_k1_forward.5} parent=5 // pred_check_branch
        %223 = sbr.rel (%p221) target = $region32
      $region31: #{ss2depthconv_k1_forward.5} parent=5 // pred_region
        // Predicated region
        $region33: #{ss2depthconv_k1_forward.5} parent=31 // pred_check
          %p224 = pneg %p39
        $region34: #{ss2depthconv_k1_forward.5} parent=31 // pred_check_branch
          %226 = sbr.rel (%p224) target = $region36
        $region35: #{ss2depthconv_k1_forward.5} parent=31 // pred_region
          #allocation13 [shape = 'u32[6]{0}', space=smem, size = 0x18, scoped, tag = 'DMA stride descriptor']
          %s227 = sand.u32 %s29, 1
          %s228 = scalar_lea.sflag [#allocation3], %s227
          %s229 = sand.u32 %s29, 1
          %s230 = smul.addr %s229, 216
          %s231 = scalar_lea.vmem [#allocation2], %s230
          %s233 = ssub.s32 3456, 3456
          %234 = vsyncadd %s228, %s233
          %s235 = smul.addr %s19, 3
          %s236 = smul.addr %s235, 128
          %s237 = scalar_lea.hbm %s0, %s236
          %s239 = sshll.u32 1, 14
          %s240 = sxor.u32 4294967295, %s239
          %s242 = sld [smem:[#allocation0]]
          %s243 = sadd.s32 2, %s242
          %s245 = sshll.u32 7, 26
          %s246 = sxor.u32 4294967295, %s245
          %s247 = sand.u32 0, %s246
          %s248 = sshll.u32 %s243, 26
          %s249 = sor.u32 %s247, %s248
          %s250 = sshll.u32 %s231, 4
          %s251 = int_to_ptr.vmem [resolvable:$true] %s250
          %257 = sst [smem:[#allocation13]] 768
          %s258 = scalar_lea.smem [#allocation13], 1
          %259 = sst [smem:[%s258]] 384
          %s260 = scalar_lea.smem [#allocation13], 2
          %261 = sst [smem:[%s260]] 3
          %s262 = scalar_lea.smem [#allocation13], 3
          %263 = sst [smem:[%s262]] 128
          %s264 = scalar_lea.smem [#allocation13], 4
          %265 = sst [smem:[%s264]] 128
          %s266 = scalar_lea.smem [#allocation13], 5
          %267 = sst [smem:[%s266]] 8
          %269 = dma.general %s237, 3456, %s251, %s228, [#allocation12], [#allocation13], %s249, 0
        $region36: #{ss2depthconv_k1_forward.5} parent=31 // pred_fallthru
          _
      $region32: #{ss2depthconv_k1_forward.5} parent=5 // pred_fallthru
        _
      %p270 = scmp.le.s32.totalorder 1, %s19
      %p271 = scmp.lt.s32.totalorder %s19, 3
      %p272 = pnand %p270, %p271
      %p273 = pneg %p272
      // Predicated region
      $region37: #{ss2depthconv_k1_forward.5} parent=5 // pred_check
        _
      $region38: #{ss2depthconv_k1_forward.5} parent=5 // pred_check_branch
        %275 = sbr.rel (%p272) target = $region40
      $region39: #{ss2depthconv_k1_forward.5} parent=5 // pred_region
        %s276 = ssub.s32 %s19, 1
        %s277 = sand.u32 %s32, 1
        %s278 = scalar_lea.sflag [#allocation3], %s277
        %s279 = sand.u32 %s32, 1
        %s280 = smul.addr %s279, 216
        %s281 = scalar_lea.vmem [#allocation2], %s280
        // Predicated region
        $region41: #{ss2depthconv_k1_forward.5} parent=39 // pred_check
          %p282 = pneg %p45
        $region42: #{ss2depthconv_k1_forward.5} parent=39 // pred_check_branch
          %284 = sbr.rel (%p282) target = $region44
        $region43: #{ss2depthconv_k1_forward.5} parent=39 // pred_region
          %285 = dma.done %s278, 3456
        $region44: #{ss2depthconv_k1_forward.5} parent=39 // pred_fallthru
          _
        // Predicated region
        $region45: #{ss2depthconv_k1_forward.5} parent=39 // pred_check
          %p286 = pneg %p66
        $region46: #{ss2depthconv_k1_forward.5} parent=39 // pred_check_branch
          %288 = sbr.rel (%p286) target = $region48
        $region47: #{ss2depthconv_k1_forward.5} parent=39 // pred_region
          %289 = dma.done [#allocation6], 3456
        $region48: #{ss2depthconv_k1_forward.5} parent=39 // pred_fallthru
          _
        // Predicated region
        $region49: #{ss2depthconv_k1_forward.5} parent=39 // pred_check
          %p290 = pneg %p87
        $region50: #{ss2depthconv_k1_forward.5} parent=39 // pred_check_branch
          %292 = sbr.rel (%p290) target = $region52
        $region51: #{ss2depthconv_k1_forward.5} parent=39 // pred_region
          %293 = dma.done [#allocation6], 384
        $region52: #{ss2depthconv_k1_forward.5} parent=39 // pred_fallthru
          _
        // Predicated region
        $region53: #{ss2depthconv_k1_forward.5} parent=39 // pred_check
          %p294 = pneg %p108
        $region54: #{ss2depthconv_k1_forward.5} parent=39 // pred_check_branch
          %296 = sbr.rel (%p294) target = $region56
        $region55: #{ss2depthconv_k1_forward.5} parent=39 // pred_region
          %297 = dma.done [#allocation9], 128
        $region56: #{ss2depthconv_k1_forward.5} parent=39 // pred_fallthru
          _
        // Predicated region
        $region57: #{ss2depthconv_k1_forward.5} parent=39 // pred_check
          %p298 = pneg %p129
        $region58: #{ss2depthconv_k1_forward.5} parent=39 // pred_check_branch
          %300 = sbr.rel (%p298) target = $region60
        $region59: #{ss2depthconv_k1_forward.5} parent=39 // pred_region
          %301 = dma.done [#allocation9], 16
        $region60: #{ss2depthconv_k1_forward.5} parent=39 // pred_fallthru
          _
        %s302 = sand.u32 %s32, 1
        %s303 = scalar_lea.sflag [#allocation3], %s302
        %s304 = sand.u32 %s32, 1
        %s305 = smul.addr %s304, 216
        %s306 = scalar_lea.vmem [#allocation2], %s305
        %p307 = pneg %p45
        %p308 = pneg %p42
        %p309 = pneg %p66
        %p310 = pneg %p63
        %p311 = pneg %p87
        %p312 = pneg %p84
        %p313 = pneg %p108
        %p314 = pneg %p105
        %p315 = pneg %p129
        %p316 = pneg %p126
        %p317 = pneg %p155
        %p318 = pneg %p152
        %s319 = sand.u32 %s142, 1
        %s320 = scalar_lea.sflag [#allocation4], %s319
        %s321 = sand.u32 %s142, 1
        %s322 = smul.addr %s321, 24
        %s323 = scalar_lea.vmem [#allocation11], %s322
        %v325 = vld [vmem:[%s281] sm:$0xff]
        %v326 = vld [vmem:[%s281 + $0x8] sm:$0xff]
        %v327 = vld [vmem:[%s281 + $0x10] sm:$0x3]
        %v328 = vld [vmem:[#allocation5] sm:$0xff]
        %v329 = vld [vmem:[#allocation5 + $0x8] sm:$0xff]
        %v330 = vld [vmem:[#allocation5 + $0x10] sm:$0x3]
        %332 = vset.pattern.permute.xlu0 0
        %333 = vperm.xlu0 %332, %v328
        %v334 = vpop.permute.xlu0 %333
        %337 = vset.pattern.permute.xlu0 0
        %338 = vperm.xlu0 %337, %v329
        %v339 = vpop.permute.xlu0 %338
        %342 = vset.pattern.permute.xlu0 0
        %343 = vperm.xlu0 %342, %v330
        %v344 = vpop.permute.xlu0 %343
        %v346 = vmul.f32 %v325, %v334
        %v347 = vmul.f32 %v326, %v339
        %v348 = vmul.f32 %v327, %v344
        %v349 = vld [vmem:[#allocation7] sm:$0xff]
        %v350 = vld [vmem:[#allocation7 + $0x8] sm:$0xff]
        %v351 = vld [vmem:[#allocation7 + $0x10] sm:$0x3]
        %353 = vset.pattern.permute.xlu0 0
        %354 = vperm.xlu0 %353, %v349
        %v355 = vpop.permute.xlu0 %354
        %358 = vset.pattern.permute.xlu0 0
        %359 = vperm.xlu0 %358, %v350
        %v360 = vpop.permute.xlu0 %359
        %363 = vset.pattern.permute.xlu0 0
        %364 = vperm.xlu0 %363, %v351
        %v365 = vpop.permute.xlu0 %364
        %v367 = vadd.f32 %v346, %v355
        %v368 = vadd.f32 %v347, %v360
        %v369 = vadd.f32 %v348, %v365
        %s370 = scalar_lea.vmem %s281, 24 [#allocation2]
        %v371 = vld [vmem:[%s370] sm:$0xff]
        %v372 = vld [vmem:[%s370 + $0x8] sm:$0xff]
        %v373 = vld [vmem:[%s370 + $0x10] sm:$0x3]
        %s374 = scalar_lea.vmem [#allocation5], 24
        %v375 = vld [vmem:[%s374] sm:$0xff]
        %v376 = vld [vmem:[%s374 + $0x8] sm:$0xff]
        %v377 = vld [vmem:[%s374 + $0x10] sm:$0x3]
        %379 = vset.pattern.permute.xlu0 0
        %380 = vperm.xlu0 %379, %v375
        %v381 = vpop.permute.xlu0 %380
        %384 = vset.pattern.permute.xlu0 0
        %385 = vperm.xlu0 %384, %v376
        %v386 = vpop.permute.xlu0 %385
        %389 = vset.pattern.permute.xlu0 0
        %390 = vperm.xlu0 %389, %v377
        %v391 = vpop.permute.xlu0 %390
        %v393 = vmul.f32 %v371, %v381
        %v394 = vmul.f32 %v372, %v386
        %v395 = vmul.f32 %v373, %v391
        %v396 = vadd.f32 %v367, %v393
        %v397 = vadd.f32 %v368, %v394
        %v398 = vadd.f32 %v369, %v395
        %s399 = scalar_lea.vmem %s281, 48 [#allocation2]
        %v400 = vld [vmem:[%s399] sm:$0xff]
        %v401 = vld [vmem:[%s399 + $0x8] sm:$0xff]
        %v402 = vld [vmem:[%s399 + $0x10] sm:$0x3]
        %s403 = scalar_lea.vmem [#allocation5], 48
        %v404 = vld [vmem:[%s403] sm:$0xff]
        %v405 = vld [vmem:[%s403 + $0x8] sm:$0xff]
        %v406 = vld [vmem:[%s403 + $0x10] sm:$0x3]
        %408 = vset.pattern.permute.xlu0 0
        %409 = vperm.xlu0 %408, %v404
        %v410 = vpop.permute.xlu0 %409
        %413 = vset.pattern.permute.xlu0 0
        %414 = vperm.xlu0 %413, %v405
        %v415 = vpop.permute.xlu0 %414
        %418 = vset.pattern.permute.xlu0 0
        %419 = vperm.xlu0 %418, %v406
        %v420 = vpop.permute.xlu0 %419
        %v422 = vmul.f32 %v400, %v410
        %v423 = vmul.f32 %v401, %v415
        %v424 = vmul.f32 %v402, %v420
        %v425 = vadd.f32 %v396, %v422
        %v426 = vadd.f32 %v397, %v423
        %v427 = vadd.f32 %v398, %v424
        %s428 = scalar_lea.vmem %s281, 72 [#allocation2]
        %v429 = vld [vmem:[%s428] sm:$0xff]
        %v430 = vld [vmem:[%s428 + $0x8] sm:$0xff]
        %v431 = vld [vmem:[%s428 + $0x10] sm:$0x3]
        %s432 = scalar_lea.vmem [#allocation5], 72
        %v433 = vld [vmem:[%s432] sm:$0xff]
        %v434 = vld [vmem:[%s432 + $0x8] sm:$0xff]
        %v435 = vld [vmem:[%s432 + $0x10] sm:$0x3]
        %437 = vset.pattern.permute.xlu0 0
        %438 = vperm.xlu0 %437, %v433
        %v439 = vpop.permute.xlu0 %438
        %442 = vset.pattern.permute.xlu0 0
        %443 = vperm.xlu0 %442, %v434
        %v444 = vpop.permute.xlu0 %443
        %447 = vset.pattern.permute.xlu0 0
        %448 = vperm.xlu0 %447, %v435
        %v449 = vpop.permute.xlu0 %448
        %v451 = vmul.f32 %v429, %v439
        %v452 = vmul.f32 %v430, %v444
        %v453 = vmul.f32 %v431, %v449
        %v454 = vadd.f32 %v425, %v451
        %v455 = vadd.f32 %v426, %v452
        %v456 = vadd.f32 %v427, %v453
        %s457 = scalar_lea.vmem %s281, 96 [#allocation2]
        %v458 = vld [vmem:[%s457] sm:$0xff]
        %v459 = vld [vmem:[%s457 + $0x8] sm:$0xff]
        %v460 = vld [vmem:[%s457 + $0x10] sm:$0x3]
        %s461 = scalar_lea.vmem [#allocation5], 96
        %v462 = vld [vmem:[%s461] sm:$0xff]
        %v463 = vld [vmem:[%s461 + $0x8] sm:$0xff]
        %v464 = vld [vmem:[%s461 + $0x10] sm:$0x3]
        %466 = vset.pattern.permute.xlu0 0
        %467 = vperm.xlu0 %466, %v462
        %v468 = vpop.permute.xlu0 %467
        %471 = vset.pattern.permute.xlu0 0
        %472 = vperm.xlu0 %471, %v463
        %v473 = vpop.permute.xlu0 %472
        %476 = vset.pattern.permute.xlu0 0
        %477 = vperm.xlu0 %476, %v464
        %v478 = vpop.permute.xlu0 %477
        %v480 = vmul.f32 %v458, %v468
        %v481 = vmul.f32 %v459, %v473
        %v482 = vmul.f32 %v460, %v478
        %v483 = vadd.f32 %v454, %v480
        %v484 = vadd.f32 %v455, %v481
        %v485 = vadd.f32 %v456, %v482
        %s486 = scalar_lea.vmem %s281, 120 [#allocation2]
        %v487 = vld [vmem:[%s486] sm:$0xff]
        %v488 = vld [vmem:[%s486 + $0x8] sm:$0xff]
        %v489 = vld [vmem:[%s486 + $0x10] sm:$0x3]
        %s490 = scalar_lea.vmem [#allocation5], 120
        %v491 = vld [vmem:[%s490] sm:$0xff]
        %v492 = vld [vmem:[%s490 + $0x8] sm:$0xff]
        %v493 = vld [vmem:[%s490 + $0x10] sm:$0x3]
        %495 = vset.pattern.permute.xlu0 0
        %496 = vperm.xlu0 %495, %v491
        %v497 = vpop.permute.xlu0 %496
        %500 = vset.pattern.permute.xlu0 0
        %501 = vperm.xlu0 %500, %v492
        %v502 = vpop.permute.xlu0 %501
        %505 = vset.pattern.permute.xlu0 0
        %506 = vperm.xlu0 %505, %v493
        %v507 = vpop.permute.xlu0 %506
        %v509 = vmul.f32 %v487, %v497
        %v510 = vmul.f32 %v488, %v502
        %v511 = vmul.f32 %v489, %v507
        %v512 = vadd.f32 %v483, %v509
        %v513 = vadd.f32 %v484, %v510
        %v514 = vadd.f32 %v485, %v511
        %s515 = scalar_lea.vmem %s281, 144 [#allocation2]
        %v516 = vld [vmem:[%s515] sm:$0xff]
        %v517 = vld [vmem:[%s515 + $0x8] sm:$0xff]
        %v518 = vld [vmem:[%s515 + $0x10] sm:$0x3]
        %s519 = scalar_lea.vmem [#allocation5], 144
        %v520 = vld [vmem:[%s519] sm:$0xff]
        %v521 = vld [vmem:[%s519 + $0x8] sm:$0xff]
        %v522 = vld [vmem:[%s519 + $0x10] sm:$0x3]
        %524 = vset.pattern.permute.xlu0 0
        %525 = vperm.xlu0 %524, %v520
        %v526 = vpop.permute.xlu0 %525
        %529 = vset.pattern.permute.xlu0 0
        %530 = vperm.xlu0 %529, %v521
        %v531 = vpop.permute.xlu0 %530
        %534 = vset.pattern.permute.xlu0 0
        %535 = vperm.xlu0 %534, %v522
        %v536 = vpop.permute.xlu0 %535
        %v538 = vmul.f32 %v516, %v526
        %v539 = vmul.f32 %v517, %v531
        %v540 = vmul.f32 %v518, %v536
        %v541 = vadd.f32 %v512, %v538
        %v542 = vadd.f32 %v513, %v539
        %v543 = vadd.f32 %v514, %v540
        %s544 = scalar_lea.vmem %s281, 168 [#allocation2]
        %v545 = vld [vmem:[%s544] sm:$0xff]
        %v546 = vld [vmem:[%s544 + $0x8] sm:$0xff]
        %v547 = vld [vmem:[%s544 + $0x10] sm:$0x3]
        %s548 = scalar_lea.vmem [#allocation5], 168
        %v549 = vld [vmem:[%s548] sm:$0xff]
        %v550 = vld [vmem:[%s548 + $0x8] sm:$0xff]
        %v551 = vld [vmem:[%s548 + $0x10] sm:$0x3]
        %553 = vset.pattern.permute.xlu0 0
        %554 = vperm.xlu0 %553, %v549
        %v555 = vpop.permute.xlu0 %554
        %558 = vset.pattern.permute.xlu0 0
        %559 = vperm.xlu0 %558, %v550
        %v560 = vpop.permute.xlu0 %559
        %563 = vset.pattern.permute.xlu0 0
        %564 = vperm.xlu0 %563, %v551
        %v565 = vpop.permute.xlu0 %564
        %v567 = vmul.f32 %v545, %v555
        %v568 = vmul.f32 %v546, %v560
        %v569 = vmul.f32 %v547, %v565
        %v570 = vadd.f32 %v541, %v567
        %v571 = vadd.f32 %v542, %v568
        %v572 = vadd.f32 %v543, %v569
        %s573 = scalar_lea.vmem %s281, 192 [#allocation2]
        %v574 = vld [vmem:[%s573] sm:$0xff]
        %v575 = vld [vmem:[%s573 + $0x8] sm:$0xff]
        %v576 = vld [vmem:[%s573 + $0x10] sm:$0x3]
        %s577 = scalar_lea.vmem [#allocation5], 192
        %v578 = vld [vmem:[%s577] sm:$0xff]
        %v579 = vld [vmem:[%s577 + $0x8] sm:$0xff]
        %v580 = vld [vmem:[%s577 + $0x10] sm:$0x3]
        %582 = vset.pattern.permute.xlu0 0
        %583 = vperm.xlu0 %582, %v578
        %v584 = vpop.permute.xlu0 %583
        %587 = vset.pattern.permute.xlu0 0
        %588 = vperm.xlu0 %587, %v579
        %v589 = vpop.permute.xlu0 %588
        %592 = vset.pattern.permute.xlu0 0
        %593 = vperm.xlu0 %592, %v580
        %v594 = vpop.permute.xlu0 %593
        %v596 = vmul.f32 %v574, %v584
        %v597 = vmul.f32 %v575, %v589
        %v598 = vmul.f32 %v576, %v594
        %v599 = vadd.f32 %v570, %v596
        %v600 = vadd.f32 %v571, %v597
        %v601 = vadd.f32 %v572, %v598
        %v602 = vpack.c.bf16 %v600, %v599
        %v603 = vpack.c.bf16 %v601, %v601
        %v604 = vld [vmem:[#allocation8] sm:$0xf]
        %v605 = vld [vmem:[#allocation8 + $0x4] sm:$0xf]
        %v606 = vld [vmem:[#allocation10] sm:$0x1]
        %v608 = vlaneseq
        %v609 = vshrl.u32 %v608, 7
        %v610 = vsub.s32 0, %v609
        %v611 = vrot.slane %v606, %v610
        %v615 = vunpack.c.l.b16 %v604
        %v616 = vunpack.c.l.b16 %v605
        %v617 = vpack.c.b16 %v616, %v615
        %vm619 = vcmask 130048
        %v621 = vsel %vm619, %v602, 0
        %v624 = vsel %vm619, %v603, 0
        %626 = vmatprep.subr.bf16.mxu0 0
        %627 = vmatpush1.bf16.msra.mxu0 %v617
        %628 = vmatprep.subr.bf16.mxu0 0
        %629 = vmatpush1.bf16.msra.mxu0 0
        %630 = vmatprep.subr.bf16.mxu0 0
        %631 = vmatpush1.bf16.msra.mxu0 0
        %632 = vmatprep.subr.bf16.mxu0 0
        %633 = vmatpush1.bf16.msra.mxu0 0
        %634 = vmatprep.subr.bf16.mxu0 0
        %635 = vmatpush1.bf16.msra.mxu0 0
        %636 = vmatprep.subr.bf16.mxu0 0
        %637 = vmatpush1.bf16.msra.mxu0 0
        %638 = vmatprep.subr.bf16.mxu0 0
        %639 = vmatpush1.bf16.msra.mxu0 0
        %640 = vmatprep.subr.bf16.mxu0 0
        %641 = vmatpush1.bf16.msra.mxu0 0
        %642 = vmatprep.subr.bf16.mxu0 0
        %643 = vmatpush1.bf16.msra.mxu0 0
        %644 = vmatprep.subr.bf16.mxu0 0
        %645 = vmatpush1.bf16.msra.mxu0 0
        %646 = vmatprep.subr.bf16.mxu0 0
        %647 = vmatpush1.bf16.msra.mxu0 0
        %648 = vmatprep.subr.bf16.mxu0 0
        %649 = vmatpush1.bf16.msra.mxu0 0
        %650 = vmatprep.subr.bf16.mxu0 0
        %651 = vmatpush1.bf16.msra.mxu0 0
        %652 = vmatprep.subr.bf16.mxu0 0
        %653 = vmatpush1.bf16.msra.mxu0 0
        %654 = vmatprep.subr.bf16.mxu0 0
        %655 = vmatpush1.bf16.msra.mxu0 0
        %656 = vmatprep.subr.bf16.mxu0 0
        %657 = vmatpush1.bf16.msra.mxu0 0
        %658 = vmatprep.mubr.bf16.mxu0 0
        %659 = vmatmul.mubr.bf16.gmra.mrb[0].mxu0 %v621
        %v660 = vpop.f32.mrb[0].mxu0
        %v661 = vadd.f32 %v611, %v660
        %v662 = vpop.f32.mrb[0].mxu0
        %v663 = vpop.f32.mrb[0].mxu0
        %v664 = vadd.f32 %v611, %v663
        %v665 = vpop.f32.mrb[0].mxu0
        %666 = vmatprep.mubr.bf16.mxu0 0
        %667 = vmatmul.mubr.bf16.gmra.mrb[0].mxu0 %v624
        %v668 = vpop.f32.mrb[0].mxu0
        %v669 = vadd.f32 %v611, %v668
        %v670 = vpop.f32.mrb[0].mxu0
        %v671 = vpop.f32.mrb[0].mxu0
        %v672 = vpop.f32.mrb[0].mxu0
        %673 = vdwg.mxu0
        %v674 = vsub.f32 0.0, %v661
        %v675 = vsub.f32 0.0, %v664
        %v676 = vsub.f32 0.0, %v669
        %v677 = vmul.f32 %v674, 1.442695
        %v678 = vpow.pop %v677
        %v679 = vmul.f32 %v675, 1.442695
        %v680 = vpow.pop %v679
        %v681 = vmul.f32 %v676, 1.442695
        %v682 = vpow.pop %v681
        %v683 = vadd.f32 %v678, 1.0
        %v684 = vadd.f32 %v680, 1.0
        %v685 = vadd.f32 %v682, 1.0
        %v686 = vrcp.pop %v683
        %v687 = vrcp.pop %v684
        %v688 = vrcp.pop %v685
        %v689 = vmul.f32 %v661, %v686
        %v690 = vmul.f32 %v664, %v687
        %v691 = vmul.f32 %v669, %v688
        %vm692 = vcmask 146432
        %693 = vst.msk [vmem:[%s323] sm:$0xff] %vm692, %v689
        %694 = vst.msk [vmem:[%s323 + $0x8] sm:$0xff] %vm692, %v690
        %vm695 = vcmask 140288
        %696 = vst.msk [vmem:[%s323 + $0x10] sm:$0x3] %vm695, %v691
        %s697 = sand.u32 %s142, 1
        %s698 = scalar_lea.sflag [#allocation4], %s697
        %s699 = sand.u32 %s142, 1
        %s700 = smul.addr %s699, 24
        %s701 = scalar_lea.vmem [#allocation11], %s700
        // Predicated region
        $region61: #{ss2depthconv_k1_forward.5} parent=39 // pred_check
          %p702 = pneg %p152
        $region62: #{ss2depthconv_k1_forward.5} parent=39 // pred_check_branch
          %704 = sbr.rel (%p702) target = $region64
        $region63: #{ss2depthconv_k1_forward.5} parent=39 // pred_region
          %s706 = ssub.s32 384, 384
          %707 = vsyncadd %s698, %s706
          %s708 = smul.addr %s24, 3
          %s709 = smul.addr %s708, 128
          %s710 = scalar_lea.hbm %s5, %s709
          %s711 = sshll.u32 %s701, 4
          %s712 = int_to_ptr.vmem [resolvable:$true] %s711
          %717 = dma.vmem_to_hbm [thread:$0]  %s712, 384, %s710, %s698, 128, 128, 8
        $region64: #{ss2depthconv_k1_forward.5} parent=39 // pred_fallthru
          _
      $region40: #{ss2depthconv_k1_forward.5} parent=5 // pred_fallthru
        _
      %p718 = scmp.le.s32.totalorder 2, %s19
      // Predicated region
      $region65: #{ss2depthconv_k1_forward.5} parent=5 // pred_check
        %p719 = pneg %p718
      $region66: #{ss2depthconv_k1_forward.5} parent=5 // pred_check_branch
        %721 = sbr.rel (%p719) target = $region68
      $region67: #{ss2depthconv_k1_forward.5} parent=5 // pred_region
        %s722 = ssub.s32 %s19, 2
        // Predicated region
        $region69: #{ss2depthconv_k1_forward.5} parent=67 // pred_check
          %p723 = pneg %p158
        $region70: #{ss2depthconv_k1_forward.5} parent=67 // pred_check_branch
          %725 = sbr.rel (%p723) target = $region72
        $region71: #{ss2depthconv_k1_forward.5} parent=67 // pred_region
          %s726 = sand.u32 %s143, 1
          %s727 = scalar_lea.sflag [#allocation4], %s726
          %s728 = sand.u32 %s143, 1
          %s729 = smul.addr %s728, 24
          %s730 = scalar_lea.vmem [#allocation11], %s729
          %731 = dma.done %s727, 384
        $region72: #{ss2depthconv_k1_forward.5} parent=67 // pred_fallthru
          _
      $region68: #{ss2depthconv_k1_forward.5} parent=5 // pred_fallthru
        _
    $region6: #{ss2depthconv_k1_forward.5} parent=1 // loop_footer
      %s23 = sadd.s32 1, %s19
    $region7: #{ss2depthconv_k1_forward.5} parent=1 // loop_footer_branch
      %18 = sbr.rel target = $region3
    $region8: #{ss2depthconv_k1_forward.5} parent=1 // loop_exit
      _
    %732 = vsyncpa [#allocation3], 1
    %s733 = scalar_lea.sflag [#allocation3], 1
    %734 = vsyncpa %s733, 1
    %735 = vsyncpa [#allocation6], 1
    %736 = vsyncpa [#allocation9], 1
    %737 = vsyncpa [#allocation4], 1
    %s738 = scalar_lea.sflag [#allocation4], 1
    %739 = vsyncpa %s738, 1

// kernel: ss2depthconv_k1_forward.7
$region0: #{ss2depthconv_k1_forward.7}
  #allocation0 [shape = 'u32[]', space=smem, size = 0x4, offset = 0x4, fixed_abs, tag = 'smem constant byte address 0x4 - core index']
  #allocation1 [shape = 'u32[144,128]{1,0:T(1,128)}', space=vmem, size = 0x12000, scoped, tag = 'internal scratch']
  %s0 = inlined_call_operand.hbm [shape: bf16[128,18], index: 0, kind: input, shape index: {}]
  %s1 = inlined_call_operand.hbm [shape: f32[128,16], index: 1, kind: input, shape index: {}]
  %s2 = inlined_call_operand.hbm [shape: bf16[18,16], index: 2, kind: input, shape index: {}]
  %s3 = inlined_call_operand.hbm [shape: f32[1,16], index: 3, kind: input, shape index: {}]
  %s4 = inlined_call_operand.hbm [shape: f32[1,16], index: 4, kind: input, shape index: {}]
  %s5 = inlined_call_operand.hbm [shape: bf16[16,16], index: 5, kind: input, shape index: {}]
  %s6 = inlined_call_operand.hbm [shape: f32[128,16], index: 6, kind: output, shape index: {}]
  %s7 = sld [smem:[#allocation0]]
  $region58: #{ss2depthconv_k1_forward.7} parent=0
    _
  %s9 = ssub.s32 1, %s7
  %s10 = scalar_select 0, %s9, %s7
  $region1: #{ss2depthconv_k1_forward.7} parent=0
    #allocation2 [shape = 'u8[32768]{0}', space=vmem, size = 0x8000, scoped, tag = 'input window, operand 0, single buffered']
    #allocation3 [shape = 's32[1]{0}', space=sflag, size = 0x4, scoped, tag = 'scoped memory for ss2depthconv_k1_forward.7']
    #allocation4 [shape = 's32[1]{0}', space=sflag, size = 0x4, scoped, tag = 'scoped memory for ss2depthconv_k1_forward.7']
    #allocation5 [shape = 'u8[65536]{0}', space=vmem, size = 0x10000, scoped, tag = 'input window, operand 1, single buffered']
    #allocation6 [shape = 's32[1]{0}', space=sflag, size = 0x4, scoped, tag = 'scoped memory for ss2depthconv_k1_forward.7']
    #allocation7 [shape = 'u8[6144]{0}', space=vmem, size = 0x1800, scoped, tag = 'input window, operand 2, single buffered']
    #allocation8 [shape = 'u8[512]{0}', space=vmem, size = 0x400, scoped, tag = 'input window, operand 3, single buffered']
    #allocation9 [shape = 's32[1]{0}', space=sflag, size = 0x4, scoped, tag = 'scoped memory for ss2depthconv_k1_forward.7']
    #allocation10 [shape = 'u8[512]{0}', space=vmem, size = 0x400, scoped, tag = 'input window, operand 4, single buffered']
    #allocation11 [shape = 'u8[4096]{0}', space=vmem, size = 0x1000, scoped, tag = 'input window, operand 5, single buffered']
    #allocation12 [shape = 's32[1]{0}', space=sflag, size = 0x4, scoped, tag = 'scoped memory for ss2depthconv_k1_forward.7']
    #allocation13 [shape = 'u8[65536]{0}', space=vmem, size = 0x10000, scoped, tag = 'output window, operand 0, single buffered']
    %11 = vsyncpa [#allocation3], 0
    %12 = vsyncpa [#allocation6], 0
    %13 = vsyncpa [#allocation9], 0
    %14 = vsyncpa [#allocation12], 0
    %15 = vsyncpa [#allocation4], 0
    // Predicated region
    $region2: #{ss2depthconv_k1_forward.7} parent=1 // pred_check
      _
    $region3: #{ss2depthconv_k1_forward.7} parent=1 // pred_check_branch
      %17 = sbr.rel (0) target = $region5
    $region4: #{ss2depthconv_k1_forward.7} parent=1 // pred_region
      %s19 = ssub.s32 1024, 1024
      %20 = vsyncadd [#allocation3], %s19
      %s21 = sshll.u32 [#allocation2], 4
      %s22 = int_to_ptr.vmem [resolvable:$true] %s21
      %27 = dma.hbm_to_vmem [thread:$0]  %s0, 1024, %s22, [#allocation3], 64, 64, 4
    $region5: #{ss2depthconv_k1_forward.7} parent=1 // pred_fallthru
      _
    // Predicated region
    $region6: #{ss2depthconv_k1_forward.7} parent=1 // pred_check
      _
    $region7: #{ss2depthconv_k1_forward.7} parent=1 // pred_check_branch
      %29 = sbr.rel (0) target = $region9
    $region8: #{ss2depthconv_k1_forward.7} parent=1 // pred_region
      %s31 = ssub.s32 2048, 2048
      %32 = vsyncadd [#allocation6], %s31
      %s33 = sshll.u32 [#allocation5], 4
      %s34 = int_to_ptr.vmem [resolvable:$true] %s33
      %39 = dma.hbm_to_vmem [thread:$0]  %s1, 2048, %s34, [#allocation6], 128, 128, 8
    $region9: #{ss2depthconv_k1_forward.7} parent=1 // pred_fallthru
      _
    // Predicated region
    $region10: #{ss2depthconv_k1_forward.7} parent=1 // pred_check
      _
    $region11: #{ss2depthconv_k1_forward.7} parent=1 // pred_check_branch
      %41 = sbr.rel (0) target = $region13
    $region12: #{ss2depthconv_k1_forward.7} parent=1 // pred_region
      %s43 = ssub.s32 192, 192
      %44 = vsyncadd [#allocation6], %s43
      %s45 = sshll.u32 [#allocation7], 4
      %s46 = int_to_ptr.vmem [resolvable:$true] %s45
      %51 = dma.hbm_to_vmem [thread:$0]  %s2, 192, %s46, [#allocation6], 64, 64, 4
    $region13: #{ss2depthconv_k1_forward.7} parent=1 // pred_fallthru
      _
    // Predicated region
    $region14: #{ss2depthconv_k1_forward.7} parent=1 // pred_check
      _
    $region15: #{ss2depthconv_k1_forward.7} parent=1 // pred_check_branch
      %53 = sbr.rel (0) target = $region17
    $region16: #{ss2depthconv_k1_forward.7} parent=1 // pred_region
      %s55 = ssub.s32 16, 16
      %56 = vsyncadd [#allocation9], %s55
      %s58 = sshll.u32 [#allocation8], 4
      %s59 = int_to_ptr.vmem [resolvable:$true] %s58
      %61 = dma.hbm_to_vmem [thread:$0]  %s3, 16, %s59, [#allocation9]
    $region17: #{ss2depthconv_k1_forward.7} parent=1 // pred_fallthru
      _
    // Predicated region
    $region18: #{ss2depthconv_k1_forward.7} parent=1 // pred_check
      _
    $region19: #{ss2depthconv_k1_forward.7} parent=1 // pred_check_branch
      %63 = sbr.rel (0) target = $region21
    $region20: #{ss2depthconv_k1_forward.7} parent=1 // pred_region
      %s65 = ssub.s32 16, 16
      %66 = vsyncadd [#allocation9], %s65
      %s68 = sshll.u32 [#allocation10], 4
      %s69 = int_to_ptr.vmem [resolvable:$true] %s68
      %71 = dma.hbm_to_vmem [thread:$0]  %s4, 16, %s69, [#allocation9]
    $region21: #{ss2depthconv_k1_forward.7} parent=1 // pred_fallthru
      _
    // Predicated region
    $region22: #{ss2depthconv_k1_forward.7} parent=1 // pred_check
      _
    $region23: #{ss2depthconv_k1_forward.7} parent=1 // pred_check_branch
      %73 = sbr.rel (0) target = $region25
    $region24: #{ss2depthconv_k1_forward.7} parent=1 // pred_region
      %s75 = ssub.s32 128, 128
      %76 = vsyncadd [#allocation12], %s75
      %s77 = sshll.u32 [#allocation11], 4
      %s78 = int_to_ptr.vmem [resolvable:$true] %s77
      %83 = dma.hbm_to_vmem [thread:$0]  %s5, 128, %s78, [#allocation12], 64, 64, 4
    $region25: #{ss2depthconv_k1_forward.7} parent=1 // pred_fallthru
      _
    // Predicated region
    $region26: #{ss2depthconv_k1_forward.7} parent=1 // pred_check
      _
    $region27: #{ss2depthconv_k1_forward.7} parent=1 // pred_check_branch
      %85 = sbr.rel (0) target = $region29
    $region28: #{ss2depthconv_k1_forward.7} parent=1 // pred_region
      %86 = dma.done [#allocation3], 1024
    $region29: #{ss2depthconv_k1_forward.7} parent=1 // pred_fallthru
      _
    // Predicated region
    $region30: #{ss2depthconv_k1_forward.7} parent=1 // pred_check
      _
    $region31: #{ss2depthconv_k1_forward.7} parent=1 // pred_check_branch
      %88 = sbr.rel (0) target = $region33
    $region32: #{ss2depthconv_k1_forward.7} parent=1 // pred_region
      %89 = dma.done [#allocation6], 2048
    $region33: #{ss2depthconv_k1_forward.7} parent=1 // pred_fallthru
      _
    // Predicated region
    $region34: #{ss2depthconv_k1_forward.7} parent=1 // pred_check
      _
    $region35: #{ss2depthconv_k1_forward.7} parent=1 // pred_check_branch
      %91 = sbr.rel (0) target = $region37
    $region36: #{ss2depthconv_k1_forward.7} parent=1 // pred_region
      %92 = dma.done [#allocation6], 192
    $region37: #{ss2depthconv_k1_forward.7} parent=1 // pred_fallthru
      _
    // Predicated region
    $region38: #{ss2depthconv_k1_forward.7} parent=1 // pred_check
      _
    $region39: #{ss2depthconv_k1_forward.7} parent=1 // pred_check_branch
      %94 = sbr.rel (0) target = $region41
    $region40: #{ss2depthconv_k1_forward.7} parent=1 // pred_region
      %95 = dma.done [#allocation9], 16
    $region41: #{ss2depthconv_k1_forward.7} parent=1 // pred_fallthru
      _
    // Predicated region
    $region42: #{ss2depthconv_k1_forward.7} parent=1 // pred_check
      _
    $region43: #{ss2depthconv_k1_forward.7} parent=1 // pred_check_branch
      %97 = sbr.rel (0) target = $region45
    $region44: #{ss2depthconv_k1_forward.7} parent=1 // pred_region
      %98 = dma.done [#allocation9], 16
    $region45: #{ss2depthconv_k1_forward.7} parent=1 // pred_fallthru
      _
    // Predicated region
    $region46: #{ss2depthconv_k1_forward.7} parent=1 // pred_check
      _
    $region47: #{ss2depthconv_k1_forward.7} parent=1 // pred_check_branch
      %100 = sbr.rel (0) target = $region49
    $region48: #{ss2depthconv_k1_forward.7} parent=1 // pred_region
      %101 = dma.done [#allocation12], 128
    $region49: #{ss2depthconv_k1_forward.7} parent=1 // pred_fallthru
      _
    %v103 = vld [vmem:[#allocation2] sm:$0xf]
    %v104 = vld [vmem:[#allocation2 + $0x4] sm:$0xf]
    %v105 = vld [vmem:[#allocation2 + $0x8] sm:$0xf]
    %v106 = vld [vmem:[#allocation2 + $0xc] sm:$0xf]
    %v107 = vld [vmem:[#allocation2 + $0x10] sm:$0xf]
    %v108 = vld [vmem:[#allocation2 + $0x14] sm:$0xf]
    %v109 = vld [vmem:[#allocation2 + $0x18] sm:$0xf]
    %v110 = vld [vmem:[#allocation2 + $0x1c] sm:$0xf]
    %v111 = vld [vmem:[#allocation2 + $0x20] sm:$0xf]
    %v112 = vld [vmem:[#allocation2 + $0x24] sm:$0xf]
    %v113 = vld [vmem:[#allocation2 + $0x28] sm:$0xf]
    %v114 = vld [vmem:[#allocation2 + $0x2c] sm:$0xf]
    %v115 = vld [vmem:[#allocation2 + $0x30] sm:$0xf]
    %v116 = vld [vmem:[#allocation2 + $0x34] sm:$0xf]
    %v117 = vld [vmem:[#allocation2 + $0x38] sm:$0xf]
    %v118 = vld [vmem:[#allocation2 + $0x3c] sm:$0xf]
    %v119 = vld [vmem:[#allocation7] sm:$0xf]
    %v120 = vld [vmem:[#allocation7 + $0x4] sm:$0xf]
    %v121 = vld [vmem:[#allocation7 + $0x8] sm:$0x1]
    %v138 = vunpack.c.l.b16 %v103
    %v139 = vunpack.c.l.b16 %v104
    %v140 = vunpack.c.l.b16 %v105
    %v141 = vunpack.c.l.b16 %v106
    %v142 = vunpack.c.l.b16 %v107
    %v143 = vunpack.c.l.b16 %v108
    %v144 = vunpack.c.l.b16 %v109
    %v145 = vunpack.c.l.b16 %v110
    %v146 = vunpack.c.l.b16 %v111
    %v147 = vunpack.c.l.b16 %v112
    %v148 = vunpack.c.l.b16 %v113
    %v149 = vunpack.c.l.b16 %v114
    %v150 = vunpack.c.l.b16 %v115
    %v151 = vunpack.c.l.b16 %v116
    %v152 = vunpack.c.l.b16 %v117
    %v153 = vunpack.c.l.b16 %v118
    %v154 = vpack.c.b16 %v139, %v138
    %v155 = vpack.c.b16 %v141, %v140
    %v156 = vpack.c.b16 %v143, %v142
    %v157 = vpack.c.b16 %v145, %v144
    %v158 = vpack.c.b16 %v147, %v146
    %v159 = vpack.c.b16 %v149, %v148
    %v160 = vpack.c.b16 %v151, %v150
    %v161 = vpack.c.b16 %v153, %v152
    %v165 = vunpack.c.l.b16 %v119
    %v166 = vunpack.c.l.b16 %v120
    %v167 = vunpack.c.l.b16 %v121
    %v168 = vpack.c.b16 %v166, %v165
    %v169 = vpack.c.b16 %v167, %v167
    %vm171 = vcmask 146432
    %v173 = vsel %vm171, %v154, 0
    %v176 = vsel %vm171, %v155, 0
    %v179 = vsel %vm171, %v156, 0
    %v182 = vsel %vm171, %v157, 0
    %v185 = vsel %vm171, %v158, 0
    %v188 = vsel %vm171, %v159, 0
    %v191 = vsel %vm171, %v160, 0
    %v194 = vsel %vm171, %v161, 0
    %vm196 = vcmask 1040384
    %v198 = vsel %vm196, %v169, 0
    %200 = vmatprep.subr.bf16.mxu0 0
    %201 = vmatpush1.bf16.msra.mxu0 %v168
    %202 = vmatprep.subr.bf16.mxu0 0
    %203 = vmatpush1.bf16.msra.mxu0 %v198
    %204 = vmatprep.subr.bf16.mxu0 0
    %205 = vmatpush1.bf16.msra.mxu0 0
    %206 = vmatprep.subr.bf16.mxu0 0
    %207 = vmatpush1.bf16.msra.mxu0 0
    %208 = vmatprep.subr.bf16.mxu0 0
    %209 = vmatpush1.bf16.msra.mxu0 0
    %210 = vmatprep.subr.bf16.mxu0 0
    %211 = vmatpush1.bf16.msra.mxu0 0
    %212 = vmatprep.subr.bf16.mxu0 0
    %213 = vmatpush1.bf16.msra.mxu0 0
    %214 = vmatprep.subr.bf16.mxu0 0
    %215 = vmatpush1.bf16.msra.mxu0 0
    %216 = vmatprep.subr.bf16.mxu0 0
    %217 = vmatpush1.bf16.msra.mxu0 0
    %218 = vmatprep.subr.bf16.mxu0 0
    %219 = vmatpush1.bf16.msra.mxu0 0
    %220 = vmatprep.subr.bf16.mxu0 0
    %221 = vmatpush1.bf16.msra.mxu0 0
    %222 = vmatprep.subr.bf16.mxu0 0
    %223 = vmatpush1.bf16.msra.mxu0 0
    %224 = vmatprep.subr.bf16.mxu0 0
    %225 = vmatpush1.bf16.msra.mxu0 0
    %226 = vmatprep.subr.bf16.mxu0 0
    %227 = vmatpush1.bf16.msra.mxu0 0
    %228 = vmatprep.subr.bf16.mxu0 0
    %229 = vmatpush1.bf16.msra.mxu0 0
    %230 = vmatprep.subr.bf16.mxu0 0
    %231 = vmatpush1.bf16.msra.mxu0 0
    %232 = vmatprep.mubr.bf16.mxu0 0
    %233 = vmatmul.mubr.bf16.gmra.mrb[0].mxu0 %v173
    %v234 = vpop.f32.mrb[0].mxu0
    %v235 = vadd.f32 0.0, %v234
    %v236 = vpop.f32.mrb[0].mxu0
    %v237 = vpop.f32.mrb[0].mxu0
    %v238 = vadd.f32 0.0, %v237
    %v239 = vpop.f32.mrb[0].mxu0
    %240 = vmatprep.mubr.bf16.mxu0 0
    %241 = vmatmul.mubr.bf16.gmra.mrb[0].mxu0 %v176
    %v242 = vpop.f32.mrb[0].mxu0
    %v243 = vadd.f32 0.0, %v242
    %v244 = vpop.f32.mrb[0].mxu0
    %v245 = vpop.f32.mrb[0].mxu0
    %v246 = vadd.f32 0.0, %v245
    %v247 = vpop.f32.mrb[0].mxu0
    %248 = vmatprep.mubr.bf16.mxu0 0
    %249 = vmatmul.mubr.bf16.gmra.mrb[0].mxu0 %v179
    %v250 = vpop.f32.mrb[0].mxu0
    %v251 = vadd.f32 0.0, %v250
    %v252 = vpop.f32.mrb[0].mxu0
    %v253 = vpop.f32.mrb[0].mxu0
    %v254 = vadd.f32 0.0, %v253
    %v255 = vpop.f32.mrb[0].mxu0
    %256 = vmatprep.mubr.bf16.mxu0 0
    %257 = vmatmul.mubr.bf16.gmra.mrb[0].mxu0 %v182
    %v258 = vpop.f32.mrb[0].mxu0
    %v259 = vadd.f32 0.0, %v258
    %v260 = vpop.f32.mrb[0].mxu0
    %v261 = vpop.f32.mrb[0].mxu0
    %v262 = vadd.f32 0.0, %v261
    %v263 = vpop.f32.mrb[0].mxu0
    %264 = vmatprep.mubr.bf16.mxu0 0
    %265 = vmatmul.mubr.bf16.gmra.mrb[0].mxu0 %v185
    %v266 = vpop.f32.mrb[0].mxu0
    %v267 = vadd.f32 0.0, %v266
    %v268 = vpop.f32.mrb[0].mxu0
    %v269 = vpop.f32.mrb[0].mxu0
    %v270 = vadd.f32 0.0, %v269
    %v271 = vpop.f32.mrb[0].mxu0
    %272 = vmatprep.mubr.bf16.mxu0 0
    %273 = vmatmul.mubr.bf16.gmra.mrb[0].mxu0 %v188
    %v274 = vpop.f32.mrb[0].mxu0
    %v275 = vadd.f32 0.0, %v274
    %v276 = vpop.f32.mrb[0].mxu0
    %v277 = vpop.f32.mrb[0].mxu0
    %v278 = vadd.f32 0.0, %v277
    %v279 = vpop.f32.mrb[0].mxu0
    %280 = vmatprep.mubr.bf16.mxu0 0
    %281 = vmatmul.mubr.bf16.gmra.mrb[0].mxu0 %v191
    %v282 = vpop.f32.mrb[0].mxu0
    %v283 = vadd.f32 0.0, %v282
    %v284 = vpop.f32.mrb[0].mxu0
    %v285 = vpop.f32.mrb[0].mxu0
    %v286 = vadd.f32 0.0, %v285
    %v287 = vpop.f32.mrb[0].mxu0
    %288 = vmatprep.mubr.bf16.mxu0 0
    %289 = vmatmul.mubr.bf16.gmra.mrb[0].mxu0 %v194
    %v290 = vpop.f32.mrb[0].mxu0
    %v291 = vadd.f32 0.0, %v290
    %v292 = vpop.f32.mrb[0].mxu0
    %v293 = vpop.f32.mrb[0].mxu0
    %v294 = vadd.f32 0.0, %v293
    %v295 = vpop.f32.mrb[0].mxu0
    %296 = vdwg.mxu0
    %vm297 = vcmask 130048
    %v298 = vsel %vm297, %v235, 0.0
    %299 = vadd.xlane.f32.xlu0 %v298
    %v300 = vpop.xlane.xlu0 %299
    %v301 = vsel %vm297, %v238, 0.0
    %302 = vadd.xlane.f32.xlu0 %v301
    %v303 = vpop.xlane.xlu0 %302
    %v304 = vsel %vm297, %v243, 0.0
    %305 = vadd.xlane.f32.xlu0 %v304
    %v306 = vpop.xlane.xlu0 %305
    %v307 = vsel %vm297, %v246, 0.0
    %308 = vadd.xlane.f32.xlu0 %v307
    %v309 = vpop.xlane.xlu0 %308
    %v310 = vsel %vm297, %v251, 0.0
    %311 = vadd.xlane.f32.xlu0 %v310
    %v312 = vpop.xlane.xlu0 %311
    %v313 = vsel %vm297, %v254, 0.0
    %314 = vadd.xlane.f32.xlu0 %v313
    %v315 = vpop.xlane.xlu0 %314
    %v316 = vsel %vm297, %v259, 0.0
    %317 = vadd.xlane.f32.xlu0 %v316
    %v318 = vpop.xlane.xlu0 %317
    %v319 = vsel %vm297, %v262, 0.0
    %320 = vadd.xlane.f32.xlu0 %v319
    %v321 = vpop.xlane.xlu0 %320
    %v322 = vsel %vm297, %v267, 0.0
    %323 = vadd.xlane.f32.xlu0 %v322
    %v324 = vpop.xlane.xlu0 %323
    %v325 = vsel %vm297, %v270, 0.0
    %326 = vadd.xlane.f32.xlu0 %v325
    %v327 = vpop.xlane.xlu0 %326
    %v328 = vsel %vm297, %v275, 0.0
    %329 = vadd.xlane.f32.xlu0 %v328
    %v330 = vpop.xlane.xlu0 %329
    %v331 = vsel %vm297, %v278, 0.0
    %332 = vadd.xlane.f32.xlu0 %v331
    %v333 = vpop.xlane.xlu0 %332
    %v334 = vsel %vm297, %v283, 0.0
    %335 = vadd.xlane.f32.xlu0 %v334
    %v336 = vpop.xlane.xlu0 %335
    %v337 = vsel %vm297, %v286, 0.0
    %338 = vadd.xlane.f32.xlu0 %v337
    %v339 = vpop.xlane.xlu0 %338
    %v340 = vsel %vm297, %v291, 0.0
    %341 = vadd.xlane.f32.xlu0 %v340
    %v342 = vpop.xlane.xlu0 %341
    %v343 = vsel %vm297, %v294, 0.0
    %344 = vadd.xlane.f32.xlu0 %v343
    %v345 = vpop.xlane.xlu0 %344
    %v346 = vrcp.pop 16.0
    %v347 = vmul.f32 %v300, %v346
    %v348 = vmul.f32 %v303, %v346
    %v349 = vmul.f32 %v306, %v346
    %v350 = vmul.f32 %v309, %v346
    %v351 = vmul.f32 %v312, %v346
    %v352 = vmul.f32 %v315, %v346
    %v353 = vmul.f32 %v318, %v346
    %v354 = vmul.f32 %v321, %v346
    %v355 = vmul.f32 %v324, %v346
    %v356 = vmul.f32 %v327, %v346
    %v357 = vmul.f32 %v330, %v346
    %v358 = vmul.f32 %v333, %v346
    %v359 = vmul.f32 %v336, %v346
    %v360 = vmul.f32 %v339, %v346
    %v361 = vmul.f32 %v342, %v346
    %v362 = vmul.f32 %v345, %v346
    %v363 = vsub.f32 %v235, %v347
    %v364 = vsub.f32 %v238, %v348
    %v365 = vsub.f32 %v243, %v349
    %v366 = vsub.f32 %v246, %v350
    %v367 = vsub.f32 %v251, %v351
    %v368 = vsub.f32 %v254, %v352
    %v369 = vsub.f32 %v259, %v353
    %v370 = vsub.f32 %v262, %v354
    %v371 = vsub.f32 %v267, %v355
    %v372 = vsub.f32 %v270, %v356
    %v373 = vsub.f32 %v275, %v357
    %v374 = vsub.f32 %v278, %v358
    %v375 = vsub.f32 %v283, %v359
    %v376 = vsub.f32 %v286, %v360
    %v377 = vsub.f32 %v291, %v361
    %v378 = vsub.f32 %v294, %v362
    %v379 = vmul.f32 %v363, %v363
    %v380 = vmul.f32 %v364, %v364
    %v381 = vmul.f32 %v365, %v365
    %v382 = vmul.f32 %v366, %v366
    %v383 = vmul.f32 %v367, %v367
    %v384 = vmul.f32 %v368, %v368
    %v385 = vmul.f32 %v369, %v369
    %v386 = vmul.f32 %v370, %v370
    %v387 = vmul.f32 %v371, %v371
    %v388 = vmul.f32 %v372, %v372
    %v389 = vmul.f32 %v373, %v373
    %v390 = vmul.f32 %v374, %v374
    %v391 = vmul.f32 %v375, %v375
    %v392 = vmul.f32 %v376, %v376
    %v393 = vmul.f32 %v377, %v377
    %v394 = vmul.f32 %v378, %v378
    %v395 = vsel %vm297, %v379, 0.0
    %396 = vadd.xlane.f32.xlu0 %v395
    %v397 = vpop.xlane.xlu0 %396
    %v398 = vsel %vm297, %v380, 0.0
    %399 = vadd.xlane.f32.xlu0 %v398
    %v400 = vpop.xlane.xlu0 %399
    %v401 = vsel %vm297, %v381, 0.0
    %402 = vadd.xlane.f32.xlu0 %v401
    %v403 = vpop.xlane.xlu0 %402
    %v404 = vsel %vm297, %v382, 0.0
    %405 = vadd.xlane.f32.xlu0 %v404
    %v406 = vpop.xlane.xlu0 %405
    %v407 = vsel %vm297, %v383, 0.0
    %408 = vadd.xlane.f32.xlu0 %v407
    %v409 = vpop.xlane.xlu0 %408
    %v410 = vsel %vm297, %v384, 0.0
    %411 = vadd.xlane.f32.xlu0 %v410
    %v412 = vpop.xlane.xlu0 %411
    %v413 = vsel %vm297, %v385, 0.0
    %414 = vadd.xlane.f32.xlu0 %v413
    %v415 = vpop.xlane.xlu0 %414
    %v416 = vsel %vm297, %v386, 0.0
    %417 = vadd.xlane.f32.xlu0 %v416
    %v418 = vpop.xlane.xlu0 %417
    %v419 = vsel %vm297, %v387, 0.0
    %420 = vadd.xlane.f32.xlu0 %v419
    %v421 = vpop.xlane.xlu0 %420
    %v422 = vsel %vm297, %v388, 0.0
    %423 = vadd.xlane.f32.xlu0 %v422
    %v424 = vpop.xlane.xlu0 %423
    %v425 = vsel %vm297, %v389, 0.0
    %426 = vadd.xlane.f32.xlu0 %v425
    %v427 = vpop.xlane.xlu0 %426
    %v428 = vsel %vm297, %v390, 0.0
    %429 = vadd.xlane.f32.xlu0 %v428
    %v430 = vpop.xlane.xlu0 %429
    %v431 = vsel %vm297, %v391, 0.0
    %432 = vadd.xlane.f32.xlu0 %v431
    %v433 = vpop.xlane.xlu0 %432
    %v434 = vsel %vm297, %v392, 0.0
    %435 = vadd.xlane.f32.xlu0 %v434
    %v436 = vpop.xlane.xlu0 %435
    %v437 = vsel %vm297, %v393, 0.0
    %438 = vadd.xlane.f32.xlu0 %v437
    %v439 = vpop.xlane.xlu0 %438
    %v440 = vsel %vm297, %v394, 0.0
    %441 = vadd.xlane.f32.xlu0 %v440
    %v442 = vpop.xlane.xlu0 %441
    %v443 = vmul.f32 %v397, %v346
    %v444 = vmul.f32 %v400, %v346
    %v445 = vmul.f32 %v403, %v346
    %v446 = vmul.f32 %v406, %v346
    %v447 = vmul.f32 %v409, %v346
    %v448 = vmul.f32 %v412, %v346
    %v449 = vmul.f32 %v415, %v346
    %v450 = vmul.f32 %v418, %v346
    %v451 = vmul.f32 %v421, %v346
    %v452 = vmul.f32 %v424, %v346
    %v453 = vmul.f32 %v427, %v346
    %v454 = vmul.f32 %v430, %v346
    %v455 = vmul.f32 %v433, %v346
    %v456 = vmul.f32 %v436, %v346
    %v457 = vmul.f32 %v439, %v346
    %v458 = vmul.f32 %v442, %v346
    %v459 = vadd.f32 %v443, 1e-05
    %v460 = vadd.f32 %v444, 1e-05
    %v461 = vadd.f32 %v445, 1e-05
    %v462 = vadd.f32 %v446, 1e-05
    %v463 = vadd.f32 %v447, 1e-05
    %v464 = vadd.f32 %v448, 1e-05
    %v465 = vadd.f32 %v449, 1e-05
    %v466 = vadd.f32 %v450, 1e-05
    %v467 = vadd.f32 %v451, 1e-05
    %v468 = vadd.f32 %v452, 1e-05
    %v469 = vadd.f32 %v453, 1e-05
    %v470 = vadd.f32 %v454, 1e-05
    %v471 = vadd.f32 %v455, 1e-05
    %v472 = vadd.f32 %v456, 1e-05
    %v473 = vadd.f32 %v457, 1e-05
    %v474 = vadd.f32 %v458, 1e-05
    %v475 = vrsqrt.pop %v459
    %v476 = vrsqrt.pop %v460
    %v477 = vrsqrt.pop %v461
    %v478 = vrsqrt.pop %v462
    %v479 = vrsqrt.pop %v463
    %v480 = vrsqrt.pop %v464
    %v481 = vrsqrt.pop %v465
    %v482 = vrsqrt.pop %v466
    %v483 = vrsqrt.pop %v467
    %v484 = vrsqrt.pop %v468
    %v485 = vrsqrt.pop %v469
    %v486 = vrsqrt.pop %v470
    %v487 = vrsqrt.pop %v471
    %v488 = vrsqrt.pop %v472
    %v489 = vrsqrt.pop %v473
    %v490 = vrsqrt.pop %v474
    %v491 = vmul.f32 %v363, %v475
    %v492 = vmul.f32 %v364, %v476
    %v493 = vmul.f32 %v365, %v477
    %v494 = vmul.f32 %v366, %v478
    %v495 = vmul.f32 %v367, %v479
    %v496 = vmul.f32 %v368, %v480
    %v497 = vmul.f32 %v369, %v481
    %v498 = vmul.f32 %v370, %v482
    %v499 = vmul.f32 %v371, %v483
    %v500 = vmul.f32 %v372, %v484
    %v501 = vmul.f32 %v373, %v485
    %v502 = vmul.f32 %v374, %v486
    %v503 = vmul.f32 %v375, %v487
    %v504 = vmul.f32 %v376, %v488
    %v505 = vmul.f32 %v377, %v489
    %v506 = vmul.f32 %v378, %v490
    %v507 = vld [vmem:[#allocation8] sm:$0x1]
    %v509 = vlaneseq
    %v510 = vshrl.u32 %v509, 7
    %v511 = vsub.s32 0, %v510
    %v512 = vrot.slane %v507, %v511
    %v514 = vmul.f32 %v491, %v512
    %v515 = vmul.f32 %v492, %v512
    %v516 = vmul.f32 %v493, %v512
    %v517 = vmul.f32 %v494, %v512
    %v518 = vmul.f32 %v495, %v512
    %v519 = vmul.f32 %v496, %v512
    %v520 = vmul.f32 %v497, %v512
    %v521 = vmul.f32 %v498, %v512
    %v522 = vmul.f32 %v499, %v512
    %v523 = vmul.f32 %v500, %v512
    %v524 = vmul.f32 %v501, %v512
    %v525 = vmul.f32 %v502, %v512
    %v526 = vmul.f32 %v503, %v512
    %v527 = vmul.f32 %v504, %v512
    %v528 = vmul.f32 %v505, %v512
    %v529 = vmul.f32 %v506, %v512
    %v530 = vld [vmem:[#allocation10] sm:$0x1]
    %v532 = vlaneseq
    %v533 = vshrl.u32 %v532, 7
    %v534 = vsub.s32 0, %v533
    %v535 = vrot.slane %v530, %v534
    %v537 = vadd.f32 %v514, %v535
    %v538 = vadd.f32 %v515, %v535
    %v539 = vadd.f32 %v516, %v535
    %v540 = vadd.f32 %v517, %v535
    %v541 = vadd.f32 %v518, %v535
    %v542 = vadd.f32 %v519, %v535
    %v543 = vadd.f32 %v520, %v535
    %v544 = vadd.f32 %v521, %v535
    %v545 = vadd.f32 %v522, %v535
    %v546 = vadd.f32 %v523, %v535
    %v547 = vadd.f32 %v524, %v535
    %v548 = vadd.f32 %v525, %v535
    %v549 = vadd.f32 %v526, %v535
    %v550 = vadd.f32 %v527, %v535
    %v551 = vadd.f32 %v528, %v535
    %v552 = vadd.f32 %v529, %v535
    %v553 = vld [vmem:[#allocation5] sm:$0xff]
    %v554 = vld [vmem:[#allocation5 + $0x8] sm:$0xff]
    %v555 = vld [vmem:[#allocation5 + $0x10] sm:$0xff]
    %v556 = vld [vmem:[#allocation5 + $0x18] sm:$0xff]
    %v557 = vld [vmem:[#allocation5 + $0x20] sm:$0xff]
    %v558 = vld [vmem:[#allocation5 + $0x28] sm:$0xff]
    %v559 = vld [vmem:[#allocation5 + $0x30] sm:$0xff]
    %v560 = vld [vmem:[#allocation5 + $0x38] sm:$0xff]
    %v561 = vld [vmem:[#allocation5 + $0x40] sm:$0xff]
    %v562 = vld [vmem:[#allocation5 + $0x48] sm:$0xff]
    %v563 = vld [vmem:[#allocation5 + $0x50] sm:$0xff]
    %v564 = vld [vmem:[#allocation5 + $0x58] sm:$0xff]
    %v565 = vld [vmem:[#allocation5 + $0x60] sm:$0xff]
    %v566 = vld [vmem:[#allocation5 + $0x68] sm:$0xff]
    %v567 = vld [vmem:[#allocation5 + $0x70] sm:$0xff]
    %v568 = vld [vmem:[#allocation5 + $0x78] sm:$0xff]
    %v569 = vsub.f32 0.0, %v553
    %v570 = vsub.f32 0.0, %v554
    %v571 = vsub.f32 0.0, %v555
    %v572 = vsub.f32 0.0, %v556
    %v573 = vsub.f32 0.0, %v557
    %v574 = vsub.f32 0.0, %v558
    %v575 = vsub.f32 0.0, %v559
    %v576 = vsub.f32 0.0, %v560
    %v577 = vsub.f32 0.0, %v561
    %v578 = vsub.f32 0.0, %v562
    %v579 = vsub.f32 0.0, %v563
    %v580 = vsub.f32 0.0, %v564
    %v581 = vsub.f32 0.0, %v565
    %v582 = vsub.f32 0.0, %v566
    %v583 = vsub.f32 0.0, %v567
    %v584 = vsub.f32 0.0, %v568
    %v585 = vmul.f32 %v569, 1.442695
    %v586 = vpow.pop %v585
    %v587 = vmul.f32 %v570, 1.442695
    %v588 = vpow.pop %v587
    %v589 = vmul.f32 %v571, 1.442695
    %v590 = vpow.pop %v589
    %v591 = vmul.f32 %v572, 1.442695
    %v592 = vpow.pop %v591
    %v593 = vmul.f32 %v573, 1.442695
    %v594 = vpow.pop %v593
    %v595 = vmul.f32 %v574, 1.442695
    %v596 = vpow.pop %v595
    %v597 = vmul.f32 %v575, 1.442695
    %v598 = vpow.pop %v597
    %v599 = vmul.f32 %v576, 1.442695
    %v600 = vpow.pop %v599
    %v601 = vmul.f32 %v577, 1.442695
    %v602 = vpow.pop %v601
    %v603 = vmul.f32 %v578, 1.442695
    %v604 = vpow.pop %v603
    %v605 = vmul.f32 %v579, 1.442695
    %v606 = vpow.pop %v605
    %v607 = vmul.f32 %v580, 1.442695
    %v608 = vpow.pop %v607
    %v609 = vmul.f32 %v581, 1.442695
    %v610 = vpow.pop %v609
    %v611 = vmul.f32 %v582, 1.442695
    %v612 = vpow.pop %v611
    %v613 = vmul.f32 %v583, 1.442695
    %v614 = vpow.pop %v613
    %v615 = vmul.f32 %v584, 1.442695
    %v616 = vpow.pop %v615
    %v617 = vadd.f32 %v586, 1.0
    %v618 = vadd.f32 %v588, 1.0
    %v619 = vadd.f32 %v590, 1.0
    %v620 = vadd.f32 %v592, 1.0
    %v621 = vadd.f32 %v594, 1.0
    %v622 = vadd.f32 %v596, 1.0
    %v623 = vadd.f32 %v598, 1.0
    %v624 = vadd.f32 %v600, 1.0
    %v625 = vadd.f32 %v602, 1.0
    %v626 = vadd.f32 %v604, 1.0
    %v627 = vadd.f32 %v606, 1.0
    %v628 = vadd.f32 %v608, 1.0
    %v629 = vadd.f32 %v610, 1.0
    %v630 = vadd.f32 %v612, 1.0
    %v631 = vadd.f32 %v614, 1.0
    %v632 = vadd.f32 %v616, 1.0
    %v633 = vrcp.pop %v617
    %v634 = vrcp.pop %v618
    %v635 = vrcp.pop %v619
    %v636 = vrcp.pop %v620
    %v637 = vrcp.pop %v621
    %v638 = vrcp.pop %v622
    %v639 = vrcp.pop %v623
    %v640 = vrcp.pop %v624
    %v641 = vrcp.pop %v625
    %v642 = vrcp.pop %v626
    %v643 = vrcp.pop %v627
    %v644 = vrcp.pop %v628
    %v645 = vrcp.pop %v629
    %v646 = vrcp.pop %v630
    %v647 = vrcp.pop %v631
    %v648 = vrcp.pop %v632
    %v649 = vmul.f32 %v553, %v633
    %v650 = vmul.f32 %v554, %v634
    %v651 = vmul.f32 %v555, %v635
    %v652 = vmul.f32 %v556, %v636
    %v653 = vmul.f32 %v557, %v637
    %v654 = vmul.f32 %v558, %v638
    %v655 = vmul.f32 %v559, %v639
    %v656 = vmul.f32 %v560, %v640
    %v657 = vmul.f32 %v561, %v641
    %v658 = vmul.f32 %v562, %v642
    %v659 = vmul.f32 %v563, %v643
    %v660 = vmul.f32 %v564, %v644
    %v661 = vmul.f32 %v565, %v645
    %v662 = vmul.f32 %v566, %v646
    %v663 = vmul.f32 %v567, %v647
    %v664 = vmul.f32 %v568, %v648
    %v665 = vmul.f32 %v537, %v649
    %v666 = vmul.f32 %v538, %v650
    %v667 = vmul.f32 %v539, %v651
    %v668 = vmul.f32 %v540, %v652
    %v669 = vmul.f32 %v541, %v653
    %v670 = vmul.f32 %v542, %v654
    %v671 = vmul.f32 %v543, %v655
    %v672 = vmul.f32 %v544, %v656
    %v673 = vmul.f32 %v545, %v657
    %v674 = vmul.f32 %v546, %v658
    %v675 = vmul.f32 %v547, %v659
    %v676 = vmul.f32 %v548, %v660
    %v677 = vmul.f32 %v549, %v661
    %v678 = vmul.f32 %v550, %v662
    %v679 = vmul.f32 %v551, %v663
    %v680 = vmul.f32 %v552, %v664
    %v681 = vpack.c.bf16 %v666, %v665
    %v682 = vpack.c.bf16 %v668, %v667
    %v683 = vpack.c.bf16 %v670, %v669
    %v684 = vpack.c.bf16 %v672, %v671
    %v685 = vpack.c.bf16 %v674, %v673
    %v686 = vpack.c.bf16 %v676, %v675
    %v687 = vpack.c.bf16 %v678, %v677
    %v688 = vpack.c.bf16 %v680, %v679
    %v689 = vld [vmem:[#allocation11] sm:$0xf]
    %v690 = vld [vmem:[#allocation11 + $0x4] sm:$0xf]
    %v693 = vunpack.c.l.b16 %v689
    %v694 = vunpack.c.l.b16 %v690
    %v695 = vpack.c.b16 %v694, %v693
    %v698 = vsel %vm297, %v681, 0
    %v701 = vsel %vm297, %v682, 0
    %v704 = vsel %vm297, %v683, 0
    %v707 = vsel %vm297, %v684, 0
    %v710 = vsel %vm297, %v685, 0
    %v713 = vsel %vm297, %v686, 0
    %v716 = vsel %vm297, %v687, 0
    %v719 = vsel %vm297, %v688, 0
    %721 = vmatprep.subr.bf16.mxu0 0
    %722 = vmatpush1.bf16.msra.mxu0 %v695
    %723 = vmatprep.subr.bf16.mxu0 0
    %724 = vmatpush1.bf16.msra.mxu0 0
    %725 = vmatprep.subr.bf16.mxu0 0
    %726 = vmatpush1.bf16.msra.mxu0 0
    %727 = vmatprep.subr.bf16.mxu0 0
    %728 = vmatpush1.bf16.msra.mxu0 0
    %729 = vmatprep.subr.bf16.mxu0 0
    %730 = vmatpush1.bf16.msra.mxu0 0
    %731 = vmatprep.subr.bf16.mxu0 0
    %732 = vmatpush1.bf16.msra.mxu0 0
    %733 = vmatprep.subr.bf16.mxu0 0
    %734 = vmatpush1.bf16.msra.mxu0 0
    %735 = vmatprep.subr.bf16.mxu0 0
    %736 = vmatpush1.bf16.msra.mxu0 0
    %737 = vmatprep.subr.bf16.mxu0 0
    %738 = vmatpush1.bf16.msra.mxu0 0
    %739 = vmatprep.subr.bf16.mxu0 0
    %740 = vmatpush1.bf16.msra.mxu0 0
    %741 = vmatprep.subr.bf16.mxu0 0
    %742 = vmatpush1.bf16.msra.mxu0 0
    %743 = vmatprep.subr.bf16.mxu0 0
    %744 = vmatpush1.bf16.msra.mxu0 0
    %745 = vmatprep.subr.bf16.mxu0 0
    %746 = vmatpush1.bf16.msra.mxu0 0
    %747 = vmatprep.subr.bf16.mxu0 0
    %748 = vmatpush1.bf16.msra.mxu0 0
    %749 = vmatprep.subr.bf16.mxu0 0
    %750 = vmatpush1.bf16.msra.mxu0 0
    %751 = vmatprep.subr.bf16.mxu0 0
    %752 = vmatpush1.bf16.msra.mxu0 0
    %753 = vmatprep.mubr.bf16.mxu0 0
    %754 = vmatmul.mubr.bf16.gmra.mrb[0].mxu0 %v698
    %v755 = vpop.f32.mrb[0].mxu0
    %v756 = vadd.f32 0.0, %v755
    %v757 = vpop.f32.mrb[0].mxu0
    %v758 = vpop.f32.mrb[0].mxu0
    %v759 = vadd.f32 0.0, %v758
    %v760 = vpop.f32.mrb[0].mxu0
    %761 = vmatprep.mubr.bf16.mxu0 0
    %762 = vmatmul.mubr.bf16.gmra.mrb[0].mxu0 %v701
    %v763 = vpop.f32.mrb[0].mxu0
    %v764 = vadd.f32 0.0, %v763
    %v765 = vpop.f32.mrb[0].mxu0
    %v766 = vpop.f32.mrb[0].mxu0
    %v767 = vadd.f32 0.0, %v766
    %v768 = vpop.f32.mrb[0].mxu0
    %769 = vmatprep.mubr.bf16.mxu0 0
    %770 = vmatmul.mubr.bf16.gmra.mrb[0].mxu0 %v704
    %v771 = vpop.f32.mrb[0].mxu0
    %v772 = vadd.f32 0.0, %v771
    %v773 = vpop.f32.mrb[0].mxu0
    %v774 = vpop.f32.mrb[0].mxu0
    %v775 = vadd.f32 0.0, %v774
    %v776 = vpop.f32.mrb[0].mxu0
    %777 = vmatprep.mubr.bf16.mxu0 0
    %778 = vmatmul.mubr.bf16.gmra.mrb[0].mxu0 %v707
    %v779 = vpop.f32.mrb[0].mxu0
    %v780 = vadd.f32 0.0, %v779
    %v781 = vpop.f32.mrb[0].mxu0
    %v782 = vpop.f32.mrb[0].mxu0
    %v783 = vadd.f32 0.0, %v782
    %v784 = vpop.f32.mrb[0].mxu0
    %785 = vmatprep.mubr.bf16.mxu0 0
    %786 = vmatmul.mubr.bf16.gmra.mrb[0].mxu0 %v710
    %v787 = vpop.f32.mrb[0].mxu0
    %v788 = vadd.f32 0.0, %v787
    %v789 = vpop.f32.mrb[0].mxu0
    %v790 = vpop.f32.mrb[0].mxu0
    %v791 = vadd.f32 0.0, %v790
    %v792 = vpop.f32.mrb[0].mxu0
    %793 = vmatprep.mubr.bf16.mxu0 0
    %794 = vmatmul.mubr.bf16.gmra.mrb[0].mxu0 %v713
    %v795 = vpop.f32.mrb[0].mxu0
    %v796 = vadd.f32 0.0, %v795
    %v797 = vpop.f32.mrb[0].mxu0
    %v798 = vpop.f32.mrb[0].mxu0
    %v799 = vadd.f32 0.0, %v798
    %v800 = vpop.f32.mrb[0].mxu0
    %801 = vmatprep.mubr.bf16.mxu0 0
    %802 = vmatmul.mubr.bf16.gmra.mrb[0].mxu0 %v716
    %v803 = vpop.f32.mrb[0].mxu0
    %v804 = vadd.f32 0.0, %v803
    %v805 = vpop.f32.mrb[0].mxu0
    %v806 = vpop.f32.mrb[0].mxu0
    %v807 = vadd.f32 0.0, %v806
    %v808 = vpop.f32.mrb[0].mxu0
    %809 = vmatprep.mubr.bf16.mxu0 0
    %810 = vmatmul.mubr.bf16.gmra.mrb[0].mxu0 %v719
    %v811 = vpop.f32.mrb[0].mxu0
    %v812 = vadd.f32 0.0, %v811
    %v813 = vpop.f32.mrb[0].mxu0
    %v814 = vpop.f32.mrb[0].mxu0
    %v815 = vadd.f32 0.0, %v814
    %v816 = vpop.f32.mrb[0].mxu0
    %817 = vdwg.mxu0
    %818 = vst.msk [vmem:[#allocation13] sm:$0xff] %vm297, %v756
    %819 = vst.msk [vmem:[#allocation13 + $0x8] sm:$0xff] %vm297, %v759
    %820 = vst.msk [vmem:[#allocation13 + $0x10] sm:$0xff] %vm297, %v764
    %821 = vst.msk [vmem:[#allocation13 + $0x18] sm:$0xff] %vm297, %v767
    %822 = vst.msk [vmem:[#allocation13 + $0x20] sm:$0xff] %vm297, %v772
    %823 = vst.msk [vmem:[#allocation13 + $0x28] sm:$0xff] %vm297, %v775
    %824 = vst.msk [vmem:[#allocation13 + $0x30] sm:$0xff] %vm297, %v780
    %825 = vst.msk [vmem:[#allocation13 + $0x38] sm:$0xff] %vm297, %v783
    %826 = vst.msk [vmem:[#allocation13 + $0x40] sm:$0xff] %vm297, %v788
    %827 = vst.msk [vmem:[#allocation13 + $0x48] sm:$0xff] %vm297, %v791
    %828 = vst.msk [vmem:[#allocation13 + $0x50] sm:$0xff] %vm297, %v796
    %829 = vst.msk [vmem:[#allocation13 + $0x58] sm:$0xff] %vm297, %v799
    %830 = vst.msk [vmem:[#allocation13 + $0x60] sm:$0xff] %vm297, %v804
    %831 = vst.msk [vmem:[#allocation13 + $0x68] sm:$0xff] %vm297, %v807
    %832 = vst.msk [vmem:[#allocation13 + $0x70] sm:$0xff] %vm297, %v812
    %833 = vst.msk [vmem:[#allocation13 + $0x78] sm:$0xff] %vm297, %v815
    // Predicated region
    $region50: #{ss2depthconv_k1_forward.7} parent=1 // pred_check
      _
    $region51: #{ss2depthconv_k1_forward.7} parent=1 // pred_check_branch
      %835 = sbr.rel (0) target = $region53
    $region52: #{ss2depthconv_k1_forward.7} parent=1 // pred_region
      %s837 = ssub.s32 2048, 2048
      %838 = vsyncadd [#allocation4], %s837
      %s839 = sshll.u32 [#allocation13], 4
      %s840 = int_to_ptr.vmem [resolvable:$true] %s839
      %845 = dma.vmem_to_hbm [thread:$0]  %s840, 2048, %s6, [#allocation4], 128, 128, 8
    $region53: #{ss2depthconv_k1_forward.7} parent=1 // pred_fallthru
      _
    // Predicated region
    $region54: #{ss2depthconv_k1_forward.7} parent=1 // pred_check
      _
    $region55: #{ss2depthconv_k1_forward.7} parent=1 // pred_check_branch
      %847 = sbr.rel (0) target = $region57
    $region56: #{ss2depthconv_k1_forward.7} parent=1 // pred_region
      %848 = dma.done [#allocation4], 2048
    $region57: #{ss2depthconv_k1_forward.7} parent=1 // pred_fallthru
      _
    %849 = vsyncpa [#allocation3], 1
    %850 = vsyncpa [#allocation6], 1
    %851 = vsyncpa [#allocation9], 1
    %852 = vsyncpa [#allocation12], 1
    %853 = vsyncpa [#allocation4], 1

// kernel: ss2depthconv_k1_forward.6
$region0: #{ss2depthconv_k1_forward.6}
  #allocation0 [shape = 'u32[]', space=smem, size = 0x4, offset = 0x4, fixed_abs, tag = 'smem constant byte address 0x4 - core index']
  #allocation1 [shape = 'u32[144,128]{1,0:T(1,128)}', space=vmem, size = 0x12000, scoped, tag = 'internal scratch']
  #allocation2 [shape = 'f32[88,16,18]{2,1,0:T(8,128)}', space=vmem, size = 0xb0000, scoped, tag = 'scratch operand']
  #allocation3 [shape = 'f32[88,16,18]{2,1,0:T(8,128)}', space=vmem, size = 0xb0000, scoped, tag = 'scratch operand']
  #allocation4 [shape = 'f32[88,16,18]{2,1,0:T(8,128)}', space=vmem, size = 0xb0000, scoped, tag = 'scratch operand']
  #allocation5 [shape = 'f32[88,18]{1,0:T(8,128)}', space=vmem, size = 0xb000, scoped, tag = 'scratch operand']
  %s0 = inlined_call_operand.hbm [shape: f32[2,88,18], index: 0, kind: input, shape index: {}]
  %s1 = inlined_call_operand.hbm [shape: bf16[18,50], index: 1, kind: input, shape index: {}]
  %s2 = inlined_call_operand.hbm [shape: f32[16,18], index: 2, kind: input, shape index: {}]
  %s3 = inlined_call_operand.hbm [shape: f32[1,18], index: 3, kind: input, shape index: {}]
  %s4 = inlined_call_operand.hbm [shape: f32[1,18], index: 4, kind: input, shape index: {}]
  %s5 = inlined_call_operand.hbm [shape: f32[2,88,18], index: 5, kind: output, shape index: {}]
  %s6 = sld [smem:[#allocation0]]
  $region80: #{ss2depthconv_k1_forward.6} parent=0
    _
  %s8 = ssub.s32 1, %s6
  %s9 = scalar_select 0, %s8, %s6
  $region1: #{ss2depthconv_k1_forward.6} parent=0
    #allocation6 [shape = 'u8[90112]{0}', space=vmem, size = 0x16000, scoped, tag = 'input window, operand 0']
    #allocation7 [shape = 's32[2]{0}', space=sflag, size = 0x8, scoped, tag = 'scoped memory for ss2depthconv_k1_forward.6']
    #allocation8 [shape = 's32[2]{0}', space=sflag, size = 0x8, scoped, tag = 'scoped memory for ss2depthconv_k1_forward.6']
    #allocation9 [shape = 'u8[6144]{0}', space=vmem, size = 0x1800, scoped, tag = 'input window, operand 1, single buffered']
    #allocation10 [shape = 's32[1]{0}', space=sflag, size = 0x4, scoped, tag = 'scoped memory for ss2depthconv_k1_forward.6']
    #allocation11 [shape = 'u8[8192]{0}', space=vmem, size = 0x2000, scoped, tag = 'input window, operand 2, single buffered']
    #allocation12 [shape = 'u8[512]{0}', space=vmem, size = 0x400, scoped, tag = 'input window, operand 3, single buffered']
    #allocation13 [shape = 's32[1]{0}', space=sflag, size = 0x4, scoped, tag = 'scoped memory for ss2depthconv_k1_forward.6']
    #allocation14 [shape = 'u8[512]{0}', space=vmem, size = 0x400, scoped, tag = 'input window, operand 4, single buffered']
    #allocation15 [shape = 'u8[90112]{0}', space=vmem, size = 0x16000, scoped, tag = 'output window, operand 0']
    %10 = vsyncpa [#allocation7], 0
    %s11 = scalar_lea.sflag [#allocation7], 1
    %12 = vsyncpa %s11, 0
    %13 = vsyncpa [#allocation10], 0
    %14 = vsyncpa [#allocation13], 0
    %15 = vsyncpa [#allocation8], 0
    %s16 = scalar_lea.sflag [#allocation8], 1
    %17 = vsyncpa %s16, 0
    loop: start=0, step=1, limit=4
    $region2: #{ss2depthconv_k1_forward.6} parent=1 // loop_pre_header
      _
    $region3: #{ss2depthconv_k1_forward.6} parent=1 // loop_header
      %s19 = sphi 0, %s23
      %p20 = scmp.ge.s32.totalorder %s19, 4
      %s29 = sphi 0, %s31
      %s32 = sphi 0, %s29
      %s33 = sphi 0, %s32
      %s49 = sphi 0, %s33
      %s53 = sphi 0, %s53
      %s55 = sphi 0, %s53
      %s56 = sphi 0, %s55
      %s70 = sphi 0, %s56
      %s74 = sphi 0, %s74
      %s76 = sphi 0, %s74
      %s77 = sphi 0, %s76
      %s91 = sphi 0, %s77
      %s95 = sphi 0, %s95
      %s97 = sphi 0, %s95
      %s98 = sphi 0, %s97
      %s112 = sphi 0, %s98
      %s116 = sphi 0, %s116
      %s118 = sphi 0, %s116
      %s119 = sphi 0, %s118
      %s133 = sphi 0, %s119
      %s139 = sphi 0, %s141
      %s142 = sphi 0, %s139
      %s143 = sphi 0, %s142
      %s159 = sphi 0, %s143
    $region4: #{ss2depthconv_k1_forward.6} parent=1 // loop_header_branch
      %22 = sbr.rel (%p20) target = $region8
    $region5: #{ss2depthconv_k1_forward.6} parent=1 // loop_body
      %s24 = ssub.s32 %s19, 1
      %s25 = ssub.s32 %s19, 2
      %s26 = sadd.s32 %s19, 1
      %s27 = ssub.s32 %s19, %s26
      %p28 = scmp.eq.s32.totalorder %s27, 0
      %s30 = sadd.s32 %s29, 1
      %s31 = scalar_select %p28, %s29, %s30
      %p34 = pneg %p28
      %p35 = scmp.eq.s32.totalorder %s19, 1
      %p36 = por %p34, %p35
      %p37 = scmp.ne.s32.totalorder %s29, %s32
      %p38 = scmp.eq.s32.totalorder %s19, 0
      %p39 = por %p37, %p38
      %p40 = scmp.ne.s32.totalorder %s29, %s32
      %p41 = scmp.eq.s32.totalorder %s24, 1
      %p42 = por %p40, %p41
      %p43 = scmp.ne.s32.totalorder %s32, %s33
      %p44 = scmp.eq.s32.totalorder %s24, 0
      %p45 = por %p43, %p44
      %p46 = scmp.ne.s32.totalorder %s32, %s33
      %p47 = scmp.eq.s32.totalorder %s25, 1
      %p48 = por %p46, %p47
      %p50 = scmp.ne.s32.totalorder %s33, %s49
      %p51 = scmp.eq.s32.totalorder %s25, 0
      %p52 = por %p50, %p51
      %s54 = sadd.s32 %s53, 1
      %p57 = scmp.eq.s32.totalorder %s19, 1
      %p58 = scmp.ne.s32.totalorder %s53, %s55
      %p59 = scmp.eq.s32.totalorder %s19, 0
      %p60 = por %p58, %p59
      %p61 = scmp.ne.s32.totalorder %s53, %s55
      %p62 = scmp.eq.s32.totalorder %s24, 1
      %p63 = por %p61, %p62
      %p64 = scmp.ne.s32.totalorder %s55, %s56
      %p65 = scmp.eq.s32.totalorder %s24, 0
      %p66 = por %p64, %p65
      %p67 = scmp.ne.s32.totalorder %s55, %s56
      %p68 = scmp.eq.s32.totalorder %s25, 1
      %p69 = por %p67, %p68
      %p71 = scmp.ne.s32.totalorder %s56, %s70
      %p72 = scmp.eq.s32.totalorder %s25, 0
      %p73 = por %p71, %p72
      %s75 = sadd.s32 %s74, 1
      %p78 = scmp.eq.s32.totalorder %s19, 1
      %p79 = scmp.ne.s32.totalorder %s74, %s76
      %p80 = scmp.eq.s32.totalorder %s19, 0
      %p81 = por %p79, %p80
      %p82 = scmp.ne.s32.totalorder %s74, %s76
      %p83 = scmp.eq.s32.totalorder %s24, 1
      %p84 = por %p82, %p83
      %p85 = scmp.ne.s32.totalorder %s76, %s77
      %p86 = scmp.eq.s32.totalorder %s24, 0
      %p87 = por %p85, %p86
      %p88 = scmp.ne.s32.totalorder %s76, %s77
      %p89 = scmp.eq.s32.totalorder %s25, 1
      %p90 = por %p88, %p89
      %p92 = scmp.ne.s32.totalorder %s77, %s91
      %p93 = scmp.eq.s32.totalorder %s25, 0
      %p94 = por %p92, %p93
      %s96 = sadd.s32 %s95, 1
      %p99 = scmp.eq.s32.totalorder %s19, 1
      %p100 = scmp.ne.s32.totalorder %s95, %s97
      %p101 = scmp.eq.s32.totalorder %s19, 0
      %p102 = por %p100, %p101
      %p103 = scmp.ne.s32.totalorder %s95, %s97
      %p104 = scmp.eq.s32.totalorder %s24, 1
      %p105 = por %p103, %p104
      %p106 = scmp.ne.s32.totalorder %s97, %s98
      %p107 = scmp.eq.s32.totalorder %s24, 0
      %p108 = por %p106, %p107
      %p109 = scmp.ne.s32.totalorder %s97, %s98
      %p110 = scmp.eq.s32.totalorder %s25, 1
      %p111 = por %p109, %p110
      %p113 = scmp.ne.s32.totalorder %s98, %s112
      %p114 = scmp.eq.s32.totalorder %s25, 0
      %p115 = por %p113, %p114
      %s117 = sadd.s32 %s116, 1
      %p120 = scmp.eq.s32.totalorder %s19, 1
      %p121 = scmp.ne.s32.totalorder %s116, %s118
      %p122 = scmp.eq.s32.totalorder %s19, 0
      %p123 = por %p121, %p122
      %p124 = scmp.ne.s32.totalorder %s116, %s118
      %p125 = scmp.eq.s32.totalorder %s24, 1
      %p126 = por %p124, %p125
      %p127 = scmp.ne.s32.totalorder %s118, %s119
      %p128 = scmp.eq.s32.totalorder %s24, 0
      %p129 = por %p127, %p128
      %p130 = scmp.ne.s32.totalorder %s118, %s119
      %p131 = scmp.eq.s32.totalorder %s25, 1
      %p132 = por %p130, %p131
      %p134 = scmp.ne.s32.totalorder %s119, %s133
      %p135 = scmp.eq.s32.totalorder %s25, 0
      %p136 = por %p134, %p135
      %s137 = ssub.s32 %s19, %s26
      %p138 = scmp.eq.s32.totalorder %s137, 0
      %s140 = sadd.s32 %s139, 1
      %s141 = scalar_select %p138, %s139, %s140
      %p144 = pneg %p138
      %p145 = scmp.eq.s32.totalorder %s19, 1
      %p146 = por %p144, %p145
      %p147 = scmp.ne.s32.totalorder %s139, %s142
      %p148 = scmp.eq.s32.totalorder %s19, 0
      %p149 = por %p147, %p148
      %p150 = scmp.ne.s32.totalorder %s139, %s142
      %p151 = scmp.eq.s32.totalorder %s24, 1
      %p152 = por %p150, %p151
      %p153 = scmp.ne.s32.totalorder %s142, %s143
      %p154 = scmp.eq.s32.totalorder %s24, 0
      %p155 = por %p153, %p154
      %p156 = scmp.ne.s32.totalorder %s142, %s143
      %p157 = scmp.eq.s32.totalorder %s25, 1
      %p158 = por %p156, %p157
      %p160 = scmp.ne.s32.totalorder %s143, %s159
      %p161 = scmp.eq.s32.totalorder %s25, 0
      %p162 = por %p160, %p161
      %p163 = scmp.le.s32.totalorder 1, %s19
      %p164 = scmp.lt.s32.totalorder %s19, 3
      %p165 = pnand %p163, %p164
      %p166 = pneg %p165
      // Predicated region
      $region9: #{ss2depthconv_k1_forward.6} parent=5 // pred_check
        _
      $region10: #{ss2depthconv_k1_forward.6} parent=5 // pred_check_branch
        %168 = sbr.rel (%p165) target = $region12
      $region11: #{ss2depthconv_k1_forward.6} parent=5 // pred_region
        %s169 = ssub.s32 %s19, 1
        // Predicated region
        $region13: #{ss2depthconv_k1_forward.6} parent=11 // pred_check
          %p170 = pneg %p66
        $region14: #{ss2depthconv_k1_forward.6} parent=11 // pred_check_branch
          %172 = sbr.rel (%p170) target = $region16
        $region15: #{ss2depthconv_k1_forward.6} parent=11 // pred_region
          %s174 = ssub.s32 192, 192
          %175 = vsyncadd [#allocation10], %s174
          %s176 = sshll.u32 [#allocation9], 4
          %s177 = int_to_ptr.vmem [resolvable:$true] %s176
          %182 = dma.hbm_to_vmem [thread:$0]  %s1, 192, %s177, [#allocation10], 64, 64, 4
        $region16: #{ss2depthconv_k1_forward.6} parent=11 // pred_fallthru
          _
        // Predicated region
        $region17: #{ss2depthconv_k1_forward.6} parent=11 // pred_check
          %p183 = pneg %p87
        $region18: #{ss2depthconv_k1_forward.6} parent=11 // pred_check_branch
          %185 = sbr.rel (%p183) target = $region20
        $region19: #{ss2depthconv_k1_forward.6} parent=11 // pred_region
          %s187 = ssub.s32 256, 256
          %188 = vsyncadd [#allocation10], %s187
          %s189 = sshll.u32 [#allocation11], 4
          %s190 = int_to_ptr.vmem [resolvable:$true] %s189
          %195 = dma.hbm_to_vmem [thread:$0]  %s2, 256, %s190, [#allocation10], 128, 128, 8
        $region20: #{ss2depthconv_k1_forward.6} parent=11 // pred_fallthru
          _
        // Predicated region
        $region21: #{ss2depthconv_k1_forward.6} parent=11 // pred_check
          %p196 = pneg %p108
        $region22: #{ss2depthconv_k1_forward.6} parent=11 // pred_check_branch
          %198 = sbr.rel (%p196) target = $region24
        $region23: #{ss2depthconv_k1_forward.6} parent=11 // pred_region
          %s200 = ssub.s32 16, 16
          %201 = vsyncadd [#allocation13], %s200
          %s203 = sshll.u32 [#allocation12], 4
          %s204 = int_to_ptr.vmem [resolvable:$true] %s203
          %206 = dma.hbm_to_vmem [thread:$0]  %s3, 16, %s204, [#allocation13]
        $region24: #{ss2depthconv_k1_forward.6} parent=11 // pred_fallthru
          _
        // Predicated region
        $region25: #{ss2depthconv_k1_forward.6} parent=11 // pred_check
          %p207 = pneg %p129
        $region26: #{ss2depthconv_k1_forward.6} parent=11 // pred_check_branch
          %209 = sbr.rel (%p207) target = $region28
        $region27: #{ss2depthconv_k1_forward.6} parent=11 // pred_region
          %s211 = ssub.s32 16, 16
          %212 = vsyncadd [#allocation13], %s211
          %s214 = sshll.u32 [#allocation14], 4
          %s215 = int_to_ptr.vmem [resolvable:$true] %s214
          %217 = dma.hbm_to_vmem [thread:$0]  %s4, 16, %s215, [#allocation13]
        $region28: #{ss2depthconv_k1_forward.6} parent=11 // pred_fallthru
          _
      $region12: #{ss2depthconv_k1_forward.6} parent=5 // pred_fallthru
        _
      %p218 = scmp.lt.s32.totalorder %s19, 2
      // Predicated region
      $region29: #{ss2depthconv_k1_forward.6} parent=5 // pred_check
        %p219 = pneg %p218
      $region30: #{ss2depthconv_k1_forward.6} parent=5 // pred_check_branch
        %221 = sbr.rel (%p219) target = $region32
      $region31: #{ss2depthconv_k1_forward.6} parent=5 // pred_region
        // Predicated region
        $region33: #{ss2depthconv_k1_forward.6} parent=31 // pred_check
          %p222 = pneg %p39
        $region34: #{ss2depthconv_k1_forward.6} parent=31 // pred_check_branch
          %224 = sbr.rel (%p222) target = $region36
        $region35: #{ss2depthconv_k1_forward.6} parent=31 // pred_region
          %s225 = sand.u32 %s29, 1
          %s226 = scalar_lea.sflag [#allocation7], %s225
          %s227 = sand.u32 %s29, 1
          %s228 = smul.addr %s227, 88
          %s229 = scalar_lea.vmem [#allocation6], %s228
          %s231 = ssub.s32 1408, 1408
          %232 = vsyncadd %s226, %s231
          %s233 = smul.addr %s19, 11
          %s234 = smul.addr %s233, 128
          %s235 = scalar_lea.hbm %s0, %s234
          %s236 = sshll.u32 %s229, 4
          %s237 = int_to_ptr.vmem [resolvable:$true] %s236
          %242 = dma.hbm_to_vmem [thread:$0]  %s235, 1408, %s237, %s226, 128, 128, 8
        $region36: #{ss2depthconv_k1_forward.6} parent=31 // pred_fallthru
          _
      $region32: #{ss2depthconv_k1_forward.6} parent=5 // pred_fallthru
        _
      %p243 = scmp.le.s32.totalorder 1, %s19
      %p244 = scmp.lt.s32.totalorder %s19, 3
      %p245 = pnand %p243, %p244
      %p246 = pneg %p245
      // Predicated region
      $region37: #{ss2depthconv_k1_forward.6} parent=5 // pred_check
        _
      $region38: #{ss2depthconv_k1_forward.6} parent=5 // pred_check_branch
        %248 = sbr.rel (%p245) target = $region40
      $region39: #{ss2depthconv_k1_forward.6} parent=5 // pred_region
        %s249 = ssub.s32 %s19, 1
        %s250 = sand.u32 %s32, 1
        %s251 = scalar_lea.sflag [#allocation7], %s250
        %s252 = sand.u32 %s32, 1
        %s253 = smul.addr %s252, 88
        %s254 = scalar_lea.vmem [#allocation6], %s253
        // Predicated region
        $region41: #{ss2depthconv_k1_forward.6} parent=39 // pred_check
          %p255 = pneg %p45
        $region42: #{ss2depthconv_k1_forward.6} parent=39 // pred_check_branch
          %257 = sbr.rel (%p255) target = $region44
        $region43: #{ss2depthconv_k1_forward.6} parent=39 // pred_region
          %258 = dma.done %s251, 1408
        $region44: #{ss2depthconv_k1_forward.6} parent=39 // pred_fallthru
          _
        // Predicated region
        $region45: #{ss2depthconv_k1_forward.6} parent=39 // pred_check
          %p259 = pneg %p66
        $region46: #{ss2depthconv_k1_forward.6} parent=39 // pred_check_branch
          %261 = sbr.rel (%p259) target = $region48
        $region47: #{ss2depthconv_k1_forward.6} parent=39 // pred_region
          %262 = dma.done [#allocation10], 192
        $region48: #{ss2depthconv_k1_forward.6} parent=39 // pred_fallthru
          _
        // Predicated region
        $region49: #{ss2depthconv_k1_forward.6} parent=39 // pred_check
          %p263 = pneg %p87
        $region50: #{ss2depthconv_k1_forward.6} parent=39 // pred_check_branch
          %265 = sbr.rel (%p263) target = $region52
        $region51: #{ss2depthconv_k1_forward.6} parent=39 // pred_region
          %266 = dma.done [#allocation10], 256
        $region52: #{ss2depthconv_k1_forward.6} parent=39 // pred_fallthru
          _
        // Predicated region
        $region53: #{ss2depthconv_k1_forward.6} parent=39 // pred_check
          %p267 = pneg %p108
        $region54: #{ss2depthconv_k1_forward.6} parent=39 // pred_check_branch
          %269 = sbr.rel (%p267) target = $region56
        $region55: #{ss2depthconv_k1_forward.6} parent=39 // pred_region
          %270 = dma.done [#allocation13], 16
        $region56: #{ss2depthconv_k1_forward.6} parent=39 // pred_fallthru
          _
        // Predicated region
        $region57: #{ss2depthconv_k1_forward.6} parent=39 // pred_check
          %p271 = pneg %p129
        $region58: #{ss2depthconv_k1_forward.6} parent=39 // pred_check_branch
          %273 = sbr.rel (%p271) target = $region60
        $region59: #{ss2depthconv_k1_forward.6} parent=39 // pred_region
          %274 = dma.done [#allocation13], 16
        $region60: #{ss2depthconv_k1_forward.6} parent=39 // pred_fallthru
          _
        %s275 = sand.u32 %s32, 1
        %s276 = scalar_lea.sflag [#allocation7], %s275
        %s277 = sand.u32 %s32, 1
        %s278 = smul.addr %s277, 88
        %s279 = scalar_lea.vmem [#allocation6], %s278
        %p280 = pneg %p45
        %p281 = pneg %p42
        %p282 = pneg %p66
        %p283 = pneg %p63
        %p284 = pneg %p87
        %p285 = pneg %p84
        %p286 = pneg %p108
        %p287 = pneg %p105
        %p288 = pneg %p129
        %p289 = pneg %p126
        %p290 = pneg %p155
        %p291 = pneg %p152
        %s292 = sand.u32 %s142, 1
        %s293 = scalar_lea.sflag [#allocation8], %s292
        %s294 = sand.u32 %s142, 1
        %s295 = smul.addr %s294, 88
        %s296 = scalar_lea.vmem [#allocation15], %s295
        %v298 = vld [vmem:[#allocation11] sm:$0xff]
        %v299 = vld [vmem:[#allocation11 + $0x8] sm:$0xff]
        %v300 = vld [vmem:[%s254] sm:$0xff]
        %v301 = vld [vmem:[%s254 + $0x8] sm:$0xff]
        %v302 = vld [vmem:[%s254 + $0x10] sm:$0xff]
        %v303 = vld [vmem:[%s254 + $0x18] sm:$0xff]
        %v304 = vld [vmem:[%s254 + $0x20] sm:$0xff]
        %v305 = vld [vmem:[%s254 + $0x28] sm:$0xff]
        %v306 = vld [vmem:[%s254 + $0x30] sm:$0xff]
        %v307 = vld [vmem:[%s254 + $0x38] sm:$0xff]
        %v308 = vld [vmem:[%s254 + $0x40] sm:$0xff]
        %v309 = vld [vmem:[%s254 + $0x48] sm:$0xff]
        %v310 = vld [vmem:[%s254 + $0x50] sm:$0xff]
        %v311 = vpack.c.bf16 %v301, %v300
        %v312 = vpack.c.bf16 %v303, %v302
        %v313 = vpack.c.bf16 %v305, %v304
        %v314 = vpack.c.bf16 %v307, %v306
        %v315 = vpack.c.bf16 %v309, %v308
        %v316 = vpack.c.bf16 %v310, %v310
        %v317 = vld [vmem:[#allocation9] sm:$0xf]
        %v318 = vld [vmem:[#allocation9 + $0x4] sm:$0xf]
        %v319 = vld [vmem:[#allocation9 + $0x8] sm:$0x1]
        %v323 = vunpack.c.l.b16 %v317
        %v324 = vunpack.c.l.b16 %v318
        %v325 = vunpack.c.l.b16 %v319
        %v326 = vpack.c.b16 %v324, %v323
        %v327 = vpack.c.b16 %v325, %v325
        %vm329 = vcmask 146432
        %v331 = vsel %vm329, %v311, 0
        %v334 = vsel %vm329, %v312, 0
        %v337 = vsel %vm329, %v313, 0
        %v340 = vsel %vm329, %v314, 0
        %v343 = vsel %vm329, %v315, 0
        %v346 = vsel %vm329, %v316, 0
        %vm348 = vcmask 1040384
        %v350 = vsel %vm348, %v327, 0
        %352 = vmatprep.subr.bf16.mxu0 0
        %353 = vmatpush1.bf16.msra.mxu0 %v326
        %354 = vmatprep.subr.bf16.mxu0 0
        %355 = vmatpush1.bf16.msra.mxu0 %v350
        %356 = vmatprep.subr.bf16.mxu0 0
        %357 = vmatpush1.bf16.msra.mxu0 0
        %358 = vmatprep.subr.bf16.mxu0 0
        %359 = vmatpush1.bf16.msra.mxu0 0
        %360 = vmatprep.subr.bf16.mxu0 0
        %361 = vmatpush1.bf16.msra.mxu0 0
        %362 = vmatprep.subr.bf16.mxu0 0
        %363 = vmatpush1.bf16.msra.mxu0 0
        %364 = vmatprep.subr.bf16.mxu0 0
        %365 = vmatpush1.bf16.msra.mxu0 0
        %366 = vmatprep.subr.bf16.mxu0 0
        %367 = vmatpush1.bf16.msra.mxu0 0
        %368 = vmatprep.subr.bf16.mxu0 0
        %369 = vmatpush1.bf16.msra.mxu0 0
        %370 = vmatprep.subr.bf16.mxu0 0
        %371 = vmatpush1.bf16.msra.mxu0 0
        %372 = vmatprep.subr.bf16.mxu0 0
        %373 = vmatpush1.bf16.msra.mxu0 0
        %374 = vmatprep.subr.bf16.mxu0 0
        %375 = vmatpush1.bf16.msra.mxu0 0
        %376 = vmatprep.subr.bf16.mxu0 0
        %377 = vmatpush1.bf16.msra.mxu0 0
        %378 = vmatprep.subr.bf16.mxu0 0
        %379 = vmatpush1.bf16.msra.mxu0 0
        %380 = vmatprep.subr.bf16.mxu0 0
        %381 = vmatpush1.bf16.msra.mxu0 0
        %382 = vmatprep.subr.bf16.mxu0 0
        %383 = vmatpush1.bf16.msra.mxu0 0
        %384 = vmatprep.mubr.bf16.mxu0 0
        %385 = vmatmul.mubr.bf16.gmra.mrb[0].mxu0 %v331
        %v386 = vpop.f32.mrb[0].mxu0
        %v387 = vadd.f32 0.0, %v386
        %v388 = vpop.f32.mrb[0].mxu0
        %v389 = vpop.f32.mrb[0].mxu0
        %v390 = vadd.f32 0.0, %v389
        %v391 = vpop.f32.mrb[0].mxu0
        %392 = vmatprep.mubr.bf16.mxu0 0
        %393 = vmatmul.mubr.bf16.gmra.mrb[0].mxu0 %v334
        %v394 = vpop.f32.mrb[0].mxu0
        %v395 = vadd.f32 0.0, %v394
        %v396 = vpop.f32.mrb[0].mxu0
        %v397 = vpop.f32.mrb[0].mxu0
        %v398 = vadd.f32 0.0, %v397
        %v399 = vpop.f32.mrb[0].mxu0
        %400 = vmatprep.mubr.bf16.mxu0 0
        %401 = vmatmul.mubr.bf16.gmra.mrb[0].mxu0 %v337
        %v402 = vpop.f32.mrb[0].mxu0
        %v403 = vadd.f32 0.0, %v402
        %v404 = vpop.f32.mrb[0].mxu0
        %v405 = vpop.f32.mrb[0].mxu0
        %v406 = vadd.f32 0.0, %v405
        %v407 = vpop.f32.mrb[0].mxu0
        %408 = vmatprep.mubr.bf16.mxu0 0
        %409 = vmatmul.mubr.bf16.gmra.mrb[0].mxu0 %v340
        %v410 = vpop.f32.mrb[0].mxu0
        %v411 = vadd.f32 0.0, %v410
        %v412 = vpop.f32.mrb[0].mxu0
        %v413 = vpop.f32.mrb[0].mxu0
        %v414 = vadd.f32 0.0, %v413
        %v415 = vpop.f32.mrb[0].mxu0
        %416 = vmatprep.mubr.bf16.mxu0 0
        %417 = vmatmul.mubr.bf16.gmra.mrb[0].mxu0 %v343
        %v418 = vpop.f32.mrb[0].mxu0
        %v419 = vadd.f32 0.0, %v418
        %v420 = vpop.f32.mrb[0].mxu0
        %v421 = vpop.f32.mrb[0].mxu0
        %v422 = vadd.f32 0.0, %v421
        %v423 = vpop.f32.mrb[0].mxu0
        %424 = vmatprep.mubr.bf16.mxu0 0
        %425 = vmatmul.mubr.bf16.gmra.mrb[0].mxu0 %v346
        %v426 = vpop.f32.mrb[0].mxu0
        %v427 = vadd.f32 0.0, %v426
        %v428 = vpop.f32.mrb[0].mxu0
        %v429 = vpop.f32.mrb[0].mxu0
        %v430 = vpop.f32.mrb[0].mxu0
        %431 = vdwg.mxu0
        %v432 = vld [vmem:[#allocation14] sm:$0x1]
        %v434 = vlaneseq
        %v435 = vshrl.u32 %v434, 7
        %v436 = vsub.s32 0, %v435
        %v437 = vrot.slane %v432, %v436
        %v439 = vadd.f32 %v387, %v437
        %v440 = vadd.f32 %v390, %v437
        %v441 = vadd.f32 %v395, %v437
        %v442 = vadd.f32 %v398, %v437
        %v443 = vadd.f32 %v403, %v437
        %v444 = vadd.f32 %v406, %v437
        %v445 = vadd.f32 %v411, %v437
        %v446 = vadd.f32 %v414, %v437
        %v447 = vadd.f32 %v419, %v437
        %v448 = vadd.f32 %v422, %v437
        %v449 = vadd.f32 %v427, %v437
        %v450 = vmax.f32 %v439, 0.0
        %v451 = vmax.f32 %v440, 0.0
        %v452 = vmax.f32 %v441, 0.0
        %v453 = vmax.f32 %v442, 0.0
        %v454 = vmax.f32 %v443, 0.0
        %v455 = vmax.f32 %v444, 0.0
        %v456 = vmax.f32 %v445, 0.0
        %v457 = vmax.f32 %v446, 0.0
        %v458 = vmax.f32 %v447, 0.0
        %v459 = vmax.f32 %v448, 0.0
        %v460 = vmax.f32 %v449, 0.0
        %v461 = vand.u32 2147483647, %v439
        %v462 = vand.u32 2147483647, %v440
        %v463 = vand.u32 2147483647, %v441
        %v464 = vand.u32 2147483647, %v442
        %v465 = vand.u32 2147483647, %v443
        %v466 = vand.u32 2147483647, %v444
        %v467 = vand.u32 2147483647, %v445
        %v468 = vand.u32 2147483647, %v446
        %v469 = vand.u32 2147483647, %v447
        %v470 = vand.u32 2147483647, %v448
        %v471 = vand.u32 2147483647, %v449
        %v472 = vsub.f32 0.0, %v461
        %v473 = vsub.f32 0.0, %v462
        %v474 = vsub.f32 0.0, %v463
        %v475 = vsub.f32 0.0, %v464
        %v476 = vsub.f32 0.0, %v465
        %v477 = vsub.f32 0.0, %v466
        %v478 = vsub.f32 0.0, %v467
        %v479 = vsub.f32 0.0, %v468
        %v480 = vsub.f32 0.0, %v469
        %v481 = vsub.f32 0.0, %v470
        %v482 = vsub.f32 0.0, %v471
        %v483 = vmul.f32 %v472, 1.442695
        %v484 = vpow.pop %v483
        %v485 = vmul.f32 %v473, 1.442695
        %v486 = vpow.pop %v485
        %v487 = vmul.f32 %v474, 1.442695
        %v488 = vpow.pop %v487
        %v489 = vmul.f32 %v475, 1.442695
        %v490 = vpow.pop %v489
        %v491 = vmul.f32 %v476, 1.442695
        %v492 = vpow.pop %v491
        %v493 = vmul.f32 %v477, 1.442695
        %v494 = vpow.pop %v493
        %v495 = vmul.f32 %v478, 1.442695
        %v496 = vpow.pop %v495
        %v497 = vmul.f32 %v479, 1.442695
        %v498 = vpow.pop %v497
        %v499 = vmul.f32 %v480, 1.442695
        %v500 = vpow.pop %v499
        %v501 = vmul.f32 %v481, 1.442695
        %v502 = vpow.pop %v501
        %v503 = vmul.f32 %v482, 1.442695
        %v504 = vpow.pop %v503
        %v505 = vadd.f32 %v484, 1.0
        %v506 = vadd.f32 %v486, 1.0
        %v507 = vadd.f32 %v488, 1.0
        %v508 = vadd.f32 %v490, 1.0
        %v509 = vadd.f32 %v492, 1.0
        %v510 = vadd.f32 %v494, 1.0
        %v511 = vadd.f32 %v496, 1.0
        %v512 = vadd.f32 %v498, 1.0
        %v513 = vadd.f32 %v500, 1.0
        %v514 = vadd.f32 %v502, 1.0
        %v515 = vadd.f32 %v504, 1.0
        %v516 = vlog2.pop %v505
        %v517 = vmul.f32 %v516, 0.6931472
        %v518 = vlog2.pop %v506
        %v519 = vmul.f32 %v518, 0.6931472
        %v520 = vlog2.pop %v507
        %v521 = vmul.f32 %v520, 0.6931472
        %v522 = vlog2.pop %v508
        %v523 = vmul.f32 %v522, 0.6931472
        %v524 = vlog2.pop %v509
        %v525 = vmul.f32 %v524, 0.6931472
        %v526 = vlog2.pop %v510
        %v527 = vmul.f32 %v526, 0.6931472
        %v528 = vlog2.pop %v511
        %v529 = vmul.f32 %v528, 0.6931472
        %v530 = vlog2.pop %v512
        %v531 = vmul.f32 %v530, 0.6931472
        %v532 = vlog2.pop %v513
        %v533 = vmul.f32 %v532, 0.6931472
        %v534 = vlog2.pop %v514
        %v535 = vmul.f32 %v534, 0.6931472
        %v536 = vlog2.pop %v515
        %v537 = vmul.f32 %v536, 0.6931472
        %v538 = vadd.f32 %v450, %v517
        %v539 = vadd.f32 %v451, %v519
        %v540 = vadd.f32 %v452, %v521
        %v541 = vadd.f32 %v453, %v523
        %v542 = vadd.f32 %v454, %v525
        %v543 = vadd.f32 %v455, %v527
        %v544 = vadd.f32 %v456, %v529
        %v545 = vadd.f32 %v457, %v531
        %v546 = vadd.f32 %v458, %v533
        %v547 = vadd.f32 %v459, %v535
        %v548 = vadd.f32 %v460, %v537
        %v549 = vmul.f32 %v538, %v300
        %v550 = vmul.f32 %v539, %v301
        %v551 = vmul.f32 %v540, %v302
        %v552 = vmul.f32 %v541, %v303
        %v553 = vmul.f32 %v542, %v304
        %v554 = vmul.f32 %v543, %v305
        %v555 = vmul.f32 %v544, %v306
        %v556 = vmul.f32 %v545, %v307
        %v557 = vmul.f32 %v546, %v308
        %v558 = vmul.f32 %v547, %v309
        %v559 = vmul.f32 %v548, %v310
        %v571 = vcombine.high %v538, %v538
        %v573 = vunpack.c.l.s4 1966171168
        %v574 = vunpack.c.0.s8 %v573
        %v575 = vlaneseq
        %v576 = vshrl.u32 %v575, 7
        %v577 = vsub.s32 %v574, %v576
        %v578 = vrot.slane %v538, %v577
        %v580 = vunpack.c.l.s4 1966171168
        %v581 = vunpack.c.0.s8 %v580
        %v582 = vlaneseq
        %v583 = vshrl.u32 %v582, 7
        %v584 = vsub.s32 %v581, %v583
        %v585 = vrot.slane %v571, %v584
        %v586 = vcombine.high %v578, %v578
        %v587 = vcombine.high %v585, %v585
        %v589 = vunpack.c.l.s4 1966171168
        %v590 = vunpack.c.0.s8 %v589
        %v591 = vlaneseq
        %v592 = vshrl.u32 %v591, 7
        %v593 = vsub.s32 %v590, %v592
        %v594 = vrot.slane %v578, %v593
        %v596 = vunpack.c.l.s4 1966171168
        %v597 = vunpack.c.0.s8 %v596
        %v598 = vlaneseq
        %v599 = vshrl.u32 %v598, 7
        %v600 = vsub.s32 %v597, %v599
        %v601 = vrot.slane %v585, %v600
        %v603 = vunpack.c.l.s4 1966171168
        %v604 = vunpack.c.0.s8 %v603
        %v605 = vlaneseq
        %v606 = vshrl.u32 %v605, 7
        %v607 = vsub.s32 %v604, %v606
        %v608 = vrot.slane %v586, %v607
        %v610 = vunpack.c.l.s4 1966171168
        %v611 = vunpack.c.0.s8 %v610
        %v612 = vlaneseq
        %v613 = vshrl.u32 %v612, 7
        %v614 = vsub.s32 %v611, %v613
        %v615 = vrot.slane %v587, %v614
        %v616 = vcombine.high %v594, %v594
        %v617 = vcombine.high %v601, %v601
        %v618 = vcombine.high %v608, %v608
        %v619 = vcombine.high %v615, %v615
        %v620 = vcombine.high %v539, %v539
        %v622 = vunpack.c.l.s4 1966171168
        %v623 = vunpack.c.0.s8 %v622
        %v624 = vlaneseq
        %v625 = vshrl.u32 %v624, 7
        %v626 = vsub.s32 %v623, %v625
        %v627 = vrot.slane %v539, %v626
        %v629 = vunpack.c.l.s4 1966171168
        %v630 = vunpack.c.0.s8 %v629
        %v631 = vlaneseq
        %v632 = vshrl.u32 %v631, 7
        %v633 = vsub.s32 %v630, %v632
        %v634 = vrot.slane %v620, %v633
        %v635 = vcombine.high %v627, %v627
        %v636 = vcombine.high %v634, %v634
        %v638 = vunpack.c.l.s4 1966171168
        %v639 = vunpack.c.0.s8 %v638
        %v640 = vlaneseq
        %v641 = vshrl.u32 %v640, 7
        %v642 = vsub.s32 %v639, %v641
        %v643 = vrot.slane %v627, %v642
        %v645 = vunpack.c.l.s4 1966171168
        %v646 = vunpack.c.0.s8 %v645
        %v647 = vlaneseq
        %v648 = vshrl.u32 %v647, 7
        %v649 = vsub.s32 %v646, %v648
        %v650 = vrot.slane %v634, %v649
        %v652 = vunpack.c.l.s4 1966171168
        %v653 = vunpack.c.0.s8 %v652
        %v654 = vlaneseq
        %v655 = vshrl.u32 %v654, 7
        %v656 = vsub.s32 %v653, %v655
        %v657 = vrot.slane %v635, %v656
        %v659 = vunpack.c.l.s4 1966171168
        %v660 = vunpack.c.0.s8 %v659
        %v661 = vlaneseq
        %v662 = vshrl.u32 %v661, 7
        %v663 = vsub.s32 %v660, %v662
        %v664 = vrot.slane %v636, %v663
        %v665 = vcombine.high %v643, %v643
        %v666 = vcombine.high %v650, %v650
        %v667 = vcombine.high %v657, %v657
        %v668 = vcombine.high %v664, %v664
        %v669 = vcombine.high %v540, %v540
        %v671 = vunpack.c.l.s4 1966171168
        %v672 = vunpack.c.0.s8 %v671
        %v673 = vlaneseq
        %v674 = vshrl.u32 %v673, 7
        %v675 = vsub.s32 %v672, %v674
        %v676 = vrot.slane %v540, %v675
        %v678 = vunpack.c.l.s4 1966171168
        %v679 = vunpack.c.0.s8 %v678
        %v680 = vlaneseq
        %v681 = vshrl.u32 %v680, 7
        %v682 = vsub.s32 %v679, %v681
        %v683 = vrot.slane %v669, %v682
        %v684 = vcombine.high %v676, %v676
        %v685 = vcombine.high %v683, %v683
        %v687 = vunpack.c.l.s4 1966171168
        %v688 = vunpack.c.0.s8 %v687
        %v689 = vlaneseq
        %v690 = vshrl.u32 %v689, 7
        %v691 = vsub.s32 %v688, %v690
        %v692 = vrot.slane %v676, %v691
        %v694 = vunpack.c.l.s4 1966171168
        %v695 = vunpack.c.0.s8 %v694
        %v696 = vlaneseq
        %v697 = vshrl.u32 %v696, 7
        %v698 = vsub.s32 %v695, %v697
        %v699 = vrot.slane %v683, %v698
        %v701 = vunpack.c.l.s4 1966171168
        %v702 = vunpack.c.0.s8 %v701
        %v703 = vlaneseq
        %v704 = vshrl.u32 %v703, 7
        %v705 = vsub.s32 %v702, %v704
        %v706 = vrot.slane %v684, %v705
        %v708 = vunpack.c.l.s4 1966171168
        %v709 = vunpack.c.0.s8 %v708
        %v710 = vlaneseq
        %v711 = vshrl.u32 %v710, 7
        %v712 = vsub.s32 %v709, %v711
        %v713 = vrot.slane %v685, %v712
        %v714 = vcombine.high %v692, %v692
        %v715 = vcombine.high %v699, %v699
        %v716 = vcombine.high %v706, %v706
        %v717 = vcombine.high %v713, %v713
        %v718 = vcombine.high %v541, %v541
        %v720 = vunpack.c.l.s4 1966171168
        %v721 = vunpack.c.0.s8 %v720
        %v722 = vlaneseq
        %v723 = vshrl.u32 %v722, 7
        %v724 = vsub.s32 %v721, %v723
        %v725 = vrot.slane %v541, %v724
        %v727 = vunpack.c.l.s4 1966171168
        %v728 = vunpack.c.0.s8 %v727
        %v729 = vlaneseq
        %v730 = vshrl.u32 %v729, 7
        %v731 = vsub.s32 %v728, %v730
        %v732 = vrot.slane %v718, %v731
        %v733 = vcombine.high %v725, %v725
        %v734 = vcombine.high %v732, %v732
        %v736 = vunpack.c.l.s4 1966171168
        %v737 = vunpack.c.0.s8 %v736
        %v738 = vlaneseq
        %v739 = vshrl.u32 %v738, 7
        %v740 = vsub.s32 %v737, %v739
        %v741 = vrot.slane %v725, %v740
        %v743 = vunpack.c.l.s4 1966171168
        %v744 = vunpack.c.0.s8 %v743
        %v745 = vlaneseq
        %v746 = vshrl.u32 %v745, 7
        %v747 = vsub.s32 %v744, %v746
        %v748 = vrot.slane %v732, %v747
        %v750 = vunpack.c.l.s4 1966171168
        %v751 = vunpack.c.0.s8 %v750
        %v752 = vlaneseq
        %v753 = vshrl.u32 %v752, 7
        %v754 = vsub.s32 %v751, %v753
        %v755 = vrot.slane %v733, %v754
        %v757 = vunpack.c.l.s4 1966171168
        %v758 = vunpack.c.0.s8 %v757
        %v759 = vlaneseq
        %v760 = vshrl.u32 %v759, 7
        %v761 = vsub.s32 %v758, %v760
        %v762 = vrot.slane %v734, %v761
        %v763 = vcombine.high %v741, %v741
        %v764 = vcombine.high %v748, %v748
        %v765 = vcombine.high %v755, %v755
        %v766 = vcombine.high %v762, %v762
        %v767 = vcombine.high %v542, %v542
        %v769 = vunpack.c.l.s4 1966171168
        %v770 = vunpack.c.0.s8 %v769
        %v771 = vlaneseq
        %v772 = vshrl.u32 %v771, 7
        %v773 = vsub.s32 %v770, %v772
        %v774 = vrot.slane %v542, %v773
        %v776 = vunpack.c.l.s4 1966171168
        %v777 = vunpack.c.0.s8 %v776
        %v778 = vlaneseq
        %v779 = vshrl.u32 %v778, 7
        %v780 = vsub.s32 %v777, %v779
        %v781 = vrot.slane %v767, %v780
        %v782 = vcombine.high %v774, %v774
        %v783 = vcombine.high %v781, %v781
        %v785 = vunpack.c.l.s4 1966171168
        %v786 = vunpack.c.0.s8 %v785
        %v787 = vlaneseq
        %v788 = vshrl.u32 %v787, 7
        %v789 = vsub.s32 %v786, %v788
        %v790 = vrot.slane %v774, %v789
        %v792 = vunpack.c.l.s4 1966171168
        %v793 = vunpack.c.0.s8 %v792
        %v794 = vlaneseq
        %v795 = vshrl.u32 %v794, 7
        %v796 = vsub.s32 %v793, %v795
        %v797 = vrot.slane %v781, %v796
        %v799 = vunpack.c.l.s4 1966171168
        %v800 = vunpack.c.0.s8 %v799
        %v801 = vlaneseq
        %v802 = vshrl.u32 %v801, 7
        %v803 = vsub.s32 %v800, %v802
        %v804 = vrot.slane %v782, %v803
        %v806 = vunpack.c.l.s4 1966171168
        %v807 = vunpack.c.0.s8 %v806
        %v808 = vlaneseq
        %v809 = vshrl.u32 %v808, 7
        %v810 = vsub.s32 %v807, %v809
        %v811 = vrot.slane %v783, %v810
        %v812 = vcombine.high %v790, %v790
        %v813 = vcombine.high %v797, %v797
        %v814 = vcombine.high %v804, %v804
        %v815 = vcombine.high %v811, %v811
        %v816 = vcombine.high %v543, %v543
        %v818 = vunpack.c.l.s4 1966171168
        %v819 = vunpack.c.0.s8 %v818
        %v820 = vlaneseq
        %v821 = vshrl.u32 %v820, 7
        %v822 = vsub.s32 %v819, %v821
        %v823 = vrot.slane %v543, %v822
        %v825 = vunpack.c.l.s4 1966171168
        %v826 = vunpack.c.0.s8 %v825
        %v827 = vlaneseq
        %v828 = vshrl.u32 %v827, 7
        %v829 = vsub.s32 %v826, %v828
        %v830 = vrot.slane %v816, %v829
        %v831 = vcombine.high %v823, %v823
        %v832 = vcombine.high %v830, %v830
        %v834 = vunpack.c.l.s4 1966171168
        %v835 = vunpack.c.0.s8 %v834
        %v836 = vlaneseq
        %v837 = vshrl.u32 %v836, 7
        %v838 = vsub.s32 %v835, %v837
        %v839 = vrot.slane %v823, %v838
        %v841 = vunpack.c.l.s4 1966171168
        %v842 = vunpack.c.0.s8 %v841
        %v843 = vlaneseq
        %v844 = vshrl.u32 %v843, 7
        %v845 = vsub.s32 %v842, %v844
        %v846 = vrot.slane %v830, %v845
        %v848 = vunpack.c.l.s4 1966171168
        %v849 = vunpack.c.0.s8 %v848
        %v850 = vlaneseq
        %v851 = vshrl.u32 %v850, 7
        %v852 = vsub.s32 %v849, %v851
        %v853 = vrot.slane %v831, %v852
        %v855 = vunpack.c.l.s4 1966171168
        %v856 = vunpack.c.0.s8 %v855
        %v857 = vlaneseq
        %v858 = vshrl.u32 %v857, 7
        %v859 = vsub.s32 %v856, %v858
        %v860 = vrot.slane %v832, %v859
        %v861 = vcombine.high %v839, %v839
        %v862 = vcombine.high %v846, %v846
        %v863 = vcombine.high %v853, %v853
        %v864 = vcombine.high %v860, %v860
        %v865 = vcombine.high %v544, %v544
        %v867 = vunpack.c.l.s4 1966171168
        %v868 = vunpack.c.0.s8 %v867
        %v869 = vlaneseq
        %v870 = vshrl.u32 %v869, 7
        %v871 = vsub.s32 %v868, %v870
        %v872 = vrot.slane %v544, %v871
        %v874 = vunpack.c.l.s4 1966171168
        %v875 = vunpack.c.0.s8 %v874
        %v876 = vlaneseq
        %v877 = vshrl.u32 %v876, 7
        %v878 = vsub.s32 %v875, %v877
        %v879 = vrot.slane %v865, %v878
        %v880 = vcombine.high %v872, %v872
        %v881 = vcombine.high %v879, %v879
        %v883 = vunpack.c.l.s4 1966171168
        %v884 = vunpack.c.0.s8 %v883
        %v885 = vlaneseq
        %v886 = vshrl.u32 %v885, 7
        %v887 = vsub.s32 %v884, %v886
        %v888 = vrot.slane %v872, %v887
        %v890 = vunpack.c.l.s4 1966171168
        %v891 = vunpack.c.0.s8 %v890
        %v892 = vlaneseq
        %v893 = vshrl.u32 %v892, 7
        %v894 = vsub.s32 %v891, %v893
        %v895 = vrot.slane %v879, %v894
        %v897 = vunpack.c.l.s4 1966171168
        %v898 = vunpack.c.0.s8 %v897
        %v899 = vlaneseq
        %v900 = vshrl.u32 %v899, 7
        %v901 = vsub.s32 %v898, %v900
        %v902 = vrot.slane %v880, %v901
        %v904 = vunpack.c.l.s4 1966171168
        %v905 = vunpack.c.0.s8 %v904
        %v906 = vlaneseq
        %v907 = vshrl.u32 %v906, 7
        %v908 = vsub.s32 %v905, %v907
        %v909 = vrot.slane %v881, %v908
        %v910 = vcombine.high %v888, %v888
        %v911 = vcombine.high %v895, %v895
        %v912 = vcombine.high %v902, %v902
        %v913 = vcombine.high %v909, %v909
        %v914 = vcombine.high %v545, %v545
        %v916 = vunpack.c.l.s4 1966171168
        %v917 = vunpack.c.0.s8 %v916
        %v918 = vlaneseq
        %v919 = vshrl.u32 %v918, 7
        %v920 = vsub.s32 %v917, %v919
        %v921 = vrot.slane %v545, %v920
        %v923 = vunpack.c.l.s4 1966171168
        %v924 = vunpack.c.0.s8 %v923
        %v925 = vlaneseq
        %v926 = vshrl.u32 %v925, 7
        %v927 = vsub.s32 %v924, %v926
        %v928 = vrot.slane %v914, %v927
        %v929 = vcombine.high %v921, %v921
        %v930 = vcombine.high %v928, %v928
        %v932 = vunpack.c.l.s4 1966171168
        %v933 = vunpack.c.0.s8 %v932
        %v934 = vlaneseq
        %v935 = vshrl.u32 %v934, 7
        %v936 = vsub.s32 %v933, %v935
        %v937 = vrot.slane %v921, %v936
        %v939 = vunpack.c.l.s4 1966171168
        %v940 = vunpack.c.0.s8 %v939
        %v941 = vlaneseq
        %v942 = vshrl.u32 %v941, 7
        %v943 = vsub.s32 %v940, %v942
        %v944 = vrot.slane %v928, %v943
        %v946 = vunpack.c.l.s4 1966171168
        %v947 = vunpack.c.0.s8 %v946
        %v948 = vlaneseq
        %v949 = vshrl.u32 %v948, 7
        %v950 = vsub.s32 %v947, %v949
        %v951 = vrot.slane %v929, %v950
        %v953 = vunpack.c.l.s4 1966171168
        %v954 = vunpack.c.0.s8 %v953
        %v955 = vlaneseq
        %v956 = vshrl.u32 %v955, 7
        %v957 = vsub.s32 %v954, %v956
        %v958 = vrot.slane %v930, %v957
        %v959 = vcombine.high %v937, %v937
        %v960 = vcombine.high %v944, %v944
        %v961 = vcombine.high %v951, %v951
        %v962 = vcombine.high %v958, %v958
        %v963 = vcombine.high %v546, %v546
        %v965 = vunpack.c.l.s4 1966171168
        %v966 = vunpack.c.0.s8 %v965
        %v967 = vlaneseq
        %v968 = vshrl.u32 %v967, 7
        %v969 = vsub.s32 %v966, %v968
        %v970 = vrot.slane %v546, %v969
        %v972 = vunpack.c.l.s4 1966171168
        %v973 = vunpack.c.0.s8 %v972
        %v974 = vlaneseq
        %v975 = vshrl.u32 %v974, 7
        %v976 = vsub.s32 %v973, %v975
        %v977 = vrot.slane %v963, %v976
        %v978 = vcombine.high %v970, %v970
        %v979 = vcombine.high %v977, %v977
        %v981 = vunpack.c.l.s4 1966171168
        %v982 = vunpack.c.0.s8 %v981
        %v983 = vlaneseq
        %v984 = vshrl.u32 %v983, 7
        %v985 = vsub.s32 %v982, %v984
        %v986 = vrot.slane %v970, %v985
        %v988 = vunpack.c.l.s4 1966171168
        %v989 = vunpack.c.0.s8 %v988
        %v990 = vlaneseq
        %v991 = vshrl.u32 %v990, 7
        %v992 = vsub.s32 %v989, %v991
        %v993 = vrot.slane %v977, %v992
        %v995 = vunpack.c.l.s4 1966171168
        %v996 = vunpack.c.0.s8 %v995
        %v997 = vlaneseq
        %v998 = vshrl.u32 %v997, 7
        %v999 = vsub.s32 %v996, %v998
        %v1000 = vrot.slane %v978, %v999
        %v1002 = vunpack.c.l.s4 1966171168
        %v1003 = vunpack.c.0.s8 %v1002
        %v1004 = vlaneseq
        %v1005 = vshrl.u32 %v1004, 7
        %v1006 = vsub.s32 %v1003, %v1005
        %v1007 = vrot.slane %v979, %v1006
        %v1008 = vcombine.high %v986, %v986
        %v1009 = vcombine.high %v993, %v993
        %v1010 = vcombine.high %v1000, %v1000
        %v1011 = vcombine.high %v1007, %v1007
        %v1012 = vcombine.high %v547, %v547
        %v1014 = vunpack.c.l.s4 1966171168
        %v1015 = vunpack.c.0.s8 %v1014
        %v1016 = vlaneseq
        %v1017 = vshrl.u32 %v1016, 7
        %v1018 = vsub.s32 %v1015, %v1017
        %v1019 = vrot.slane %v547, %v1018
        %v1021 = vunpack.c.l.s4 1966171168
        %v1022 = vunpack.c.0.s8 %v1021
        %v1023 = vlaneseq
        %v1024 = vshrl.u32 %v1023, 7
        %v1025 = vsub.s32 %v1022, %v1024
        %v1026 = vrot.slane %v1012, %v1025
        %v1027 = vcombine.high %v1019, %v1019
        %v1028 = vcombine.high %v1026, %v1026
        %v1030 = vunpack.c.l.s4 1966171168
        %v1031 = vunpack.c.0.s8 %v1030
        %v1032 = vlaneseq
        %v1033 = vshrl.u32 %v1032, 7
        %v1034 = vsub.s32 %v1031, %v1033
        %v1035 = vrot.slane %v1019, %v1034
        %v1037 = vunpack.c.l.s4 1966171168
        %v1038 = vunpack.c.0.s8 %v1037
        %v1039 = vlaneseq
        %v1040 = vshrl.u32 %v1039, 7
        %v1041 = vsub.s32 %v1038, %v1040
        %v1042 = vrot.slane %v1026, %v1041
        %v1044 = vunpack.c.l.s4 1966171168
        %v1045 = vunpack.c.0.s8 %v1044
        %v1046 = vlaneseq
        %v1047 = vshrl.u32 %v1046, 7
        %v1048 = vsub.s32 %v1045, %v1047
        %v1049 = vrot.slane %v1027, %v1048
        %v1051 = vunpack.c.l.s4 1966171168
        %v1052 = vunpack.c.0.s8 %v1051
        %v1053 = vlaneseq
        %v1054 = vshrl.u32 %v1053, 7
        %v1055 = vsub.s32 %v1052, %v1054
        %v1056 = vrot.slane %v1028, %v1055
        %v1057 = vcombine.high %v1035, %v1035
        %v1058 = vcombine.high %v1042, %v1042
        %v1059 = vcombine.high %v1049, %v1049
        %v1060 = vcombine.high %v1056, %v1056
        %v1061 = vcombine.high %v548, %v548
        %v1063 = vunpack.c.l.s4 1966171168
        %v1064 = vunpack.c.0.s8 %v1063
        %v1065 = vlaneseq
        %v1066 = vshrl.u32 %v1065, 7
        %v1067 = vsub.s32 %v1064, %v1066
        %v1068 = vrot.slane %v548, %v1067
        %v1070 = vunpack.c.l.s4 1966171168
        %v1071 = vunpack.c.0.s8 %v1070
        %v1072 = vlaneseq
        %v1073 = vshrl.u32 %v1072, 7
        %v1074 = vsub.s32 %v1071, %v1073
        %v1075 = vrot.slane %v1061, %v1074
        %v1076 = vcombine.high %v1068, %v1068
        %v1077 = vcombine.high %v1075, %v1075
        %v1079 = vunpack.c.l.s4 1966171168
        %v1080 = vunpack.c.0.s8 %v1079
        %v1081 = vlaneseq
        %v1082 = vshrl.u32 %v1081, 7
        %v1083 = vsub.s32 %v1080, %v1082
        %v1084 = vrot.slane %v1068, %v1083
        %v1086 = vunpack.c.l.s4 1966171168
        %v1087 = vunpack.c.0.s8 %v1086
        %v1088 = vlaneseq
        %v1089 = vshrl.u32 %v1088, 7
        %v1090 = vsub.s32 %v1087, %v1089
        %v1091 = vrot.slane %v1075, %v1090
        %v1093 = vunpack.c.l.s4 1966171168
        %v1094 = vunpack.c.0.s8 %v1093
        %v1095 = vlaneseq
        %v1096 = vshrl.u32 %v1095, 7
        %v1097 = vsub.s32 %v1094, %v1096
        %v1098 = vrot.slane %v1076, %v1097
        %v1100 = vunpack.c.l.s4 1966171168
        %v1101 = vunpack.c.0.s8 %v1100
        %v1102 = vlaneseq
        %v1103 = vshrl.u32 %v1102, 7
        %v1104 = vsub.s32 %v1101, %v1103
        %v1105 = vrot.slane %v1077, %v1104
        %v1106 = vcombine.high %v1084, %v1084
        %v1107 = vcombine.high %v1091, %v1091
        %v1108 = vcombine.high %v1098, %v1098
        %v1109 = vcombine.high %v1105, %v1105
        %v1110 = vlaneseq
        %v1111 = vshrl.u32 %v1110, 7
        %v1112 = vsub.s32 0, %v1111
        %v1113 = vrot.slane %v594, %v1112
        %v1114 = vlaneseq
        %v1115 = vshrl.u32 %v1114, 7
        %v1116 = vsub.s32 0, %v1115
        %v1117 = vrot.slane %v608, %v1116
        %v1118 = vlaneseq
        %v1119 = vshrl.u32 %v1118, 7
        %v1120 = vsub.s32 0, %v1119
        %v1121 = vrot.slane %v616, %v1120
        %v1122 = vlaneseq
        %v1123 = vshrl.u32 %v1122, 7
        %v1124 = vsub.s32 0, %v1123
        %v1125 = vrot.slane %v618, %v1124
        %v1126 = vlaneseq
        %v1127 = vshrl.u32 %v1126, 7
        %v1128 = vsub.s32 0, %v1127
        %v1129 = vrot.slane %v601, %v1128
        %v1130 = vlaneseq
        %v1131 = vshrl.u32 %v1130, 7
        %v1132 = vsub.s32 0, %v1131
        %v1133 = vrot.slane %v615, %v1132
        %v1134 = vlaneseq
        %v1135 = vshrl.u32 %v1134, 7
        %v1136 = vsub.s32 0, %v1135
        %v1137 = vrot.slane %v617, %v1136
        %v1138 = vlaneseq
        %v1139 = vshrl.u32 %v1138, 7
        %v1140 = vsub.s32 0, %v1139
        %v1141 = vrot.slane %v619, %v1140
        %v1142 = vlaneseq
        %v1143 = vshrl.u32 %v1142, 7
        %v1144 = vsub.s32 0, %v1143
        %v1145 = vrot.slane %v643, %v1144
        %v1146 = vlaneseq
        %v1147 = vshrl.u32 %v1146, 7
        %v1148 = vsub.s32 0, %v1147
        %v1149 = vrot.slane %v657, %v1148
        %v1150 = vlaneseq
        %v1151 = vshrl.u32 %v1150, 7
        %v1152 = vsub.s32 0, %v1151
        %v1153 = vrot.slane %v665, %v1152
        %v1154 = vlaneseq
        %v1155 = vshrl.u32 %v1154, 7
        %v1156 = vsub.s32 0, %v1155
        %v1157 = vrot.slane %v667, %v1156
        %v1158 = vlaneseq
        %v1159 = vshrl.u32 %v1158, 7
        %v1160 = vsub.s32 0, %v1159
        %v1161 = vrot.slane %v650, %v1160
        %v1162 = vlaneseq
        %v1163 = vshrl.u32 %v1162, 7
        %v1164 = vsub.s32 0, %v1163
        %v1165 = vrot.slane %v664, %v1164
        %v1166 = vlaneseq
        %v1167 = vshrl.u32 %v1166, 7
        %v1168 = vsub.s32 0, %v1167
        %v1169 = vrot.slane %v666, %v1168
        %v1170 = vlaneseq
        %v1171 = vshrl.u32 %v1170, 7
        %v1172 = vsub.s32 0, %v1171
        %v1173 = vrot.slane %v668, %v1172
        %v1174 = vlaneseq
        %v1175 = vshrl.u32 %v1174, 7
        %v1176 = vsub.s32 0, %v1175
        %v1177 = vrot.slane %v692, %v1176
        %v1178 = vlaneseq
        %v1179 = vshrl.u32 %v1178, 7
        %v1180 = vsub.s32 0, %v1179
        %v1181 = vrot.slane %v706, %v1180
        %v1182 = vlaneseq
        %v1183 = vshrl.u32 %v1182, 7
        %v1184 = vsub.s32 0, %v1183
        %v1185 = vrot.slane %v714, %v1184
        %v1186 = vlaneseq
        %v1187 = vshrl.u32 %v1186, 7
        %v1188 = vsub.s32 0, %v1187
        %v1189 = vrot.slane %v716, %v1188
        %v1190 = vlaneseq
        %v1191 = vshrl.u32 %v1190, 7
        %v1192 = vsub.s32 0, %v1191
        %v1193 = vrot.slane %v699, %v1192
        %v1194 = vlaneseq
        %v1195 = vshrl.u32 %v1194, 7
        %v1196 = vsub.s32 0, %v1195
        %v1197 = vrot.slane %v713, %v1196
        %v1198 = vlaneseq
        %v1199 = vshrl.u32 %v1198, 7
        %v1200 = vsub.s32 0, %v1199
        %v1201 = vrot.slane %v715, %v1200
        %v1202 = vlaneseq
        %v1203 = vshrl.u32 %v1202, 7
        %v1204 = vsub.s32 0, %v1203
        %v1205 = vrot.slane %v717, %v1204
        %v1206 = vlaneseq
        %v1207 = vshrl.u32 %v1206, 7
        %v1208 = vsub.s32 0, %v1207
        %v1209 = vrot.slane %v741, %v1208
        %v1210 = vlaneseq
        %v1211 = vshrl.u32 %v1210, 7
        %v1212 = vsub.s32 0, %v1211
        %v1213 = vrot.slane %v755, %v1212
        %v1214 = vlaneseq
        %v1215 = vshrl.u32 %v1214, 7
        %v1216 = vsub.s32 0, %v1215
        %v1217 = vrot.slane %v763, %v1216
        %v1218 = vlaneseq
        %v1219 = vshrl.u32 %v1218, 7
        %v1220 = vsub.s32 0, %v1219
        %v1221 = vrot.slane %v765, %v1220
        %v1222 = vlaneseq
        %v1223 = vshrl.u32 %v1222, 7
        %v1224 = vsub.s32 0, %v1223
        %v1225 = vrot.slane %v748, %v1224
        %v1226 = vlaneseq
        %v1227 = vshrl.u32 %v1226, 7
        %v1228 = vsub.s32 0, %v1227
        %v1229 = vrot.slane %v762, %v1228
        %v1230 = vlaneseq
        %v1231 = vshrl.u32 %v1230, 7
        %v1232 = vsub.s32 0, %v1231
        %v1233 = vrot.slane %v764, %v1232
        %v1234 = vlaneseq
        %v1235 = vshrl.u32 %v1234, 7
        %v1236 = vsub.s32 0, %v1235
        %v1237 = vrot.slane %v766, %v1236
        %v1238 = vlaneseq
        %v1239 = vshrl.u32 %v1238, 7
        %v1240 = vsub.s32 0, %v1239
        %v1241 = vrot.slane %v790, %v1240
        %v1242 = vlaneseq
        %v1243 = vshrl.u32 %v1242, 7
        %v1244 = vsub.s32 0, %v1243
        %v1245 = vrot.slane %v804, %v1244
        %v1246 = vlaneseq
        %v1247 = vshrl.u32 %v1246, 7
        %v1248 = vsub.s32 0, %v1247
        %v1249 = vrot.slane %v812, %v1248
        %v1250 = vlaneseq
        %v1251 = vshrl.u32 %v1250, 7
        %v1252 = vsub.s32 0, %v1251
        %v1253 = vrot.slane %v814, %v1252
        %v1254 = vlaneseq
        %v1255 = vshrl.u32 %v1254, 7
        %v1256 = vsub.s32 0, %v1255
        %v1257 = vrot.slane %v797, %v1256
        %v1258 = vlaneseq
        %v1259 = vshrl.u32 %v1258, 7
        %v1260 = vsub.s32 0, %v1259
        %v1261 = vrot.slane %v811, %v1260
        %v1262 = vlaneseq
        %v1263 = vshrl.u32 %v1262, 7
        %v1264 = vsub.s32 0, %v1263
        %v1265 = vrot.slane %v813, %v1264
        %v1266 = vlaneseq
        %v1267 = vshrl.u32 %v1266, 7
        %v1268 = vsub.s32 0, %v1267
        %v1269 = vrot.slane %v815, %v1268
        %v1270 = vlaneseq
        %v1271 = vshrl.u32 %v1270, 7
        %v1272 = vsub.s32 0, %v1271
        %v1273 = vrot.slane %v839, %v1272
        %v1274 = vlaneseq
        %v1275 = vshrl.u32 %v1274, 7
        %v1276 = vsub.s32 0, %v1275
        %v1277 = vrot.slane %v853, %v1276
        %v1278 = vlaneseq
        %v1279 = vshrl.u32 %v1278, 7
        %v1280 = vsub.s32 0, %v1279
        %v1281 = vrot.slane %v861, %v1280
        %v1282 = vlaneseq
        %v1283 = vshrl.u32 %v1282, 7
        %v1284 = vsub.s32 0, %v1283
        %v1285 = vrot.slane %v863, %v1284
        %v1286 = vlaneseq
        %v1287 = vshrl.u32 %v1286, 7
        %v1288 = vsub.s32 0, %v1287
        %v1289 = vrot.slane %v846, %v1288
        %v1290 = vlaneseq
        %v1291 = vshrl.u32 %v1290, 7
        %v1292 = vsub.s32 0, %v1291
        %v1293 = vrot.slane %v860, %v1292
        %v1294 = vlaneseq
        %v1295 = vshrl.u32 %v1294, 7
        %v1296 = vsub.s32 0, %v1295
        %v1297 = vrot.slane %v862, %v1296
        %v1298 = vlaneseq
        %v1299 = vshrl.u32 %v1298, 7
        %v1300 = vsub.s32 0, %v1299
        %v1301 = vrot.slane %v864, %v1300
        %v1302 = vlaneseq
        %v1303 = vshrl.u32 %v1302, 7
        %v1304 = vsub.s32 0, %v1303
        %v1305 = vrot.slane %v888, %v1304
        %v1306 = vlaneseq
        %v1307 = vshrl.u32 %v1306, 7
        %v1308 = vsub.s32 0, %v1307
        %v1309 = vrot.slane %v902, %v1308
        %v1310 = vlaneseq
        %v1311 = vshrl.u32 %v1310, 7
        %v1312 = vsub.s32 0, %v1311
        %v1313 = vrot.slane %v910, %v1312
        %v1314 = vlaneseq
        %v1315 = vshrl.u32 %v1314, 7
        %v1316 = vsub.s32 0, %v1315
        %v1317 = vrot.slane %v912, %v1316
        %v1318 = vlaneseq
        %v1319 = vshrl.u32 %v1318, 7
        %v1320 = vsub.s32 0, %v1319
        %v1321 = vrot.slane %v895, %v1320
        %v1322 = vlaneseq
        %v1323 = vshrl.u32 %v1322, 7
        %v1324 = vsub.s32 0, %v1323
        %v1325 = vrot.slane %v909, %v1324
        %v1326 = vlaneseq
        %v1327 = vshrl.u32 %v1326, 7
        %v1328 = vsub.s32 0, %v1327
        %v1329 = vrot.slane %v911, %v1328
        %v1330 = vlaneseq
        %v1331 = vshrl.u32 %v1330, 7
        %v1332 = vsub.s32 0, %v1331
        %v1333 = vrot.slane %v913, %v1332
        %v1334 = vlaneseq
        %v1335 = vshrl.u32 %v1334, 7
        %v1336 = vsub.s32 0, %v1335
        %v1337 = vrot.slane %v937, %v1336
        %v1338 = vlaneseq
        %v1339 = vshrl.u32 %v1338, 7
        %v1340 = vsub.s32 0, %v1339
        %v1341 = vrot.slane %v951, %v1340
        %v1342 = vlaneseq
        %v1343 = vshrl.u32 %v1342, 7
        %v1344 = vsub.s32 0, %v1343
        %v1345 = vrot.slane %v959, %v1344
        %v1346 = vlaneseq
        %v1347 = vshrl.u32 %v1346, 7
        %v1348 = vsub.s32 0, %v1347
        %v1349 = vrot.slane %v961, %v1348
        %v1350 = vlaneseq
        %v1351 = vshrl.u32 %v1350, 7
        %v1352 = vsub.s32 0, %v1351
        %v1353 = vrot.slane %v944, %v1352
        %v1354 = vlaneseq
        %v1355 = vshrl.u32 %v1354, 7
        %v1356 = vsub.s32 0, %v1355
        %v1357 = vrot.slane %v958, %v1356
        %v1358 = vlaneseq
        %v1359 = vshrl.u32 %v1358, 7
        %v1360 = vsub.s32 0, %v1359
        %v1361 = vrot.slane %v960, %v1360
        %v1362 = vlaneseq
        %v1363 = vshrl.u32 %v1362, 7
        %v1364 = vsub.s32 0, %v1363
        %v1365 = vrot.slane %v962, %v1364
        %v1366 = vlaneseq
        %v1367 = vshrl.u32 %v1366, 7
        %v1368 = vsub.s32 0, %v1367
        %v1369 = vrot.slane %v986, %v1368
        %v1370 = vlaneseq
        %v1371 = vshrl.u32 %v1370, 7
        %v1372 = vsub.s32 0, %v1371
        %v1373 = vrot.slane %v1000, %v1372
        %v1374 = vlaneseq
        %v1375 = vshrl.u32 %v1374, 7
        %v1376 = vsub.s32 0, %v1375
        %v1377 = vrot.slane %v1008, %v1376
        %v1378 = vlaneseq
        %v1379 = vshrl.u32 %v1378, 7
        %v1380 = vsub.s32 0, %v1379
        %v1381 = vrot.slane %v1010, %v1380
        %v1382 = vlaneseq
        %v1383 = vshrl.u32 %v1382, 7
        %v1384 = vsub.s32 0, %v1383
        %v1385 = vrot.slane %v993, %v1384
        %v1386 = vlaneseq
        %v1387 = vshrl.u32 %v1386, 7
        %v1388 = vsub.s32 0, %v1387
        %v1389 = vrot.slane %v1007, %v1388
        %v1390 = vlaneseq
        %v1391 = vshrl.u32 %v1390, 7
        %v1392 = vsub.s32 0, %v1391
        %v1393 = vrot.slane %v1009, %v1392
        %v1394 = vlaneseq
        %v1395 = vshrl.u32 %v1394, 7
        %v1396 = vsub.s32 0, %v1395
        %v1397 = vrot.slane %v1011, %v1396
        %v1398 = vlaneseq
        %v1399 = vshrl.u32 %v1398, 7
        %v1400 = vsub.s32 0, %v1399
        %v1401 = vrot.slane %v1035, %v1400
        %v1402 = vlaneseq
        %v1403 = vshrl.u32 %v1402, 7
        %v1404 = vsub.s32 0, %v1403
        %v1405 = vrot.slane %v1049, %v1404
        %v1406 = vlaneseq
        %v1407 = vshrl.u32 %v1406, 7
        %v1408 = vsub.s32 0, %v1407
        %v1409 = vrot.slane %v1057, %v1408
        %v1410 = vlaneseq
        %v1411 = vshrl.u32 %v1410, 7
        %v1412 = vsub.s32 0, %v1411
        %v1413 = vrot.slane %v1059, %v1412
        %v1414 = vlaneseq
        %v1415 = vshrl.u32 %v1414, 7
        %v1416 = vsub.s32 0, %v1415
        %v1417 = vrot.slane %v1042, %v1416
        %v1418 = vlaneseq
        %v1419 = vshrl.u32 %v1418, 7
        %v1420 = vsub.s32 0, %v1419
        %v1421 = vrot.slane %v1056, %v1420
        %v1422 = vlaneseq
        %v1423 = vshrl.u32 %v1422, 7
        %v1424 = vsub.s32 0, %v1423
        %v1425 = vrot.slane %v1058, %v1424
        %v1426 = vlaneseq
        %v1427 = vshrl.u32 %v1426, 7
        %v1428 = vsub.s32 0, %v1427
        %v1429 = vrot.slane %v1060, %v1428
        %v1430 = vlaneseq
        %v1431 = vshrl.u32 %v1430, 7
        %v1432 = vsub.s32 0, %v1431
        %v1433 = vrot.slane %v1084, %v1432
        %v1434 = vlaneseq
        %v1435 = vshrl.u32 %v1434, 7
        %v1436 = vsub.s32 0, %v1435
        %v1437 = vrot.slane %v1098, %v1436
        %v1438 = vlaneseq
        %v1439 = vshrl.u32 %v1438, 7
        %v1440 = vsub.s32 0, %v1439
        %v1441 = vrot.slane %v1106, %v1440
        %v1442 = vlaneseq
        %v1443 = vshrl.u32 %v1442, 7
        %v1444 = vsub.s32 0, %v1443
        %v1445 = vrot.slane %v1108, %v1444
        %v1446 = vlaneseq
        %v1447 = vshrl.u32 %v1446, 7
        %v1448 = vsub.s32 0, %v1447
        %v1449 = vrot.slane %v1091, %v1448
        %v1450 = vlaneseq
        %v1451 = vshrl.u32 %v1450, 7
        %v1452 = vsub.s32 0, %v1451
        %v1453 = vrot.slane %v1105, %v1452
        %v1454 = vlaneseq
        %v1455 = vshrl.u32 %v1454, 7
        %v1456 = vsub.s32 0, %v1455
        %v1457 = vrot.slane %v1107, %v1456
        %v1458 = vlaneseq
        %v1459 = vshrl.u32 %v1458, 7
        %v1460 = vsub.s32 0, %v1459
        %v1461 = vrot.slane %v1109, %v1460
        %v1550 = vmul.f32 %v1113, %v298
        %v1551 = vmul.f32 %v1113, %v299
        %v1552 = vmul.f32 %v1117, %v298
        %v1553 = vmul.f32 %v1117, %v299
        %v1554 = vmul.f32 %v1121, %v298
        %v1555 = vmul.f32 %v1121, %v299
        %v1556 = vmul.f32 %v1125, %v298
        %v1557 = vmul.f32 %v1125, %v299
        %v1558 = vmul.f32 %v1129, %v298
        %v1559 = vmul.f32 %v1129, %v299
        %v1560 = vmul.f32 %v1133, %v298
        %v1561 = vmul.f32 %v1133, %v299
        %v1562 = vmul.f32 %v1137, %v298
        %v1563 = vmul.f32 %v1137, %v299
        %v1564 = vmul.f32 %v1141, %v298
        %v1565 = vmul.f32 %v1141, %v299
        %v1566 = vmul.f32 %v1145, %v298
        %v1567 = vmul.f32 %v1145, %v299
        %v1568 = vmul.f32 %v1149, %v298
        %v1569 = vmul.f32 %v1149, %v299
        %v1570 = vmul.f32 %v1153, %v298
        %v1571 = vmul.f32 %v1153, %v299
        %v1572 = vmul.f32 %v1157, %v298
        %v1573 = vmul.f32 %v1157, %v299
        %v1574 = vmul.f32 %v1161, %v298
        %v1575 = vmul.f32 %v1161, %v299
        %v1576 = vmul.f32 %v1165, %v298
        %v1577 = vmul.f32 %v1165, %v299
        %v1578 = vmul.f32 %v1169, %v298
        %v1579 = vmul.f32 %v1169, %v299
        %v1580 = vmul.f32 %v1173, %v298
        %v1581 = vmul.f32 %v1173, %v299
        %v1582 = vmul.f32 %v1177, %v298
        %v1583 = vmul.f32 %v1177, %v299
        %v1584 = vmul.f32 %v1181, %v298
        %v1585 = vmul.f32 %v1181, %v299
        %v1586 = vmul.f32 %v1185, %v298
        %v1587 = vmul.f32 %v1185, %v299
        %v1588 = vmul.f32 %v1189, %v298
        %v1589 = vmul.f32 %v1189, %v299
        %v1590 = vmul.f32 %v1193, %v298
        %v1591 = vmul.f32 %v1193, %v299
        %v1592 = vmul.f32 %v1197, %v298
        %v1593 = vmul.f32 %v1197, %v299
        %v1594 = vmul.f32 %v1201, %v298
        %v1595 = vmul.f32 %v1201, %v299
        %v1596 = vmul.f32 %v1205, %v298
        %v1597 = vmul.f32 %v1205, %v299
        %v1598 = vmul.f32 %v1209, %v298
        %v1599 = vmul.f32 %v1209, %v299
        %v1600 = vmul.f32 %v1213, %v298
        %v1601 = vmul.f32 %v1213, %v299
        %v1602 = vmul.f32 %v1217, %v298
        %v1603 = vmul.f32 %v1217, %v299
        %v1604 = vmul.f32 %v1221, %v298
        %v1605 = vmul.f32 %v1221, %v299
        %v1606 = vmul.f32 %v1225, %v298
        %v1607 = vmul.f32 %v1225, %v299
        %v1608 = vmul.f32 %v1229, %v298
        %v1609 = vmul.f32 %v1229, %v299
        %v1610 = vmul.f32 %v1233, %v298
        %v1611 = vmul.f32 %v1233, %v299
        %v1612 = vmul.f32 %v1237, %v298
        %v1613 = vmul.f32 %v1237, %v299
        %v1614 = vmul.f32 %v1241, %v298
        %v1615 = vmul.f32 %v1241, %v299
        %v1616 = vmul.f32 %v1245, %v298
        %v1617 = vmul.f32 %v1245, %v299
        %v1618 = vmul.f32 %v1249, %v298
        %v1619 = vmul.f32 %v1249, %v299
        %v1620 = vmul.f32 %v1253, %v298
        %v1621 = vmul.f32 %v1253, %v299
        %v1622 = vmul.f32 %v1257, %v298
        %v1623 = vmul.f32 %v1257, %v299
        %v1624 = vmul.f32 %v1261, %v298
        %v1625 = vmul.f32 %v1261, %v299
        %v1626 = vmul.f32 %v1265, %v298
        %v1627 = vmul.f32 %v1265, %v299
        %v1628 = vmul.f32 %v1269, %v298
        %v1629 = vmul.f32 %v1269, %v299
        %v1630 = vmul.f32 %v1273, %v298
        %v1631 = vmul.f32 %v1273, %v299
        %v1632 = vmul.f32 %v1277, %v298
        %v1633 = vmul.f32 %v1277, %v299
        %v1634 = vmul.f32 %v1281, %v298
        %v1635 = vmul.f32 %v1281, %v299
        %v1636 = vmul.f32 %v1285, %v298
        %v1637 = vmul.f32 %v1285, %v299
        %v1638 = vmul.f32 %v1289, %v298
        %v1639 = vmul.f32 %v1289, %v299
        %v1640 = vmul.f32 %v1293, %v298
        %v1641 = vmul.f32 %v1293, %v299
        %v1642 = vmul.f32 %v1297, %v298
        %v1643 = vmul.f32 %v1297, %v299
        %v1644 = vmul.f32 %v1301, %v298
        %v1645 = vmul.f32 %v1301, %v299
        %v1646 = vmul.f32 %v1305, %v298
        %v1647 = vmul.f32 %v1305, %v299
        %v1648 = vmul.f32 %v1309, %v298
        %v1649 = vmul.f32 %v1309, %v299
        %v1650 = vmul.f32 %v1313, %v298
        %v1651 = vmul.f32 %v1313, %v299
        %v1652 = vmul.f32 %v1317, %v298
        %v1653 = vmul.f32 %v1317, %v299
        %v1654 = vmul.f32 %v1321, %v298
        %v1655 = vmul.f32 %v1321, %v299
        %v1656 = vmul.f32 %v1325, %v298
        %v1657 = vmul.f32 %v1325, %v299
        %v1658 = vmul.f32 %v1329, %v298
        %v1659 = vmul.f32 %v1329, %v299
        %v1660 = vmul.f32 %v1333, %v298
        %v1661 = vmul.f32 %v1333, %v299
        %v1662 = vmul.f32 %v1337, %v298
        %v1663 = vmul.f32 %v1337, %v299
        %v1664 = vmul.f32 %v1341, %v298
        %v1665 = vmul.f32 %v1341, %v299
        %v1666 = vmul.f32 %v1345, %v298
        %v1667 = vmul.f32 %v1345, %v299
        %v1668 = vmul.f32 %v1349, %v298
        %v1669 = vmul.f32 %v1349, %v299
        %v1670 = vmul.f32 %v1353, %v298
        %v1671 = vmul.f32 %v1353, %v299
        %v1672 = vmul.f32 %v1357, %v298
        %v1673 = vmul.f32 %v1357, %v299
        %v1674 = vmul.f32 %v1361, %v298
        %v1675 = vmul.f32 %v1361, %v299
        %v1676 = vmul.f32 %v1365, %v298
        %v1677 = vmul.f32 %v1365, %v299
        %v1678 = vmul.f32 %v1369, %v298
        %v1679 = vmul.f32 %v1369, %v299
        %v1680 = vmul.f32 %v1373, %v298
        %v1681 = vmul.f32 %v1373, %v299
        %v1682 = vmul.f32 %v1377, %v298
        %v1683 = vmul.f32 %v1377, %v299
        %v1684 = vmul.f32 %v1381, %v298
        %v1685 = vmul.f32 %v1381, %v299
        %v1686 = vmul.f32 %v1385, %v298
        %v1687 = vmul.f32 %v1385, %v299
        %v1688 = vmul.f32 %v1389, %v298
        %v1689 = vmul.f32 %v1389, %v299
        %v1690 = vmul.f32 %v1393, %v298
        %v1691 = vmul.f32 %v1393, %v299
        %v1692 = vmul.f32 %v1397, %v298
        %v1693 = vmul.f32 %v1397, %v299
        %v1694 = vmul.f32 %v1401, %v298
        %v1695 = vmul.f32 %v1401, %v299
        %v1696 = vmul.f32 %v1405, %v298
        %v1697 = vmul.f32 %v1405, %v299
        %v1698 = vmul.f32 %v1409, %v298
        %v1699 = vmul.f32 %v1409, %v299
        %v1700 = vmul.f32 %v1413, %v298
        %v1701 = vmul.f32 %v1413, %v299
        %v1702 = vmul.f32 %v1417, %v298
        %v1703 = vmul.f32 %v1417, %v299
        %v1704 = vmul.f32 %v1421, %v298
        %v1705 = vmul.f32 %v1421, %v299
        %v1706 = vmul.f32 %v1425, %v298
        %v1707 = vmul.f32 %v1425, %v299
        %v1708 = vmul.f32 %v1429, %v298
        %v1709 = vmul.f32 %v1429, %v299
        %v1710 = vmul.f32 %v1433, %v298
        %v1711 = vmul.f32 %v1433, %v299
        %v1712 = vmul.f32 %v1437, %v298
        %v1713 = vmul.f32 %v1437, %v299
        %v1714 = vmul.f32 %v1441, %v298
        %v1715 = vmul.f32 %v1441, %v299
        %v1716 = vmul.f32 %v1445, %v298
        %v1717 = vmul.f32 %v1445, %v299
        %v1718 = vmul.f32 %v1449, %v298
        %v1719 = vmul.f32 %v1449, %v299
        %v1720 = vmul.f32 %v1453, %v298
        %v1721 = vmul.f32 %v1453, %v299
        %v1722 = vmul.f32 %v1457, %v298
        %v1723 = vmul.f32 %v1457, %v299
        %v1724 = vmul.f32 %v1461, %v298
        %v1725 = vmul.f32 %v1461, %v299
        %v1726 = vmul.f32 %v1550, 1.442695
        %v1727 = vpow.pop %v1726
        %v1728 = vmul.f32 %v1551, 1.442695
        %v1729 = vpow.pop %v1728
        %v1730 = vmul.f32 %v1552, 1.442695
        %v1731 = vpow.pop %v1730
        %v1732 = vmul.f32 %v1553, 1.442695
        %v1733 = vpow.pop %v1732
        %v1734 = vmul.f32 %v1554, 1.442695
        %v1735 = vpow.pop %v1734
        %v1736 = vmul.f32 %v1555, 1.442695
        %v1737 = vpow.pop %v1736
        %v1738 = vmul.f32 %v1556, 1.442695
        %v1739 = vpow.pop %v1738
        %v1740 = vmul.f32 %v1557, 1.442695
        %v1741 = vpow.pop %v1740
        %v1742 = vmul.f32 %v1558, 1.442695
        %v1743 = vpow.pop %v1742
        %v1744 = vmul.f32 %v1559, 1.442695
        %v1745 = vpow.pop %v1744
        %v1746 = vmul.f32 %v1560, 1.442695
        %v1747 = vpow.pop %v1746
        %v1748 = vmul.f32 %v1561, 1.442695
        %v1749 = vpow.pop %v1748
        %v1750 = vmul.f32 %v1562, 1.442695
        %v1751 = vpow.pop %v1750
        %v1752 = vmul.f32 %v1563, 1.442695
        %v1753 = vpow.pop %v1752
        %v1754 = vmul.f32 %v1564, 1.442695
        %v1755 = vpow.pop %v1754
        %v1756 = vmul.f32 %v1565, 1.442695
        %v1757 = vpow.pop %v1756
        %v1758 = vmul.f32 %v1566, 1.442695
        %v1759 = vpow.pop %v1758
        %v1760 = vmul.f32 %v1567, 1.442695
        %v1761 = vpow.pop %v1760
        %v1762 = vmul.f32 %v1568, 1.442695
        %v1763 = vpow.pop %v1762
        %v1764 = vmul.f32 %v1569, 1.442695
        %v1765 = vpow.pop %v1764
        %v1766 = vmul.f32 %v1570, 1.442695
        %v1767 = vpow.pop %v1766
        %v1768 = vmul.f32 %v1571, 1.442695
        %v1769 = vpow.pop %v1768
        %v1770 = vmul.f32 %v1572, 1.442695
        %v1771 = vpow.pop %v1770
        %v1772 = vmul.f32 %v1573, 1.442695
        %v1773 = vpow.pop %v1772
        %v1774 = vmul.f32 %v1574, 1.442695
        %v1775 = vpow.pop %v1774
        %v1776 = vmul.f32 %v1575, 1.442695
        %v1777 = vpow.pop %v1776
        %v1778 = vmul.f32 %v1576, 1.442695
        %v1779 = vpow.pop %v1778
        %v1780 = vmul.f32 %v1577, 1.442695
        %v1781 = vpow.pop %v1780
        %v1782 = vmul.f32 %v1578, 1.442695
        %v1783 = vpow.pop %v1782
        %v1784 = vmul.f32 %v1579, 1.442695
        %v1785 = vpow.pop %v1784
        %v1786 = vmul.f32 %v1580, 1.442695
        %v1787 = vpow.pop %v1786
        %v1788 = vmul.f32 %v1581, 1.442695
        %v1789 = vpow.pop %v1788
        %v1790 = vmul.f32 %v1582, 1.442695
        %v1791 = vpow.pop %v1790
        %v1792 = vmul.f32 %v1583, 1.442695
        %v1793 = vpow.pop %v1792
        %v1794 = vmul.f32 %v1584, 1.442695
        %v1795 = vpow.pop %v1794
        %v1796 = vmul.f32 %v1585, 1.442695
        %v1797 = vpow.pop %v1796
        %v1798 = vmul.f32 %v1586, 1.442695
        %v1799 = vpow.pop %v1798
        %v1800 = vmul.f32 %v1587, 1.442695
        %v1801 = vpow.pop %v1800
        %v1802 = vmul.f32 %v1588, 1.442695
        %v1803 = vpow.pop %v1802
        %v1804 = vmul.f32 %v1589, 1.442695
        %v1805 = vpow.pop %v1804
        %v1806 = vmul.f32 %v1590, 1.442695
        %v1807 = vpow.pop %v1806
        %v1808 = vmul.f32 %v1591, 1.442695
        %v1809 = vpow.pop %v1808
        %v1810 = vmul.f32 %v1592, 1.442695
        %v1811 = vpow.pop %v1810
        %v1812 = vmul.f32 %v1593, 1.442695
        %v1813 = vpow.pop %v1812
        %v1814 = vmul.f32 %v1594, 1.442695
        %v1815 = vpow.pop %v1814
        %v1816 = vmul.f32 %v1595, 1.442695
        %v1817 = vpow.pop %v1816
        %v1818 = vmul.f32 %v1596, 1.442695
        %v1819 = vpow.pop %v1818
        %v1820 = vmul.f32 %v1597, 1.442695
        %v1821 = vpow.pop %v1820
        %v1822 = vmul.f32 %v1598, 1.442695
        %v1823 = vpow.pop %v1822
        %v1824 = vmul.f32 %v1599, 1.442695
        %v1825 = vpow.pop %v1824
        %v1826 = vmul.f32 %v1600, 1.442695
        %v1827 = vpow.pop %v1826
        %v1828 = vmul.f32 %v1601, 1.442695
        %v1829 = vpow.pop %v1828
        %v1830 = vmul.f32 %v1602, 1.442695
        %v1831 = vpow.pop %v1830
        %v1832 = vmul.f32 %v1603, 1.442695
        %v1833 = vpow.pop %v1832
        %v1834 = vmul.f32 %v1604, 1.442695
        %v1835 = vpow.pop %v1834
        %v1836 = vmul.f32 %v1605, 1.442695
        %v1837 = vpow.pop %v1836
        %v1838 = vmul.f32 %v1606, 1.442695
        %v1839 = vpow.pop %v1838
        %v1840 = vmul.f32 %v1607, 1.442695
        %v1841 = vpow.pop %v1840
        %v1842 = vmul.f32 %v1608, 1.442695
        %v1843 = vpow.pop %v1842
        %v1844 = vmul.f32 %v1609, 1.442695
        %v1845 = vpow.pop %v1844
        %v1846 = vmul.f32 %v1610, 1.442695
        %v1847 = vpow.pop %v1846
        %v1848 = vmul.f32 %v1611, 1.442695
        %v1849 = vpow.pop %v1848
        %v1850 = vmul.f32 %v1612, 1.442695
        %v1851 = vpow.pop %v1850
        %v1852 = vmul.f32 %v1613, 1.442695
        %v1853 = vpow.pop %v1852
        %v1854 = vmul.f32 %v1614, 1.442695
        %v1855 = vpow.pop %v1854
        %v1856 = vmul.f32 %v1615, 1.442695
        %v1857 = vpow.pop %v1856
        %v1858 = vmul.f32 %v1616, 1.442695
        %v1859 = vpow.pop %v1858
        %v1860 = vmul.f32 %v1617, 1.442695
        %v1861 = vpow.pop %v1860
        %v1862 = vmul.f32 %v1618, 1.442695
        %v1863 = vpow.pop %v1862
        %v1864 = vmul.f32 %v1619, 1.442695
        %v1865 = vpow.pop %v1864
        %v1866 = vmul.f32 %v1620, 1.442695
        %v1867 = vpow.pop %v1866
        %v1868 = vmul.f32 %v1621, 1.442695
        %v1869 = vpow.pop %v1868
        %v1870 = vmul.f32 %v1622, 1.442695
        %v1871 = vpow.pop %v1870
        %v1872 = vmul.f32 %v1623, 1.442695
        %v1873 = vpow.pop %v1872
        %v1874 = vmul.f32 %v1624, 1.442695
        %v1875 = vpow.pop %v1874
        %v1876 = vmul.f32 %v1625, 1.442695
        %v1877 = vpow.pop %v1876
        %v1878 = vmul.f32 %v1626, 1.442695
        %v1879 = vpow.pop %v1878
        %v1880 = vmul.f32 %v1627, 1.442695
        %v1881 = vpow.pop %v1880
        %v1882 = vmul.f32 %v1628, 1.442695
        %v1883 = vpow.pop %v1882
        %v1884 = vmul.f32 %v1629, 1.442695
        %v1885 = vpow.pop %v1884
        %v1886 = vmul.f32 %v1630, 1.442695
        %v1887 = vpow.pop %v1886
        %v1888 = vmul.f32 %v1631, 1.442695
        %v1889 = vpow.pop %v1888
        %v1890 = vmul.f32 %v1632, 1.442695
        %v1891 = vpow.pop %v1890
        %v1892 = vmul.f32 %v1633, 1.442695
        %v1893 = vpow.pop %v1892
        %v1894 = vmul.f32 %v1634, 1.442695
        %v1895 = vpow.pop %v1894
        %v1896 = vmul.f32 %v1635, 1.442695
        %v1897 = vpow.pop %v1896
        %v1898 = vmul.f32 %v1636, 1.442695
        %v1899 = vpow.pop %v1898
        %v1900 = vmul.f32 %v1637, 1.442695
        %v1901 = vpow.pop %v1900
        %v1902 = vmul.f32 %v1638, 1.442695
        %v1903 = vpow.pop %v1902
        %v1904 = vmul.f32 %v1639, 1.442695
        %v1905 = vpow.pop %v1904
        %v1906 = vmul.f32 %v1640, 1.442695
        %v1907 = vpow.pop %v1906
        %v1908 = vmul.f32 %v1641, 1.442695
        %v1909 = vpow.pop %v1908
        %v1910 = vmul.f32 %v1642, 1.442695
        %v1911 = vpow.pop %v1910
        %v1912 = vmul.f32 %v1643, 1.442695
        %v1913 = vpow.pop %v1912
        %v1914 = vmul.f32 %v1644, 1.442695
        %v1915 = vpow.pop %v1914
        %v1916 = vmul.f32 %v1645, 1.442695
        %v1917 = vpow.pop %v1916
        %v1918 = vmul.f32 %v1646, 1.442695
        %v1919 = vpow.pop %v1918
        %v1920 = vmul.f32 %v1647, 1.442695
        %v1921 = vpow.pop %v1920
        %v1922 = vmul.f32 %v1648, 1.442695
        %v1923 = vpow.pop %v1922
        %v1924 = vmul.f32 %v1649, 1.442695
        %v1925 = vpow.pop %v1924
        %v1926 = vmul.f32 %v1650, 1.442695
        %v1927 = vpow.pop %v1926
        %v1928 = vmul.f32 %v1651, 1.442695
        %v1929 = vpow.pop %v1928
        %v1930 = vmul.f32 %v1652, 1.442695
        %v1931 = vpow.pop %v1930
        %v1932 = vmul.f32 %v1653, 1.442695
        %v1933 = vpow.pop %v1932
        %v1934 = vmul.f32 %v1654, 1.442695
        %v1935 = vpow.pop %v1934
        %v1936 = vmul.f32 %v1655, 1.442695
        %v1937 = vpow.pop %v1936
        %v1938 = vmul.f32 %v1656, 1.442695
        %v1939 = vpow.pop %v1938
        %v1940 = vmul.f32 %v1657, 1.442695
        %v1941 = vpow.pop %v1940
        %v1942 = vmul.f32 %v1658, 1.442695
        %v1943 = vpow.pop %v1942
        %v1944 = vmul.f32 %v1659, 1.442695
        %v1945 = vpow.pop %v1944
        %v1946 = vmul.f32 %v1660, 1.442695
        %v1947 = vpow.pop %v1946
        %v1948 = vmul.f32 %v1661, 1.442695
        %v1949 = vpow.pop %v1948
        %v1950 = vmul.f32 %v1662, 1.442695
        %v1951 = vpow.pop %v1950
        %v1952 = vmul.f32 %v1663, 1.442695
        %v1953 = vpow.pop %v1952
        %v1954 = vmul.f32 %v1664, 1.442695
        %v1955 = vpow.pop %v1954
        %v1956 = vmul.f32 %v1665, 1.442695
        %v1957 = vpow.pop %v1956
        %v1958 = vmul.f32 %v1666, 1.442695
        %v1959 = vpow.pop %v1958
        %v1960 = vmul.f32 %v1667, 1.442695
        %v1961 = vpow.pop %v1960
        %v1962 = vmul.f32 %v1668, 1.442695
        %v1963 = vpow.pop %v1962
        %v1964 = vmul.f32 %v1669, 1.442695
        %v1965 = vpow.pop %v1964
        %v1966 = vmul.f32 %v1670, 1.442695
        %v1967 = vpow.pop %v1966
        %v1968 = vmul.f32 %v1671, 1.442695
        %v1969 = vpow.pop %v1968
        %v1970 = vmul.f32 %v1672, 1.442695
        %v1971 = vpow.pop %v1970
        %v1972 = vmul.f32 %v1673, 1.442695
        %v1973 = vpow.pop %v1972
        %v1974 = vmul.f32 %v1674, 1.442695
        %v1975 = vpow.pop %v1974
        %v1976 = vmul.f32 %v1675, 1.442695
        %v1977 = vpow.pop %v1976
        %v1978 = vmul.f32 %v1676, 1.442695
        %v1979 = vpow.pop %v1978
        %v1980 = vmul.f32 %v1677, 1.442695
        %v1981 = vpow.pop %v1980
        %v1982 = vmul.f32 %v1678, 1.442695
        %v1983 = vpow.pop %v1982
        %v1984 = vmul.f32 %v1679, 1.442695
        %v1985 = vpow.pop %v1984
        %v1986 = vmul.f32 %v1680, 1.442695
        %v1987 = vpow.pop %v1986
        %v1988 = vmul.f32 %v1681, 1.442695
        %v1989 = vpow.pop %v1988
        %v1990 = vmul.f32 %v1682, 1.442695
        %v1991 = vpow.pop %v1990
        %v1992 = vmul.f32 %v1683, 1.442695
        %v1993 = vpow.pop %v1992
        %v1994 = vmul.f32 %v1684, 1.442695
        %v1995 = vpow.pop %v1994
        %v1996 = vmul.f32 %v1685, 1.442695
        %v1997 = vpow.pop %v1996
        %v1998 = vmul.f32 %v1686, 1.442695
        %v1999 = vpow.pop %v1998
        %v2000 = vmul.f32 %v1687, 1.442695
        %v2001 = vpow.pop %v2000
        %v2002 = vmul.f32 %v1688, 1.442695
        %v2003 = vpow.pop %v2002
        %v2004 = vmul.f32 %v1689, 1.442695
        %v2005 = vpow.pop %v2004
        %v2006 = vmul.f32 %v1690, 1.442695
        %v2007 = vpow.pop %v2006
        %v2008 = vmul.f32 %v1691, 1.442695
        %v2009 = vpow.pop %v2008
        %v2010 = vmul.f32 %v1692, 1.442695
        %v2011 = vpow.pop %v2010
        %v2012 = vmul.f32 %v1693, 1.442695
        %v2013 = vpow.pop %v2012
        %v2014 = vmul.f32 %v1694, 1.442695
        %v2015 = vpow.pop %v2014
        %v2016 = vmul.f32 %v1695, 1.442695
        %v2017 = vpow.pop %v2016
        %v2018 = vmul.f32 %v1696, 1.442695
        %v2019 = vpow.pop %v2018
        %v2020 = vmul.f32 %v1697, 1.442695
        %v2021 = vpow.pop %v2020
        %v2022 = vmul.f32 %v1698, 1.442695
        %v2023 = vpow.pop %v2022
        %v2024 = vmul.f32 %v1699, 1.442695
        %v2025 = vpow.pop %v2024
        %v2026 = vmul.f32 %v1700, 1.442695
        %v2027 = vpow.pop %v2026
        %v2028 = vmul.f32 %v1701, 1.442695
        %v2029 = vpow.pop %v2028
        %v2030 = vmul.f32 %v1702, 1.442695
        %v2031 = vpow.pop %v2030
        %v2032 = vmul.f32 %v1703, 1.442695
        %v2033 = vpow.pop %v2032
        %v2034 = vmul.f32 %v1704, 1.442695
        %v2035 = vpow.pop %v2034
        %v2036 = vmul.f32 %v1705, 1.442695
        %v2037 = vpow.pop %v2036
        %v2038 = vmul.f32 %v1706, 1.442695
        %v2039 = vpow.pop %v2038
        %v2040 = vmul.f32 %v1707, 1.442695
        %v2041 = vpow.pop %v2040
        %v2042 = vmul.f32 %v1708, 1.442695
        %v2043 = vpow.pop %v2042
        %v2044 = vmul.f32 %v1709, 1.442695
        %v2045 = vpow.pop %v2044
        %v2046 = vmul.f32 %v1710, 1.442695
        %v2047 = vpow.pop %v2046
        %v2048 = vmul.f32 %v1711, 1.442695
        %v2049 = vpow.pop %v2048
        %v2050 = vmul.f32 %v1712, 1.442695
        %v2051 = vpow.pop %v2050
        %v2052 = vmul.f32 %v1713, 1.442695
        %v2053 = vpow.pop %v2052
        %v2054 = vmul.f32 %v1714, 1.442695
        %v2055 = vpow.pop %v2054
        %v2056 = vmul.f32 %v1715, 1.442695
        %v2057 = vpow.pop %v2056
        %v2058 = vmul.f32 %v1716, 1.442695
        %v2059 = vpow.pop %v2058
        %v2060 = vmul.f32 %v1717, 1.442695
        %v2061 = vpow.pop %v2060
        %v2062 = vmul.f32 %v1718, 1.442695
        %v2063 = vpow.pop %v2062
        %v2064 = vmul.f32 %v1719, 1.442695
        %v2065 = vpow.pop %v2064
        %v2066 = vmul.f32 %v1720, 1.442695
        %v2067 = vpow.pop %v2066
        %v2068 = vmul.f32 %v1721, 1.442695
        %v2069 = vpow.pop %v2068
        %v2070 = vmul.f32 %v1722, 1.442695
        %v2071 = vpow.pop %v2070
        %v2072 = vmul.f32 %v1723, 1.442695
        %v2073 = vpow.pop %v2072
        %v2074 = vmul.f32 %v1724, 1.442695
        %v2075 = vpow.pop %v2074
        %v2076 = vmul.f32 %v1725, 1.442695
        %v2077 = vpow.pop %v2076
        %2078 = vst.msk [vmem:[#allocation2] sm:$0xff] %vm329, %v1727
        %2079 = vst.msk [vmem:[#allocation2 + $0x8] sm:$0xff] %vm329, %v1729
        %2080 = vst.msk [vmem:[#allocation2 + $0x10] sm:$0xff] %vm329, %v1731
        %2081 = vst.msk [vmem:[#allocation2 + $0x18] sm:$0xff] %vm329, %v1733
        %2082 = vst.msk [vmem:[#allocation2 + $0x20] sm:$0xff] %vm329, %v1735
        %2083 = vst.msk [vmem:[#allocation2 + $0x28] sm:$0xff] %vm329, %v1737
        %2084 = vst.msk [vmem:[#allocation2 + $0x30] sm:$0xff] %vm329, %v1739
        %2085 = vst.msk [vmem:[#allocation2 + $0x38] sm:$0xff] %vm329, %v1741
        %2086 = vst.msk [vmem:[#allocation2 + $0x40] sm:$0xff] %vm329, %v1743
        %2087 = vst.msk [vmem:[#allocation2 + $0x48] sm:$0xff] %vm329, %v1745
        %2088 = vst.msk [vmem:[#allocation2 + $0x50] sm:$0xff] %vm329, %v1747
        %2089 = vst.msk [vmem:[#allocation2 + $0x58] sm:$0xff] %vm329, %v1749
        %2090 = vst.msk [vmem:[#allocation2 + $0x60] sm:$0xff] %vm329, %v1751
        %2091 = vst.msk [vmem:[#allocation2 + $0x68] sm:$0xff] %vm329, %v1753
        %2092 = vst.msk [vmem:[#allocation2 + $0x70] sm:$0xff] %vm329, %v1755
        %2093 = vst.msk [vmem:[#allocation2 + $0x78] sm:$0xff] %vm329, %v1757
        %2094 = vst.msk [vmem:[#allocation2 + $0x80] sm:$0xff] %vm329, %v1759
        %2095 = vst.msk [vmem:[#allocation2 + $0x88] sm:$0xff] %vm329, %v1761
        %2096 = vst.msk [vmem:[#allocation2 + $0x90] sm:$0xff] %vm329, %v1763
        %2097 = vst.msk [vmem:[#allocation2 + $0x98] sm:$0xff] %vm329, %v1765
        %2098 = vst.msk [vmem:[#allocation2 + $0xa0] sm:$0xff] %vm329, %v1767
        %2099 = vst.msk [vmem:[#allocation2 + $0xa8] sm:$0xff] %vm329, %v1769
        %2100 = vst.msk [vmem:[#allocation2 + $0xb0] sm:$0xff] %vm329, %v1771
        %2101 = vst.msk [vmem:[#allocation2 + $0xb8] sm:$0xff] %vm329, %v1773
        %2102 = vst.msk [vmem:[#allocation2 + $0xc0] sm:$0xff] %vm329, %v1775
        %2103 = vst.msk [vmem:[#allocation2 + $0xc8] sm:$0xff] %vm329, %v1777
        %2104 = vst.msk [vmem:[#allocation2 + $0xd0] sm:$0xff] %vm329, %v1779
        %2105 = vst.msk [vmem:[#allocation2 + $0xd8] sm:$0xff] %vm329, %v1781
        %2106 = vst.msk [vmem:[#allocation2 + $0xe0] sm:$0xff] %vm329, %v1783
        %2107 = vst.msk [vmem:[#allocation2 + $0xe8] sm:$0xff] %vm329, %v1785
        %2108 = vst.msk [vmem:[#allocation2 + $0xf0] sm:$0xff] %vm329, %v1787
        %2109 = vst.msk [vmem:[#allocation2 + $0xf8] sm:$0xff] %vm329, %v1789
        %2110 = vst.msk [vmem:[#allocation2 + $0x100] sm:$0xff] %vm329, %v1791
        %2111 = vst.msk [vmem:[#allocation2 + $0x108] sm:$0xff] %vm329, %v1793
        %2112 = vst.msk [vmem:[#allocation2 + $0x110] sm:$0xff] %vm329, %v1795
        %2113 = vst.msk [vmem:[#allocation2 + $0x118] sm:$0xff] %vm329, %v1797
        %2114 = vst.msk [vmem:[#allocation2 + $0x120] sm:$0xff] %vm329, %v1799
        %2115 = vst.msk [vmem:[#allocation2 + $0x128] sm:$0xff] %vm329, %v1801
        %2116 = vst.msk [vmem:[#allocation2 + $0x130] sm:$0xff] %vm329, %v1803
        %2117 = vst.msk [vmem:[#allocation2 + $0x138] sm:$0xff] %vm329, %v1805
        %2118 = vst.msk [vmem:[#allocation2 + $0x140] sm:$0xff] %vm329, %v1807
        %2119 = vst.msk [vmem:[#allocation2 + $0x148] sm:$0xff] %vm329, %v1809
        %2120 = vst.msk [vmem:[#allocation2 + $0x150] sm:$0xff] %vm329, %v1811
        %2121 = vst.msk [vmem:[#allocation2 + $0x158] sm:$0xff] %vm329, %v1813
        %2122 = vst.msk [vmem:[#allocation2 + $0x160] sm:$0xff] %vm329, %v1815
        %2123 = vst.msk [vmem:[#allocation2 + $0x168] sm:$0xff] %vm329, %v1817
        %2124 = vst.msk [vmem:[#allocation2 + $0x170] sm:$0xff] %vm329, %v1819
        %2125 = vst.msk [vmem:[#allocation2 + $0x178] sm:$0xff] %vm329, %v1821
        %2126 = vst.msk [vmem:[#allocation2 + $0x180] sm:$0xff] %vm329, %v1823
        %2127 = vst.msk [vmem:[#allocation2 + $0x188] sm:$0xff] %vm329, %v1825
        %2128 = vst.msk [vmem:[#allocation2 + $0x190] sm:$0xff] %vm329, %v1827
        %2129 = vst.msk [vmem:[#allocation2 + $0x198] sm:$0xff] %vm329, %v1829
        %2130 = vst.msk [vmem:[#allocation2 + $0x1a0] sm:$0xff] %vm329, %v1831
        %2131 = vst.msk [vmem:[#allocation2 + $0x1a8] sm:$0xff] %vm329, %v1833
        %2132 = vst.msk [vmem:[#allocation2 + $0x1b0] sm:$0xff] %vm329, %v1835
        %2133 = vst.msk [vmem:[#allocation2 + $0x1b8] sm:$0xff] %vm329, %v1837
        %2134 = vst.msk [vmem:[#allocation2 + $0x1c0] sm:$0xff] %vm329, %v1839
        %2135 = vst.msk [vmem:[#allocation2 + $0x1c8] sm:$0xff] %vm329, %v1841
        %2136 = vst.msk [vmem:[#allocation2 + $0x1d0] sm:$0xff] %vm329, %v1843
        %2137 = vst.msk [vmem:[#allocation2 + $0x1d8] sm:$0xff] %vm329, %v1845
        %2138 = vst.msk [vmem:[#allocation2 + $0x1e0] sm:$0xff] %vm329, %v1847
        %2139 = vst.msk [vmem:[#allocation2 + $0x1e8] sm:$0xff] %vm329, %v1849
        %2140 = vst.msk [vmem:[#allocation2 + $0x1f0] sm:$0xff] %vm329, %v1851
        %2141 = vst.msk [vmem:[#allocation2 + $0x1f8] sm:$0xff] %vm329, %v1853
        %2142 = vst.msk [vmem:[#allocation2 + $0x200] sm:$0xff] %vm329, %v1855
        %2143 = vst.msk [vmem:[#allocation2 + $0x208] sm:$0xff] %vm329, %v1857
        %2144 = vst.msk [vmem:[#allocation2 + $0x210] sm:$0xff] %vm329, %v1859
        %2145 = vst.msk [vmem:[#allocation2 + $0x218] sm:$0xff] %vm329, %v1861
        %2146 = vst.msk [vmem:[#allocation2 + $0x220] sm:$0xff] %vm329, %v1863
        %2147 = vst.msk [vmem:[#allocation2 + $0x228] sm:$0xff] %vm329, %v1865
        %2148 = vst.msk [vmem:[#allocation2 + $0x230] sm:$0xff] %vm329, %v1867
        %2149 = vst.msk [vmem:[#allocation2 + $0x238] sm:$0xff] %vm329, %v1869
        %2150 = vst.msk [vmem:[#allocation2 + $0x240] sm:$0xff] %vm329, %v1871
        %2151 = vst.msk [vmem:[#allocation2 + $0x248] sm:$0xff] %vm329, %v1873
        %2152 = vst.msk [vmem:[#allocation2 + $0x250] sm:$0xff] %vm329, %v1875
        %2153 = vst.msk [vmem:[#allocation2 + $0x258] sm:$0xff] %vm329, %v1877
        %2154 = vst.msk [vmem:[#allocation2 + $0x260] sm:$0xff] %vm329, %v1879
        %2155 = vst.msk [vmem:[#allocation2 + $0x268] sm:$0xff] %vm329, %v1881
        %2156 = vst.msk [vmem:[#allocation2 + $0x270] sm:$0xff] %vm329, %v1883
        %2157 = vst.msk [vmem:[#allocation2 + $0x278] sm:$0xff] %vm329, %v1885
        %2158 = vst.msk [vmem:[#allocation2 + $0x280] sm:$0xff] %vm329, %v1887
        %2159 = vst.msk [vmem:[#allocation2 + $0x288] sm:$0xff] %vm329, %v1889
        %2160 = vst.msk [vmem:[#allocation2 + $0x290] sm:$0xff] %vm329, %v1891
        %2161 = vst.msk [vmem:[#allocation2 + $0x298] sm:$0xff] %vm329, %v1893
        %2162 = vst.msk [vmem:[#allocation2 + $0x2a0] sm:$0xff] %vm329, %v1895
        %2163 = vst.msk [vmem:[#allocation2 + $0x2a8] sm:$0xff] %vm329, %v1897
        %2164 = vst.msk [vmem:[#allocation2 + $0x2b0] sm:$0xff] %vm329, %v1899
        %2165 = vst.msk [vmem:[#allocation2 + $0x2b8] sm:$0xff] %vm329, %v1901
        %2166 = vst.msk [vmem:[#allocation2 + $0x2c0] sm:$0xff] %vm329, %v1903
        %2167 = vst.msk [vmem:[#allocation2 + $0x2c8] sm:$0xff] %vm329, %v1905
        %2168 = vst.msk [vmem:[#allocation2 + $0x2d0] sm:$0xff] %vm329, %v1907
        %2169 = vst.msk [vmem:[#allocation2 + $0x2d8] sm:$0xff] %vm329, %v1909
        %2170 = vst.msk [vmem:[#allocation2 + $0x2e0] sm:$0xff] %vm329, %v1911
        %2171 = vst.msk [vmem:[#allocation2 + $0x2e8] sm:$0xff] %vm329, %v1913
        %2172 = vst.msk [vmem:[#allocation2 + $0x2f0] sm:$0xff] %vm329, %v1915
        %2173 = vst.msk [vmem:[#allocation2 + $0x2f8] sm:$0xff] %vm329, %v1917
        %2174 = vst.msk [vmem:[#allocation2 + $0x300] sm:$0xff] %vm329, %v1919
        %2175 = vst.msk [vmem:[#allocation2 + $0x308] sm:$0xff] %vm329, %v1921
        %2176 = vst.msk [vmem:[#allocation2 + $0x310] sm:$0xff] %vm329, %v1923
        %2177 = vst.msk [vmem:[#allocation2 + $0x318] sm:$0xff] %vm329, %v1925
        %2178 = vst.msk [vmem:[#allocation2 + $0x320] sm:$0xff] %vm329, %v1927
        %2179 = vst.msk [vmem:[#allocation2 + $0x328] sm:$0xff] %vm329, %v1929
        %2180 = vst.msk [vmem:[#allocation2 + $0x330] sm:$0xff] %vm329, %v1931
        %2181 = vst.msk [vmem:[#allocation2 + $0x338] sm:$0xff] %vm329, %v1933
        %2182 = vst.msk [vmem:[#allocation2 + $0x340] sm:$0xff] %vm329, %v1935
        %2183 = vst.msk [vmem:[#allocation2 + $0x348] sm:$0xff] %vm329, %v1937
        %2184 = vst.msk [vmem:[#allocation2 + $0x350] sm:$0xff] %vm329, %v1939
        %2185 = vst.msk [vmem:[#allocation2 + $0x358] sm:$0xff] %vm329, %v1941
        %2186 = vst.msk [vmem:[#allocation2 + $0x360] sm:$0xff] %vm329, %v1943
        %2187 = vst.msk [vmem:[#allocation2 + $0x368] sm:$0xff] %vm329, %v1945
        %2188 = vst.msk [vmem:[#allocation2 + $0x370] sm:$0xff] %vm329, %v1947
        %2189 = vst.msk [vmem:[#allocation2 + $0x378] sm:$0xff] %vm329, %v1949
        %2190 = vst.msk [vmem:[#allocation2 + $0x380] sm:$0xff] %vm329, %v1951
        %2191 = vst.msk [vmem:[#allocation2 + $0x388] sm:$0xff] %vm329, %v1953
        %2192 = vst.msk [vmem:[#allocation2 + $0x390] sm:$0xff] %vm329, %v1955
        %2193 = vst.msk [vmem:[#allocation2 + $0x398] sm:$0xff] %vm329, %v1957
        %2194 = vst.msk [vmem:[#allocation2 + $0x3a0] sm:$0xff] %vm329, %v1959
        %2195 = vst.msk [vmem:[#allocation2 + $0x3a8] sm:$0xff] %vm329, %v1961
        %2196 = vst.msk [vmem:[#allocation2 + $0x3b0] sm:$0xff] %vm329, %v1963
        %2197 = vst.msk [vmem:[#allocation2 + $0x3b8] sm:$0xff] %vm329, %v1965
        %2198 = vst.msk [vmem:[#allocation2 + $0x3c0] sm:$0xff] %vm329, %v1967
        %2199 = vst.msk [vmem:[#allocation2 + $0x3c8] sm:$0xff] %vm329, %v1969
        %2200 = vst.msk [vmem:[#allocation2 + $0x3d0] sm:$0xff] %vm329, %v1971
        %2201 = vst.msk [vmem:[#allocation2 + $0x3d8] sm:$0xff] %vm329, %v1973
        %2202 = vst.msk [vmem:[#allocation2 + $0x3e0] sm:$0xff] %vm329, %v1975
        %2203 = vst.msk [vmem:[#allocation2 + $0x3e8] sm:$0xff] %vm329, %v1977
        %2204 = vst.msk [vmem:[#allocation2 + $0x3f0] sm:$0xff] %vm329, %v1979
        %2205 = vst.msk [vmem:[#allocation2 + $0x3f8] sm:$0xff] %vm329, %v1981
        %2206 = vst.msk [vmem:[#allocation2 + $0x400] sm:$0xff] %vm329, %v1983
        %2207 = vst.msk [vmem:[#allocation2 + $0x408] sm:$0xff] %vm329, %v1985
        %2208 = vst.msk [vmem:[#allocation2 + $0x410] sm:$0xff] %vm329, %v1987
        %2209 = vst.msk [vmem:[#allocation2 + $0x418] sm:$0xff] %vm329, %v1989
        %2210 = vst.msk [vmem:[#allocation2 + $0x420] sm:$0xff] %vm329, %v1991
        %2211 = vst.msk [vmem:[#allocation2 + $0x428] sm:$0xff] %vm329, %v1993
        %2212 = vst.msk [vmem:[#allocation2 + $0x430] sm:$0xff] %vm329, %v1995
        %2213 = vst.msk [vmem:[#allocation2 + $0x438] sm:$0xff] %vm329, %v1997
        %2214 = vst.msk [vmem:[#allocation2 + $0x440] sm:$0xff] %vm329, %v1999
        %2215 = vst.msk [vmem:[#allocation2 + $0x448] sm:$0xff] %vm329, %v2001
        %2216 = vst.msk [vmem:[#allocation2 + $0x450] sm:$0xff] %vm329, %v2003
        %2217 = vst.msk [vmem:[#allocation2 + $0x458] sm:$0xff] %vm329, %v2005
        %2218 = vst.msk [vmem:[#allocation2 + $0x460] sm:$0xff] %vm329, %v2007
        %2219 = vst.msk [vmem:[#allocation2 + $0x468] sm:$0xff] %vm329, %v2009
        %2220 = vst.msk [vmem:[#allocation2 + $0x470] sm:$0xff] %vm329, %v2011
        %2221 = vst.msk [vmem:[#allocation2 + $0x478] sm:$0xff] %vm329, %v2013
        %2222 = vst.msk [vmem:[#allocation2 + $0x480] sm:$0xff] %vm329, %v2015
        %2223 = vst.msk [vmem:[#allocation2 + $0x488] sm:$0xff] %vm329, %v2017
        %2224 = vst.msk [vmem:[#allocation2 + $0x490] sm:$0xff] %vm329, %v2019
        %2225 = vst.msk [vmem:[#allocation2 + $0x498] sm:$0xff] %vm329, %v2021
        %2226 = vst.msk [vmem:[#allocation2 + $0x4a0] sm:$0xff] %vm329, %v2023
        %2227 = vst.msk [vmem:[#allocation2 + $0x4a8] sm:$0xff] %vm329, %v2025
        %2228 = vst.msk [vmem:[#allocation2 + $0x4b0] sm:$0xff] %vm329, %v2027
        %2229 = vst.msk [vmem:[#allocation2 + $0x4b8] sm:$0xff] %vm329, %v2029
        %2230 = vst.msk [vmem:[#allocation2 + $0x4c0] sm:$0xff] %vm329, %v2031
        %2231 = vst.msk [vmem:[#allocation2 + $0x4c8] sm:$0xff] %vm329, %v2033
        %2232 = vst.msk [vmem:[#allocation2 + $0x4d0] sm:$0xff] %vm329, %v2035
        %2233 = vst.msk [vmem:[#allocation2 + $0x4d8] sm:$0xff] %vm329, %v2037
        %2234 = vst.msk [vmem:[#allocation2 + $0x4e0] sm:$0xff] %vm329, %v2039
        %2235 = vst.msk [vmem:[#allocation2 + $0x4e8] sm:$0xff] %vm329, %v2041
        %2236 = vst.msk [vmem:[#allocation2 + $0x4f0] sm:$0xff] %vm329, %v2043
        %2237 = vst.msk [vmem:[#allocation2 + $0x4f8] sm:$0xff] %vm329, %v2045
        %2238 = vst.msk [vmem:[#allocation2 + $0x500] sm:$0xff] %vm329, %v2047
        %2239 = vst.msk [vmem:[#allocation2 + $0x508] sm:$0xff] %vm329, %v2049
        %2240 = vst.msk [vmem:[#allocation2 + $0x510] sm:$0xff] %vm329, %v2051
        %2241 = vst.msk [vmem:[#allocation2 + $0x518] sm:$0xff] %vm329, %v2053
        %2242 = vst.msk [vmem:[#allocation2 + $0x520] sm:$0xff] %vm329, %v2055
        %2243 = vst.msk [vmem:[#allocation2 + $0x528] sm:$0xff] %vm329, %v2057
        %2244 = vst.msk [vmem:[#allocation2 + $0x530] sm:$0xff] %vm329, %v2059
        %2245 = vst.msk [vmem:[#allocation2 + $0x538] sm:$0xff] %vm329, %v2061
        %2246 = vst.msk [vmem:[#allocation2 + $0x540] sm:$0xff] %vm329, %v2063
        %2247 = vst.msk [vmem:[#allocation2 + $0x548] sm:$0xff] %vm329, %v2065
        %2248 = vst.msk [vmem:[#allocation2 + $0x550] sm:$0xff] %vm329, %v2067
        %2249 = vst.msk [vmem:[#allocation2 + $0x558] sm:$0xff] %vm329, %v2069
        %2250 = vst.msk [vmem:[#allocation2 + $0x560] sm:$0xff] %vm329, %v2071
        %2251 = vst.msk [vmem:[#allocation2 + $0x568] sm:$0xff] %vm329, %v2073
        %2252 = vst.msk [vmem:[#allocation2 + $0x570] sm:$0xff] %vm329, %v2075
        %2253 = vst.msk [vmem:[#allocation2 + $0x578] sm:$0xff] %vm329, %v2077
        %v2254 = vlaneseq
        %v2255 = vshrl.u32 %v2254, 7
        %v2256 = vsub.s32 0, %v2255
        %v2257 = vrot.slane %v387, %v2256
        %s2259 = sor.u32 256, 18
        %2260 = vbcast.lane.b32.xlu0 %v2257, %s2259
        %v2261 = vpop.permute.xlu0 %2260
        %s2263 = sor.u32 256, 26
        %2264 = vbcast.lane.b32.xlu0 %v2257, %s2263
        %v2265 = vpop.permute.xlu0 %2264
        %v2266 = vlaneseq
        %v2267 = vshrl.u32 %v2266, 7
        %v2268 = vsub.s32 1, %v2267
        %v2269 = vrot.slane %v387, %v2268
        %s2271 = sor.u32 256, 18
        %2272 = vbcast.lane.b32.xlu0 %v2269, %s2271
        %v2273 = vpop.permute.xlu0 %2272
        %s2275 = sor.u32 256, 26
        %2276 = vbcast.lane.b32.xlu0 %v2269, %s2275
        %v2277 = vpop.permute.xlu0 %2276
        %v2278 = vlaneseq
        %v2279 = vshrl.u32 %v2278, 7
        %v2280 = vsub.s32 2, %v2279
        %v2281 = vrot.slane %v387, %v2280
        %s2283 = sor.u32 256, 18
        %2284 = vbcast.lane.b32.xlu0 %v2281, %s2283
        %v2285 = vpop.permute.xlu0 %2284
        %s2287 = sor.u32 256, 26
        %2288 = vbcast.lane.b32.xlu0 %v2281, %s2287
        %v2289 = vpop.permute.xlu0 %2288
        %v2290 = vlaneseq
        %v2291 = vshrl.u32 %v2290, 7
        %v2292 = vsub.s32 3, %v2291
        %v2293 = vrot.slane %v387, %v2292
        %s2295 = sor.u32 256, 18
        %2296 = vbcast.lane.b32.xlu0 %v2293, %s2295
        %v2297 = vpop.permute.xlu0 %2296
        %s2299 = sor.u32 256, 26
        %2300 = vbcast.lane.b32.xlu0 %v2293, %s2299
        %v2301 = vpop.permute.xlu0 %2300
        %v2302 = vlaneseq
        %v2303 = vshrl.u32 %v2302, 7
        %v2304 = vsub.s32 4, %v2303
        %v2305 = vrot.slane %v387, %v2304
        %s2307 = sor.u32 256, 18
        %2308 = vbcast.lane.b32.xlu0 %v2305, %s2307
        %v2309 = vpop.permute.xlu0 %2308
        %s2311 = sor.u32 256, 26
        %2312 = vbcast.lane.b32.xlu0 %v2305, %s2311
        %v2313 = vpop.permute.xlu0 %2312
        %v2314 = vlaneseq
        %v2315 = vshrl.u32 %v2314, 7
        %v2316 = vsub.s32 5, %v2315
        %v2317 = vrot.slane %v387, %v2316
        %s2319 = sor.u32 256, 18
        %2320 = vbcast.lane.b32.xlu0 %v2317, %s2319
        %v2321 = vpop.permute.xlu0 %2320
        %s2323 = sor.u32 256, 26
        %2324 = vbcast.lane.b32.xlu0 %v2317, %s2323
        %v2325 = vpop.permute.xlu0 %2324
        %v2326 = vlaneseq
        %v2327 = vshrl.u32 %v2326, 7
        %v2328 = vsub.s32 6, %v2327
        %v2329 = vrot.slane %v387, %v2328
        %s2331 = sor.u32 256, 18
        %2332 = vbcast.lane.b32.xlu0 %v2329, %s2331
        %v2333 = vpop.permute.xlu0 %2332
        %s2335 = sor.u32 256, 26
        %2336 = vbcast.lane.b32.xlu0 %v2329, %s2335
        %v2337 = vpop.permute.xlu0 %2336
        %v2338 = vlaneseq
        %v2339 = vshrl.u32 %v2338, 7
        %v2340 = vsub.s32 7, %v2339
        %v2341 = vrot.slane %v387, %v2340
        %s2343 = sor.u32 256, 18
        %2344 = vbcast.lane.b32.xlu0 %v2341, %s2343
        %v2345 = vpop.permute.xlu0 %2344
        %s2347 = sor.u32 256, 26
        %2348 = vbcast.lane.b32.xlu0 %v2341, %s2347
        %v2349 = vpop.permute.xlu0 %2348
        %v2350 = vlaneseq
        %v2351 = vshrl.u32 %v2350, 7
        %v2352 = vsub.s32 0, %v2351
        %v2353 = vrot.slane %v390, %v2352
        %s2355 = sor.u32 256, 18
        %2356 = vbcast.lane.b32.xlu0 %v2353, %s2355
        %v2357 = vpop.permute.xlu0 %2356
        %s2359 = sor.u32 256, 26
        %2360 = vbcast.lane.b32.xlu0 %v2353, %s2359
        %v2361 = vpop.permute.xlu0 %2360
        %v2362 = vlaneseq
        %v2363 = vshrl.u32 %v2362, 7
        %v2364 = vsub.s32 1, %v2363
        %v2365 = vrot.slane %v390, %v2364
        %s2367 = sor.u32 256, 18
        %2368 = vbcast.lane.b32.xlu0 %v2365, %s2367
        %v2369 = vpop.permute.xlu0 %2368
        %s2371 = sor.u32 256, 26
        %2372 = vbcast.lane.b32.xlu0 %v2365, %s2371
        %v2373 = vpop.permute.xlu0 %2372
        %v2374 = vlaneseq
        %v2375 = vshrl.u32 %v2374, 7
        %v2376 = vsub.s32 2, %v2375
        %v2377 = vrot.slane %v390, %v2376
        %s2379 = sor.u32 256, 18
        %2380 = vbcast.lane.b32.xlu0 %v2377, %s2379
        %v2381 = vpop.permute.xlu0 %2380
        %s2383 = sor.u32 256, 26
        %2384 = vbcast.lane.b32.xlu0 %v2377, %s2383
        %v2385 = vpop.permute.xlu0 %2384
        %v2386 = vlaneseq
        %v2387 = vshrl.u32 %v2386, 7
        %v2388 = vsub.s32 3, %v2387
        %v2389 = vrot.slane %v390, %v2388
        %s2391 = sor.u32 256, 18
        %2392 = vbcast.lane.b32.xlu0 %v2389, %s2391
        %v2393 = vpop.permute.xlu0 %2392
        %s2395 = sor.u32 256, 26
        %2396 = vbcast.lane.b32.xlu0 %v2389, %s2395
        %v2397 = vpop.permute.xlu0 %2396
        %v2398 = vlaneseq
        %v2399 = vshrl.u32 %v2398, 7
        %v2400 = vsub.s32 4, %v2399
        %v2401 = vrot.slane %v390, %v2400
        %s2403 = sor.u32 256, 18
        %2404 = vbcast.lane.b32.xlu0 %v2401, %s2403
        %v2405 = vpop.permute.xlu0 %2404
        %s2407 = sor.u32 256, 26
        %2408 = vbcast.lane.b32.xlu0 %v2401, %s2407
        %v2409 = vpop.permute.xlu0 %2408
        %v2410 = vlaneseq
        %v2411 = vshrl.u32 %v2410, 7
        %v2412 = vsub.s32 5, %v2411
        %v2413 = vrot.slane %v390, %v2412
        %s2415 = sor.u32 256, 18
        %2416 = vbcast.lane.b32.xlu0 %v2413, %s2415
        %v2417 = vpop.permute.xlu0 %2416
        %s2419 = sor.u32 256, 26
        %2420 = vbcast.lane.b32.xlu0 %v2413, %s2419
        %v2421 = vpop.permute.xlu0 %2420
        %v2422 = vlaneseq
        %v2423 = vshrl.u32 %v2422, 7
        %v2424 = vsub.s32 6, %v2423
        %v2425 = vrot.slane %v390, %v2424
        %s2427 = sor.u32 256, 18
        %2428 = vbcast.lane.b32.xlu0 %v2425, %s2427
        %v2429 = vpop.permute.xlu0 %2428
        %s2431 = sor.u32 256, 26
        %2432 = vbcast.lane.b32.xlu0 %v2425, %s2431
        %v2433 = vpop.permute.xlu0 %2432
        %v2434 = vlaneseq
        %v2435 = vshrl.u32 %v2434, 7
        %v2436 = vsub.s32 7, %v2435
        %v2437 = vrot.slane %v390, %v2436
        %s2439 = sor.u32 256, 18
        %2440 = vbcast.lane.b32.xlu0 %v2437, %s2439
        %v2441 = vpop.permute.xlu0 %2440
        %s2443 = sor.u32 256, 26
        %2444 = vbcast.lane.b32.xlu0 %v2437, %s2443
        %v2445 = vpop.permute.xlu0 %2444
        %v2446 = vlaneseq
        %v2447 = vshrl.u32 %v2446, 7
        %v2448 = vsub.s32 0, %v2447
        %v2449 = vrot.slane %v395, %v2448
        %s2451 = sor.u32 256, 18
        %2452 = vbcast.lane.b32.xlu0 %v2449, %s2451
        %v2453 = vpop.permute.xlu0 %2452
        %s2455 = sor.u32 256, 26
        %2456 = vbcast.lane.b32.xlu0 %v2449, %s2455
        %v2457 = vpop.permute.xlu0 %2456
        %v2458 = vlaneseq
        %v2459 = vshrl.u32 %v2458, 7
        %v2460 = vsub.s32 1, %v2459
        %v2461 = vrot.slane %v395, %v2460
        %s2463 = sor.u32 256, 18
        %2464 = vbcast.lane.b32.xlu0 %v2461, %s2463
        %v2465 = vpop.permute.xlu0 %2464
        %s2467 = sor.u32 256, 26
        %2468 = vbcast.lane.b32.xlu0 %v2461, %s2467
        %v2469 = vpop.permute.xlu0 %2468
        %v2470 = vlaneseq
        %v2471 = vshrl.u32 %v2470, 7
        %v2472 = vsub.s32 2, %v2471
        %v2473 = vrot.slane %v395, %v2472
        %s2475 = sor.u32 256, 18
        %2476 = vbcast.lane.b32.xlu0 %v2473, %s2475
        %v2477 = vpop.permute.xlu0 %2476
        %s2479 = sor.u32 256, 26
        %2480 = vbcast.lane.b32.xlu0 %v2473, %s2479
        %v2481 = vpop.permute.xlu0 %2480
        %v2482 = vlaneseq
        %v2483 = vshrl.u32 %v2482, 7
        %v2484 = vsub.s32 3, %v2483
        %v2485 = vrot.slane %v395, %v2484
        %s2487 = sor.u32 256, 18
        %2488 = vbcast.lane.b32.xlu0 %v2485, %s2487
        %v2489 = vpop.permute.xlu0 %2488
        %s2491 = sor.u32 256, 26
        %2492 = vbcast.lane.b32.xlu0 %v2485, %s2491
        %v2493 = vpop.permute.xlu0 %2492
        %v2494 = vlaneseq
        %v2495 = vshrl.u32 %v2494, 7
        %v2496 = vsub.s32 4, %v2495
        %v2497 = vrot.slane %v395, %v2496
        %s2499 = sor.u32 256, 18
        %2500 = vbcast.lane.b32.xlu0 %v2497, %s2499
        %v2501 = vpop.permute.xlu0 %2500
        %s2503 = sor.u32 256, 26
        %2504 = vbcast.lane.b32.xlu0 %v2497, %s2503
        %v2505 = vpop.permute.xlu0 %2504
        %v2506 = vlaneseq
        %v2507 = vshrl.u32 %v2506, 7
        %v2508 = vsub.s32 5, %v2507
        %v2509 = vrot.slane %v395, %v2508
        %s2511 = sor.u32 256, 18
        %2512 = vbcast.lane.b32.xlu0 %v2509, %s2511
        %v2513 = vpop.permute.xlu0 %2512
        %s2515 = sor.u32 256, 26
        %2516 = vbcast.lane.b32.xlu0 %v2509, %s2515
        %v2517 = vpop.permute.xlu0 %2516
        %v2518 = vlaneseq
        %v2519 = vshrl.u32 %v2518, 7
        %v2520 = vsub.s32 6, %v2519
        %v2521 = vrot.slane %v395, %v2520
        %s2523 = sor.u32 256, 18
        %2524 = vbcast.lane.b32.xlu0 %v2521, %s2523
        %v2525 = vpop.permute.xlu0 %2524
        %s2527 = sor.u32 256, 26
        %2528 = vbcast.lane.b32.xlu0 %v2521, %s2527
        %v2529 = vpop.permute.xlu0 %2528
        %v2530 = vlaneseq
        %v2531 = vshrl.u32 %v2530, 7
        %v2532 = vsub.s32 7, %v2531
        %v2533 = vrot.slane %v395, %v2532
        %s2535 = sor.u32 256, 18
        %2536 = vbcast.lane.b32.xlu0 %v2533, %s2535
        %v2537 = vpop.permute.xlu0 %2536
        %s2539 = sor.u32 256, 26
        %2540 = vbcast.lane.b32.xlu0 %v2533, %s2539
        %v2541 = vpop.permute.xlu0 %2540
        %v2542 = vlaneseq
        %v2543 = vshrl.u32 %v2542, 7
        %v2544 = vsub.s32 0, %v2543
        %v2545 = vrot.slane %v398, %v2544
        %s2547 = sor.u32 256, 18
        %2548 = vbcast.lane.b32.xlu0 %v2545, %s2547
        %v2549 = vpop.permute.xlu0 %2548
        %s2551 = sor.u32 256, 26
        %2552 = vbcast.lane.b32.xlu0 %v2545, %s2551
        %v2553 = vpop.permute.xlu0 %2552
        %v2554 = vlaneseq
        %v2555 = vshrl.u32 %v2554, 7
        %v2556 = vsub.s32 1, %v2555
        %v2557 = vrot.slane %v398, %v2556
        %s2559 = sor.u32 256, 18
        %2560 = vbcast.lane.b32.xlu0 %v2557, %s2559
        %v2561 = vpop.permute.xlu0 %2560
        %s2563 = sor.u32 256, 26
        %2564 = vbcast.lane.b32.xlu0 %v2557, %s2563
        %v2565 = vpop.permute.xlu0 %2564
        %v2566 = vlaneseq
        %v2567 = vshrl.u32 %v2566, 7
        %v2568 = vsub.s32 2, %v2567
        %v2569 = vrot.slane %v398, %v2568
        %s2571 = sor.u32 256, 18
        %2572 = vbcast.lane.b32.xlu0 %v2569, %s2571
        %v2573 = vpop.permute.xlu0 %2572
        %s2575 = sor.u32 256, 26
        %2576 = vbcast.lane.b32.xlu0 %v2569, %s2575
        %v2577 = vpop.permute.xlu0 %2576
        %v2578 = vlaneseq
        %v2579 = vshrl.u32 %v2578, 7
        %v2580 = vsub.s32 3, %v2579
        %v2581 = vrot.slane %v398, %v2580
        %s2583 = sor.u32 256, 18
        %2584 = vbcast.lane.b32.xlu0 %v2581, %s2583
        %v2585 = vpop.permute.xlu0 %2584
        %s2587 = sor.u32 256, 26
        %2588 = vbcast.lane.b32.xlu0 %v2581, %s2587
        %v2589 = vpop.permute.xlu0 %2588
        %v2590 = vlaneseq
        %v2591 = vshrl.u32 %v2590, 7
        %v2592 = vsub.s32 4, %v2591
        %v2593 = vrot.slane %v398, %v2592
        %s2595 = sor.u32 256, 18
        %2596 = vbcast.lane.b32.xlu0 %v2593, %s2595
        %v2597 = vpop.permute.xlu0 %2596
        %s2599 = sor.u32 256, 26
        %2600 = vbcast.lane.b32.xlu0 %v2593, %s2599
        %v2601 = vpop.permute.xlu0 %2600
        %v2602 = vlaneseq
        %v2603 = vshrl.u32 %v2602, 7
        %v2604 = vsub.s32 5, %v2603
        %v2605 = vrot.slane %v398, %v2604
        %s2607 = sor.u32 256, 18
        %2608 = vbcast.lane.b32.xlu0 %v2605, %s2607
        %v2609 = vpop.permute.xlu0 %2608
        %s2611 = sor.u32 256, 26
        %2612 = vbcast.lane.b32.xlu0 %v2605, %s2611
        %v2613 = vpop.permute.xlu0 %2612
        %v2614 = vlaneseq
        %v2615 = vshrl.u32 %v2614, 7
        %v2616 = vsub.s32 6, %v2615
        %v2617 = vrot.slane %v398, %v2616
        %s2619 = sor.u32 256, 18
        %2620 = vbcast.lane.b32.xlu0 %v2617, %s2619
        %v2621 = vpop.permute.xlu0 %2620
        %s2623 = sor.u32 256, 26
        %2624 = vbcast.lane.b32.xlu0 %v2617, %s2623
        %v2625 = vpop.permute.xlu0 %2624
        %v2626 = vlaneseq
        %v2627 = vshrl.u32 %v2626, 7
        %v2628 = vsub.s32 7, %v2627
        %v2629 = vrot.slane %v398, %v2628
        %s2631 = sor.u32 256, 18
        %2632 = vbcast.lane.b32.xlu0 %v2629, %s2631
        %v2633 = vpop.permute.xlu0 %2632
        %s2635 = sor.u32 256, 26
        %2636 = vbcast.lane.b32.xlu0 %v2629, %s2635
        %v2637 = vpop.permute.xlu0 %2636
        %v2638 = vlaneseq
        %v2639 = vshrl.u32 %v2638, 7
        %v2640 = vsub.s32 0, %v2639
        %v2641 = vrot.slane %v403, %v2640
        %s2643 = sor.u32 256, 18
        %2644 = vbcast.lane.b32.xlu0 %v2641, %s2643
        %v2645 = vpop.permute.xlu0 %2644
        %s2647 = sor.u32 256, 26
        %2648 = vbcast.lane.b32.xlu0 %v2641, %s2647
        %v2649 = vpop.permute.xlu0 %2648
        %v2650 = vlaneseq
        %v2651 = vshrl.u32 %v2650, 7
        %v2652 = vsub.s32 1, %v2651
        %v2653 = vrot.slane %v403, %v2652
        %s2655 = sor.u32 256, 18
        %2656 = vbcast.lane.b32.xlu0 %v2653, %s2655
        %v2657 = vpop.permute.xlu0 %2656
        %s2659 = sor.u32 256, 26
        %2660 = vbcast.lane.b32.xlu0 %v2653, %s2659
        %v2661 = vpop.permute.xlu0 %2660
        %v2662 = vlaneseq
        %v2663 = vshrl.u32 %v2662, 7
        %v2664 = vsub.s32 2, %v2663
        %v2665 = vrot.slane %v403, %v2664
        %s2667 = sor.u32 256, 18
        %2668 = vbcast.lane.b32.xlu0 %v2665, %s2667
        %v2669 = vpop.permute.xlu0 %2668
        %s2671 = sor.u32 256, 26
        %2672 = vbcast.lane.b32.xlu0 %v2665, %s2671
        %v2673 = vpop.permute.xlu0 %2672
        %v2674 = vlaneseq
        %v2675 = vshrl.u32 %v2674, 7
        %v2676 = vsub.s32 3, %v2675
        %v2677 = vrot.slane %v403, %v2676
        %s2679 = sor.u32 256, 18
        %2680 = vbcast.lane.b32.xlu0 %v2677, %s2679
        %v2681 = vpop.permute.xlu0 %2680
        %s2683 = sor.u32 256, 26
        %2684 = vbcast.lane.b32.xlu0 %v2677, %s2683
        %v2685 = vpop.permute.xlu0 %2684
        %v2686 = vlaneseq
        %v2687 = vshrl.u32 %v2686, 7
        %v2688 = vsub.s32 4, %v2687
        %v2689 = vrot.slane %v403, %v2688
        %s2691 = sor.u32 256, 18
        %2692 = vbcast.lane.b32.xlu0 %v2689, %s2691
        %v2693 = vpop.permute.xlu0 %2692
        %s2695 = sor.u32 256, 26
        %2696 = vbcast.lane.b32.xlu0 %v2689, %s2695
        %v2697 = vpop.permute.xlu0 %2696
        %v2698 = vlaneseq
        %v2699 = vshrl.u32 %v2698, 7
        %v2700 = vsub.s32 5, %v2699
        %v2701 = vrot.slane %v403, %v2700
        %s2703 = sor.u32 256, 18
        %2704 = vbcast.lane.b32.xlu0 %v2701, %s2703
        %v2705 = vpop.permute.xlu0 %2704
        %s2707 = sor.u32 256, 26
        %2708 = vbcast.lane.b32.xlu0 %v2701, %s2707
        %v2709 = vpop.permute.xlu0 %2708
        %v2710 = vlaneseq
        %v2711 = vshrl.u32 %v2710, 7
        %v2712 = vsub.s32 6, %v2711
        %v2713 = vrot.slane %v403, %v2712
        %s2715 = sor.u32 256, 18
        %2716 = vbcast.lane.b32.xlu0 %v2713, %s2715
        %v2717 = vpop.permute.xlu0 %2716
        %s2719 = sor.u32 256, 26
        %2720 = vbcast.lane.b32.xlu0 %v2713, %s2719
        %v2721 = vpop.permute.xlu0 %2720
        %v2722 = vlaneseq
        %v2723 = vshrl.u32 %v2722, 7
        %v2724 = vsub.s32 7, %v2723
        %v2725 = vrot.slane %v403, %v2724
        %s2727 = sor.u32 256, 18
        %2728 = vbcast.lane.b32.xlu0 %v2725, %s2727
        %v2729 = vpop.permute.xlu0 %2728
        %s2731 = sor.u32 256, 26
        %2732 = vbcast.lane.b32.xlu0 %v2725, %s2731
        %v2733 = vpop.permute.xlu0 %2732
        %v2734 = vlaneseq
        %v2735 = vshrl.u32 %v2734, 7
        %v2736 = vsub.s32 0, %v2735
        %v2737 = vrot.slane %v406, %v2736
        %s2739 = sor.u32 256, 18
        %2740 = vbcast.lane.b32.xlu0 %v2737, %s2739
        %v2741 = vpop.permute.xlu0 %2740
        %s2743 = sor.u32 256, 26
        %2744 = vbcast.lane.b32.xlu0 %v2737, %s2743
        %v2745 = vpop.permute.xlu0 %2744
        %v2746 = vlaneseq
        %v2747 = vshrl.u32 %v2746, 7
        %v2748 = vsub.s32 1, %v2747
        %v2749 = vrot.slane %v406, %v2748
        %s2751 = sor.u32 256, 18
        %2752 = vbcast.lane.b32.xlu0 %v2749, %s2751
        %v2753 = vpop.permute.xlu0 %2752
        %s2755 = sor.u32 256, 26
        %2756 = vbcast.lane.b32.xlu0 %v2749, %s2755
        %v2757 = vpop.permute.xlu0 %2756
        %v2758 = vlaneseq
        %v2759 = vshrl.u32 %v2758, 7
        %v2760 = vsub.s32 2, %v2759
        %v2761 = vrot.slane %v406, %v2760
        %s2763 = sor.u32 256, 18
        %2764 = vbcast.lane.b32.xlu0 %v2761, %s2763
        %v2765 = vpop.permute.xlu0 %2764
        %s2767 = sor.u32 256, 26
        %2768 = vbcast.lane.b32.xlu0 %v2761, %s2767
        %v2769 = vpop.permute.xlu0 %2768
        %v2770 = vlaneseq
        %v2771 = vshrl.u32 %v2770, 7
        %v2772 = vsub.s32 3, %v2771
        %v2773 = vrot.slane %v406, %v2772
        %s2775 = sor.u32 256, 18
        %2776 = vbcast.lane.b32.xlu0 %v2773, %s2775
        %v2777 = vpop.permute.xlu0 %2776
        %s2779 = sor.u32 256, 26
        %2780 = vbcast.lane.b32.xlu0 %v2773, %s2779
        %v2781 = vpop.permute.xlu0 %2780
        %v2782 = vlaneseq
        %v2783 = vshrl.u32 %v2782, 7
        %v2784 = vsub.s32 4, %v2783
        %v2785 = vrot.slane %v406, %v2784
        %s2787 = sor.u32 256, 18
        %2788 = vbcast.lane.b32.xlu0 %v2785, %s2787
        %v2789 = vpop.permute.xlu0 %2788
        %s2791 = sor.u32 256, 26
        %2792 = vbcast.lane.b32.xlu0 %v2785, %s2791
        %v2793 = vpop.permute.xlu0 %2792
        %v2794 = vlaneseq
        %v2795 = vshrl.u32 %v2794, 7
        %v2796 = vsub.s32 5, %v2795
        %v2797 = vrot.slane %v406, %v2796
        %s2799 = sor.u32 256, 18
        %2800 = vbcast.lane.b32.xlu0 %v2797, %s2799
        %v2801 = vpop.permute.xlu0 %2800
        %s2803 = sor.u32 256, 26
        %2804 = vbcast.lane.b32.xlu0 %v2797, %s2803
        %v2805 = vpop.permute.xlu0 %2804
        %v2806 = vlaneseq
        %v2807 = vshrl.u32 %v2806, 7
        %v2808 = vsub.s32 6, %v2807
        %v2809 = vrot.slane %v406, %v2808
        %s2811 = sor.u32 256, 18
        %2812 = vbcast.lane.b32.xlu0 %v2809, %s2811
        %v2813 = vpop.permute.xlu0 %2812
        %s2815 = sor.u32 256, 26
        %2816 = vbcast.lane.b32.xlu0 %v2809, %s2815
        %v2817 = vpop.permute.xlu0 %2816
        %v2818 = vlaneseq
        %v2819 = vshrl.u32 %v2818, 7
        %v2820 = vsub.s32 7, %v2819
        %v2821 = vrot.slane %v406, %v2820
        %s2823 = sor.u32 256, 18
        %2824 = vbcast.lane.b32.xlu0 %v2821, %s2823
        %v2825 = vpop.permute.xlu0 %2824
        %s2827 = sor.u32 256, 26
        %2828 = vbcast.lane.b32.xlu0 %v2821, %s2827
        %v2829 = vpop.permute.xlu0 %2828
        %v2830 = vlaneseq
        %v2831 = vshrl.u32 %v2830, 7
        %v2832 = vsub.s32 0, %v2831
        %v2833 = vrot.slane %v411, %v2832
        %s2835 = sor.u32 256, 18
        %2836 = vbcast.lane.b32.xlu0 %v2833, %s2835
        %v2837 = vpop.permute.xlu0 %2836
        %s2839 = sor.u32 256, 26
        %2840 = vbcast.lane.b32.xlu0 %v2833, %s2839
        %v2841 = vpop.permute.xlu0 %2840
        %v2842 = vlaneseq
        %v2843 = vshrl.u32 %v2842, 7
        %v2844 = vsub.s32 1, %v2843
        %v2845 = vrot.slane %v411, %v2844
        %s2847 = sor.u32 256, 18
        %2848 = vbcast.lane.b32.xlu0 %v2845, %s2847
        %v2849 = vpop.permute.xlu0 %2848
        %s2851 = sor.u32 256, 26
        %2852 = vbcast.lane.b32.xlu0 %v2845, %s2851
        %v2853 = vpop.permute.xlu0 %2852
        %v2854 = vlaneseq
        %v2855 = vshrl.u32 %v2854, 7
        %v2856 = vsub.s32 2, %v2855
        %v2857 = vrot.slane %v411, %v2856
        %s2859 = sor.u32 256, 18
        %2860 = vbcast.lane.b32.xlu0 %v2857, %s2859
        %v2861 = vpop.permute.xlu0 %2860
        %s2863 = sor.u32 256, 26
        %2864 = vbcast.lane.b32.xlu0 %v2857, %s2863
        %v2865 = vpop.permute.xlu0 %2864
        %v2866 = vlaneseq
        %v2867 = vshrl.u32 %v2866, 7
        %v2868 = vsub.s32 3, %v2867
        %v2869 = vrot.slane %v411, %v2868
        %s2871 = sor.u32 256, 18
        %2872 = vbcast.lane.b32.xlu0 %v2869, %s2871
        %v2873 = vpop.permute.xlu0 %2872
        %s2875 = sor.u32 256, 26
        %2876 = vbcast.lane.b32.xlu0 %v2869, %s2875
        %v2877 = vpop.permute.xlu0 %2876
        %v2878 = vlaneseq
        %v2879 = vshrl.u32 %v2878, 7
        %v2880 = vsub.s32 4, %v2879
        %v2881 = vrot.slane %v411, %v2880
        %s2883 = sor.u32 256, 18
        %2884 = vbcast.lane.b32.xlu0 %v2881, %s2883
        %v2885 = vpop.permute.xlu0 %2884
        %s2887 = sor.u32 256, 26
        %2888 = vbcast.lane.b32.xlu0 %v2881, %s2887
        %v2889 = vpop.permute.xlu0 %2888
        %v2890 = vlaneseq
        %v2891 = vshrl.u32 %v2890, 7
        %v2892 = vsub.s32 5, %v2891
        %v2893 = vrot.slane %v411, %v2892
        %s2895 = sor.u32 256, 18
        %2896 = vbcast.lane.b32.xlu0 %v2893, %s2895
        %v2897 = vpop.permute.xlu0 %2896
        %s2899 = sor.u32 256, 26
        %2900 = vbcast.lane.b32.xlu0 %v2893, %s2899
        %v2901 = vpop.permute.xlu0 %2900
        %v2902 = vlaneseq
        %v2903 = vshrl.u32 %v2902, 7
        %v2904 = vsub.s32 6, %v2903
        %v2905 = vrot.slane %v411, %v2904
        %s2907 = sor.u32 256, 18
        %2908 = vbcast.lane.b32.xlu0 %v2905, %s2907
        %v2909 = vpop.permute.xlu0 %2908
        %s2911 = sor.u32 256, 26
        %2912 = vbcast.lane.b32.xlu0 %v2905, %s2911
        %v2913 = vpop.permute.xlu0 %2912
        %v2914 = vlaneseq
        %v2915 = vshrl.u32 %v2914, 7
        %v2916 = vsub.s32 7, %v2915
        %v2917 = vrot.slane %v411, %v2916
        %s2919 = sor.u32 256, 18
        %2920 = vbcast.lane.b32.xlu0 %v2917, %s2919
        %v2921 = vpop.permute.xlu0 %2920
        %s2923 = sor.u32 256, 26
        %2924 = vbcast.lane.b32.xlu0 %v2917, %s2923
        %v2925 = vpop.permute.xlu0 %2924
        %v2926 = vlaneseq
        %v2927 = vshrl.u32 %v2926, 7
        %v2928 = vsub.s32 0, %v2927
        %v2929 = vrot.slane %v414, %v2928
        %s2931 = sor.u32 256, 18
        %2932 = vbcast.lane.b32.xlu0 %v2929, %s2931
        %v2933 = vpop.permute.xlu0 %2932
        %s2935 = sor.u32 256, 26
        %2936 = vbcast.lane.b32.xlu0 %v2929, %s2935
        %v2937 = vpop.permute.xlu0 %2936
        %v2938 = vlaneseq
        %v2939 = vshrl.u32 %v2938, 7
        %v2940 = vsub.s32 1, %v2939
        %v2941 = vrot.slane %v414, %v2940
        %s2943 = sor.u32 256, 18
        %2944 = vbcast.lane.b32.xlu0 %v2941, %s2943
        %v2945 = vpop.permute.xlu0 %2944
        %s2947 = sor.u32 256, 26
        %2948 = vbcast.lane.b32.xlu0 %v2941, %s2947
        %v2949 = vpop.permute.xlu0 %2948
        %v2950 = vlaneseq
        %v2951 = vshrl.u32 %v2950, 7
        %v2952 = vsub.s32 2, %v2951
        %v2953 = vrot.slane %v414, %v2952
        %s2955 = sor.u32 256, 18
        %2956 = vbcast.lane.b32.xlu0 %v2953, %s2955
        %v2957 = vpop.permute.xlu0 %2956
        %s2959 = sor.u32 256, 26
        %2960 = vbcast.lane.b32.xlu0 %v2953, %s2959
        %v2961 = vpop.permute.xlu0 %2960
        %v2962 = vlaneseq
        %v2963 = vshrl.u32 %v2962, 7
        %v2964 = vsub.s32 3, %v2963
        %v2965 = vrot.slane %v414, %v2964
        %s2967 = sor.u32 256, 18
        %2968 = vbcast.lane.b32.xlu0 %v2965, %s2967
        %v2969 = vpop.permute.xlu0 %2968
        %s2971 = sor.u32 256, 26
        %2972 = vbcast.lane.b32.xlu0 %v2965, %s2971
        %v2973 = vpop.permute.xlu0 %2972
        %v2974 = vlaneseq
        %v2975 = vshrl.u32 %v2974, 7
        %v2976 = vsub.s32 4, %v2975
        %v2977 = vrot.slane %v414, %v2976
        %s2979 = sor.u32 256, 18
        %2980 = vbcast.lane.b32.xlu0 %v2977, %s2979
        %v2981 = vpop.permute.xlu0 %2980
        %s2983 = sor.u32 256, 26
        %2984 = vbcast.lane.b32.xlu0 %v2977, %s2983
        %v2985 = vpop.permute.xlu0 %2984
        %v2986 = vlaneseq
        %v2987 = vshrl.u32 %v2986, 7
        %v2988 = vsub.s32 5, %v2987
        %v2989 = vrot.slane %v414, %v2988
        %s2991 = sor.u32 256, 18
        %2992 = vbcast.lane.b32.xlu0 %v2989, %s2991
        %v2993 = vpop.permute.xlu0 %2992
        %s2995 = sor.u32 256, 26
        %2996 = vbcast.lane.b32.xlu0 %v2989, %s2995
        %v2997 = vpop.permute.xlu0 %2996
        %v2998 = vlaneseq
        %v2999 = vshrl.u32 %v2998, 7
        %v3000 = vsub.s32 6, %v2999
        %v3001 = vrot.slane %v414, %v3000
        %s3003 = sor.u32 256, 18
        %3004 = vbcast.lane.b32.xlu0 %v3001, %s3003
        %v3005 = vpop.permute.xlu0 %3004
        %s3007 = sor.u32 256, 26
        %3008 = vbcast.lane.b32.xlu0 %v3001, %s3007
        %v3009 = vpop.permute.xlu0 %3008
        %v3010 = vlaneseq
        %v3011 = vshrl.u32 %v3010, 7
        %v3012 = vsub.s32 7, %v3011
        %v3013 = vrot.slane %v414, %v3012
        %s3015 = sor.u32 256, 18
        %3016 = vbcast.lane.b32.xlu0 %v3013, %s3015
        %v3017 = vpop.permute.xlu0 %3016
        %s3019 = sor.u32 256, 26
        %3020 = vbcast.lane.b32.xlu0 %v3013, %s3019
        %v3021 = vpop.permute.xlu0 %3020
        %v3022 = vlaneseq
        %v3023 = vshrl.u32 %v3022, 7
        %v3024 = vsub.s32 0, %v3023
        %v3025 = vrot.slane %v419, %v3024
        %s3027 = sor.u32 256, 18
        %3028 = vbcast.lane.b32.xlu0 %v3025, %s3027
        %v3029 = vpop.permute.xlu0 %3028
        %s3031 = sor.u32 256, 26
        %3032 = vbcast.lane.b32.xlu0 %v3025, %s3031
        %v3033 = vpop.permute.xlu0 %3032
        %v3034 = vlaneseq
        %v3035 = vshrl.u32 %v3034, 7
        %v3036 = vsub.s32 1, %v3035
        %v3037 = vrot.slane %v419, %v3036
        %s3039 = sor.u32 256, 18
        %3040 = vbcast.lane.b32.xlu0 %v3037, %s3039
        %v3041 = vpop.permute.xlu0 %3040
        %s3043 = sor.u32 256, 26
        %3044 = vbcast.lane.b32.xlu0 %v3037, %s3043
        %v3045 = vpop.permute.xlu0 %3044
        %v3046 = vlaneseq
        %v3047 = vshrl.u32 %v3046, 7
        %v3048 = vsub.s32 2, %v3047
        %v3049 = vrot.slane %v419, %v3048
        %s3051 = sor.u32 256, 18
        %3052 = vbcast.lane.b32.xlu0 %v3049, %s3051
        %v3053 = vpop.permute.xlu0 %3052
        %s3055 = sor.u32 256, 26
        %3056 = vbcast.lane.b32.xlu0 %v3049, %s3055
        %v3057 = vpop.permute.xlu0 %3056
        %v3058 = vlaneseq
        %v3059 = vshrl.u32 %v3058, 7
        %v3060 = vsub.s32 3, %v3059
        %v3061 = vrot.slane %v419, %v3060
        %s3063 = sor.u32 256, 18
        %3064 = vbcast.lane.b32.xlu0 %v3061, %s3063
        %v3065 = vpop.permute.xlu0 %3064
        %s3067 = sor.u32 256, 26
        %3068 = vbcast.lane.b32.xlu0 %v3061, %s3067
        %v3069 = vpop.permute.xlu0 %3068
        %v3070 = vlaneseq
        %v3071 = vshrl.u32 %v3070, 7
        %v3072 = vsub.s32 4, %v3071
        %v3073 = vrot.slane %v419, %v3072
        %s3075 = sor.u32 256, 18
        %3076 = vbcast.lane.b32.xlu0 %v3073, %s3075
        %v3077 = vpop.permute.xlu0 %3076
        %s3079 = sor.u32 256, 26
        %3080 = vbcast.lane.b32.xlu0 %v3073, %s3079
        %v3081 = vpop.permute.xlu0 %3080
        %v3082 = vlaneseq
        %v3083 = vshrl.u32 %v3082, 7
        %v3084 = vsub.s32 5, %v3083
        %v3085 = vrot.slane %v419, %v3084
        %s3087 = sor.u32 256, 18
        %3088 = vbcast.lane.b32.xlu0 %v3085, %s3087
        %v3089 = vpop.permute.xlu0 %3088
        %s3091 = sor.u32 256, 26
        %3092 = vbcast.lane.b32.xlu0 %v3085, %s3091
        %v3093 = vpop.permute.xlu0 %3092
        %v3094 = vlaneseq
        %v3095 = vshrl.u32 %v3094, 7
        %v3096 = vsub.s32 6, %v3095
        %v3097 = vrot.slane %v419, %v3096
        %s3099 = sor.u32 256, 18
        %3100 = vbcast.lane.b32.xlu0 %v3097, %s3099
        %v3101 = vpop.permute.xlu0 %3100
        %s3103 = sor.u32 256, 26
        %3104 = vbcast.lane.b32.xlu0 %v3097, %s3103
        %v3105 = vpop.permute.xlu0 %3104
        %v3106 = vlaneseq
        %v3107 = vshrl.u32 %v3106, 7
        %v3108 = vsub.s32 7, %v3107
        %v3109 = vrot.slane %v419, %v3108
        %s3111 = sor.u32 256, 18
        %3112 = vbcast.lane.b32.xlu0 %v3109, %s3111
        %v3113 = vpop.permute.xlu0 %3112
        %s3115 = sor.u32 256, 26
        %3116 = vbcast.lane.b32.xlu0 %v3109, %s3115
        %v3117 = vpop.permute.xlu0 %3116
        %v3118 = vlaneseq
        %v3119 = vshrl.u32 %v3118, 7
        %v3120 = vsub.s32 0, %v3119
        %v3121 = vrot.slane %v422, %v3120
        %s3123 = sor.u32 256, 18
        %3124 = vbcast.lane.b32.xlu0 %v3121, %s3123
        %v3125 = vpop.permute.xlu0 %3124
        %s3127 = sor.u32 256, 26
        %3128 = vbcast.lane.b32.xlu0 %v3121, %s3127
        %v3129 = vpop.permute.xlu0 %3128
        %v3130 = vlaneseq
        %v3131 = vshrl.u32 %v3130, 7
        %v3132 = vsub.s32 1, %v3131
        %v3133 = vrot.slane %v422, %v3132
        %s3135 = sor.u32 256, 18
        %3136 = vbcast.lane.b32.xlu0 %v3133, %s3135
        %v3137 = vpop.permute.xlu0 %3136
        %s3139 = sor.u32 256, 26
        %3140 = vbcast.lane.b32.xlu0 %v3133, %s3139
        %v3141 = vpop.permute.xlu0 %3140
        %v3142 = vlaneseq
        %v3143 = vshrl.u32 %v3142, 7
        %v3144 = vsub.s32 2, %v3143
        %v3145 = vrot.slane %v422, %v3144
        %s3147 = sor.u32 256, 18
        %3148 = vbcast.lane.b32.xlu0 %v3145, %s3147
        %v3149 = vpop.permute.xlu0 %3148
        %s3151 = sor.u32 256, 26
        %3152 = vbcast.lane.b32.xlu0 %v3145, %s3151
        %v3153 = vpop.permute.xlu0 %3152
        %v3154 = vlaneseq
        %v3155 = vshrl.u32 %v3154, 7
        %v3156 = vsub.s32 3, %v3155
        %v3157 = vrot.slane %v422, %v3156
        %s3159 = sor.u32 256, 18
        %3160 = vbcast.lane.b32.xlu0 %v3157, %s3159
        %v3161 = vpop.permute.xlu0 %3160
        %s3163 = sor.u32 256, 26
        %3164 = vbcast.lane.b32.xlu0 %v3157, %s3163
        %v3165 = vpop.permute.xlu0 %3164
        %v3166 = vlaneseq
        %v3167 = vshrl.u32 %v3166, 7
        %v3168 = vsub.s32 4, %v3167
        %v3169 = vrot.slane %v422, %v3168
        %s3171 = sor.u32 256, 18
        %3172 = vbcast.lane.b32.xlu0 %v3169, %s3171
        %v3173 = vpop.permute.xlu0 %3172
        %s3175 = sor.u32 256, 26
        %3176 = vbcast.lane.b32.xlu0 %v3169, %s3175
        %v3177 = vpop.permute.xlu0 %3176
        %v3178 = vlaneseq
        %v3179 = vshrl.u32 %v3178, 7
        %v3180 = vsub.s32 5, %v3179
        %v3181 = vrot.slane %v422, %v3180
        %s3183 = sor.u32 256, 18
        %3184 = vbcast.lane.b32.xlu0 %v3181, %s3183
        %v3185 = vpop.permute.xlu0 %3184
        %s3187 = sor.u32 256, 26
        %3188 = vbcast.lane.b32.xlu0 %v3181, %s3187
        %v3189 = vpop.permute.xlu0 %3188
        %v3190 = vlaneseq
        %v3191 = vshrl.u32 %v3190, 7
        %v3192 = vsub.s32 6, %v3191
        %v3193 = vrot.slane %v422, %v3192
        %s3195 = sor.u32 256, 18
        %3196 = vbcast.lane.b32.xlu0 %v3193, %s3195
        %v3197 = vpop.permute.xlu0 %3196
        %s3199 = sor.u32 256, 26
        %3200 = vbcast.lane.b32.xlu0 %v3193, %s3199
        %v3201 = vpop.permute.xlu0 %3200
        %v3202 = vlaneseq
        %v3203 = vshrl.u32 %v3202, 7
        %v3204 = vsub.s32 7, %v3203
        %v3205 = vrot.slane %v422, %v3204
        %s3207 = sor.u32 256, 18
        %3208 = vbcast.lane.b32.xlu0 %v3205, %s3207
        %v3209 = vpop.permute.xlu0 %3208
        %s3211 = sor.u32 256, 26
        %3212 = vbcast.lane.b32.xlu0 %v3205, %s3211
        %v3213 = vpop.permute.xlu0 %3212
        %v3214 = vlaneseq
        %v3215 = vshrl.u32 %v3214, 7
        %v3216 = vsub.s32 0, %v3215
        %v3217 = vrot.slane %v427, %v3216
        %s3219 = sor.u32 256, 18
        %3220 = vbcast.lane.b32.xlu0 %v3217, %s3219
        %v3221 = vpop.permute.xlu0 %3220
        %s3223 = sor.u32 256, 26
        %3224 = vbcast.lane.b32.xlu0 %v3217, %s3223
        %v3225 = vpop.permute.xlu0 %3224
        %v3226 = vlaneseq
        %v3227 = vshrl.u32 %v3226, 7
        %v3228 = vsub.s32 1, %v3227
        %v3229 = vrot.slane %v427, %v3228
        %s3231 = sor.u32 256, 18
        %3232 = vbcast.lane.b32.xlu0 %v3229, %s3231
        %v3233 = vpop.permute.xlu0 %3232
        %s3235 = sor.u32 256, 26
        %3236 = vbcast.lane.b32.xlu0 %v3229, %s3235
        %v3237 = vpop.permute.xlu0 %3236
        %v3238 = vlaneseq
        %v3239 = vshrl.u32 %v3238, 7
        %v3240 = vsub.s32 2, %v3239
        %v3241 = vrot.slane %v427, %v3240
        %s3243 = sor.u32 256, 18
        %3244 = vbcast.lane.b32.xlu0 %v3241, %s3243
        %v3245 = vpop.permute.xlu0 %3244
        %s3247 = sor.u32 256, 26
        %3248 = vbcast.lane.b32.xlu0 %v3241, %s3247
        %v3249 = vpop.permute.xlu0 %3248
        %v3250 = vlaneseq
        %v3251 = vshrl.u32 %v3250, 7
        %v3252 = vsub.s32 3, %v3251
        %v3253 = vrot.slane %v427, %v3252
        %s3255 = sor.u32 256, 18
        %3256 = vbcast.lane.b32.xlu0 %v3253, %s3255
        %v3257 = vpop.permute.xlu0 %3256
        %s3259 = sor.u32 256, 26
        %3260 = vbcast.lane.b32.xlu0 %v3253, %s3259
        %v3261 = vpop.permute.xlu0 %3260
        %v3262 = vlaneseq
        %v3263 = vshrl.u32 %v3262, 7
        %v3264 = vsub.s32 4, %v3263
        %v3265 = vrot.slane %v427, %v3264
        %s3267 = sor.u32 256, 18
        %3268 = vbcast.lane.b32.xlu0 %v3265, %s3267
        %v3269 = vpop.permute.xlu0 %3268
        %s3271 = sor.u32 256, 26
        %3272 = vbcast.lane.b32.xlu0 %v3265, %s3271
        %v3273 = vpop.permute.xlu0 %3272
        %v3274 = vlaneseq
        %v3275 = vshrl.u32 %v3274, 7
        %v3276 = vsub.s32 5, %v3275
        %v3277 = vrot.slane %v427, %v3276
        %s3279 = sor.u32 256, 18
        %3280 = vbcast.lane.b32.xlu0 %v3277, %s3279
        %v3281 = vpop.permute.xlu0 %3280
        %s3283 = sor.u32 256, 26
        %3284 = vbcast.lane.b32.xlu0 %v3277, %s3283
        %v3285 = vpop.permute.xlu0 %3284
        %v3286 = vlaneseq
        %v3287 = vshrl.u32 %v3286, 7
        %v3288 = vsub.s32 6, %v3287
        %v3289 = vrot.slane %v427, %v3288
        %s3291 = sor.u32 256, 18
        %3292 = vbcast.lane.b32.xlu0 %v3289, %s3291
        %v3293 = vpop.permute.xlu0 %3292
        %s3295 = sor.u32 256, 26
        %3296 = vbcast.lane.b32.xlu0 %v3289, %s3295
        %v3297 = vpop.permute.xlu0 %3296
        %v3298 = vlaneseq
        %v3299 = vshrl.u32 %v3298, 7
        %v3300 = vsub.s32 7, %v3299
        %v3301 = vrot.slane %v427, %v3300
        %s3303 = sor.u32 256, 18
        %3304 = vbcast.lane.b32.xlu0 %v3301, %s3303
        %v3305 = vpop.permute.xlu0 %3304
        %s3307 = sor.u32 256, 26
        %3308 = vbcast.lane.b32.xlu0 %v3301, %s3307
        %v3309 = vpop.permute.xlu0 %3308
        %v3321 = vcombine.high %v549, %v549
        %v3323 = vunpack.c.l.s4 1966171168
        %v3324 = vunpack.c.0.s8 %v3323
        %v3325 = vlaneseq
        %v3326 = vshrl.u32 %v3325, 7
        %v3327 = vsub.s32 %v3324, %v3326
        %v3328 = vrot.slane %v549, %v3327
        %v3330 = vunpack.c.l.s4 1966171168
        %v3331 = vunpack.c.0.s8 %v3330
        %v3332 = vlaneseq
        %v3333 = vshrl.u32 %v3332, 7
        %v3334 = vsub.s32 %v3331, %v3333
        %v3335 = vrot.slane %v3321, %v3334
        %v3336 = vcombine.high %v3328, %v3328
        %v3337 = vcombine.high %v3335, %v3335
        %v3339 = vunpack.c.l.s4 1966171168
        %v3340 = vunpack.c.0.s8 %v3339
        %v3341 = vlaneseq
        %v3342 = vshrl.u32 %v3341, 7
        %v3343 = vsub.s32 %v3340, %v3342
        %v3344 = vrot.slane %v3328, %v3343
        %v3346 = vunpack.c.l.s4 1966171168
        %v3347 = vunpack.c.0.s8 %v3346
        %v3348 = vlaneseq
        %v3349 = vshrl.u32 %v3348, 7
        %v3350 = vsub.s32 %v3347, %v3349
        %v3351 = vrot.slane %v3335, %v3350
        %v3353 = vunpack.c.l.s4 1966171168
        %v3354 = vunpack.c.0.s8 %v3353
        %v3355 = vlaneseq
        %v3356 = vshrl.u32 %v3355, 7
        %v3357 = vsub.s32 %v3354, %v3356
        %v3358 = vrot.slane %v3336, %v3357
        %v3360 = vunpack.c.l.s4 1966171168
        %v3361 = vunpack.c.0.s8 %v3360
        %v3362 = vlaneseq
        %v3363 = vshrl.u32 %v3362, 7
        %v3364 = vsub.s32 %v3361, %v3363
        %v3365 = vrot.slane %v3337, %v3364
        %v3366 = vcombine.high %v3344, %v3344
        %v3367 = vcombine.high %v3351, %v3351
        %v3368 = vcombine.high %v3358, %v3358
        %v3369 = vcombine.high %v3365, %v3365
        %v3370 = vcombine.high %v550, %v550
        %v3372 = vunpack.c.l.s4 1966171168
        %v3373 = vunpack.c.0.s8 %v3372
        %v3374 = vlaneseq
        %v3375 = vshrl.u32 %v3374, 7
        %v3376 = vsub.s32 %v3373, %v3375
        %v3377 = vrot.slane %v550, %v3376
        %v3379 = vunpack.c.l.s4 1966171168
        %v3380 = vunpack.c.0.s8 %v3379
        %v3381 = vlaneseq
        %v3382 = vshrl.u32 %v3381, 7
        %v3383 = vsub.s32 %v3380, %v3382
        %v3384 = vrot.slane %v3370, %v3383
        %v3385 = vcombine.high %v3377, %v3377
        %v3386 = vcombine.high %v3384, %v3384
        %v3388 = vunpack.c.l.s4 1966171168
        %v3389 = vunpack.c.0.s8 %v3388
        %v3390 = vlaneseq
        %v3391 = vshrl.u32 %v3390, 7
        %v3392 = vsub.s32 %v3389, %v3391
        %v3393 = vrot.slane %v3377, %v3392
        %v3395 = vunpack.c.l.s4 1966171168
        %v3396 = vunpack.c.0.s8 %v3395
        %v3397 = vlaneseq
        %v3398 = vshrl.u32 %v3397, 7
        %v3399 = vsub.s32 %v3396, %v3398
        %v3400 = vrot.slane %v3384, %v3399
        %v3402 = vunpack.c.l.s4 1966171168
        %v3403 = vunpack.c.0.s8 %v3402
        %v3404 = vlaneseq
        %v3405 = vshrl.u32 %v3404, 7
        %v3406 = vsub.s32 %v3403, %v3405
        %v3407 = vrot.slane %v3385, %v3406
        %v3409 = vunpack.c.l.s4 1966171168
        %v3410 = vunpack.c.0.s8 %v3409
        %v3411 = vlaneseq
        %v3412 = vshrl.u32 %v3411, 7
        %v3413 = vsub.s32 %v3410, %v3412
        %v3414 = vrot.slane %v3386, %v3413
        %v3415 = vcombine.high %v3393, %v3393
        %v3416 = vcombine.high %v3400, %v3400
        %v3417 = vcombine.high %v3407, %v3407
        %v3418 = vcombine.high %v3414, %v3414
        %v3419 = vcombine.high %v551, %v551
        %v3421 = vunpack.c.l.s4 1966171168
        %v3422 = vunpack.c.0.s8 %v3421
        %v3423 = vlaneseq
        %v3424 = vshrl.u32 %v3423, 7
        %v3425 = vsub.s32 %v3422, %v3424
        %v3426 = vrot.slane %v551, %v3425
        %v3428 = vunpack.c.l.s4 1966171168
        %v3429 = vunpack.c.0.s8 %v3428
        %v3430 = vlaneseq
        %v3431 = vshrl.u32 %v3430, 7
        %v3432 = vsub.s32 %v3429, %v3431
        %v3433 = vrot.slane %v3419, %v3432
        %v3434 = vcombine.high %v3426, %v3426
        %v3435 = vcombine.high %v3433, %v3433
        %v3437 = vunpack.c.l.s4 1966171168
        %v3438 = vunpack.c.0.s8 %v3437
        %v3439 = vlaneseq
        %v3440 = vshrl.u32 %v3439, 7
        %v3441 = vsub.s32 %v3438, %v3440
        %v3442 = vrot.slane %v3426, %v3441
        %v3444 = vunpack.c.l.s4 1966171168
        %v3445 = vunpack.c.0.s8 %v3444
        %v3446 = vlaneseq
        %v3447 = vshrl.u32 %v3446, 7
        %v3448 = vsub.s32 %v3445, %v3447
        %v3449 = vrot.slane %v3433, %v3448
        %v3451 = vunpack.c.l.s4 1966171168
        %v3452 = vunpack.c.0.s8 %v3451
        %v3453 = vlaneseq
        %v3454 = vshrl.u32 %v3453, 7
        %v3455 = vsub.s32 %v3452, %v3454
        %v3456 = vrot.slane %v3434, %v3455
        %v3458 = vunpack.c.l.s4 1966171168
        %v3459 = vunpack.c.0.s8 %v3458
        %v3460 = vlaneseq
        %v3461 = vshrl.u32 %v3460, 7
        %v3462 = vsub.s32 %v3459, %v3461
        %v3463 = vrot.slane %v3435, %v3462
        %v3464 = vcombine.high %v3442, %v3442
        %v3465 = vcombine.high %v3449, %v3449
        %v3466 = vcombine.high %v3456, %v3456
        %v3467 = vcombine.high %v3463, %v3463
        %v3468 = vcombine.high %v552, %v552
        %v3470 = vunpack.c.l.s4 1966171168
        %v3471 = vunpack.c.0.s8 %v3470
        %v3472 = vlaneseq
        %v3473 = vshrl.u32 %v3472, 7
        %v3474 = vsub.s32 %v3471, %v3473
        %v3475 = vrot.slane %v552, %v3474
        %v3477 = vunpack.c.l.s4 1966171168
        %v3478 = vunpack.c.0.s8 %v3477
        %v3479 = vlaneseq
        %v3480 = vshrl.u32 %v3479, 7
        %v3481 = vsub.s32 %v3478, %v3480
        %v3482 = vrot.slane %v3468, %v3481
        %v3483 = vcombine.high %v3475, %v3475
        %v3484 = vcombine.high %v3482, %v3482
        %v3486 = vunpack.c.l.s4 1966171168
        %v3487 = vunpack.c.0.s8 %v3486
        %v3488 = vlaneseq
        %v3489 = vshrl.u32 %v3488, 7
        %v3490 = vsub.s32 %v3487, %v3489
        %v3491 = vrot.slane %v3475, %v3490
        %v3493 = vunpack.c.l.s4 1966171168
        %v3494 = vunpack.c.0.s8 %v3493
        %v3495 = vlaneseq
        %v3496 = vshrl.u32 %v3495, 7
        %v3497 = vsub.s32 %v3494, %v3496
        %v3498 = vrot.slane %v3482, %v3497
        %v3500 = vunpack.c.l.s4 1966171168
        %v3501 = vunpack.c.0.s8 %v3500
        %v3502 = vlaneseq
        %v3503 = vshrl.u32 %v3502, 7
        %v3504 = vsub.s32 %v3501, %v3503
        %v3505 = vrot.slane %v3483, %v3504
        %v3507 = vunpack.c.l.s4 1966171168
        %v3508 = vunpack.c.0.s8 %v3507
        %v3509 = vlaneseq
        %v3510 = vshrl.u32 %v3509, 7
        %v3511 = vsub.s32 %v3508, %v3510
        %v3512 = vrot.slane %v3484, %v3511
        %v3513 = vcombine.high %v3491, %v3491
        %v3514 = vcombine.high %v3498, %v3498
        %v3515 = vcombine.high %v3505, %v3505
        %v3516 = vcombine.high %v3512, %v3512
        %v3517 = vcombine.high %v553, %v553
        %v3519 = vunpack.c.l.s4 1966171168
        %v3520 = vunpack.c.0.s8 %v3519
        %v3521 = vlaneseq
        %v3522 = vshrl.u32 %v3521, 7
        %v3523 = vsub.s32 %v3520, %v3522
        %v3524 = vrot.slane %v553, %v3523
        %v3526 = vunpack.c.l.s4 1966171168
        %v3527 = vunpack.c.0.s8 %v3526
        %v3528 = vlaneseq
        %v3529 = vshrl.u32 %v3528, 7
        %v3530 = vsub.s32 %v3527, %v3529
        %v3531 = vrot.slane %v3517, %v3530
        %v3532 = vcombine.high %v3524, %v3524
        %v3533 = vcombine.high %v3531, %v3531
        %v3535 = vunpack.c.l.s4 1966171168
        %v3536 = vunpack.c.0.s8 %v3535
        %v3537 = vlaneseq
        %v3538 = vshrl.u32 %v3537, 7
        %v3539 = vsub.s32 %v3536, %v3538
        %v3540 = vrot.slane %v3524, %v3539
        %v3542 = vunpack.c.l.s4 1966171168
        %v3543 = vunpack.c.0.s8 %v3542
        %v3544 = vlaneseq
        %v3545 = vshrl.u32 %v3544, 7
        %v3546 = vsub.s32 %v3543, %v3545
        %v3547 = vrot.slane %v3531, %v3546
        %v3549 = vunpack.c.l.s4 1966171168
        %v3550 = vunpack.c.0.s8 %v3549
        %v3551 = vlaneseq
        %v3552 = vshrl.u32 %v3551, 7
        %v3553 = vsub.s32 %v3550, %v3552
        %v3554 = vrot.slane %v3532, %v3553
        %v3556 = vunpack.c.l.s4 1966171168
        %v3557 = vunpack.c.0.s8 %v3556
        %v3558 = vlaneseq
        %v3559 = vshrl.u32 %v3558, 7
        %v3560 = vsub.s32 %v3557, %v3559
        %v3561 = vrot.slane %v3533, %v3560
        %v3562 = vcombine.high %v3540, %v3540
        %v3563 = vcombine.high %v3547, %v3547
        %v3564 = vcombine.high %v3554, %v3554
        %v3565 = vcombine.high %v3561, %v3561
        %v3566 = vcombine.high %v554, %v554
        %v3568 = vunpack.c.l.s4 1966171168
        %v3569 = vunpack.c.0.s8 %v3568
        %v3570 = vlaneseq
        %v3571 = vshrl.u32 %v3570, 7
        %v3572 = vsub.s32 %v3569, %v3571
        %v3573 = vrot.slane %v554, %v3572
        %v3575 = vunpack.c.l.s4 1966171168
        %v3576 = vunpack.c.0.s8 %v3575
        %v3577 = vlaneseq
        %v3578 = vshrl.u32 %v3577, 7
        %v3579 = vsub.s32 %v3576, %v3578
        %v3580 = vrot.slane %v3566, %v3579
        %v3581 = vcombine.high %v3573, %v3573
        %v3582 = vcombine.high %v3580, %v3580
        %v3584 = vunpack.c.l.s4 1966171168
        %v3585 = vunpack.c.0.s8 %v3584
        %v3586 = vlaneseq
        %v3587 = vshrl.u32 %v3586, 7
        %v3588 = vsub.s32 %v3585, %v3587
        %v3589 = vrot.slane %v3573, %v3588
        %v3591 = vunpack.c.l.s4 1966171168
        %v3592 = vunpack.c.0.s8 %v3591
        %v3593 = vlaneseq
        %v3594 = vshrl.u32 %v3593, 7
        %v3595 = vsub.s32 %v3592, %v3594
        %v3596 = vrot.slane %v3580, %v3595
        %v3598 = vunpack.c.l.s4 1966171168
        %v3599 = vunpack.c.0.s8 %v3598
        %v3600 = vlaneseq
        %v3601 = vshrl.u32 %v3600, 7
        %v3602 = vsub.s32 %v3599, %v3601
        %v3603 = vrot.slane %v3581, %v3602
        %v3605 = vunpack.c.l.s4 1966171168
        %v3606 = vunpack.c.0.s8 %v3605
        %v3607 = vlaneseq
        %v3608 = vshrl.u32 %v3607, 7
        %v3609 = vsub.s32 %v3606, %v3608
        %v3610 = vrot.slane %v3582, %v3609
        %v3611 = vcombine.high %v3589, %v3589
        %v3612 = vcombine.high %v3596, %v3596
        %v3613 = vcombine.high %v3603, %v3603
        %v3614 = vcombine.high %v3610, %v3610
        %v3615 = vcombine.high %v555, %v555
        %v3617 = vunpack.c.l.s4 1966171168
        %v3618 = vunpack.c.0.s8 %v3617
        %v3619 = vlaneseq
        %v3620 = vshrl.u32 %v3619, 7
        %v3621 = vsub.s32 %v3618, %v3620
        %v3622 = vrot.slane %v555, %v3621
        %v3624 = vunpack.c.l.s4 1966171168
        %v3625 = vunpack.c.0.s8 %v3624
        %v3626 = vlaneseq
        %v3627 = vshrl.u32 %v3626, 7
        %v3628 = vsub.s32 %v3625, %v3627
        %v3629 = vrot.slane %v3615, %v3628
        %v3630 = vcombine.high %v3622, %v3622
        %v3631 = vcombine.high %v3629, %v3629
        %v3633 = vunpack.c.l.s4 1966171168
        %v3634 = vunpack.c.0.s8 %v3633
        %v3635 = vlaneseq
        %v3636 = vshrl.u32 %v3635, 7
        %v3637 = vsub.s32 %v3634, %v3636
        %v3638 = vrot.slane %v3622, %v3637
        %v3640 = vunpack.c.l.s4 1966171168
        %v3641 = vunpack.c.0.s8 %v3640
        %v3642 = vlaneseq
        %v3643 = vshrl.u32 %v3642, 7
        %v3644 = vsub.s32 %v3641, %v3643
        %v3645 = vrot.slane %v3629, %v3644
        %v3647 = vunpack.c.l.s4 1966171168
        %v3648 = vunpack.c.0.s8 %v3647
        %v3649 = vlaneseq
        %v3650 = vshrl.u32 %v3649, 7
        %v3651 = vsub.s32 %v3648, %v3650
        %v3652 = vrot.slane %v3630, %v3651
        %v3654 = vunpack.c.l.s4 1966171168
        %v3655 = vunpack.c.0.s8 %v3654
        %v3656 = vlaneseq
        %v3657 = vshrl.u32 %v3656, 7
        %v3658 = vsub.s32 %v3655, %v3657
        %v3659 = vrot.slane %v3631, %v3658
        %v3660 = vcombine.high %v3638, %v3638
        %v3661 = vcombine.high %v3645, %v3645
        %v3662 = vcombine.high %v3652, %v3652
        %v3663 = vcombine.high %v3659, %v3659
        %v3664 = vcombine.high %v556, %v556
        %v3666 = vunpack.c.l.s4 1966171168
        %v3667 = vunpack.c.0.s8 %v3666
        %v3668 = vlaneseq
        %v3669 = vshrl.u32 %v3668, 7
        %v3670 = vsub.s32 %v3667, %v3669
        %v3671 = vrot.slane %v556, %v3670
        %v3673 = vunpack.c.l.s4 1966171168
        %v3674 = vunpack.c.0.s8 %v3673
        %v3675 = vlaneseq
        %v3676 = vshrl.u32 %v3675, 7
        %v3677 = vsub.s32 %v3674, %v3676
        %v3678 = vrot.slane %v3664, %v3677
        %v3679 = vcombine.high %v3671, %v3671
        %v3680 = vcombine.high %v3678, %v3678
        %v3682 = vunpack.c.l.s4 1966171168
        %v3683 = vunpack.c.0.s8 %v3682
        %v3684 = vlaneseq
        %v3685 = vshrl.u32 %v3684, 7
        %v3686 = vsub.s32 %v3683, %v3685
        %v3687 = vrot.slane %v3671, %v3686
        %v3689 = vunpack.c.l.s4 1966171168
        %v3690 = vunpack.c.0.s8 %v3689
        %v3691 = vlaneseq
        %v3692 = vshrl.u32 %v3691, 7
        %v3693 = vsub.s32 %v3690, %v3692
        %v3694 = vrot.slane %v3678, %v3693
        %v3696 = vunpack.c.l.s4 1966171168
        %v3697 = vunpack.c.0.s8 %v3696
        %v3698 = vlaneseq
        %v3699 = vshrl.u32 %v3698, 7
        %v3700 = vsub.s32 %v3697, %v3699
        %v3701 = vrot.slane %v3679, %v3700
        %v3703 = vunpack.c.l.s4 1966171168
        %v3704 = vunpack.c.0.s8 %v3703
        %v3705 = vlaneseq
        %v3706 = vshrl.u32 %v3705, 7
        %v3707 = vsub.s32 %v3704, %v3706
        %v3708 = vrot.slane %v3680, %v3707
        %v3709 = vcombine.high %v3687, %v3687
        %v3710 = vcombine.high %v3694, %v3694
        %v3711 = vcombine.high %v3701, %v3701
        %v3712 = vcombine.high %v3708, %v3708
        %v3713 = vcombine.high %v557, %v557
        %v3715 = vunpack.c.l.s4 1966171168
        %v3716 = vunpack.c.0.s8 %v3715
        %v3717 = vlaneseq
        %v3718 = vshrl.u32 %v3717, 7
        %v3719 = vsub.s32 %v3716, %v3718
        %v3720 = vrot.slane %v557, %v3719
        %v3722 = vunpack.c.l.s4 1966171168
        %v3723 = vunpack.c.0.s8 %v3722
        %v3724 = vlaneseq
        %v3725 = vshrl.u32 %v3724, 7
        %v3726 = vsub.s32 %v3723, %v3725
        %v3727 = vrot.slane %v3713, %v3726
        %v3728 = vcombine.high %v3720, %v3720
        %v3729 = vcombine.high %v3727, %v3727
        %v3731 = vunpack.c.l.s4 1966171168
        %v3732 = vunpack.c.0.s8 %v3731
        %v3733 = vlaneseq
        %v3734 = vshrl.u32 %v3733, 7
        %v3735 = vsub.s32 %v3732, %v3734
        %v3736 = vrot.slane %v3720, %v3735
        %v3738 = vunpack.c.l.s4 1966171168
        %v3739 = vunpack.c.0.s8 %v3738
        %v3740 = vlaneseq
        %v3741 = vshrl.u32 %v3740, 7
        %v3742 = vsub.s32 %v3739, %v3741
        %v3743 = vrot.slane %v3727, %v3742
        %v3745 = vunpack.c.l.s4 1966171168
        %v3746 = vunpack.c.0.s8 %v3745
        %v3747 = vlaneseq
        %v3748 = vshrl.u32 %v3747, 7
        %v3749 = vsub.s32 %v3746, %v3748
        %v3750 = vrot.slane %v3728, %v3749
        %v3752 = vunpack.c.l.s4 1966171168
        %v3753 = vunpack.c.0.s8 %v3752
        %v3754 = vlaneseq
        %v3755 = vshrl.u32 %v3754, 7
        %v3756 = vsub.s32 %v3753, %v3755
        %v3757 = vrot.slane %v3729, %v3756
        %v3758 = vcombine.high %v3736, %v3736
        %v3759 = vcombine.high %v3743, %v3743
        %v3760 = vcombine.high %v3750, %v3750
        %v3761 = vcombine.high %v3757, %v3757
        %v3762 = vcombine.high %v558, %v558
        %v3764 = vunpack.c.l.s4 1966171168
        %v3765 = vunpack.c.0.s8 %v3764
        %v3766 = vlaneseq
        %v3767 = vshrl.u32 %v3766, 7
        %v3768 = vsub.s32 %v3765, %v3767
        %v3769 = vrot.slane %v558, %v3768
        %v3771 = vunpack.c.l.s4 1966171168
        %v3772 = vunpack.c.0.s8 %v3771
        %v3773 = vlaneseq
        %v3774 = vshrl.u32 %v3773, 7
        %v3775 = vsub.s32 %v3772, %v3774
        %v3776 = vrot.slane %v3762, %v3775
        %v3777 = vcombine.high %v3769, %v3769
        %v3778 = vcombine.high %v3776, %v3776
        %v3780 = vunpack.c.l.s4 1966171168
        %v3781 = vunpack.c.0.s8 %v3780
        %v3782 = vlaneseq
        %v3783 = vshrl.u32 %v3782, 7
        %v3784 = vsub.s32 %v3781, %v3783
        %v3785 = vrot.slane %v3769, %v3784
        %v3787 = vunpack.c.l.s4 1966171168
        %v3788 = vunpack.c.0.s8 %v3787
        %v3789 = vlaneseq
        %v3790 = vshrl.u32 %v3789, 7
        %v3791 = vsub.s32 %v3788, %v3790
        %v3792 = vrot.slane %v3776, %v3791
        %v3794 = vunpack.c.l.s4 1966171168
        %v3795 = vunpack.c.0.s8 %v3794
        %v3796 = vlaneseq
        %v3797 = vshrl.u32 %v3796, 7
        %v3798 = vsub.s32 %v3795, %v3797
        %v3799 = vrot.slane %v3777, %v3798
        %v3801 = vunpack.c.l.s4 1966171168
        %v3802 = vunpack.c.0.s8 %v3801
        %v3803 = vlaneseq
        %v3804 = vshrl.u32 %v3803, 7
        %v3805 = vsub.s32 %v3802, %v3804
        %v3806 = vrot.slane %v3778, %v3805
        %v3807 = vcombine.high %v3785, %v3785
        %v3808 = vcombine.high %v3792, %v3792
        %v3809 = vcombine.high %v3799, %v3799
        %v3810 = vcombine.high %v3806, %v3806
        %v3811 = vcombine.high %v559, %v559
        %v3813 = vunpack.c.l.s4 1966171168
        %v3814 = vunpack.c.0.s8 %v3813
        %v3815 = vlaneseq
        %v3816 = vshrl.u32 %v3815, 7
        %v3817 = vsub.s32 %v3814, %v3816
        %v3818 = vrot.slane %v559, %v3817
        %v3820 = vunpack.c.l.s4 1966171168
        %v3821 = vunpack.c.0.s8 %v3820
        %v3822 = vlaneseq
        %v3823 = vshrl.u32 %v3822, 7
        %v3824 = vsub.s32 %v3821, %v3823
        %v3825 = vrot.slane %v3811, %v3824
        %v3826 = vcombine.high %v3818, %v3818
        %v3827 = vcombine.high %v3825, %v3825
        %v3829 = vunpack.c.l.s4 1966171168
        %v3830 = vunpack.c.0.s8 %v3829
        %v3831 = vlaneseq
        %v3832 = vshrl.u32 %v3831, 7
        %v3833 = vsub.s32 %v3830, %v3832
        %v3834 = vrot.slane %v3818, %v3833
        %v3836 = vunpack.c.l.s4 1966171168
        %v3837 = vunpack.c.0.s8 %v3836
        %v3838 = vlaneseq
        %v3839 = vshrl.u32 %v3838, 7
        %v3840 = vsub.s32 %v3837, %v3839
        %v3841 = vrot.slane %v3825, %v3840
        %v3843 = vunpack.c.l.s4 1966171168
        %v3844 = vunpack.c.0.s8 %v3843
        %v3845 = vlaneseq
        %v3846 = vshrl.u32 %v3845, 7
        %v3847 = vsub.s32 %v3844, %v3846
        %v3848 = vrot.slane %v3826, %v3847
        %v3850 = vunpack.c.l.s4 1966171168
        %v3851 = vunpack.c.0.s8 %v3850
        %v3852 = vlaneseq
        %v3853 = vshrl.u32 %v3852, 7
        %v3854 = vsub.s32 %v3851, %v3853
        %v3855 = vrot.slane %v3827, %v3854
        %v3856 = vcombine.high %v3834, %v3834
        %v3857 = vcombine.high %v3841, %v3841
        %v3858 = vcombine.high %v3848, %v3848
        %v3859 = vcombine.high %v3855, %v3855
        %v3860 = vlaneseq
        %v3861 = vshrl.u32 %v3860, 7
        %v3862 = vsub.s32 0, %v3861
        %v3863 = vrot.slane %v3344, %v3862
        %v3864 = vlaneseq
        %v3865 = vshrl.u32 %v3864, 7
        %v3866 = vsub.s32 0, %v3865
        %v3867 = vrot.slane %v3358, %v3866
        %v3868 = vlaneseq
        %v3869 = vshrl.u32 %v3868, 7
        %v3870 = vsub.s32 0, %v3869
        %v3871 = vrot.slane %v3366, %v3870
        %v3872 = vlaneseq
        %v3873 = vshrl.u32 %v3872, 7
        %v3874 = vsub.s32 0, %v3873
        %v3875 = vrot.slane %v3368, %v3874
        %v3876 = vlaneseq
        %v3877 = vshrl.u32 %v3876, 7
        %v3878 = vsub.s32 0, %v3877
        %v3879 = vrot.slane %v3351, %v3878
        %v3880 = vlaneseq
        %v3881 = vshrl.u32 %v3880, 7
        %v3882 = vsub.s32 0, %v3881
        %v3883 = vrot.slane %v3365, %v3882
        %v3884 = vlaneseq
        %v3885 = vshrl.u32 %v3884, 7
        %v3886 = vsub.s32 0, %v3885
        %v3887 = vrot.slane %v3367, %v3886
        %v3888 = vlaneseq
        %v3889 = vshrl.u32 %v3888, 7
        %v3890 = vsub.s32 0, %v3889
        %v3891 = vrot.slane %v3369, %v3890
        %v3892 = vlaneseq
        %v3893 = vshrl.u32 %v3892, 7
        %v3894 = vsub.s32 0, %v3893
        %v3895 = vrot.slane %v3393, %v3894
        %v3896 = vlaneseq
        %v3897 = vshrl.u32 %v3896, 7
        %v3898 = vsub.s32 0, %v3897
        %v3899 = vrot.slane %v3407, %v3898
        %v3900 = vlaneseq
        %v3901 = vshrl.u32 %v3900, 7
        %v3902 = vsub.s32 0, %v3901
        %v3903 = vrot.slane %v3415, %v3902
        %v3904 = vlaneseq
        %v3905 = vshrl.u32 %v3904, 7
        %v3906 = vsub.s32 0, %v3905
        %v3907 = vrot.slane %v3417, %v3906
        %v3908 = vlaneseq
        %v3909 = vshrl.u32 %v3908, 7
        %v3910 = vsub.s32 0, %v3909
        %v3911 = vrot.slane %v3400, %v3910
        %v3912 = vlaneseq
        %v3913 = vshrl.u32 %v3912, 7
        %v3914 = vsub.s32 0, %v3913
        %v3915 = vrot.slane %v3414, %v3914
        %v3916 = vlaneseq
        %v3917 = vshrl.u32 %v3916, 7
        %v3918 = vsub.s32 0, %v3917
        %v3919 = vrot.slane %v3416, %v3918
        %v3920 = vlaneseq
        %v3921 = vshrl.u32 %v3920, 7
        %v3922 = vsub.s32 0, %v3921
        %v3923 = vrot.slane %v3418, %v3922
        %v3924 = vlaneseq
        %v3925 = vshrl.u32 %v3924, 7
        %v3926 = vsub.s32 0, %v3925
        %v3927 = vrot.slane %v3442, %v3926
        %v3928 = vlaneseq
        %v3929 = vshrl.u32 %v3928, 7
        %v3930 = vsub.s32 0, %v3929
        %v3931 = vrot.slane %v3456, %v3930
        %v3932 = vlaneseq
        %v3933 = vshrl.u32 %v3932, 7
        %v3934 = vsub.s32 0, %v3933
        %v3935 = vrot.slane %v3464, %v3934
        %v3936 = vlaneseq
        %v3937 = vshrl.u32 %v3936, 7
        %v3938 = vsub.s32 0, %v3937
        %v3939 = vrot.slane %v3466, %v3938
        %v3940 = vlaneseq
        %v3941 = vshrl.u32 %v3940, 7
        %v3942 = vsub.s32 0, %v3941
        %v3943 = vrot.slane %v3449, %v3942
        %v3944 = vlaneseq
        %v3945 = vshrl.u32 %v3944, 7
        %v3946 = vsub.s32 0, %v3945
        %v3947 = vrot.slane %v3463, %v3946
        %v3948 = vlaneseq
        %v3949 = vshrl.u32 %v3948, 7
        %v3950 = vsub.s32 0, %v3949
        %v3951 = vrot.slane %v3465, %v3950
        %v3952 = vlaneseq
        %v3953 = vshrl.u32 %v3952, 7
        %v3954 = vsub.s32 0, %v3953
        %v3955 = vrot.slane %v3467, %v3954
        %v3956 = vlaneseq
        %v3957 = vshrl.u32 %v3956, 7
        %v3958 = vsub.s32 0, %v3957
        %v3959 = vrot.slane %v3491, %v3958
        %v3960 = vlaneseq
        %v3961 = vshrl.u32 %v3960, 7
        %v3962 = vsub.s32 0, %v3961
        %v3963 = vrot.slane %v3505, %v3962
        %v3964 = vlaneseq
        %v3965 = vshrl.u32 %v3964, 7
        %v3966 = vsub.s32 0, %v3965
        %v3967 = vrot.slane %v3513, %v3966
        %v3968 = vlaneseq
        %v3969 = vshrl.u32 %v3968, 7
        %v3970 = vsub.s32 0, %v3969
        %v3971 = vrot.slane %v3515, %v3970
        %v3972 = vlaneseq
        %v3973 = vshrl.u32 %v3972, 7
        %v3974 = vsub.s32 0, %v3973
        %v3975 = vrot.slane %v3498, %v3974
        %v3976 = vlaneseq
        %v3977 = vshrl.u32 %v3976, 7
        %v3978 = vsub.s32 0, %v3977
        %v3979 = vrot.slane %v3512, %v3978
        %v3980 = vlaneseq
        %v3981 = vshrl.u32 %v3980, 7
        %v3982 = vsub.s32 0, %v3981
        %v3983 = vrot.slane %v3514, %v3982
        %v3984 = vlaneseq
        %v3985 = vshrl.u32 %v3984, 7
        %v3986 = vsub.s32 0, %v3985
        %v3987 = vrot.slane %v3516, %v3986
        %v3988 = vlaneseq
        %v3989 = vshrl.u32 %v3988, 7
        %v3990 = vsub.s32 0, %v3989
        %v3991 = vrot.slane %v3540, %v3990
        %v3992 = vlaneseq
        %v3993 = vshrl.u32 %v3992, 7
        %v3994 = vsub.s32 0, %v3993
        %v3995 = vrot.slane %v3554, %v3994
        %v3996 = vlaneseq
        %v3997 = vshrl.u32 %v3996, 7
        %v3998 = vsub.s32 0, %v3997
        %v3999 = vrot.slane %v3562, %v3998
        %v4000 = vlaneseq
        %v4001 = vshrl.u32 %v4000, 7
        %v4002 = vsub.s32 0, %v4001
        %v4003 = vrot.slane %v3564, %v4002
        %v4004 = vlaneseq
        %v4005 = vshrl.u32 %v4004, 7
        %v4006 = vsub.s32 0, %v4005
        %v4007 = vrot.slane %v3547, %v4006
        %v4008 = vlaneseq
        %v4009 = vshrl.u32 %v4008, 7
        %v4010 = vsub.s32 0, %v4009
        %v4011 = vrot.slane %v3561, %v4010
        %v4012 = vlaneseq
        %v4013 = vshrl.u32 %v4012, 7
        %v4014 = vsub.s32 0, %v4013
        %v4015 = vrot.slane %v3563, %v4014
        %v4016 = vlaneseq
        %v4017 = vshrl.u32 %v4016, 7
        %v4018 = vsub.s32 0, %v4017
        %v4019 = vrot.slane %v3565, %v4018
        %v4020 = vlaneseq
        %v4021 = vshrl.u32 %v4020, 7
        %v4022 = vsub.s32 0, %v4021
        %v4023 = vrot.slane %v3589, %v4022
        %v4024 = vlaneseq
        %v4025 = vshrl.u32 %v4024, 7
        %v4026 = vsub.s32 0, %v4025
        %v4027 = vrot.slane %v3603, %v4026
        %v4028 = vlaneseq
        %v4029 = vshrl.u32 %v4028, 7
        %v4030 = vsub.s32 0, %v4029
        %v4031 = vrot.slane %v3611, %v4030
        %v4032 = vlaneseq
        %v4033 = vshrl.u32 %v4032, 7
        %v4034 = vsub.s32 0, %v4033
        %v4035 = vrot.slane %v3613, %v4034
        %v4036 = vlaneseq
        %v4037 = vshrl.u32 %v4036, 7
        %v4038 = vsub.s32 0, %v4037
        %v4039 = vrot.slane %v3596, %v4038
        %v4040 = vlaneseq
        %v4041 = vshrl.u32 %v4040, 7
        %v4042 = vsub.s32 0, %v4041
        %v4043 = vrot.slane %v3610, %v4042
        %v4044 = vlaneseq
        %v4045 = vshrl.u32 %v4044, 7
        %v4046 = vsub.s32 0, %v4045
        %v4047 = vrot.slane %v3612, %v4046
        %v4048 = vlaneseq
        %v4049 = vshrl.u32 %v4048, 7
        %v4050 = vsub.s32 0, %v4049
        %v4051 = vrot.slane %v3614, %v4050
        %v4052 = vlaneseq
        %v4053 = vshrl.u32 %v4052, 7
        %v4054 = vsub.s32 0, %v4053
        %v4055 = vrot.slane %v3638, %v4054
        %v4056 = vlaneseq
        %v4057 = vshrl.u32 %v4056, 7
        %v4058 = vsub.s32 0, %v4057
        %v4059 = vrot.slane %v3652, %v4058
        %v4060 = vlaneseq
        %v4061 = vshrl.u32 %v4060, 7
        %v4062 = vsub.s32 0, %v4061
        %v4063 = vrot.slane %v3660, %v4062
        %v4064 = vlaneseq
        %v4065 = vshrl.u32 %v4064, 7
        %v4066 = vsub.s32 0, %v4065
        %v4067 = vrot.slane %v3662, %v4066
        %v4068 = vlaneseq
        %v4069 = vshrl.u32 %v4068, 7
        %v4070 = vsub.s32 0, %v4069
        %v4071 = vrot.slane %v3645, %v4070
        %v4072 = vlaneseq
        %v4073 = vshrl.u32 %v4072, 7
        %v4074 = vsub.s32 0, %v4073
        %v4075 = vrot.slane %v3659, %v4074
        %v4076 = vlaneseq
        %v4077 = vshrl.u32 %v4076, 7
        %v4078 = vsub.s32 0, %v4077
        %v4079 = vrot.slane %v3661, %v4078
        %v4080 = vlaneseq
        %v4081 = vshrl.u32 %v4080, 7
        %v4082 = vsub.s32 0, %v4081
        %v4083 = vrot.slane %v3663, %v4082
        %v4084 = vlaneseq
        %v4085 = vshrl.u32 %v4084, 7
        %v4086 = vsub.s32 0, %v4085
        %v4087 = vrot.slane %v3687, %v4086
        %v4088 = vlaneseq
        %v4089 = vshrl.u32 %v4088, 7
        %v4090 = vsub.s32 0, %v4089
        %v4091 = vrot.slane %v3701, %v4090
        %v4092 = vlaneseq
        %v4093 = vshrl.u32 %v4092, 7
        %v4094 = vsub.s32 0, %v4093
        %v4095 = vrot.slane %v3709, %v4094
        %v4096 = vlaneseq
        %v4097 = vshrl.u32 %v4096, 7
        %v4098 = vsub.s32 0, %v4097
        %v4099 = vrot.slane %v3711, %v4098
        %v4100 = vlaneseq
        %v4101 = vshrl.u32 %v4100, 7
        %v4102 = vsub.s32 0, %v4101
        %v4103 = vrot.slane %v3694, %v4102
        %v4104 = vlaneseq
        %v4105 = vshrl.u32 %v4104, 7
        %v4106 = vsub.s32 0, %v4105
        %v4107 = vrot.slane %v3708, %v4106
        %v4108 = vlaneseq
        %v4109 = vshrl.u32 %v4108, 7
        %v4110 = vsub.s32 0, %v4109
        %v4111 = vrot.slane %v3710, %v4110
        %v4112 = vlaneseq
        %v4113 = vshrl.u32 %v4112, 7
        %v4114 = vsub.s32 0, %v4113
        %v4115 = vrot.slane %v3712, %v4114
        %v4116 = vlaneseq
        %v4117 = vshrl.u32 %v4116, 7
        %v4118 = vsub.s32 0, %v4117
        %v4119 = vrot.slane %v3736, %v4118
        %v4120 = vlaneseq
        %v4121 = vshrl.u32 %v4120, 7
        %v4122 = vsub.s32 0, %v4121
        %v4123 = vrot.slane %v3750, %v4122
        %v4124 = vlaneseq
        %v4125 = vshrl.u32 %v4124, 7
        %v4126 = vsub.s32 0, %v4125
        %v4127 = vrot.slane %v3758, %v4126
        %v4128 = vlaneseq
        %v4129 = vshrl.u32 %v4128, 7
        %v4130 = vsub.s32 0, %v4129
        %v4131 = vrot.slane %v3760, %v4130
        %v4132 = vlaneseq
        %v4133 = vshrl.u32 %v4132, 7
        %v4134 = vsub.s32 0, %v4133
        %v4135 = vrot.slane %v3743, %v4134
        %v4136 = vlaneseq
        %v4137 = vshrl.u32 %v4136, 7
        %v4138 = vsub.s32 0, %v4137
        %v4139 = vrot.slane %v3757, %v4138
        %v4140 = vlaneseq
        %v4141 = vshrl.u32 %v4140, 7
        %v4142 = vsub.s32 0, %v4141
        %v4143 = vrot.slane %v3759, %v4142
        %v4144 = vlaneseq
        %v4145 = vshrl.u32 %v4144, 7
        %v4146 = vsub.s32 0, %v4145
        %v4147 = vrot.slane %v3761, %v4146
        %v4148 = vlaneseq
        %v4149 = vshrl.u32 %v4148, 7
        %v4150 = vsub.s32 0, %v4149
        %v4151 = vrot.slane %v3785, %v4150
        %v4152 = vlaneseq
        %v4153 = vshrl.u32 %v4152, 7
        %v4154 = vsub.s32 0, %v4153
        %v4155 = vrot.slane %v3799, %v4154
        %v4156 = vlaneseq
        %v4157 = vshrl.u32 %v4156, 7
        %v4158 = vsub.s32 0, %v4157
        %v4159 = vrot.slane %v3807, %v4158
        %v4160 = vlaneseq
        %v4161 = vshrl.u32 %v4160, 7
        %v4162 = vsub.s32 0, %v4161
        %v4163 = vrot.slane %v3809, %v4162
        %v4164 = vlaneseq
        %v4165 = vshrl.u32 %v4164, 7
        %v4166 = vsub.s32 0, %v4165
        %v4167 = vrot.slane %v3792, %v4166
        %v4168 = vlaneseq
        %v4169 = vshrl.u32 %v4168, 7
        %v4170 = vsub.s32 0, %v4169
        %v4171 = vrot.slane %v3806, %v4170
        %v4172 = vlaneseq
        %v4173 = vshrl.u32 %v4172, 7
        %v4174 = vsub.s32 0, %v4173
        %v4175 = vrot.slane %v3808, %v4174
        %v4176 = vlaneseq
        %v4177 = vshrl.u32 %v4176, 7
        %v4178 = vsub.s32 0, %v4177
        %v4179 = vrot.slane %v3810, %v4178
        %v4180 = vlaneseq
        %v4181 = vshrl.u32 %v4180, 7
        %v4182 = vsub.s32 0, %v4181
        %v4183 = vrot.slane %v3834, %v4182
        %v4184 = vlaneseq
        %v4185 = vshrl.u32 %v4184, 7
        %v4186 = vsub.s32 0, %v4185
        %v4187 = vrot.slane %v3848, %v4186
        %v4188 = vlaneseq
        %v4189 = vshrl.u32 %v4188, 7
        %v4190 = vsub.s32 0, %v4189
        %v4191 = vrot.slane %v3856, %v4190
        %v4192 = vlaneseq
        %v4193 = vshrl.u32 %v4192, 7
        %v4194 = vsub.s32 0, %v4193
        %v4195 = vrot.slane %v3858, %v4194
        %v4196 = vlaneseq
        %v4197 = vshrl.u32 %v4196, 7
        %v4198 = vsub.s32 0, %v4197
        %v4199 = vrot.slane %v3841, %v4198
        %v4200 = vlaneseq
        %v4201 = vshrl.u32 %v4200, 7
        %v4202 = vsub.s32 0, %v4201
        %v4203 = vrot.slane %v3855, %v4202
        %v4204 = vlaneseq
        %v4205 = vshrl.u32 %v4204, 7
        %v4206 = vsub.s32 0, %v4205
        %v4207 = vrot.slane %v3857, %v4206
        %v4208 = vlaneseq
        %v4209 = vshrl.u32 %v4208, 7
        %v4210 = vsub.s32 0, %v4209
        %v4211 = vrot.slane %v3859, %v4210
        %v4300 = vmul.f32 %v2261, %v3863
        %v4301 = vmul.f32 %v2265, %v3863
        %v4302 = vmul.f32 %v2273, %v3867
        %v4303 = vmul.f32 %v2277, %v3867
        %v4304 = vmul.f32 %v2285, %v3871
        %v4305 = vmul.f32 %v2289, %v3871
        %v4306 = vmul.f32 %v2297, %v3875
        %v4307 = vmul.f32 %v2301, %v3875
        %v4308 = vmul.f32 %v2309, %v3879
        %v4309 = vmul.f32 %v2313, %v3879
        %v4310 = vmul.f32 %v2321, %v3883
        %v4311 = vmul.f32 %v2325, %v3883
        %v4312 = vmul.f32 %v2333, %v3887
        %v4313 = vmul.f32 %v2337, %v3887
        %v4314 = vmul.f32 %v2345, %v3891
        %v4315 = vmul.f32 %v2349, %v3891
        %v4316 = vmul.f32 %v2357, %v3895
        %v4317 = vmul.f32 %v2361, %v3895
        %v4318 = vmul.f32 %v2369, %v3899
        %v4319 = vmul.f32 %v2373, %v3899
        %v4320 = vmul.f32 %v2381, %v3903
        %v4321 = vmul.f32 %v2385, %v3903
        %v4322 = vmul.f32 %v2393, %v3907
        %v4323 = vmul.f32 %v2397, %v3907
        %v4324 = vmul.f32 %v2405, %v3911
        %v4325 = vmul.f32 %v2409, %v3911
        %v4326 = vmul.f32 %v2417, %v3915
        %v4327 = vmul.f32 %v2421, %v3915
        %v4328 = vmul.f32 %v2429, %v3919
        %v4329 = vmul.f32 %v2433, %v3919
        %v4330 = vmul.f32 %v2441, %v3923
        %v4331 = vmul.f32 %v2445, %v3923
        %v4332 = vmul.f32 %v2453, %v3927
        %v4333 = vmul.f32 %v2457, %v3927
        %v4334 = vmul.f32 %v2465, %v3931
        %v4335 = vmul.f32 %v2469, %v3931
        %v4336 = vmul.f32 %v2477, %v3935
        %v4337 = vmul.f32 %v2481, %v3935
        %v4338 = vmul.f32 %v2489, %v3939
        %v4339 = vmul.f32 %v2493, %v3939
        %v4340 = vmul.f32 %v2501, %v3943
        %v4341 = vmul.f32 %v2505, %v3943
        %v4342 = vmul.f32 %v2513, %v3947
        %v4343 = vmul.f32 %v2517, %v3947
        %v4344 = vmul.f32 %v2525, %v3951
        %v4345 = vmul.f32 %v2529, %v3951
        %v4346 = vmul.f32 %v2537, %v3955
        %v4347 = vmul.f32 %v2541, %v3955
        %v4348 = vmul.f32 %v2549, %v3959
        %v4349 = vmul.f32 %v2553, %v3959
        %v4350 = vmul.f32 %v2561, %v3963
        %v4351 = vmul.f32 %v2565, %v3963
        %v4352 = vmul.f32 %v2573, %v3967
        %v4353 = vmul.f32 %v2577, %v3967
        %v4354 = vmul.f32 %v2585, %v3971
        %v4355 = vmul.f32 %v2589, %v3971
        %v4356 = vmul.f32 %v2597, %v3975
        %v4357 = vmul.f32 %v2601, %v3975
        %v4358 = vmul.f32 %v2609, %v3979
        %v4359 = vmul.f32 %v2613, %v3979
        %v4360 = vmul.f32 %v2621, %v3983
        %v4361 = vmul.f32 %v2625, %v3983
        %v4362 = vmul.f32 %v2633, %v3987
        %v4363 = vmul.f32 %v2637, %v3987
        %v4364 = vmul.f32 %v2645, %v3991
        %v4365 = vmul.f32 %v2649, %v3991
        %v4366 = vmul.f32 %v2657, %v3995
        %v4367 = vmul.f32 %v2661, %v3995
        %v4368 = vmul.f32 %v2669, %v3999
        %v4369 = vmul.f32 %v2673, %v3999
        %v4370 = vmul.f32 %v2681, %v4003
        %v4371 = vmul.f32 %v2685, %v4003
        %v4372 = vmul.f32 %v2693, %v4007
        %v4373 = vmul.f32 %v2697, %v4007
        %v4374 = vmul.f32 %v2705, %v4011
        %v4375 = vmul.f32 %v2709, %v4011
        %v4376 = vmul.f32 %v2717, %v4015
        %v4377 = vmul.f32 %v2721, %v4015
        %v4378 = vmul.f32 %v2729, %v4019
        %v4379 = vmul.f32 %v2733, %v4019
        %v4380 = vmul.f32 %v2741, %v4023
        %v4381 = vmul.f32 %v2745, %v4023
        %v4382 = vmul.f32 %v2753, %v4027
        %v4383 = vmul.f32 %v2757, %v4027
        %v4384 = vmul.f32 %v2765, %v4031
        %v4385 = vmul.f32 %v2769, %v4031
        %v4386 = vmul.f32 %v2777, %v4035
        %v4387 = vmul.f32 %v2781, %v4035
        %v4388 = vmul.f32 %v2789, %v4039
        %v4389 = vmul.f32 %v2793, %v4039
        %v4390 = vmul.f32 %v2801, %v4043
        %v4391 = vmul.f32 %v2805, %v4043
        %v4392 = vmul.f32 %v2813, %v4047
        %v4393 = vmul.f32 %v2817, %v4047
        %v4394 = vmul.f32 %v2825, %v4051
        %v4395 = vmul.f32 %v2829, %v4051
        %v4396 = vmul.f32 %v2837, %v4055
        %v4397 = vmul.f32 %v2841, %v4055
        %v4398 = vmul.f32 %v2849, %v4059
        %v4399 = vmul.f32 %v2853, %v4059
        %v4400 = vmul.f32 %v2861, %v4063
        %v4401 = vmul.f32 %v2865, %v4063
        %v4402 = vmul.f32 %v2873, %v4067
        %v4403 = vmul.f32 %v2877, %v4067
        %v4404 = vmul.f32 %v2885, %v4071
        %v4405 = vmul.f32 %v2889, %v4071
        %v4406 = vmul.f32 %v2897, %v4075
        %v4407 = vmul.f32 %v2901, %v4075
        %v4408 = vmul.f32 %v2909, %v4079
        %v4409 = vmul.f32 %v2913, %v4079
        %v4410 = vmul.f32 %v2921, %v4083
        %v4411 = vmul.f32 %v2925, %v4083
        %v4412 = vmul.f32 %v2933, %v4087
        %v4413 = vmul.f32 %v2937, %v4087
        %v4414 = vmul.f32 %v2945, %v4091
        %v4415 = vmul.f32 %v2949, %v4091
        %v4416 = vmul.f32 %v2957, %v4095
        %v4417 = vmul.f32 %v2961, %v4095
        %v4418 = vmul.f32 %v2969, %v4099
        %v4419 = vmul.f32 %v2973, %v4099
        %v4420 = vmul.f32 %v2981, %v4103
        %v4421 = vmul.f32 %v2985, %v4103
        %v4422 = vmul.f32 %v2993, %v4107
        %v4423 = vmul.f32 %v2997, %v4107
        %v4424 = vmul.f32 %v3005, %v4111
        %v4425 = vmul.f32 %v3009, %v4111
        %v4426 = vmul.f32 %v3017, %v4115
        %v4427 = vmul.f32 %v3021, %v4115
        %v4428 = vmul.f32 %v3029, %v4119
        %v4429 = vmul.f32 %v3033, %v4119
        %v4430 = vmul.f32 %v3041, %v4123
        %v4431 = vmul.f32 %v3045, %v4123
        %v4432 = vmul.f32 %v3053, %v4127
        %v4433 = vmul.f32 %v3057, %v4127
        %v4434 = vmul.f32 %v3065, %v4131
        %v4435 = vmul.f32 %v3069, %v4131
        %v4436 = vmul.f32 %v3077, %v4135
        %v4437 = vmul.f32 %v3081, %v4135
        %v4438 = vmul.f32 %v3089, %v4139
        %v4439 = vmul.f32 %v3093, %v4139
        %v4440 = vmul.f32 %v3101, %v4143
        %v4441 = vmul.f32 %v3105, %v4143
        %v4442 = vmul.f32 %v3113, %v4147
        %v4443 = vmul.f32 %v3117, %v4147
        %v4444 = vmul.f32 %v3125, %v4151
        %v4445 = vmul.f32 %v3129, %v4151
        %v4446 = vmul.f32 %v3137, %v4155
        %v4447 = vmul.f32 %v3141, %v4155
        %v4448 = vmul.f32 %v3149, %v4159
        %v4449 = vmul.f32 %v3153, %v4159
        %v4450 = vmul.f32 %v3161, %v4163
        %v4451 = vmul.f32 %v3165, %v4163
        %v4452 = vmul.f32 %v3173, %v4167
        %v4453 = vmul.f32 %v3177, %v4167
        %v4454 = vmul.f32 %v3185, %v4171
        %v4455 = vmul.f32 %v3189, %v4171
        %v4456 = vmul.f32 %v3197, %v4175
        %v4457 = vmul.f32 %v3201, %v4175
        %v4458 = vmul.f32 %v3209, %v4179
        %v4459 = vmul.f32 %v3213, %v4179
        %v4460 = vmul.f32 %v3221, %v4183
        %v4461 = vmul.f32 %v3225, %v4183
        %v4462 = vmul.f32 %v3233, %v4187
        %v4463 = vmul.f32 %v3237, %v4187
        %v4464 = vmul.f32 %v3245, %v4191
        %v4465 = vmul.f32 %v3249, %v4191
        %v4466 = vmul.f32 %v3257, %v4195
        %v4467 = vmul.f32 %v3261, %v4195
        %v4468 = vmul.f32 %v3269, %v4199
        %v4469 = vmul.f32 %v3273, %v4199
        %v4470 = vmul.f32 %v3281, %v4203
        %v4471 = vmul.f32 %v3285, %v4203
        %v4472 = vmul.f32 %v3293, %v4207
        %v4473 = vmul.f32 %v3297, %v4207
        %v4474 = vmul.f32 %v3305, %v4211
        %v4475 = vmul.f32 %v3309, %v4211
        %4476 = vst.msk [vmem:[#allocation3] sm:$0xff] %vm329, %v4300
        %4477 = vst.msk [vmem:[#allocation3 + $0x8] sm:$0xff] %vm329, %v4301
        %4478 = vst.msk [vmem:[#allocation3 + $0x10] sm:$0xff] %vm329, %v4302
        %4479 = vst.msk [vmem:[#allocation3 + $0x18] sm:$0xff] %vm329, %v4303
        %4480 = vst.msk [vmem:[#allocation3 + $0x20] sm:$0xff] %vm329, %v4304
        %4481 = vst.msk [vmem:[#allocation3 + $0x28] sm:$0xff] %vm329, %v4305
        %4482 = vst.msk [vmem:[#allocation3 + $0x30] sm:$0xff] %vm329, %v4306
        %4483 = vst.msk [vmem:[#allocation3 + $0x38] sm:$0xff] %vm329, %v4307
        %4484 = vst.msk [vmem:[#allocation3 + $0x40] sm:$0xff] %vm329, %v4308
        %4485 = vst.msk [vmem:[#allocation3 + $0x48] sm:$0xff] %vm329, %v4309
        %4486 = vst.msk [vmem:[#allocation3 + $0x50] sm:$0xff] %vm329, %v4310
        %4487 = vst.msk [vmem:[#allocation3 + $0x58] sm:$0xff] %vm329, %v4311
        %4488 = vst.msk [vmem:[#allocation3 + $0x60] sm:$0xff] %vm329, %v4312
        %4489 = vst.msk [vmem:[#allocation3 + $0x68] sm:$0xff] %vm329, %v4313
        %4490 = vst.msk [vmem:[#allocation3 + $0x70] sm:$0xff] %vm329, %v4314
        %4491 = vst.msk [vmem:[#allocation3 + $0x78] sm:$0xff] %vm329, %v4315
        %4492 = vst.msk [vmem:[#allocation3 + $0x80] sm:$0xff] %vm329, %v4316
        %4493 = vst.msk [vmem:[#allocation3 + $0x88] sm:$0xff] %vm329, %v4317
        %4494 = vst.msk [vmem:[#allocation3 + $0x90] sm:$0xff] %vm329, %v4318
        %4495 = vst.msk [vmem:[#allocation3 + $0x98] sm:$0xff] %vm329, %v4319
        %4496 = vst.msk [vmem:[#allocation3 + $0xa0] sm:$0xff] %vm329, %v4320
        %4497 = vst.msk [vmem:[#allocation3 + $0xa8] sm:$0xff] %vm329, %v4321
        %4498 = vst.msk [vmem:[#allocation3 + $0xb0] sm:$0xff] %vm329, %v4322
        %4499 = vst.msk [vmem:[#allocation3 + $0xb8] sm:$0xff] %vm329, %v4323
        %4500 = vst.msk [vmem:[#allocation3 + $0xc0] sm:$0xff] %vm329, %v4324
        %4501 = vst.msk [vmem:[#allocation3 + $0xc8] sm:$0xff] %vm329, %v4325
        %4502 = vst.msk [vmem:[#allocation3 + $0xd0] sm:$0xff] %vm329, %v4326
        %4503 = vst.msk [vmem:[#allocation3 + $0xd8] sm:$0xff] %vm329, %v4327
        %4504 = vst.msk [vmem:[#allocation3 + $0xe0] sm:$0xff] %vm329, %v4328
        %4505 = vst.msk [vmem:[#allocation3 + $0xe8] sm:$0xff] %vm329, %v4329
        %4506 = vst.msk [vmem:[#allocation3 + $0xf0] sm:$0xff] %vm329, %v4330
        %4507 = vst.msk [vmem:[#allocation3 + $0xf8] sm:$0xff] %vm329, %v4331
        %4508 = vst.msk [vmem:[#allocation3 + $0x100] sm:$0xff] %vm329, %v4332
        %4509 = vst.msk [vmem:[#allocation3 + $0x108] sm:$0xff] %vm329, %v4333
        %4510 = vst.msk [vmem:[#allocation3 + $0x110] sm:$0xff] %vm329, %v4334
        %4511 = vst.msk [vmem:[#allocation3 + $0x118] sm:$0xff] %vm329, %v4335
        %4512 = vst.msk [vmem:[#allocation3 + $0x120] sm:$0xff] %vm329, %v4336
        %4513 = vst.msk [vmem:[#allocation3 + $0x128] sm:$0xff] %vm329, %v4337
        %4514 = vst.msk [vmem:[#allocation3 + $0x130] sm:$0xff] %vm329, %v4338
        %4515 = vst.msk [vmem:[#allocation3 + $0x138] sm:$0xff] %vm329, %v4339
        %4516 = vst.msk [vmem:[#allocation3 + $0x140] sm:$0xff] %vm329, %v4340
        %4517 = vst.msk [vmem:[#allocation3 + $0x148] sm:$0xff] %vm329, %v4341
        %4518 = vst.msk [vmem:[#allocation3 + $0x150] sm:$0xff] %vm329, %v4342
        %4519 = vst.msk [vmem:[#allocation3 + $0x158] sm:$0xff] %vm329, %v4343
        %4520 = vst.msk [vmem:[#allocation3 + $0x160] sm:$0xff] %vm329, %v4344
        %4521 = vst.msk [vmem:[#allocation3 + $0x168] sm:$0xff] %vm329, %v4345
        %4522 = vst.msk [vmem:[#allocation3 + $0x170] sm:$0xff] %vm329, %v4346
        %4523 = vst.msk [vmem:[#allocation3 + $0x178] sm:$0xff] %vm329, %v4347
        %4524 = vst.msk [vmem:[#allocation3 + $0x180] sm:$0xff] %vm329, %v4348
        %4525 = vst.msk [vmem:[#allocation3 + $0x188] sm:$0xff] %vm329, %v4349
        %4526 = vst.msk [vmem:[#allocation3 + $0x190] sm:$0xff] %vm329, %v4350
        %4527 = vst.msk [vmem:[#allocation3 + $0x198] sm:$0xff] %vm329, %v4351
        %4528 = vst.msk [vmem:[#allocation3 + $0x1a0] sm:$0xff] %vm329, %v4352
        %4529 = vst.msk [vmem:[#allocation3 + $0x1a8] sm:$0xff] %vm329, %v4353
        %4530 = vst.msk [vmem:[#allocation3 + $0x1b0] sm:$0xff] %vm329, %v4354
        %4531 = vst.msk [vmem:[#allocation3 + $0x1b8] sm:$0xff] %vm329, %v4355
        %4532 = vst.msk [vmem:[#allocation3 + $0x1c0] sm:$0xff] %vm329, %v4356
        %4533 = vst.msk [vmem:[#allocation3 + $0x1c8] sm:$0xff] %vm329, %v4357
        %4534 = vst.msk [vmem:[#allocation3 + $0x1d0] sm:$0xff] %vm329, %v4358
        %4535 = vst.msk [vmem:[#allocation3 + $0x1d8] sm:$0xff] %vm329, %v4359
        %4536 = vst.msk [vmem:[#allocation3 + $0x1e0] sm:$0xff] %vm329, %v4360
        %4537 = vst.msk [vmem:[#allocation3 + $0x1e8] sm:$0xff] %vm329, %v4361
        %4538 = vst.msk [vmem:[#allocation3 + $0x1f0] sm:$0xff] %vm329, %v4362
        %4539 = vst.msk [vmem:[#allocation3 + $0x1f8] sm:$0xff] %vm329, %v4363
        %4540 = vst.msk [vmem:[#allocation3 + $0x200] sm:$0xff] %vm329, %v4364
        %4541 = vst.msk [vmem:[#allocation3 + $0x208] sm:$0xff] %vm329, %v4365
        %4542 = vst.msk [vmem:[#allocation3 + $0x210] sm:$0xff] %vm329, %v4366
        %4543 = vst.msk [vmem:[#allocation3 + $0x218] sm:$0xff] %vm329, %v4367
        %4544 = vst.msk [vmem:[#allocation3 + $0x220] sm:$0xff] %vm329, %v4368
        %4545 = vst.msk [vmem:[#allocation3 + $0x228] sm:$0xff] %vm329, %v4369
        %4546 = vst.msk [vmem:[#allocation3 + $0x230] sm:$0xff] %vm329, %v4370
        %4547 = vst.msk [vmem:[#allocation3 + $0x238] sm:$0xff] %vm329, %v4371
        %4548 = vst.msk [vmem:[#allocation3 + $0x240] sm:$0xff] %vm329, %v4372
        %4549 = vst.msk [vmem:[#allocation3 + $0x248] sm:$0xff] %vm329, %v4373
        %4550 = vst.msk [vmem:[#allocation3 + $0x250] sm:$0xff] %vm329, %v4374
        %4551 = vst.msk [vmem:[#allocation3 + $0x258] sm:$0xff] %vm329, %v4375
        %4552 = vst.msk [vmem:[#allocation3 + $0x260] sm:$0xff] %vm329, %v4376
        %4553 = vst.msk [vmem:[#allocation3 + $0x268] sm:$0xff] %vm329, %v4377
        %4554 = vst.msk [vmem:[#allocation3 + $0x270] sm:$0xff] %vm329, %v4378
        %4555 = vst.msk [vmem:[#allocation3 + $0x278] sm:$0xff] %vm329, %v4379
        %4556 = vst.msk [vmem:[#allocation3 + $0x280] sm:$0xff] %vm329, %v4380
        %4557 = vst.msk [vmem:[#allocation3 + $0x288] sm:$0xff] %vm329, %v4381
        %4558 = vst.msk [vmem:[#allocation3 + $0x290] sm:$0xff] %vm329, %v4382
        %4559 = vst.msk [vmem:[#allocation3 + $0x298] sm:$0xff] %vm329, %v4383
        %4560 = vst.msk [vmem:[#allocation3 + $0x2a0] sm:$0xff] %vm329, %v4384
        %4561 = vst.msk [vmem:[#allocation3 + $0x2a8] sm:$0xff] %vm329, %v4385
        %4562 = vst.msk [vmem:[#allocation3 + $0x2b0] sm:$0xff] %vm329, %v4386
        %4563 = vst.msk [vmem:[#allocation3 + $0x2b8] sm:$0xff] %vm329, %v4387
        %4564 = vst.msk [vmem:[#allocation3 + $0x2c0] sm:$0xff] %vm329, %v4388
        %4565 = vst.msk [vmem:[#allocation3 + $0x2c8] sm:$0xff] %vm329, %v4389
        %4566 = vst.msk [vmem:[#allocation3 + $0x2d0] sm:$0xff] %vm329, %v4390
        %4567 = vst.msk [vmem:[#allocation3 + $0x2d8] sm:$0xff] %vm329, %v4391
        %4568 = vst.msk [vmem:[#allocation3 + $0x2e0] sm:$0xff] %vm329, %v4392
        %4569 = vst.msk [vmem:[#allocation3 + $0x2e8] sm:$0xff] %vm329, %v4393
        %4570 = vst.msk [vmem:[#allocation3 + $0x2f0] sm:$0xff] %vm329, %v4394
        %4571 = vst.msk [vmem:[#allocation3 + $0x2f8] sm:$0xff] %vm329, %v4395
        %4572 = vst.msk [vmem:[#allocation3 + $0x300] sm:$0xff] %vm329, %v4396
        %4573 = vst.msk [vmem:[#allocation3 + $0x308] sm:$0xff] %vm329, %v4397
        %4574 = vst.msk [vmem:[#allocation3 + $0x310] sm:$0xff] %vm329, %v4398
        %4575 = vst.msk [vmem:[#allocation3 + $0x318] sm:$0xff] %vm329, %v4399
        %4576 = vst.msk [vmem:[#allocation3 + $0x320] sm:$0xff] %vm329, %v4400
        %4577 = vst.msk [vmem:[#allocation3 + $0x328] sm:$0xff] %vm329, %v4401
        %4578 = vst.msk [vmem:[#allocation3 + $0x330] sm:$0xff] %vm329, %v4402
        %4579 = vst.msk [vmem:[#allocation3 + $0x338] sm:$0xff] %vm329, %v4403
        %4580 = vst.msk [vmem:[#allocation3 + $0x340] sm:$0xff] %vm329, %v4404
        %4581 = vst.msk [vmem:[#allocation3 + $0x348] sm:$0xff] %vm329, %v4405
        %4582 = vst.msk [vmem:[#allocation3 + $0x350] sm:$0xff] %vm329, %v4406
        %4583 = vst.msk [vmem:[#allocation3 + $0x358] sm:$0xff] %vm329, %v4407
        %4584 = vst.msk [vmem:[#allocation3 + $0x360] sm:$0xff] %vm329, %v4408
        %4585 = vst.msk [vmem:[#allocation3 + $0x368] sm:$0xff] %vm329, %v4409
        %4586 = vst.msk [vmem:[#allocation3 + $0x370] sm:$0xff] %vm329, %v4410
        %4587 = vst.msk [vmem:[#allocation3 + $0x378] sm:$0xff] %vm329, %v4411
        %4588 = vst.msk [vmem:[#allocation3 + $0x380] sm:$0xff] %vm329, %v4412
        %4589 = vst.msk [vmem:[#allocation3 + $0x388] sm:$0xff] %vm329, %v4413
        %4590 = vst.msk [vmem:[#allocation3 + $0x390] sm:$0xff] %vm329, %v4414
        %4591 = vst.msk [vmem:[#allocation3 + $0x398] sm:$0xff] %vm329, %v4415
        %4592 = vst.msk [vmem:[#allocation3 + $0x3a0] sm:$0xff] %vm329, %v4416
        %4593 = vst.msk [vmem:[#allocation3 + $0x3a8] sm:$0xff] %vm329, %v4417
        %4594 = vst.msk [vmem:[#allocation3 + $0x3b0] sm:$0xff] %vm329, %v4418
        %4595 = vst.msk [vmem:[#allocation3 + $0x3b8] sm:$0xff] %vm329, %v4419
        %4596 = vst.msk [vmem:[#allocation3 + $0x3c0] sm:$0xff] %vm329, %v4420
        %4597 = vst.msk [vmem:[#allocation3 + $0x3c8] sm:$0xff] %vm329, %v4421
        %4598 = vst.msk [vmem:[#allocation3 + $0x3d0] sm:$0xff] %vm329, %v4422
        %4599 = vst.msk [vmem:[#allocation3 + $0x3d8] sm:$0xff] %vm329, %v4423
        %4600 = vst.msk [vmem:[#allocation3 + $0x3e0] sm:$0xff] %vm329, %v4424
        %4601 = vst.msk [vmem:[#allocation3 + $0x3e8] sm:$0xff] %vm329, %v4425
        %4602 = vst.msk [vmem:[#allocation3 + $0x3f0] sm:$0xff] %vm329, %v4426
        %4603 = vst.msk [vmem:[#allocation3 + $0x3f8] sm:$0xff] %vm329, %v4427
        %4604 = vst.msk [vmem:[#allocation3 + $0x400] sm:$0xff] %vm329, %v4428
        %4605 = vst.msk [vmem:[#allocation3 + $0x408] sm:$0xff] %vm329, %v4429
        %4606 = vst.msk [vmem:[#allocation3 + $0x410] sm:$0xff] %vm329, %v4430
        %4607 = vst.msk [vmem:[#allocation3 + $0x418] sm:$0xff] %vm329, %v4431
        %4608 = vst.msk [vmem:[#allocation3 + $0x420] sm:$0xff] %vm329, %v4432
        %4609 = vst.msk [vmem:[#allocation3 + $0x428] sm:$0xff] %vm329, %v4433
        %4610 = vst.msk [vmem:[#allocation3 + $0x430] sm:$0xff] %vm329, %v4434
        %4611 = vst.msk [vmem:[#allocation3 + $0x438] sm:$0xff] %vm329, %v4435
        %4612 = vst.msk [vmem:[#allocation3 + $0x440] sm:$0xff] %vm329, %v4436
        %4613 = vst.msk [vmem:[#allocation3 + $0x448] sm:$0xff] %vm329, %v4437
        %4614 = vst.msk [vmem:[#allocation3 + $0x450] sm:$0xff] %vm329, %v4438
        %4615 = vst.msk [vmem:[#allocation3 + $0x458] sm:$0xff] %vm329, %v4439
        %4616 = vst.msk [vmem:[#allocation3 + $0x460] sm:$0xff] %vm329, %v4440
        %4617 = vst.msk [vmem:[#allocation3 + $0x468] sm:$0xff] %vm329, %v4441
        %4618 = vst.msk [vmem:[#allocation3 + $0x470] sm:$0xff] %vm329, %v4442
        %4619 = vst.msk [vmem:[#allocation3 + $0x478] sm:$0xff] %vm329, %v4443
        %4620 = vst.msk [vmem:[#allocation3 + $0x480] sm:$0xff] %vm329, %v4444
        %4621 = vst.msk [vmem:[#allocation3 + $0x488] sm:$0xff] %vm329, %v4445
        %4622 = vst.msk [vmem:[#allocation3 + $0x490] sm:$0xff] %vm329, %v4446
        %4623 = vst.msk [vmem:[#allocation3 + $0x498] sm:$0xff] %vm329, %v4447
        %4624 = vst.msk [vmem:[#allocation3 + $0x4a0] sm:$0xff] %vm329, %v4448
        %4625 = vst.msk [vmem:[#allocation3 + $0x4a8] sm:$0xff] %vm329, %v4449
        %4626 = vst.msk [vmem:[#allocation3 + $0x4b0] sm:$0xff] %vm329, %v4450
        %4627 = vst.msk [vmem:[#allocation3 + $0x4b8] sm:$0xff] %vm329, %v4451
        %4628 = vst.msk [vmem:[#allocation3 + $0x4c0] sm:$0xff] %vm329, %v4452
        %4629 = vst.msk [vmem:[#allocation3 + $0x4c8] sm:$0xff] %vm329, %v4453
        %4630 = vst.msk [vmem:[#allocation3 + $0x4d0] sm:$0xff] %vm329, %v4454
        %4631 = vst.msk [vmem:[#allocation3 + $0x4d8] sm:$0xff] %vm329, %v4455
        %4632 = vst.msk [vmem:[#allocation3 + $0x4e0] sm:$0xff] %vm329, %v4456
        %4633 = vst.msk [vmem:[#allocation3 + $0x4e8] sm:$0xff] %vm329, %v4457
        %4634 = vst.msk [vmem:[#allocation3 + $0x4f0] sm:$0xff] %vm329, %v4458
        %4635 = vst.msk [vmem:[#allocation3 + $0x4f8] sm:$0xff] %vm329, %v4459
        %4636 = vst.msk [vmem:[#allocation3 + $0x500] sm:$0xff] %vm329, %v4460
        %4637 = vst.msk [vmem:[#allocation3 + $0x508] sm:$0xff] %vm329, %v4461
        %4638 = vst.msk [vmem:[#allocation3 + $0x510] sm:$0xff] %vm329, %v4462
        %4639 = vst.msk [vmem:[#allocation3 + $0x518] sm:$0xff] %vm329, %v4463
        %4640 = vst.msk [vmem:[#allocation3 + $0x520] sm:$0xff] %vm329, %v4464
        %4641 = vst.msk [vmem:[#allocation3 + $0x528] sm:$0xff] %vm329, %v4465
        %4642 = vst.msk [vmem:[#allocation3 + $0x530] sm:$0xff] %vm329, %v4466
        %4643 = vst.msk [vmem:[#allocation3 + $0x538] sm:$0xff] %vm329, %v4467
        %4644 = vst.msk [vmem:[#allocation3 + $0x540] sm:$0xff] %vm329, %v4468
        %4645 = vst.msk [vmem:[#allocation3 + $0x548] sm:$0xff] %vm329, %v4469
        %4646 = vst.msk [vmem:[#allocation3 + $0x550] sm:$0xff] %vm329, %v4470
        %4647 = vst.msk [vmem:[#allocation3 + $0x558] sm:$0xff] %vm329, %v4471
        %4648 = vst.msk [vmem:[#allocation3 + $0x560] sm:$0xff] %vm329, %v4472
        %4649 = vst.msk [vmem:[#allocation3 + $0x568] sm:$0xff] %vm329, %v4473
        %4650 = vst.msk [vmem:[#allocation3 + $0x570] sm:$0xff] %vm329, %v4474
        %4651 = vst.msk [vmem:[#allocation3 + $0x578] sm:$0xff] %vm329, %v4475
        %s4653 = sor.u32 256, 34
        %4654 = vbcast.lane.b32.xlu0 %v2257, %s4653
        %v4655 = vpop.permute.xlu0 %4654
        %s4657 = sor.u32 256, 42
        %4658 = vbcast.lane.b32.xlu0 %v2257, %s4657
        %v4659 = vpop.permute.xlu0 %4658
        %s4661 = sor.u32 256, 34
        %4662 = vbcast.lane.b32.xlu0 %v2269, %s4661
        %v4663 = vpop.permute.xlu0 %4662
        %s4665 = sor.u32 256, 42
        %4666 = vbcast.lane.b32.xlu0 %v2269, %s4665
        %v4667 = vpop.permute.xlu0 %4666
        %s4669 = sor.u32 256, 34
        %4670 = vbcast.lane.b32.xlu0 %v2281, %s4669
        %v4671 = vpop.permute.xlu0 %4670
        %s4673 = sor.u32 256, 42
        %4674 = vbcast.lane.b32.xlu0 %v2281, %s4673
        %v4675 = vpop.permute.xlu0 %4674
        %s4677 = sor.u32 256, 34
        %4678 = vbcast.lane.b32.xlu0 %v2293, %s4677
        %v4679 = vpop.permute.xlu0 %4678
        %s4681 = sor.u32 256, 42
        %4682 = vbcast.lane.b32.xlu0 %v2293, %s4681
        %v4683 = vpop.permute.xlu0 %4682
        %s4685 = sor.u32 256, 34
        %4686 = vbcast.lane.b32.xlu0 %v2305, %s4685
        %v4687 = vpop.permute.xlu0 %4686
        %s4689 = sor.u32 256, 42
        %4690 = vbcast.lane.b32.xlu0 %v2305, %s4689
        %v4691 = vpop.permute.xlu0 %4690
        %s4693 = sor.u32 256, 34
        %4694 = vbcast.lane.b32.xlu0 %v2317, %s4693
        %v4695 = vpop.permute.xlu0 %4694
        %s4697 = sor.u32 256, 42
        %4698 = vbcast.lane.b32.xlu0 %v2317, %s4697
        %v4699 = vpop.permute.xlu0 %4698
        %s4701 = sor.u32 256, 34
        %4702 = vbcast.lane.b32.xlu0 %v2329, %s4701
        %v4703 = vpop.permute.xlu0 %4702
        %s4705 = sor.u32 256, 42
        %4706 = vbcast.lane.b32.xlu0 %v2329, %s4705
        %v4707 = vpop.permute.xlu0 %4706
        %s4709 = sor.u32 256, 34
        %4710 = vbcast.lane.b32.xlu0 %v2341, %s4709
        %v4711 = vpop.permute.xlu0 %4710
        %s4713 = sor.u32 256, 42
        %4714 = vbcast.lane.b32.xlu0 %v2341, %s4713
        %v4715 = vpop.permute.xlu0 %4714
        %s4717 = sor.u32 256, 34
        %4718 = vbcast.lane.b32.xlu0 %v2353, %s4717
        %v4719 = vpop.permute.xlu0 %4718
        %s4721 = sor.u32 256, 42
        %4722 = vbcast.lane.b32.xlu0 %v2353, %s4721
        %v4723 = vpop.permute.xlu0 %4722
        %s4725 = sor.u32 256, 34
        %4726 = vbcast.lane.b32.xlu0 %v2365, %s4725
        %v4727 = vpop.permute.xlu0 %4726
        %s4729 = sor.u32 256, 42
        %4730 = vbcast.lane.b32.xlu0 %v2365, %s4729
        %v4731 = vpop.permute.xlu0 %4730
        %s4733 = sor.u32 256, 34
        %4734 = vbcast.lane.b32.xlu0 %v2377, %s4733
        %v4735 = vpop.permute.xlu0 %4734
        %s4737 = sor.u32 256, 42
        %4738 = vbcast.lane.b32.xlu0 %v2377, %s4737
        %v4739 = vpop.permute.xlu0 %4738
        %s4741 = sor.u32 256, 34
        %4742 = vbcast.lane.b32.xlu0 %v2389, %s4741
        %v4743 = vpop.permute.xlu0 %4742
        %s4745 = sor.u32 256, 42
        %4746 = vbcast.lane.b32.xlu0 %v2389, %s4745
        %v4747 = vpop.permute.xlu0 %4746
        %s4749 = sor.u32 256, 34
        %4750 = vbcast.lane.b32.xlu0 %v2401, %s4749
        %v4751 = vpop.permute.xlu0 %4750
        %s4753 = sor.u32 256, 42
        %4754 = vbcast.lane.b32.xlu0 %v2401, %s4753
        %v4755 = vpop.permute.xlu0 %4754
        %s4757 = sor.u32 256, 34
        %4758 = vbcast.lane.b32.xlu0 %v2413, %s4757
        %v4759 = vpop.permute.xlu0 %4758
        %s4761 = sor.u32 256, 42
        %4762 = vbcast.lane.b32.xlu0 %v2413, %s4761
        %v4763 = vpop.permute.xlu0 %4762
        %s4765 = sor.u32 256, 34
        %4766 = vbcast.lane.b32.xlu0 %v2425, %s4765
        %v4767 = vpop.permute.xlu0 %4766
        %s4769 = sor.u32 256, 42
        %4770 = vbcast.lane.b32.xlu0 %v2425, %s4769
        %v4771 = vpop.permute.xlu0 %4770
        %s4773 = sor.u32 256, 34
        %4774 = vbcast.lane.b32.xlu0 %v2437, %s4773
        %v4775 = vpop.permute.xlu0 %4774
        %s4777 = sor.u32 256, 42
        %4778 = vbcast.lane.b32.xlu0 %v2437, %s4777
        %v4779 = vpop.permute.xlu0 %4778
        %s4781 = sor.u32 256, 34
        %4782 = vbcast.lane.b32.xlu0 %v2449, %s4781
        %v4783 = vpop.permute.xlu0 %4782
        %s4785 = sor.u32 256, 42
        %4786 = vbcast.lane.b32.xlu0 %v2449, %s4785
        %v4787 = vpop.permute.xlu0 %4786
        %s4789 = sor.u32 256, 34
        %4790 = vbcast.lane.b32.xlu0 %v2461, %s4789
        %v4791 = vpop.permute.xlu0 %4790
        %s4793 = sor.u32 256, 42
        %4794 = vbcast.lane.b32.xlu0 %v2461, %s4793
        %v4795 = vpop.permute.xlu0 %4794
        %s4797 = sor.u32 256, 34
        %4798 = vbcast.lane.b32.xlu0 %v2473, %s4797
        %v4799 = vpop.permute.xlu0 %4798
        %s4801 = sor.u32 256, 42
        %4802 = vbcast.lane.b32.xlu0 %v2473, %s4801
        %v4803 = vpop.permute.xlu0 %4802
        %s4805 = sor.u32 256, 34
        %4806 = vbcast.lane.b32.xlu0 %v2485, %s4805
        %v4807 = vpop.permute.xlu0 %4806
        %s4809 = sor.u32 256, 42
        %4810 = vbcast.lane.b32.xlu0 %v2485, %s4809
        %v4811 = vpop.permute.xlu0 %4810
        %s4813 = sor.u32 256, 34
        %4814 = vbcast.lane.b32.xlu0 %v2497, %s4813
        %v4815 = vpop.permute.xlu0 %4814
        %s4817 = sor.u32 256, 42
        %4818 = vbcast.lane.b32.xlu0 %v2497, %s4817
        %v4819 = vpop.permute.xlu0 %4818
        %s4821 = sor.u32 256, 34
        %4822 = vbcast.lane.b32.xlu0 %v2509, %s4821
        %v4823 = vpop.permute.xlu0 %4822
        %s4825 = sor.u32 256, 42
        %4826 = vbcast.lane.b32.xlu0 %v2509, %s4825
        %v4827 = vpop.permute.xlu0 %4826
        %s4829 = sor.u32 256, 34
        %4830 = vbcast.lane.b32.xlu0 %v2521, %s4829
        %v4831 = vpop.permute.xlu0 %4830
        %s4833 = sor.u32 256, 42
        %4834 = vbcast.lane.b32.xlu0 %v2521, %s4833
        %v4835 = vpop.permute.xlu0 %4834
        %s4837 = sor.u32 256, 34
        %4838 = vbcast.lane.b32.xlu0 %v2533, %s4837
        %v4839 = vpop.permute.xlu0 %4838
        %s4841 = sor.u32 256, 42
        %4842 = vbcast.lane.b32.xlu0 %v2533, %s4841
        %v4843 = vpop.permute.xlu0 %4842
        %s4845 = sor.u32 256, 34
        %4846 = vbcast.lane.b32.xlu0 %v2545, %s4845
        %v4847 = vpop.permute.xlu0 %4846
        %s4849 = sor.u32 256, 42
        %4850 = vbcast.lane.b32.xlu0 %v2545, %s4849
        %v4851 = vpop.permute.xlu0 %4850
        %s4853 = sor.u32 256, 34
        %4854 = vbcast.lane.b32.xlu0 %v2557, %s4853
        %v4855 = vpop.permute.xlu0 %4854
        %s4857 = sor.u32 256, 42
        %4858 = vbcast.lane.b32.xlu0 %v2557, %s4857
        %v4859 = vpop.permute.xlu0 %4858
        %s4861 = sor.u32 256, 34
        %4862 = vbcast.lane.b32.xlu0 %v2569, %s4861
        %v4863 = vpop.permute.xlu0 %4862
        %s4865 = sor.u32 256, 42
        %4866 = vbcast.lane.b32.xlu0 %v2569, %s4865
        %v4867 = vpop.permute.xlu0 %4866
        %s4869 = sor.u32 256, 34
        %4870 = vbcast.lane.b32.xlu0 %v2581, %s4869
        %v4871 = vpop.permute.xlu0 %4870
        %s4873 = sor.u32 256, 42
        %4874 = vbcast.lane.b32.xlu0 %v2581, %s4873
        %v4875 = vpop.permute.xlu0 %4874
        %s4877 = sor.u32 256, 34
        %4878 = vbcast.lane.b32.xlu0 %v2593, %s4877
        %v4879 = vpop.permute.xlu0 %4878
        %s4881 = sor.u32 256, 42
        %4882 = vbcast.lane.b32.xlu0 %v2593, %s4881
        %v4883 = vpop.permute.xlu0 %4882
        %s4885 = sor.u32 256, 34
        %4886 = vbcast.lane.b32.xlu0 %v2605, %s4885
        %v4887 = vpop.permute.xlu0 %4886
        %s4889 = sor.u32 256, 42
        %4890 = vbcast.lane.b32.xlu0 %v2605, %s4889
        %v4891 = vpop.permute.xlu0 %4890
        %s4893 = sor.u32 256, 34
        %4894 = vbcast.lane.b32.xlu0 %v2617, %s4893
        %v4895 = vpop.permute.xlu0 %4894
        %s4897 = sor.u32 256, 42
        %4898 = vbcast.lane.b32.xlu0 %v2617, %s4897
        %v4899 = vpop.permute.xlu0 %4898
        %s4901 = sor.u32 256, 34
        %4902 = vbcast.lane.b32.xlu0 %v2629, %s4901
        %v4903 = vpop.permute.xlu0 %4902
        %s4905 = sor.u32 256, 42
        %4906 = vbcast.lane.b32.xlu0 %v2629, %s4905
        %v4907 = vpop.permute.xlu0 %4906
        %s4909 = sor.u32 256, 34
        %4910 = vbcast.lane.b32.xlu0 %v2641, %s4909
        %v4911 = vpop.permute.xlu0 %4910
        %s4913 = sor.u32 256, 42
        %4914 = vbcast.lane.b32.xlu0 %v2641, %s4913
        %v4915 = vpop.permute.xlu0 %4914
        %s4917 = sor.u32 256, 34
        %4918 = vbcast.lane.b32.xlu0 %v2653, %s4917
        %v4919 = vpop.permute.xlu0 %4918
        %s4921 = sor.u32 256, 42
        %4922 = vbcast.lane.b32.xlu0 %v2653, %s4921
        %v4923 = vpop.permute.xlu0 %4922
        %s4925 = sor.u32 256, 34
        %4926 = vbcast.lane.b32.xlu0 %v2665, %s4925
        %v4927 = vpop.permute.xlu0 %4926
        %s4929 = sor.u32 256, 42
        %4930 = vbcast.lane.b32.xlu0 %v2665, %s4929
        %v4931 = vpop.permute.xlu0 %4930
        %s4933 = sor.u32 256, 34
        %4934 = vbcast.lane.b32.xlu0 %v2677, %s4933
        %v4935 = vpop.permute.xlu0 %4934
        %s4937 = sor.u32 256, 42
        %4938 = vbcast.lane.b32.xlu0 %v2677, %s4937
        %v4939 = vpop.permute.xlu0 %4938
        %s4941 = sor.u32 256, 34
        %4942 = vbcast.lane.b32.xlu0 %v2689, %s4941
        %v4943 = vpop.permute.xlu0 %4942
        %s4945 = sor.u32 256, 42
        %4946 = vbcast.lane.b32.xlu0 %v2689, %s4945
        %v4947 = vpop.permute.xlu0 %4946
        %s4949 = sor.u32 256, 34
        %4950 = vbcast.lane.b32.xlu0 %v2701, %s4949
        %v4951 = vpop.permute.xlu0 %4950
        %s4953 = sor.u32 256, 42
        %4954 = vbcast.lane.b32.xlu0 %v2701, %s4953
        %v4955 = vpop.permute.xlu0 %4954
        %s4957 = sor.u32 256, 34
        %4958 = vbcast.lane.b32.xlu0 %v2713, %s4957
        %v4959 = vpop.permute.xlu0 %4958
        %s4961 = sor.u32 256, 42
        %4962 = vbcast.lane.b32.xlu0 %v2713, %s4961
        %v4963 = vpop.permute.xlu0 %4962
        %s4965 = sor.u32 256, 34
        %4966 = vbcast.lane.b32.xlu0 %v2725, %s4965
        %v4967 = vpop.permute.xlu0 %4966
        %s4969 = sor.u32 256, 42
        %4970 = vbcast.lane.b32.xlu0 %v2725, %s4969
        %v4971 = vpop.permute.xlu0 %4970
        %s4973 = sor.u32 256, 34
        %4974 = vbcast.lane.b32.xlu0 %v2737, %s4973
        %v4975 = vpop.permute.xlu0 %4974
        %s4977 = sor.u32 256, 42
        %4978 = vbcast.lane.b32.xlu0 %v2737, %s4977
        %v4979 = vpop.permute.xlu0 %4978
        %s4981 = sor.u32 256, 34
        %4982 = vbcast.lane.b32.xlu0 %v2749, %s4981
        %v4983 = vpop.permute.xlu0 %4982
        %s4985 = sor.u32 256, 42
        %4986 = vbcast.lane.b32.xlu0 %v2749, %s4985
        %v4987 = vpop.permute.xlu0 %4986
        %s4989 = sor.u32 256, 34
        %4990 = vbcast.lane.b32.xlu0 %v2761, %s4989
        %v4991 = vpop.permute.xlu0 %4990
        %s4993 = sor.u32 256, 42
        %4994 = vbcast.lane.b32.xlu0 %v2761, %s4993
        %v4995 = vpop.permute.xlu0 %4994
        %s4997 = sor.u32 256, 34
        %4998 = vbcast.lane.b32.xlu0 %v2773, %s4997
        %v4999 = vpop.permute.xlu0 %4998
        %s5001 = sor.u32 256, 42
        %5002 = vbcast.lane.b32.xlu0 %v2773, %s5001
        %v5003 = vpop.permute.xlu0 %5002
        %s5005 = sor.u32 256, 34
        %5006 = vbcast.lane.b32.xlu0 %v2785, %s5005
        %v5007 = vpop.permute.xlu0 %5006
        %s5009 = sor.u32 256, 42
        %5010 = vbcast.lane.b32.xlu0 %v2785, %s5009
        %v5011 = vpop.permute.xlu0 %5010
        %s5013 = sor.u32 256, 34
        %5014 = vbcast.lane.b32.xlu0 %v2797, %s5013
        %v5015 = vpop.permute.xlu0 %5014
        %s5017 = sor.u32 256, 42
        %5018 = vbcast.lane.b32.xlu0 %v2797, %s5017
        %v5019 = vpop.permute.xlu0 %5018
        %s5021 = sor.u32 256, 34
        %5022 = vbcast.lane.b32.xlu0 %v2809, %s5021
        %v5023 = vpop.permute.xlu0 %5022
        %s5025 = sor.u32 256, 42
        %5026 = vbcast.lane.b32.xlu0 %v2809, %s5025
        %v5027 = vpop.permute.xlu0 %5026
        %s5029 = sor.u32 256, 34
        %5030 = vbcast.lane.b32.xlu0 %v2821, %s5029
        %v5031 = vpop.permute.xlu0 %5030
        %s5033 = sor.u32 256, 42
        %5034 = vbcast.lane.b32.xlu0 %v2821, %s5033
        %v5035 = vpop.permute.xlu0 %5034
        %s5037 = sor.u32 256, 34
        %5038 = vbcast.lane.b32.xlu0 %v2833, %s5037
        %v5039 = vpop.permute.xlu0 %5038
        %s5041 = sor.u32 256, 42
        %5042 = vbcast.lane.b32.xlu0 %v2833, %s5041
        %v5043 = vpop.permute.xlu0 %5042
        %s5045 = sor.u32 256, 34
        %5046 = vbcast.lane.b32.xlu0 %v2845, %s5045
        %v5047 = vpop.permute.xlu0 %5046
        %s5049 = sor.u32 256, 42
        %5050 = vbcast.lane.b32.xlu0 %v2845, %s5049
        %v5051 = vpop.permute.xlu0 %5050
        %s5053 = sor.u32 256, 34
        %5054 = vbcast.lane.b32.xlu0 %v2857, %s5053
        %v5055 = vpop.permute.xlu0 %5054
        %s5057 = sor.u32 256, 42
        %5058 = vbcast.lane.b32.xlu0 %v2857, %s5057
        %v5059 = vpop.permute.xlu0 %5058
        %s5061 = sor.u32 256, 34
        %5062 = vbcast.lane.b32.xlu0 %v2869, %s5061
        %v5063 = vpop.permute.xlu0 %5062
        %s5065 = sor.u32 256, 42
        %5066 = vbcast.lane.b32.xlu0 %v2869, %s5065
        %v5067 = vpop.permute.xlu0 %5066
        %s5069 = sor.u32 256, 34
        %5070 = vbcast.lane.b32.xlu0 %v2881, %s5069
        %v5071 = vpop.permute.xlu0 %5070
        %s5073 = sor.u32 256, 42
        %5074 = vbcast.lane.b32.xlu0 %v2881, %s5073
        %v5075 = vpop.permute.xlu0 %5074
        %s5077 = sor.u32 256, 34
        %5078 = vbcast.lane.b32.xlu0 %v2893, %s5077
        %v5079 = vpop.permute.xlu0 %5078
        %s5081 = sor.u32 256, 42
        %5082 = vbcast.lane.b32.xlu0 %v2893, %s5081
        %v5083 = vpop.permute.xlu0 %5082
        %s5085 = sor.u32 256, 34
        %5086 = vbcast.lane.b32.xlu0 %v2905, %s5085
        %v5087 = vpop.permute.xlu0 %5086
        %s5089 = sor.u32 256, 42
        %5090 = vbcast.lane.b32.xlu0 %v2905, %s5089
        %v5091 = vpop.permute.xlu0 %5090
        %s5093 = sor.u32 256, 34
        %5094 = vbcast.lane.b32.xlu0 %v2917, %s5093
        %v5095 = vpop.permute.xlu0 %5094
        %s5097 = sor.u32 256, 42
        %5098 = vbcast.lane.b32.xlu0 %v2917, %s5097
        %v5099 = vpop.permute.xlu0 %5098
        %s5101 = sor.u32 256, 34
        %5102 = vbcast.lane.b32.xlu0 %v2929, %s5101
        %v5103 = vpop.permute.xlu0 %5102
        %s5105 = sor.u32 256, 42
        %5106 = vbcast.lane.b32.xlu0 %v2929, %s5105
        %v5107 = vpop.permute.xlu0 %5106
        %s5109 = sor.u32 256, 34
        %5110 = vbcast.lane.b32.xlu0 %v2941, %s5109
        %v5111 = vpop.permute.xlu0 %5110
        %s5113 = sor.u32 256, 42
        %5114 = vbcast.lane.b32.xlu0 %v2941, %s5113
        %v5115 = vpop.permute.xlu0 %5114
        %s5117 = sor.u32 256, 34
        %5118 = vbcast.lane.b32.xlu0 %v2953, %s5117
        %v5119 = vpop.permute.xlu0 %5118
        %s5121 = sor.u32 256, 42
        %5122 = vbcast.lane.b32.xlu0 %v2953, %s5121
        %v5123 = vpop.permute.xlu0 %5122
        %s5125 = sor.u32 256, 34
        %5126 = vbcast.lane.b32.xlu0 %v2965, %s5125
        %v5127 = vpop.permute.xlu0 %5126
        %s5129 = sor.u32 256, 42
        %5130 = vbcast.lane.b32.xlu0 %v2965, %s5129
        %v5131 = vpop.permute.xlu0 %5130
        %s5133 = sor.u32 256, 34
        %5134 = vbcast.lane.b32.xlu0 %v2977, %s5133
        %v5135 = vpop.permute.xlu0 %5134
        %s5137 = sor.u32 256, 42
        %5138 = vbcast.lane.b32.xlu0 %v2977, %s5137
        %v5139 = vpop.permute.xlu0 %5138
        %s5141 = sor.u32 256, 34
        %5142 = vbcast.lane.b32.xlu0 %v2989, %s5141
        %v5143 = vpop.permute.xlu0 %5142
        %s5145 = sor.u32 256, 42
        %5146 = vbcast.lane.b32.xlu0 %v2989, %s5145
        %v5147 = vpop.permute.xlu0 %5146
        %s5149 = sor.u32 256, 34
        %5150 = vbcast.lane.b32.xlu0 %v3001, %s5149
        %v5151 = vpop.permute.xlu0 %5150
        %s5153 = sor.u32 256, 42
        %5154 = vbcast.lane.b32.xlu0 %v3001, %s5153
        %v5155 = vpop.permute.xlu0 %5154
        %s5157 = sor.u32 256, 34
        %5158 = vbcast.lane.b32.xlu0 %v3013, %s5157
        %v5159 = vpop.permute.xlu0 %5158
        %s5161 = sor.u32 256, 42
        %5162 = vbcast.lane.b32.xlu0 %v3013, %s5161
        %v5163 = vpop.permute.xlu0 %5162
        %s5165 = sor.u32 256, 34
        %5166 = vbcast.lane.b32.xlu0 %v3025, %s5165
        %v5167 = vpop.permute.xlu0 %5166
        %s5169 = sor.u32 256, 42
        %5170 = vbcast.lane.b32.xlu0 %v3025, %s5169
        %v5171 = vpop.permute.xlu0 %5170
        %s5173 = sor.u32 256, 34
        %5174 = vbcast.lane.b32.xlu0 %v3037, %s5173
        %v5175 = vpop.permute.xlu0 %5174
        %s5177 = sor.u32 256, 42
        %5178 = vbcast.lane.b32.xlu0 %v3037, %s5177
        %v5179 = vpop.permute.xlu0 %5178
        %s5181 = sor.u32 256, 34
        %5182 = vbcast.lane.b32.xlu0 %v3049, %s5181
        %v5183 = vpop.permute.xlu0 %5182
        %s5185 = sor.u32 256, 42
        %5186 = vbcast.lane.b32.xlu0 %v3049, %s5185
        %v5187 = vpop.permute.xlu0 %5186
        %s5189 = sor.u32 256, 34
        %5190 = vbcast.lane.b32.xlu0 %v3061, %s5189
        %v5191 = vpop.permute.xlu0 %5190
        %s5193 = sor.u32 256, 42
        %5194 = vbcast.lane.b32.xlu0 %v3061, %s5193
        %v5195 = vpop.permute.xlu0 %5194
        %s5197 = sor.u32 256, 34
        %5198 = vbcast.lane.b32.xlu0 %v3073, %s5197
        %v5199 = vpop.permute.xlu0 %5198
        %s5201 = sor.u32 256, 42
        %5202 = vbcast.lane.b32.xlu0 %v3073, %s5201
        %v5203 = vpop.permute.xlu0 %5202
        %s5205 = sor.u32 256, 34
        %5206 = vbcast.lane.b32.xlu0 %v3085, %s5205
        %v5207 = vpop.permute.xlu0 %5206
        %s5209 = sor.u32 256, 42
        %5210 = vbcast.lane.b32.xlu0 %v3085, %s5209
        %v5211 = vpop.permute.xlu0 %5210
        %s5213 = sor.u32 256, 34
        %5214 = vbcast.lane.b32.xlu0 %v3097, %s5213
        %v5215 = vpop.permute.xlu0 %5214
        %s5217 = sor.u32 256, 42
        %5218 = vbcast.lane.b32.xlu0 %v3097, %s5217
        %v5219 = vpop.permute.xlu0 %5218
        %s5221 = sor.u32 256, 34
        %5222 = vbcast.lane.b32.xlu0 %v3109, %s5221
        %v5223 = vpop.permute.xlu0 %5222
        %s5225 = sor.u32 256, 42
        %5226 = vbcast.lane.b32.xlu0 %v3109, %s5225
        %v5227 = vpop.permute.xlu0 %5226
        %s5229 = sor.u32 256, 34
        %5230 = vbcast.lane.b32.xlu0 %v3121, %s5229
        %v5231 = vpop.permute.xlu0 %5230
        %s5233 = sor.u32 256, 42
        %5234 = vbcast.lane.b32.xlu0 %v3121, %s5233
        %v5235 = vpop.permute.xlu0 %5234
        %s5237 = sor.u32 256, 34
        %5238 = vbcast.lane.b32.xlu0 %v3133, %s5237
        %v5239 = vpop.permute.xlu0 %5238
        %s5241 = sor.u32 256, 42
        %5242 = vbcast.lane.b32.xlu0 %v3133, %s5241
        %v5243 = vpop.permute.xlu0 %5242
        %s5245 = sor.u32 256, 34
        %5246 = vbcast.lane.b32.xlu0 %v3145, %s5245
        %v5247 = vpop.permute.xlu0 %5246
        %s5249 = sor.u32 256, 42
        %5250 = vbcast.lane.b32.xlu0 %v3145, %s5249
        %v5251 = vpop.permute.xlu0 %5250
        %s5253 = sor.u32 256, 34
        %5254 = vbcast.lane.b32.xlu0 %v3157, %s5253
        %v5255 = vpop.permute.xlu0 %5254
        %s5257 = sor.u32 256, 42
        %5258 = vbcast.lane.b32.xlu0 %v3157, %s5257
        %v5259 = vpop.permute.xlu0 %5258
        %s5261 = sor.u32 256, 34
        %5262 = vbcast.lane.b32.xlu0 %v3169, %s5261
        %v5263 = vpop.permute.xlu0 %5262
        %s5265 = sor.u32 256, 42
        %5266 = vbcast.lane.b32.xlu0 %v3169, %s5265
        %v5267 = vpop.permute.xlu0 %5266
        %s5269 = sor.u32 256, 34
        %5270 = vbcast.lane.b32.xlu0 %v3181, %s5269
        %v5271 = vpop.permute.xlu0 %5270
        %s5273 = sor.u32 256, 42
        %5274 = vbcast.lane.b32.xlu0 %v3181, %s5273
        %v5275 = vpop.permute.xlu0 %5274
        %s5277 = sor.u32 256, 34
        %5278 = vbcast.lane.b32.xlu0 %v3193, %s5277
        %v5279 = vpop.permute.xlu0 %5278
        %s5281 = sor.u32 256, 42
        %5282 = vbcast.lane.b32.xlu0 %v3193, %s5281
        %v5283 = vpop.permute.xlu0 %5282
        %s5285 = sor.u32 256, 34
        %5286 = vbcast.lane.b32.xlu0 %v3205, %s5285
        %v5287 = vpop.permute.xlu0 %5286
        %s5289 = sor.u32 256, 42
        %5290 = vbcast.lane.b32.xlu0 %v3205, %s5289
        %v5291 = vpop.permute.xlu0 %5290
        %s5293 = sor.u32 256, 34
        %5294 = vbcast.lane.b32.xlu0 %v3217, %s5293
        %v5295 = vpop.permute.xlu0 %5294
        %s5297 = sor.u32 256, 42
        %5298 = vbcast.lane.b32.xlu0 %v3217, %s5297
        %v5299 = vpop.permute.xlu0 %5298
        %s5301 = sor.u32 256, 34
        %5302 = vbcast.lane.b32.xlu0 %v3229, %s5301
        %v5303 = vpop.permute.xlu0 %5302
        %s5305 = sor.u32 256, 42
        %5306 = vbcast.lane.b32.xlu0 %v3229, %s5305
        %v5307 = vpop.permute.xlu0 %5306
        %s5309 = sor.u32 256, 34
        %5310 = vbcast.lane.b32.xlu0 %v3241, %s5309
        %v5311 = vpop.permute.xlu0 %5310
        %s5313 = sor.u32 256, 42
        %5314 = vbcast.lane.b32.xlu0 %v3241, %s5313
        %v5315 = vpop.permute.xlu0 %5314
        %s5317 = sor.u32 256, 34
        %5318 = vbcast.lane.b32.xlu0 %v3253, %s5317
        %v5319 = vpop.permute.xlu0 %5318
        %s5321 = sor.u32 256, 42
        %5322 = vbcast.lane.b32.xlu0 %v3253, %s5321
        %v5323 = vpop.permute.xlu0 %5322
        %s5325 = sor.u32 256, 34
        %5326 = vbcast.lane.b32.xlu0 %v3265, %s5325
        %v5327 = vpop.permute.xlu0 %5326
        %s5329 = sor.u32 256, 42
        %5330 = vbcast.lane.b32.xlu0 %v3265, %s5329
        %v5331 = vpop.permute.xlu0 %5330
        %s5333 = sor.u32 256, 34
        %5334 = vbcast.lane.b32.xlu0 %v3277, %s5333
        %v5335 = vpop.permute.xlu0 %5334
        %s5337 = sor.u32 256, 42
        %5338 = vbcast.lane.b32.xlu0 %v3277, %s5337
        %v5339 = vpop.permute.xlu0 %5338
        %s5341 = sor.u32 256, 34
        %5342 = vbcast.lane.b32.xlu0 %v3289, %s5341
        %v5343 = vpop.permute.xlu0 %5342
        %s5345 = sor.u32 256, 42
        %5346 = vbcast.lane.b32.xlu0 %v3289, %s5345
        %v5347 = vpop.permute.xlu0 %5346
        %s5349 = sor.u32 256, 34
        %5350 = vbcast.lane.b32.xlu0 %v3301, %s5349
        %v5351 = vpop.permute.xlu0 %5350
        %s5353 = sor.u32 256, 42
        %5354 = vbcast.lane.b32.xlu0 %v3301, %s5353
        %v5355 = vpop.permute.xlu0 %5354
        %5356 = vst.msk [vmem:[#allocation4] sm:$0xff] %vm329, %v4655
        %5357 = vst.msk [vmem:[#allocation4 + $0x8] sm:$0xff] %vm329, %v4659
        %5358 = vst.msk [vmem:[#allocation4 + $0x10] sm:$0xff] %vm329, %v4663
        %5359 = vst.msk [vmem:[#allocation4 + $0x18] sm:$0xff] %vm329, %v4667
        %5360 = vst.msk [vmem:[#allocation4 + $0x20] sm:$0xff] %vm329, %v4671
        %5361 = vst.msk [vmem:[#allocation4 + $0x28] sm:$0xff] %vm329, %v4675
        %5362 = vst.msk [vmem:[#allocation4 + $0x30] sm:$0xff] %vm329, %v4679
        %5363 = vst.msk [vmem:[#allocation4 + $0x38] sm:$0xff] %vm329, %v4683
        %5364 = vst.msk [vmem:[#allocation4 + $0x40] sm:$0xff] %vm329, %v4687
        %5365 = vst.msk [vmem:[#allocation4 + $0x48] sm:$0xff] %vm329, %v4691
        %5366 = vst.msk [vmem:[#allocation4 + $0x50] sm:$0xff] %vm329, %v4695
        %5367 = vst.msk [vmem:[#allocation4 + $0x58] sm:$0xff] %vm329, %v4699
        %5368 = vst.msk [vmem:[#allocation4 + $0x60] sm:$0xff] %vm329, %v4703
        %5369 = vst.msk [vmem:[#allocation4 + $0x68] sm:$0xff] %vm329, %v4707
        %5370 = vst.msk [vmem:[#allocation4 + $0x70] sm:$0xff] %vm329, %v4711
        %5371 = vst.msk [vmem:[#allocation4 + $0x78] sm:$0xff] %vm329, %v4715
        %5372 = vst.msk [vmem:[#allocation4 + $0x80] sm:$0xff] %vm329, %v4719
        %5373 = vst.msk [vmem:[#allocation4 + $0x88] sm:$0xff] %vm329, %v4723
        %5374 = vst.msk [vmem:[#allocation4 + $0x90] sm:$0xff] %vm329, %v4727
        %5375 = vst.msk [vmem:[#allocation4 + $0x98] sm:$0xff] %vm329, %v4731
        %5376 = vst.msk [vmem:[#allocation4 + $0xa0] sm:$0xff] %vm329, %v4735
        %5377 = vst.msk [vmem:[#allocation4 + $0xa8] sm:$0xff] %vm329, %v4739
        %5378 = vst.msk [vmem:[#allocation4 + $0xb0] sm:$0xff] %vm329, %v4743
        %5379 = vst.msk [vmem:[#allocation4 + $0xb8] sm:$0xff] %vm329, %v4747
        %5380 = vst.msk [vmem:[#allocation4 + $0xc0] sm:$0xff] %vm329, %v4751
        %5381 = vst.msk [vmem:[#allocation4 + $0xc8] sm:$0xff] %vm329, %v4755
        %5382 = vst.msk [vmem:[#allocation4 + $0xd0] sm:$0xff] %vm329, %v4759
        %5383 = vst.msk [vmem:[#allocation4 + $0xd8] sm:$0xff] %vm329, %v4763
        %5384 = vst.msk [vmem:[#allocation4 + $0xe0] sm:$0xff] %vm329, %v4767
        %5385 = vst.msk [vmem:[#allocation4 + $0xe8] sm:$0xff] %vm329, %v4771
        %5386 = vst.msk [vmem:[#allocation4 + $0xf0] sm:$0xff] %vm329, %v4775
        %5387 = vst.msk [vmem:[#allocation4 + $0xf8] sm:$0xff] %vm329, %v4779
        %5388 = vst.msk [vmem:[#allocation4 + $0x100] sm:$0xff] %vm329, %v4783
        %5389 = vst.msk [vmem:[#allocation4 + $0x108] sm:$0xff] %vm329, %v4787
        %5390 = vst.msk [vmem:[#allocation4 + $0x110] sm:$0xff] %vm329, %v4791
        %5391 = vst.msk [vmem:[#allocation4 + $0x118] sm:$0xff] %vm329, %v4795
        %5392 = vst.msk [vmem:[#allocation4 + $0x120] sm:$0xff] %vm329, %v4799
        %5393 = vst.msk [vmem:[#allocation4 + $0x128] sm:$0xff] %vm329, %v4803
        %5394 = vst.msk [vmem:[#allocation4 + $0x130] sm:$0xff] %vm329, %v4807
        %5395 = vst.msk [vmem:[#allocation4 + $0x138] sm:$0xff] %vm329, %v4811
        %5396 = vst.msk [vmem:[#allocation4 + $0x140] sm:$0xff] %vm329, %v4815
        %5397 = vst.msk [vmem:[#allocation4 + $0x148] sm:$0xff] %vm329, %v4819
        %5398 = vst.msk [vmem:[#allocation4 + $0x150] sm:$0xff] %vm329, %v4823
        %5399 = vst.msk [vmem:[#allocation4 + $0x158] sm:$0xff] %vm329, %v4827
        %5400 = vst.msk [vmem:[#allocation4 + $0x160] sm:$0xff] %vm329, %v4831
        %5401 = vst.msk [vmem:[#allocation4 + $0x168] sm:$0xff] %vm329, %v4835
        %5402 = vst.msk [vmem:[#allocation4 + $0x170] sm:$0xff] %vm329, %v4839
        %5403 = vst.msk [vmem:[#allocation4 + $0x178] sm:$0xff] %vm329, %v4843
        %5404 = vst.msk [vmem:[#allocation4 + $0x180] sm:$0xff] %vm329, %v4847
        %5405 = vst.msk [vmem:[#allocation4 + $0x188] sm:$0xff] %vm329, %v4851
        %5406 = vst.msk [vmem:[#allocation4 + $0x190] sm:$0xff] %vm329, %v4855
        %5407 = vst.msk [vmem:[#allocation4 + $0x198] sm:$0xff] %vm329, %v4859
        %5408 = vst.msk [vmem:[#allocation4 + $0x1a0] sm:$0xff] %vm329, %v4863
        %5409 = vst.msk [vmem:[#allocation4 + $0x1a8] sm:$0xff] %vm329, %v4867
        %5410 = vst.msk [vmem:[#allocation4 + $0x1b0] sm:$0xff] %vm329, %v4871
        %5411 = vst.msk [vmem:[#allocation4 + $0x1b8] sm:$0xff] %vm329, %v4875
        %5412 = vst.msk [vmem:[#allocation4 + $0x1c0] sm:$0xff] %vm329, %v4879
        %5413 = vst.msk [vmem:[#allocation4 + $0x1c8] sm:$0xff] %vm329, %v4883
        %5414 = vst.msk [vmem:[#allocation4 + $0x1d0] sm:$0xff] %vm329, %v4887
        %5415 = vst.msk [vmem:[#allocation4 + $0x1d8] sm:$0xff] %vm329, %v4891
        %5416 = vst.msk [vmem:[#allocation4 + $0x1e0] sm:$0xff] %vm329, %v4895
        %5417 = vst.msk [vmem:[#allocation4 + $0x1e8] sm:$0xff] %vm329, %v4899
        %5418 = vst.msk [vmem:[#allocation4 + $0x1f0] sm:$0xff] %vm329, %v4903
        %5419 = vst.msk [vmem:[#allocation4 + $0x1f8] sm:$0xff] %vm329, %v4907
        %5420 = vst.msk [vmem:[#allocation4 + $0x200] sm:$0xff] %vm329, %v4911
        %5421 = vst.msk [vmem:[#allocation4 + $0x208] sm:$0xff] %vm329, %v4915
        %5422 = vst.msk [vmem:[#allocation4 + $0x210] sm:$0xff] %vm329, %v4919
        %5423 = vst.msk [vmem:[#allocation4 + $0x218] sm:$0xff] %vm329, %v4923
        %5424 = vst.msk [vmem:[#allocation4 + $0x220] sm:$0xff] %vm329, %v4927
        %5425 = vst.msk [vmem:[#allocation4 + $0x228] sm:$0xff] %vm329, %v4931
        %5426 = vst.msk [vmem:[#allocation4 + $0x230] sm:$0xff] %vm329, %v4935
        %5427 = vst.msk [vmem:[#allocation4 + $0x238] sm:$0xff] %vm329, %v4939
        %5428 = vst.msk [vmem:[#allocation4 + $0x240] sm:$0xff] %vm329, %v4943
        %5429 = vst.msk [vmem:[#allocation4 + $0x248] sm:$0xff] %vm329, %v4947
        %5430 = vst.msk [vmem:[#allocation4 + $0x250] sm:$0xff] %vm329, %v4951
        %5431 = vst.msk [vmem:[#allocation4 + $0x258] sm:$0xff] %vm329, %v4955
        %5432 = vst.msk [vmem:[#allocation4 + $0x260] sm:$0xff] %vm329, %v4959
        %5433 = vst.msk [vmem:[#allocation4 + $0x268] sm:$0xff] %vm329, %v4963
        %5434 = vst.msk [vmem:[#allocation4 + $0x270] sm:$0xff] %vm329, %v4967
        %5435 = vst.msk [vmem:[#allocation4 + $0x278] sm:$0xff] %vm329, %v4971
        %5436 = vst.msk [vmem:[#allocation4 + $0x280] sm:$0xff] %vm329, %v4975
        %5437 = vst.msk [vmem:[#allocation4 + $0x288] sm:$0xff] %vm329, %v4979
        %5438 = vst.msk [vmem:[#allocation4 + $0x290] sm:$0xff] %vm329, %v4983
        %5439 = vst.msk [vmem:[#allocation4 + $0x298] sm:$0xff] %vm329, %v4987
        %5440 = vst.msk [vmem:[#allocation4 + $0x2a0] sm:$0xff] %vm329, %v4991
        %5441 = vst.msk [vmem:[#allocation4 + $0x2a8] sm:$0xff] %vm329, %v4995
        %5442 = vst.msk [vmem:[#allocation4 + $0x2b0] sm:$0xff] %vm329, %v4999
        %5443 = vst.msk [vmem:[#allocation4 + $0x2b8] sm:$0xff] %vm329, %v5003
        %5444 = vst.msk [vmem:[#allocation4 + $0x2c0] sm:$0xff] %vm329, %v5007
        %5445 = vst.msk [vmem:[#allocation4 + $0x2c8] sm:$0xff] %vm329, %v5011
        %5446 = vst.msk [vmem:[#allocation4 + $0x2d0] sm:$0xff] %vm329, %v5015
        %5447 = vst.msk [vmem:[#allocation4 + $0x2d8] sm:$0xff] %vm329, %v5019
        %5448 = vst.msk [vmem:[#allocation4 + $0x2e0] sm:$0xff] %vm329, %v5023
        %5449 = vst.msk [vmem:[#allocation4 + $0x2e8] sm:$0xff] %vm329, %v5027
        %5450 = vst.msk [vmem:[#allocation4 + $0x2f0] sm:$0xff] %vm329, %v5031
        %5451 = vst.msk [vmem:[#allocation4 + $0x2f8] sm:$0xff] %vm329, %v5035
        %5452 = vst.msk [vmem:[#allocation4 + $0x300] sm:$0xff] %vm329, %v5039
        %5453 = vst.msk [vmem:[#allocation4 + $0x308] sm:$0xff] %vm329, %v5043
        %5454 = vst.msk [vmem:[#allocation4 + $0x310] sm:$0xff] %vm329, %v5047
        %5455 = vst.msk [vmem:[#allocation4 + $0x318] sm:$0xff] %vm329, %v5051
        %5456 = vst.msk [vmem:[#allocation4 + $0x320] sm:$0xff] %vm329, %v5055
        %5457 = vst.msk [vmem:[#allocation4 + $0x328] sm:$0xff] %vm329, %v5059
        %5458 = vst.msk [vmem:[#allocation4 + $0x330] sm:$0xff] %vm329, %v5063
        %5459 = vst.msk [vmem:[#allocation4 + $0x338] sm:$0xff] %vm329, %v5067
        %5460 = vst.msk [vmem:[#allocation4 + $0x340] sm:$0xff] %vm329, %v5071
        %5461 = vst.msk [vmem:[#allocation4 + $0x348] sm:$0xff] %vm329, %v5075
        %5462 = vst.msk [vmem:[#allocation4 + $0x350] sm:$0xff] %vm329, %v5079
        %5463 = vst.msk [vmem:[#allocation4 + $0x358] sm:$0xff] %vm329, %v5083
        %5464 = vst.msk [vmem:[#allocation4 + $0x360] sm:$0xff] %vm329, %v5087
        %5465 = vst.msk [vmem:[#allocation4 + $0x368] sm:$0xff] %vm329, %v5091
        %5466 = vst.msk [vmem:[#allocation4 + $0x370] sm:$0xff] %vm329, %v5095
        %5467 = vst.msk [vmem:[#allocation4 + $0x378] sm:$0xff] %vm329, %v5099
        %5468 = vst.msk [vmem:[#allocation4 + $0x380] sm:$0xff] %vm329, %v5103
        %5469 = vst.msk [vmem:[#allocation4 + $0x388] sm:$0xff] %vm329, %v5107
        %5470 = vst.msk [vmem:[#allocation4 + $0x390] sm:$0xff] %vm329, %v5111
        %5471 = vst.msk [vmem:[#allocation4 + $0x398] sm:$0xff] %vm329, %v5115
        %5472 = vst.msk [vmem:[#allocation4 + $0x3a0] sm:$0xff] %vm329, %v5119
        %5473 = vst.msk [vmem:[#allocation4 + $0x3a8] sm:$0xff] %vm329, %v5123
        %5474 = vst.msk [vmem:[#allocation4 + $0x3b0] sm:$0xff] %vm329, %v5127
        %5475 = vst.msk [vmem:[#allocation4 + $0x3b8] sm:$0xff] %vm329, %v5131
        %5476 = vst.msk [vmem:[#allocation4 + $0x3c0] sm:$0xff] %vm329, %v5135
        %5477 = vst.msk [vmem:[#allocation4 + $0x3c8] sm:$0xff] %vm329, %v5139
        %5478 = vst.msk [vmem:[#allocation4 + $0x3d0] sm:$0xff] %vm329, %v5143
        %5479 = vst.msk [vmem:[#allocation4 + $0x3d8] sm:$0xff] %vm329, %v5147
        %5480 = vst.msk [vmem:[#allocation4 + $0x3e0] sm:$0xff] %vm329, %v5151
        %5481 = vst.msk [vmem:[#allocation4 + $0x3e8] sm:$0xff] %vm329, %v5155
        %5482 = vst.msk [vmem:[#allocation4 + $0x3f0] sm:$0xff] %vm329, %v5159
        %5483 = vst.msk [vmem:[#allocation4 + $0x3f8] sm:$0xff] %vm329, %v5163
        %5484 = vst.msk [vmem:[#allocation4 + $0x400] sm:$0xff] %vm329, %v5167
        %5485 = vst.msk [vmem:[#allocation4 + $0x408] sm:$0xff] %vm329, %v5171
        %5486 = vst.msk [vmem:[#allocation4 + $0x410] sm:$0xff] %vm329, %v5175
        %5487 = vst.msk [vmem:[#allocation4 + $0x418] sm:$0xff] %vm329, %v5179
        %5488 = vst.msk [vmem:[#allocation4 + $0x420] sm:$0xff] %vm329, %v5183
        %5489 = vst.msk [vmem:[#allocation4 + $0x428] sm:$0xff] %vm329, %v5187
        %5490 = vst.msk [vmem:[#allocation4 + $0x430] sm:$0xff] %vm329, %v5191
        %5491 = vst.msk [vmem:[#allocation4 + $0x438] sm:$0xff] %vm329, %v5195
        %5492 = vst.msk [vmem:[#allocation4 + $0x440] sm:$0xff] %vm329, %v5199
        %5493 = vst.msk [vmem:[#allocation4 + $0x448] sm:$0xff] %vm329, %v5203
        %5494 = vst.msk [vmem:[#allocation4 + $0x450] sm:$0xff] %vm329, %v5207
        %5495 = vst.msk [vmem:[#allocation4 + $0x458] sm:$0xff] %vm329, %v5211
        %5496 = vst.msk [vmem:[#allocation4 + $0x460] sm:$0xff] %vm329, %v5215
        %5497 = vst.msk [vmem:[#allocation4 + $0x468] sm:$0xff] %vm329, %v5219
        %5498 = vst.msk [vmem:[#allocation4 + $0x470] sm:$0xff] %vm329, %v5223
        %5499 = vst.msk [vmem:[#allocation4 + $0x478] sm:$0xff] %vm329, %v5227
        %5500 = vst.msk [vmem:[#allocation4 + $0x480] sm:$0xff] %vm329, %v5231
        %5501 = vst.msk [vmem:[#allocation4 + $0x488] sm:$0xff] %vm329, %v5235
        %5502 = vst.msk [vmem:[#allocation4 + $0x490] sm:$0xff] %vm329, %v5239
        %5503 = vst.msk [vmem:[#allocation4 + $0x498] sm:$0xff] %vm329, %v5243
        %5504 = vst.msk [vmem:[#allocation4 + $0x4a0] sm:$0xff] %vm329, %v5247
        %5505 = vst.msk [vmem:[#allocation4 + $0x4a8] sm:$0xff] %vm329, %v5251
        %5506 = vst.msk [vmem:[#allocation4 + $0x4b0] sm:$0xff] %vm329, %v5255
        %5507 = vst.msk [vmem:[#allocation4 + $0x4b8] sm:$0xff] %vm329, %v5259
        %5508 = vst.msk [vmem:[#allocation4 + $0x4c0] sm:$0xff] %vm329, %v5263
        %5509 = vst.msk [vmem:[#allocation4 + $0x4c8] sm:$0xff] %vm329, %v5267
        %5510 = vst.msk [vmem:[#allocation4 + $0x4d0] sm:$0xff] %vm329, %v5271
        %5511 = vst.msk [vmem:[#allocation4 + $0x4d8] sm:$0xff] %vm329, %v5275
        %5512 = vst.msk [vmem:[#allocation4 + $0x4e0] sm:$0xff] %vm329, %v5279
        %5513 = vst.msk [vmem:[#allocation4 + $0x4e8] sm:$0xff] %vm329, %v5283
        %5514 = vst.msk [vmem:[#allocation4 + $0x4f0] sm:$0xff] %vm329, %v5287
        %5515 = vst.msk [vmem:[#allocation4 + $0x4f8] sm:$0xff] %vm329, %v5291
        %5516 = vst.msk [vmem:[#allocation4 + $0x500] sm:$0xff] %vm329, %v5295
        %5517 = vst.msk [vmem:[#allocation4 + $0x508] sm:$0xff] %vm329, %v5299
        %5518 = vst.msk [vmem:[#allocation4 + $0x510] sm:$0xff] %vm329, %v5303
        %5519 = vst.msk [vmem:[#allocation4 + $0x518] sm:$0xff] %vm329, %v5307
        %5520 = vst.msk [vmem:[#allocation4 + $0x520] sm:$0xff] %vm329, %v5311
        %5521 = vst.msk [vmem:[#allocation4 + $0x528] sm:$0xff] %vm329, %v5315
        %5522 = vst.msk [vmem:[#allocation4 + $0x530] sm:$0xff] %vm329, %v5319
        %5523 = vst.msk [vmem:[#allocation4 + $0x538] sm:$0xff] %vm329, %v5323
        %5524 = vst.msk [vmem:[#allocation4 + $0x540] sm:$0xff] %vm329, %v5327
        %5525 = vst.msk [vmem:[#allocation4 + $0x548] sm:$0xff] %vm329, %v5331
        %5526 = vst.msk [vmem:[#allocation4 + $0x550] sm:$0xff] %vm329, %v5335
        %5527 = vst.msk [vmem:[#allocation4 + $0x558] sm:$0xff] %vm329, %v5339
        %5528 = vst.msk [vmem:[#allocation4 + $0x560] sm:$0xff] %vm329, %v5343
        %5529 = vst.msk [vmem:[#allocation4 + $0x568] sm:$0xff] %vm329, %v5347
        %5530 = vst.msk [vmem:[#allocation4 + $0x570] sm:$0xff] %vm329, %v5351
        %5531 = vst.msk [vmem:[#allocation4 + $0x578] sm:$0xff] %vm329, %v5355
        loop: start=0, step=1, limit=11
        $region61: #{ss2depthconv_k1_forward.6} parent=39 // loop_pre_header
          _
        $region62: #{ss2depthconv_k1_forward.6} parent=39 // loop_header
          %s5533 = sphi 0, %s5537
          %p5534 = scmp.ge.s32.totalorder %s5533, 11
          %v5538 = vphi 0.0, %v5732
          %v5539 = vphi 0.0, %v5733
        $region63: #{ss2depthconv_k1_forward.6} parent=39 // loop_header_branch
          %5536 = sbr.rel (%p5534) target = $region67
        $region64: #{ss2depthconv_k1_forward.6} parent=39 // loop_body
          %s5540 = smul.u32 %s5533, 8
          %s5541 = smul.u32 %s5540, 16
          %s5542 = scalar_lea.vmem [#allocation2], %s5541
          %v5543 = vld [vmem:[%s5542] sm:$0xff]
          %v5544 = vld [vmem:[%s5542 + $0x8] sm:$0xff]
          %v5545 = vmul.f32 %v5543, %v5538
          %v5546 = vmul.f32 %v5544, %v5539
          %s5547 = scalar_lea.vmem [#allocation3], %s5541
          %v5548 = vld [vmem:[%s5547] sm:$0xff]
          %v5549 = vld [vmem:[%s5547 + $0x8] sm:$0xff]
          %v5550 = vadd.f32 %v5545, %v5548
          %v5551 = vadd.f32 %v5546, %v5549
          %s5552 = scalar_lea.vmem [#allocation4], %s5541
          %v5553 = vld [vmem:[%s5552] sm:$0xff]
          %v5554 = vld [vmem:[%s5552 + $0x8] sm:$0xff]
          %v5555 = vmul.f32 %v5553, %v5550
          %v5556 = vmul.f32 %v5554, %v5551
          %v5557 = vsel %vm329, %v5555, 0.0
          %v5558 = vsel %vm329, %v5556, 0.0
          %v5559 = vadd.f32 %v5557, %v5558
          %v5560 = vrot.slane %v5559, 4
          %v5561 = vadd.f32 %v5559, %v5560
          %v5562 = vrot.slane %v5561, 2
          %v5563 = vadd.f32 %v5561, %v5562
          %v5564 = vrot.slane %v5563, 1
          %v5565 = vadd.f32 %v5563, %v5564
          %s5566 = sadd.s32 %s5540, 1
          %s5567 = smul.u32 %s5566, 16
          %s5568 = scalar_lea.vmem [#allocation2], %s5567
          %v5569 = vld [vmem:[%s5568] sm:$0xff]
          %v5570 = vld [vmem:[%s5568 + $0x8] sm:$0xff]
          %v5571 = vmul.f32 %v5569, %v5550
          %v5572 = vmul.f32 %v5570, %v5551
          %s5573 = scalar_lea.vmem [#allocation3], %s5567
          %v5574 = vld [vmem:[%s5573] sm:$0xff]
          %v5575 = vld [vmem:[%s5573 + $0x8] sm:$0xff]
          %v5576 = vadd.f32 %v5571, %v5574
          %v5577 = vadd.f32 %v5572, %v5575
          %s5578 = scalar_lea.vmem [#allocation4], %s5567
          %v5579 = vld [vmem:[%s5578] sm:$0xff]
          %v5580 = vld [vmem:[%s5578 + $0x8] sm:$0xff]
          %v5581 = vmul.f32 %v5579, %v5576
          %v5582 = vmul.f32 %v5580, %v5577
          %v5583 = vsel %vm329, %v5581, 0.0
          %v5584 = vsel %vm329, %v5582, 0.0
          %v5585 = vadd.f32 %v5583, %v5584
          %v5586 = vrot.slane %v5585, 4
          %v5587 = vadd.f32 %v5585, %v5586
          %v5588 = vrot.slane %v5587, 2
          %v5589 = vadd.f32 %v5587, %v5588
          %v5590 = vrot.slane %v5589, 1
          %v5591 = vadd.f32 %v5589, %v5590
          %s5592 = sadd.s32 %s5540, 2
          %s5593 = smul.u32 %s5592, 16
          %s5594 = scalar_lea.vmem [#allocation2], %s5593
          %v5595 = vld [vmem:[%s5594] sm:$0xff]
          %v5596 = vld [vmem:[%s5594 + $0x8] sm:$0xff]
          %v5597 = vmul.f32 %v5595, %v5576
          %v5598 = vmul.f32 %v5596, %v5577
          %s5599 = scalar_lea.vmem [#allocation3], %s5593
          %v5600 = vld [vmem:[%s5599] sm:$0xff]
          %v5601 = vld [vmem:[%s5599 + $0x8] sm:$0xff]
          %v5602 = vadd.f32 %v5597, %v5600
          %v5603 = vadd.f32 %v5598, %v5601
          %s5604 = scalar_lea.vmem [#allocation4], %s5593
          %v5605 = vld [vmem:[%s5604] sm:$0xff]
          %v5606 = vld [vmem:[%s5604 + $0x8] sm:$0xff]
          %v5607 = vmul.f32 %v5605, %v5602
          %v5608 = vmul.f32 %v5606, %v5603
          %v5609 = vsel %vm329, %v5607, 0.0
          %v5610 = vsel %vm329, %v5608, 0.0
          %v5611 = vadd.f32 %v5609, %v5610
          %v5612 = vrot.slane %v5611, 4
          %v5613 = vadd.f32 %v5611, %v5612
          %v5614 = vrot.slane %v5613, 2
          %v5615 = vadd.f32 %v5613, %v5614
          %v5616 = vrot.slane %v5615, 1
          %v5617 = vadd.f32 %v5615, %v5616
          %s5618 = sadd.s32 %s5540, 3
          %s5619 = smul.u32 %s5618, 16
          %s5620 = scalar_lea.vmem [#allocation2], %s5619
          %v5621 = vld [vmem:[%s5620] sm:$0xff]
          %v5622 = vld [vmem:[%s5620 + $0x8] sm:$0xff]
          %v5623 = vmul.f32 %v5621, %v5602
          %v5624 = vmul.f32 %v5622, %v5603
          %s5625 = scalar_lea.vmem [#allocation3], %s5619
          %v5626 = vld [vmem:[%s5625] sm:$0xff]
          %v5627 = vld [vmem:[%s5625 + $0x8] sm:$0xff]
          %v5628 = vadd.f32 %v5623, %v5626
          %v5629 = vadd.f32 %v5624, %v5627
          %s5630 = scalar_lea.vmem [#allocation4], %s5619
          %v5631 = vld [vmem:[%s5630] sm:$0xff]
          %v5632 = vld [vmem:[%s5630 + $0x8] sm:$0xff]
          %v5633 = vmul.f32 %v5631, %v5628
          %v5634 = vmul.f32 %v5632, %v5629
          %v5635 = vsel %vm329, %v5633, 0.0
          %v5636 = vsel %vm329, %v5634, 0.0
          %v5637 = vadd.f32 %v5635, %v5636
          %v5638 = vrot.slane %v5637, 4
          %v5639 = vadd.f32 %v5637, %v5638
          %v5640 = vrot.slane %v5639, 2
          %v5641 = vadd.f32 %v5639, %v5640
          %v5642 = vrot.slane %v5641, 1
          %v5643 = vadd.f32 %v5641, %v5642
          %s5644 = sadd.s32 %s5540, 4
          %s5645 = smul.u32 %s5644, 16
          %s5646 = scalar_lea.vmem [#allocation2], %s5645
          %v5647 = vld [vmem:[%s5646] sm:$0xff]
          %v5648 = vld [vmem:[%s5646 + $0x8] sm:$0xff]
          %v5649 = vmul.f32 %v5647, %v5628
          %v5650 = vmul.f32 %v5648, %v5629
          %s5651 = scalar_lea.vmem [#allocation3], %s5645
          %v5652 = vld [vmem:[%s5651] sm:$0xff]
          %v5653 = vld [vmem:[%s5651 + $0x8] sm:$0xff]
          %v5654 = vadd.f32 %v5649, %v5652
          %v5655 = vadd.f32 %v5650, %v5653
          %s5656 = scalar_lea.vmem [#allocation4], %s5645
          %v5657 = vld [vmem:[%s5656] sm:$0xff]
          %v5658 = vld [vmem:[%s5656 + $0x8] sm:$0xff]
          %v5659 = vmul.f32 %v5657, %v5654
          %v5660 = vmul.f32 %v5658, %v5655
          %v5661 = vsel %vm329, %v5659, 0.0
          %v5662 = vsel %vm329, %v5660, 0.0
          %v5663 = vadd.f32 %v5661, %v5662
          %v5664 = vrot.slane %v5663, 4
          %v5665 = vadd.f32 %v5663, %v5664
          %v5666 = vrot.slane %v5665, 2
          %v5667 = vadd.f32 %v5665, %v5666
          %v5668 = vrot.slane %v5667, 1
          %v5669 = vadd.f32 %v5667, %v5668
          %s5670 = sadd.s32 %s5540, 5
          %s5671 = smul.u32 %s5670, 16
          %s5672 = scalar_lea.vmem [#allocation2], %s5671
          %v5673 = vld [vmem:[%s5672] sm:$0xff]
          %v5674 = vld [vmem:[%s5672 + $0x8] sm:$0xff]
          %v5675 = vmul.f32 %v5673, %v5654
          %v5676 = vmul.f32 %v5674, %v5655
          %s5677 = scalar_lea.vmem [#allocation3], %s5671
          %v5678 = vld [vmem:[%s5677] sm:$0xff]
          %v5679 = vld [vmem:[%s5677 + $0x8] sm:$0xff]
          %v5680 = vadd.f32 %v5675, %v5678
          %v5681 = vadd.f32 %v5676, %v5679
          %s5682 = scalar_lea.vmem [#allocation4], %s5671
          %v5683 = vld [vmem:[%s5682] sm:$0xff]
          %v5684 = vld [vmem:[%s5682 + $0x8] sm:$0xff]
          %v5685 = vmul.f32 %v5683, %v5680
          %v5686 = vmul.f32 %v5684, %v5681
          %v5687 = vsel %vm329, %v5685, 0.0
          %v5688 = vsel %vm329, %v5686, 0.0
          %v5689 = vadd.f32 %v5687, %v5688
          %v5690 = vrot.slane %v5689, 4
          %v5691 = vadd.f32 %v5689, %v5690
          %v5692 = vrot.slane %v5691, 2
          %v5693 = vadd.f32 %v5691, %v5692
          %v5694 = vrot.slane %v5693, 1
          %v5695 = vadd.f32 %v5693, %v5694
          %s5696 = sadd.s32 %s5540, 6
          %s5697 = smul.u32 %s5696, 16
          %s5698 = scalar_lea.vmem [#allocation2], %s5697
          %v5699 = vld [vmem:[%s5698] sm:$0xff]
          %v5700 = vld [vmem:[%s5698 + $0x8] sm:$0xff]
          %v5701 = vmul.f32 %v5699, %v5680
          %v5702 = vmul.f32 %v5700, %v5681
          %s5703 = scalar_lea.vmem [#allocation3], %s5697
          %v5704 = vld [vmem:[%s5703] sm:$0xff]
          %v5705 = vld [vmem:[%s5703 + $0x8] sm:$0xff]
          %v5706 = vadd.f32 %v5701, %v5704
          %v5707 = vadd.f32 %v5702, %v5705
          %s5708 = scalar_lea.vmem [#allocation4], %s5697
          %v5709 = vld [vmem:[%s5708] sm:$0xff]
          %v5710 = vld [vmem:[%s5708 + $0x8] sm:$0xff]
          %v5711 = vmul.f32 %v5709, %v5706
          %v5712 = vmul.f32 %v5710, %v5707
          %v5713 = vsel %vm329, %v5711, 0.0
          %v5714 = vsel %vm329, %v5712, 0.0
          %v5715 = vadd.f32 %v5713, %v5714
          %v5716 = vrot.slane %v5715, 4
          %v5717 = vadd.f32 %v5715, %v5716
          %v5718 = vrot.slane %v5717, 2
          %v5719 = vadd.f32 %v5717, %v5718
          %v5720 = vrot.slane %v5719, 1
          %v5721 = vadd.f32 %v5719, %v5720
          %s5722 = sadd.s32 %s5540, 7
          %s5723 = smul.u32 %s5722, 16
          %s5724 = scalar_lea.vmem [#allocation2], %s5723
          %v5725 = vld [vmem:[%s5724] sm:$0xff]
          %v5726 = vld [vmem:[%s5724 + $0x8] sm:$0xff]
          %v5727 = vmul.f32 %v5725, %v5706
          %v5728 = vmul.f32 %v5726, %v5707
          %s5729 = scalar_lea.vmem [#allocation3], %s5723
          %v5730 = vld [vmem:[%s5729] sm:$0xff]
          %v5731 = vld [vmem:[%s5729 + $0x8] sm:$0xff]
          %v5732 = vadd.f32 %v5727, %v5730
          %v5733 = vadd.f32 %v5728, %v5731
          %s5734 = scalar_lea.vmem [#allocation4], %s5723
          %v5735 = vld [vmem:[%s5734] sm:$0xff]
          %v5736 = vld [vmem:[%s5734 + $0x8] sm:$0xff]
          %v5737 = vmul.f32 %v5735, %v5732
          %v5738 = vmul.f32 %v5736, %v5733
          %v5739 = vsel %vm329, %v5737, 0.0
          %v5740 = vsel %vm329, %v5738, 0.0
          %v5741 = vadd.f32 %v5739, %v5740
          %v5742 = vrot.slane %v5741, 4
          %v5743 = vadd.f32 %v5741, %v5742
          %v5744 = vrot.slane %v5743, 2
          %v5745 = vadd.f32 %v5743, %v5744
          %v5746 = vrot.slane %v5745, 1
          %v5747 = vadd.f32 %v5745, %v5746
          %s5748 = sadd.s32 0, %s5540
          %v5749 = vsel %vm348, %v5565, %v5591
          %vm5750 = vcmask 1041408
          %v5751 = vsel %vm5750, %v5749, %v5617
          %vm5752 = vcmask 1042432
          %v5753 = vsel %vm5752, %v5751, %v5643
          %vm5754 = vcmask 1043456
          %v5755 = vsel %vm5754, %v5753, %v5669
          %vm5756 = vcmask 1044480
          %v5757 = vsel %vm5756, %v5755, %v5695
          %vm5758 = vcmask 1045504
          %v5759 = vsel %vm5758, %v5757, %v5721
          %vm5760 = vcmask 1046528
          %v5761 = vsel %vm5760, %v5759, %v5747
          %s5762 = scalar_lea.vmem [#allocation5], %s5748
          %5763 = vst.msk [vmem:[%s5762] sm:$0xff] %vm329, %v5761
        $region65: #{ss2depthconv_k1_forward.6} parent=39 // loop_footer
          %s5537 = sadd.s32 1, %s5533
        $region66: #{ss2depthconv_k1_forward.6} parent=39 // loop_footer_branch
          %5532 = sbr.rel target = $region62
        $region67: #{ss2depthconv_k1_forward.6} parent=39 // loop_exit
          _
        %v5764 = vld [vmem:[#allocation5] sm:$0xff]
        %v5765 = vld [vmem:[#allocation5 + $0x8] sm:$0xff]
        %v5766 = vld [vmem:[#allocation5 + $0x10] sm:$0xff]
        %v5767 = vld [vmem:[#allocation5 + $0x18] sm:$0xff]
        %v5768 = vld [vmem:[#allocation5 + $0x20] sm:$0xff]
        %v5769 = vld [vmem:[#allocation5 + $0x28] sm:$0xff]
        %v5770 = vld [vmem:[#allocation5 + $0x30] sm:$0xff]
        %v5771 = vld [vmem:[#allocation5 + $0x38] sm:$0xff]
        %v5772 = vld [vmem:[#allocation5 + $0x40] sm:$0xff]
        %v5773 = vld [vmem:[#allocation5 + $0x48] sm:$0xff]
        %v5774 = vld [vmem:[#allocation5 + $0x50] sm:$0xff]
        %v5775 = vld [vmem:[#allocation12] sm:$0x1]
        %v5776 = vld [vmem:[%s254] sm:$0xff]
        %v5777 = vld [vmem:[%s254 + $0x8] sm:$0xff]
        %v5778 = vld [vmem:[%s254 + $0x10] sm:$0xff]
        %v5779 = vld [vmem:[%s254 + $0x18] sm:$0xff]
        %v5780 = vld [vmem:[%s254 + $0x20] sm:$0xff]
        %v5781 = vld [vmem:[%s254 + $0x28] sm:$0xff]
        %v5782 = vld [vmem:[%s254 + $0x30] sm:$0xff]
        %v5783 = vld [vmem:[%s254 + $0x38] sm:$0xff]
        %v5784 = vld [vmem:[%s254 + $0x40] sm:$0xff]
        %v5785 = vld [vmem:[%s254 + $0x48] sm:$0xff]
        %v5786 = vld [vmem:[%s254 + $0x50] sm:$0xff]
        %v5788 = vlaneseq
        %v5789 = vshrl.u32 %v5788, 7
        %v5790 = vsub.s32 0, %v5789
        %v5791 = vrot.slane %v5775, %v5790
        %v5793 = vmul.f32 %v5791, %v5776
        %v5794 = vmul.f32 %v5791, %v5777
        %v5795 = vmul.f32 %v5791, %v5778
        %v5796 = vmul.f32 %v5791, %v5779
        %v5797 = vmul.f32 %v5791, %v5780
        %v5798 = vmul.f32 %v5791, %v5781
        %v5799 = vmul.f32 %v5791, %v5782
        %v5800 = vmul.f32 %v5791, %v5783
        %v5801 = vmul.f32 %v5791, %v5784
        %v5802 = vmul.f32 %v5791, %v5785
        %v5803 = vmul.f32 %v5791, %v5786
        %v5804 = vadd.f32 %v5764, %v5793
        %v5805 = vadd.f32 %v5765, %v5794
        %v5806 = vadd.f32 %v5766, %v5795
        %v5807 = vadd.f32 %v5767, %v5796
        %v5808 = vadd.f32 %v5768, %v5797
        %v5809 = vadd.f32 %v5769, %v5798
        %v5810 = vadd.f32 %v5770, %v5799
        %v5811 = vadd.f32 %v5771, %v5800
        %v5812 = vadd.f32 %v5772, %v5801
        %v5813 = vadd.f32 %v5773, %v5802
        %v5814 = vadd.f32 %v5774, %v5803
        %5815 = vst.msk [vmem:[%s296] sm:$0xff] %vm329, %v5804
        %5816 = vst.msk [vmem:[%s296 + $0x8] sm:$0xff] %vm329, %v5805
        %5817 = vst.msk [vmem:[%s296 + $0x10] sm:$0xff] %vm329, %v5806
        %5818 = vst.msk [vmem:[%s296 + $0x18] sm:$0xff] %vm329, %v5807
        %5819 = vst.msk [vmem:[%s296 + $0x20] sm:$0xff] %vm329, %v5808
        %5820 = vst.msk [vmem:[%s296 + $0x28] sm:$0xff] %vm329, %v5809
        %5821 = vst.msk [vmem:[%s296 + $0x30] sm:$0xff] %vm329, %v5810
        %5822 = vst.msk [vmem:[%s296 + $0x38] sm:$0xff] %vm329, %v5811
        %5823 = vst.msk [vmem:[%s296 + $0x40] sm:$0xff] %vm329, %v5812
        %5824 = vst.msk [vmem:[%s296 + $0x48] sm:$0xff] %vm329, %v5813
        %5825 = vst.msk [vmem:[%s296 + $0x50] sm:$0xff] %vm329, %v5814
        %s5826 = sand.u32 %s142, 1
        %s5827 = scalar_lea.sflag [#allocation8], %s5826
        %s5828 = sand.u32 %s142, 1
        %s5829 = smul.addr %s5828, 88
        %s5830 = scalar_lea.vmem [#allocation15], %s5829
        // Predicated region
        $region68: #{ss2depthconv_k1_forward.6} parent=39 // pred_check
          %p5831 = pneg %p152
        $region69: #{ss2depthconv_k1_forward.6} parent=39 // pred_check_branch
          %5833 = sbr.rel (%p5831) target = $region71
        $region70: #{ss2depthconv_k1_forward.6} parent=39 // pred_region
          %s5835 = ssub.s32 1408, 1408
          %5836 = vsyncadd %s5827, %s5835
          %s5837 = smul.addr %s24, 11
          %s5838 = smul.addr %s5837, 128
          %s5839 = scalar_lea.hbm %s5, %s5838
          %s5840 = sshll.u32 %s5830, 4
          %s5841 = int_to_ptr.vmem [resolvable:$true] %s5840
          %5846 = dma.vmem_to_hbm [thread:$0]  %s5841, 1408, %s5839, %s5827, 128, 128, 8
        $region71: #{ss2depthconv_k1_forward.6} parent=39 // pred_fallthru
          _
      $region40: #{ss2depthconv_k1_forward.6} parent=5 // pred_fallthru
        _
      %p5847 = scmp.le.s32.totalorder 2, %s19
      // Predicated region
      $region72: #{ss2depthconv_k1_forward.6} parent=5 // pred_check
        %p5848 = pneg %p5847
      $region73: #{ss2depthconv_k1_forward.6} parent=5 // pred_check_branch
        %5850 = sbr.rel (%p5848) target = $region75
      $region74: #{ss2depthconv_k1_forward.6} parent=5 // pred_region
        %s5851 = ssub.s32 %s19, 2
        // Predicated region
        $region76: #{ss2depthconv_k1_forward.6} parent=74 // pred_check
          %p5852 = pneg %p158
        $region77: #{ss2depthconv_k1_forward.6} parent=74 // pred_check_branch
          %5854 = sbr.rel (%p5852) target = $region79
        $region78: #{ss2depthconv_k1_forward.6} parent=74 // pred_region
          %s5855 = sand.u32 %s143, 1
          %s5856 = scalar_lea.sflag [#allocation8], %s5855
          %s5857 = sand.u32 %s143, 1
          %s5858 = smul.addr %s5857, 88
          %s5859 = scalar_lea.vmem [#allocation15], %s5858
          %5860 = dma.done %s5856, 1408
        $region79: #{ss2depthconv_k1_forward.6} parent=74 // pred_fallthru
          _
      $region75: #{ss2depthconv_k1_forward.6} parent=5 // pred_fallthru
        _
    $region6: #{ss2depthconv_k1_forward.6} parent=1 // loop_footer
      %s23 = sadd.s32 1, %s19
    $region7: #{ss2depthconv_k1_forward.6} parent=1 // loop_footer_branch
      %18 = sbr.rel target = $region3
    $region8: #{ss2depthconv_k1_forward.6} parent=1 // loop_exit
      _
    %5861 = vsyncpa [#allocation7], 1
    %s5862 = scalar_lea.sflag [#allocation7], 1
    %5863 = vsyncpa %s5862, 1
    %5864 = vsyncpa [#allocation10], 1
    %5865 = vsyncpa [#allocation13], 1
    %5866 = vsyncpa [#allocation8], 1
    %s5867 = scalar_lea.sflag [#allocation8], 1
    %5868 = vsyncpa %s5867, 1

</llo_original>
